<compile_context>
chip_gen: v7x
topology: tpu7x:2x2x1
jax: 0.10.0
libtpu: 0.0.40
codegen_flags: <defaults>
</compile_context>

<pallas_src>
import functools

import numpy as np

import jax
import jax.numpy as jnp
from jax.experimental import pallas as pl
from jax.experimental.pallas import tpu as pltpu


OWPAD = 128   # lane-dense output segment width (OW <= 128 assumed)


# ----------------------------------------------------------------------------
# The single fused kernel
# ----------------------------------------------------------------------------
def _decoder_kernel(x_ref, w1_ref, w2_ref, w3c_ref, lcat_ref,
                    p1_ref, e1_ref, p2_ref, e2_ref,
                    g1_ref, be1_ref, g2_ref, be2_ref, b3_ref,
                    out_ref, u_sc, *, cnt1, cnt2, eps, hn):
    f32 = jnp.float32
    bf16 = jnp.bfloat16

    # ---- layer 1: ConvTranspose2d(64,32,2,s=2) as ONE bf16 MXU matmul -------
    y1 = jnp.dot(x_ref[...], w1_ref[...], preferred_element_type=f32)   # (HN, W*128)

    # BatchNorm(32) batch statistics: XLU row-sum, then a tiny M=1 channel
    # pooling matmul.  Entire stats path stays in f32.
    r1 = jnp.sum(y1, axis=0, keepdims=True)                             # (1, W*128)
    rq1 = jnp.sum(y1 * y1, axis=0, keepdims=True)
    s1 = jnp.dot(r1, p1_ref[...], preferred_element_type=f32)           # (1, 32)
    q1 = jnp.dot(rq1, p1_ref[...], preferred_element_type=f32)
    mean1 = s1 * (1.0 / cnt1)
    var1 = q1 * (1.0 / cnt1) - mean1 * mean1
    scale1 = g1_ref[...] * jax.lax.rsqrt(var1 + eps)                    # (1, 32)
    shift1 = be1_ref[...] - mean1 * scale1
    # per-channel -> (w, c1, tap) column layout; (1, W*128) rows are then
    # sublane-broadcast for free by the VPU in the fused BN+ReLU below.
    scale1e = jnp.dot(scale1, e1_ref[...], preferred_element_type=f32)  # (1, W*128)
    shift1e = jnp.dot(shift1, e1_ref[...], preferred_element_type=f32)
    a1 = jnp.maximum(y1 * scale1e + shift1e, 0.0)                       # BN + ReLU (f32)

    # ---- layer 2: ConvTranspose2d(32,16,2,s=2) ------------------------------
    y2 = jnp.dot(a1.astype(bf16), w2_ref[...], preferred_element_type=f32)  # (HN, W*256)
    r2 = jnp.sum(y2, axis=0, keepdims=True)
    rq2 = jnp.sum(y2 * y2, axis=0, keepdims=True)
    s2 = jnp.dot(r2, p2_ref[...], preferred_element_type=f32)           # (1, 16)
    q2 = jnp.dot(rq2, p2_ref[...], preferred_element_type=f32)
    mean2 = s2 * (1.0 / cnt2)
    var2 = q2 * (1.0 / cnt2) - mean2 * mean2
    scale2 = g2_ref[...] * jax.lax.rsqrt(var2 + eps)                    # (1, 16)
    shift2 = be2_ref[...] - mean2 * scale2
    scale2e = jnp.dot(scale2, e2_ref[...], preferred_element_type=f32)  # (1, W*256)
    shift2e = jnp.dot(shift2, e2_ref[...], preferred_element_type=f32)
    a2 = jnp.maximum(y2 * scale2e + shift2e, 0.0)                       # BN + ReLU (f32)

    # ---- layer 3: ConvTranspose2d(16,1,3) + overlap-add, fully fused --------
    # ONE matmul against the concatenated lane-padded kernel (instead of six
    # tiny ones), stage the six 128-lane segments at sublane-aligned rows of a
    # small VMEM scratch, then ONE scatter matmul performs the vertical
    # overlap-add straight into the lane-dense (N*OH, 128) output slab.
    u = jnp.dot(a2.astype(bf16), w3c_ref[...], preferred_element_type=f32)   # (HN, 6*128)
    for k in range(6):
        u_sc[pl.ds(k * hn, hn), :] = u[:, k * 128:(k + 1) * 128]
    z = jnp.dot(lcat_ref[...], u_sc[...], preferred_element_type=f32) + b3_ref[0]
    # Sigmoid entirely on the EUP: exp + approximate reciprocal; clamp keeps
    # the exact [0, 1] sigmoid range despite the approx recip.
    out_ref[...] = jnp.clip(pl.reciprocal(1.0 + jnp.exp(-z), approx=True), 0.0, 1.0)


# ----------------------------------------------------------------------------
# Layout / scatter constants (0/1 matrices, independent of learned weights)
# ----------------------------------------------------------------------------
def _structural_constants(N, H, W):
    OH, OW = 4 * H + 2, 4 * W + 2
    f32 = np.float32
    # channel-pooling matrices for BN statistics / broadcasts
    p1 = np.kron(np.ones((W, 1), f32),
                 np.kron(np.eye(32, dtype=f32), np.ones((4, 1), f32)))   # (W*128, 32)
    p2 = np.kron(np.ones((W * 4, 1), f32),
                 np.kron(np.eye(16, dtype=f32), np.ones((4, 1), f32)))   # (W*256, 16)
    # horizontal scatter structure (folded into W3cat): S[k, w, t1, t2, t3, q]
    s = np.zeros((6, W, 4, 4, 9, OW), f32)
    for w in range(W):
        for kh1 in range(2):
            for kw1 in range(2):
                for kh2 in range(2):
                    for kw2 in range(2):
                        for kh3 in range(3):
                            for kw3 in range(3):
                                k = 2 * kh1 + kh2 + kh3
                                q = 4 * w + 2 * kw1 + kw2 + kw3
                                s[k, w, 2 * kh1 + kw1, 2 * kh2 + kw2,
                                  3 * kh3 + kw3, q] = 1.0
    # vertical scatter: L[k, n*OH + P, h*N + n] = 1  iff  P == 4h + k
    l = np.zeros((6, N * OH, H * N), f32)
    for k in range(6):
        for h in range(H):
            P = 4 * h + k
            for n in range(N):
                l[k, n * OH + P, h * N + n] = 1.0
    return p1, p2, s, l


# ----------------------------------------------------------------------------
# One-time preparation + jitted forward (NCHW in, NCHW out)
# ----------------------------------------------------------------------------
def build_decoder(params, N, H, W, eps=1e-5):
    """Expand the learned weights into the fused-kernel layout ONCE (host
    NumPy) and return a jitted forward callable whose per-call work is only
    the input transpose + the single pallas_call."""
    assert 4 * W + 2 <= OWPAD, "output width must fit one 128-lane segment"
    OH, OW = 4 * H + 2, 4 * W + 2
    HN = H * N
    f32np = np.float32

    p1_np, p2_np, s_np, l_np = _structural_constants(N, H, W)
    eyeW = np.eye(W, dtype=f32np)
    eye4 = np.eye(4, dtype=f32np)

    # Block-diagonal expanded conv weights (one-off host NumPy prep).
    w1r = np.asarray(params["w1"], f32np).reshape(64, 128)               # (cin, c1*4+t1)
    W1big = np.einsum('cj,wx->wcxj', w1r, eyeW).reshape(W * 64, W * 128)

    w2r = np.asarray(params["w2"], f32np).reshape(32, 16, 4)             # (c1, c2, t2)
    W2big = np.einsum('cde,wx,ab->wcaxbde', w2r, eyeW, eye4).reshape(W * 128, W * 256)

    w3r = np.asarray(params["w3"], f32np).reshape(16, 9)                 # (c2, t3)
    W3M = np.einsum('ct,kwabtq->kwacbq', w3r, s_np).reshape(6, W * 256, OW)
    # Concatenate the six vertical-offset kernels along lanes, each padded to
    # a full 128-lane segment -> one MXU push in the kernel, aligned slices.
    W3cat = np.zeros((W * 256, 6 * OWPAD), f32np)
    for k in range(6):
        W3cat[:, k * OWPAD:k * OWPAD + OW] = W3M[k]

    # Concatenated vertical scatter: one (N*OH, 6*HN) matmul replaces six.
    Lcat = np.zeros((N * OH, 6 * HN), f32np)
    for k in range(6):
        Lcat[:, k * HN:(k + 1) * HN] = l_np[k]

    # NOTE: b1/b2 are intentionally unused — a constant per-channel bias is
    # cancelled exactly by the training-mode BatchNorm that follows it.
    consts = (
        jnp.asarray(W1big, jnp.bfloat16),                # MXU operands in bf16
        jnp.asarray(W2big, jnp.bfloat16),
        jnp.asarray(W3cat, jnp.bfloat16),
        jnp.asarray(Lcat, jnp.float32),                  # stats/scatter stay f32
        jnp.asarray(p1_np, jnp.float32),
        jnp.asarray(p1_np.T, jnp.float32),
        jnp.asarray(p2_np, jnp.float32),
        jnp.asarray(p2_np.T, jnp.float32),
        jnp.asarray(np.asarray(params["g1"], f32np).reshape(1, 32)),
        jnp.asarray(np.asarray(params["be1"], f32np).reshape(1, 32)),
        jnp.asarray(np.asarray(params["g2"], f32np).reshape(1, 16)),
        jnp.asarray(np.asarray(params["be2"], f32np).reshape(1, 16)),
        jnp.asarray(np.asarray(params["b3"], f32np).reshape(1)),
    )

    cnt1 = float(N * (2 * H) * (2 * W))
    cnt2 = float(N * (4 * H) * (4 * W))
    kernel = functools.partial(_decoder_kernel, cnt1=cnt1, cnt2=cnt2, eps=eps, hn=HN)

    vmem = pl.BlockSpec(memory_space=pltpu.MemorySpace.VMEM)
    smem = pl.BlockSpec(memory_space=pltpu.MemorySpace.SMEM)
    call = pl.pallas_call(
        kernel,
        out_shape=jax.ShapeDtypeStruct((N * OH, OWPAD), jnp.float32),   # lane-dense slab
        in_specs=[vmem] * 13 + [smem],
        out_specs=vmem,
        scratch_shapes=[pltpu.VMEM((6 * HN, OWPAD), jnp.float32)],
        compiler_params=pltpu.CompilerParams(vmem_limit_bytes=16 * 1024 * 1024),
    )

    def _impl(x_nchw, w1, w2, w3c, lcat, p1, e1, p2, e2, g1, be1, g2, be2, b3):
        # rows = (h, n), cols = (w, cin); bf16 feed for the MXU
        x_r = jnp.transpose(x_nchw, (2, 0, 3, 1)).reshape(H * N, W * 64)
        x_r = x_r.astype(jnp.bfloat16)
        out2d = call(x_r, w1, w2, w3c, lcat, p1, e1, p2, e2, g1, be1, g2, be2, b3)
        return out2d[:, :OW].reshape(N, OH, OW)[:, None, :, :]          # (N, 1, OH, OW)

    fwd = jax.jit(_impl)

    def forward(x_nchw):
        return fwd(x_nchw, *consts)

    return forward


# ----------------------------------------------------------------------------
# Pure-JAX reference (mirrors the PyTorch module, training-mode BN)
# ----------------------------------------------------------------------------
def _decoder_reference(x_nchw, params, eps=1e-5):
    N, Cin, H, W = x_nchw.shape
    x = jnp.transpose(x_nchw, (0, 2, 3, 1)).astype(jnp.float32)  # NHWC
    w1, b1 = params["w1"], params["b1"]
    y1 = jnp.einsum('nhwc,cokl->nhwokl', x, w1) + b1[None, None, None, :, None, None]
    h1 = jnp.transpose(y1, (0, 1, 4, 2, 5, 3)).reshape(N, 2 * H, 2 * W, 32)
    m1, v1 = h1.mean(axis=(0, 1, 2)), h1.var(axis=(0, 1, 2))
    a1 = jnp.maximum((h1 - m1) / jnp.sqrt(v1 + eps) * params["g1"] + params["be1"], 0.0)
    w2, b2 = params["w2"], params["b2"]
    y2 = jnp.einsum('nhwc,cokl->nhwokl', a1, w2) + b2[None, None, None, :, None, None]
    h2 = jnp.transpose(y2, (0, 1, 4, 2, 5, 3)).reshape(N, 4 * H, 4 * W, 16)
    m2, v2 = h2.mean(axis=(0, 1, 2)), h2.var(axis=(0, 1, 2))
    a2 = jnp.maximum((h2 - m2) / jnp.sqrt(v2 + eps) * params["g2"] + params["be2"], 0.0)
    w3, b3 = params["w3"], params["b3"]
    y3 = jnp.einsum('nhwc,ckl->nhwkl', a2, w3[:, 0])             # (N, 4H, 4W, 3, 3)
    out = jnp.zeros((N, 4 * H + 2, 4 * W + 2), jnp.float32)
    for kh in range(3):
        for kw in range(3):
            out = out + jnp.pad(y3[..., kh, kw], ((0, 0), (kh, 2 - kh), (kw, 2 - kw)))
    return jax.nn.sigmoid(out + b3[0])[:, None, :, :]


# ----------------------------------------------------------------------------
# Deterministic parameter construction (shapes from the module __init__)
# ----------------------------------------------------------------------------
def make_params(key):
    ks = jax.random.split(key, 6)
    return {
        "w1": 0.1 * jax.random.normal(ks[0], (64, 32, 2, 2), jnp.float32),
        "b1": 0.1 * jax.random.normal(ks[1], (32,), jnp.float32),
        "w2": 0.1 * jax.random.normal(ks[2], (32, 16, 2, 2), jnp.float32),
        "b2": 0.1 * jax.random.normal(ks[3], (16,), jnp.float32),
        "w3": 0.1 * jax.random.normal(ks[4], (16, 1, 3, 3), jnp.float32),
        "b3": 0.1 * jax.random.normal(ks[5], (1,), jnp.float32),
        # BatchNorm affine params at PyTorch defaults (weight=1, bias=0)
        "g1": jnp.ones((32,), jnp.float32),
        "be1": jnp.zeros((32,), jnp.float32),
        "g2": jnp.ones((16,), jnp.float32),
        "be2": jnp.zeros((16,), jnp.float32),
    }


if __name__ == "__main__":
    key = jax.random.PRNGKey(0)
    kx, kp = jax.random.split(key)
    # 64-channel latent, 4x4 spatial (consistent with the module's decoder)
    x = jax.random.normal(kx, (2, 64, 4, 4), jnp.float32)
    params = make_params(kp)

    forward = build_decoder(params, N=2, H=4, W=4)   # one-time weight prep
    out = forward(x)
    out = jax.block_until_ready(out)

    assert out.shape == (2, 1, 18, 18), out.shape
    assert bool(jnp.all(jnp.isfinite(out)))
    assert bool(jnp.all((out >= 0.0) & (out <= 1.0)))            # sigmoid range

    ref = jax.jit(_decoder_reference)(x, params)
    err = float(jnp.max(jnp.abs(out - ref)))
    assert err < 5e-2, f"max abs err vs reference: {err}"
    print("KERNEL_OK")
</pallas_src>

<mosaic_0001>
module attributes {stable_mosaic.version = 11 : i64} {
  func.func @_decoder_kernel(%arg0: memref<8x256xbf16, #tpu.memory_space<vmem>>, %arg1: memref<256x512xbf16, #tpu.memory_space<vmem>>, %arg2: memref<512x1024xbf16, #tpu.memory_space<vmem>>, %arg3: memref<1024x768xbf16, #tpu.memory_space<vmem>>, %arg4: memref<36x48xf32, #tpu.memory_space<vmem>>, %arg5: memref<512x32xf32, #tpu.memory_space<vmem>>, %arg6: memref<32x512xf32, #tpu.memory_space<vmem>>, %arg7: memref<1024x16xf32, #tpu.memory_space<vmem>>, %arg8: memref<16x1024xf32, #tpu.memory_space<vmem>>, %arg9: memref<1x32xf32, #tpu.memory_space<vmem>>, %arg10: memref<1x32xf32, #tpu.memory_space<vmem>>, %arg11: memref<1x16xf32, #tpu.memory_space<vmem>>, %arg12: memref<1x16xf32, #tpu.memory_space<vmem>>, %arg13: memref<1xf32, #tpu.memory_space<smem>>, %arg14: memref<36x128xf32, #tpu.memory_space<vmem>>, %arg15: memref<48x128xf32, #tpu.memory_space<vmem>>) attributes {dimension_semantics = [], scalar_prefetch = 0 : i64, scratch_operands = 1 : i64, tpu.core_type = #tpu.core_type<tc>} {
    %c0 = arith.constant 0 : index
    %c0_0 = arith.constant 0 : index
    %0 = vector.load %arg0[%c0, %c0_0] : memref<8x256xbf16, #tpu.memory_space<vmem>>, vector<8x256xbf16>
    %c0_1 = arith.constant 0 : index
    %c0_2 = arith.constant 0 : index
    %1 = vector.load %arg1[%c0_1, %c0_2] : memref<256x512xbf16, #tpu.memory_space<vmem>>, vector<256x512xbf16>
    %cst = arith.constant dense<0.000000e+00> : vector<8x512xf32>
    %2 = tpu.matmul %0, %1, %cst {dimension_numbers = #tpu.dot_dimension_numbers<[1], [0], [0], [1], [0, 0, 1, 1], [], []>} : vector<8x256xbf16>, vector<256x512xbf16>, vector<8x512xf32> -> vector<8x512xf32>
    %cst_3 = arith.constant dense<0.000000e+00> : vector<512xf32>
    %3 = vector.multi_reduction <add>, %2, %cst_3 [0] : vector<8x512xf32> to vector<512xf32>
    %4 = vector.shape_cast %3 : vector<512xf32> to vector<1x512xf32>
    %5 = arith.mulf %2, %2 : vector<8x512xf32>
    %cst_4 = arith.constant dense<0.000000e+00> : vector<512xf32>
    %6 = vector.multi_reduction <add>, %5, %cst_4 [0] : vector<8x512xf32> to vector<512xf32>
    %7 = vector.shape_cast %6 : vector<512xf32> to vector<1x512xf32>
    %c0_5 = arith.constant 0 : index
    %c0_6 = arith.constant 0 : index
    %8 = vector.load %arg5[%c0_5, %c0_6] : memref<512x32xf32, #tpu.memory_space<vmem>>, vector<512x32xf32>
    %cst_7 = arith.constant dense<0.000000e+00> : vector<1x32xf32>
    %9 = tpu.matmul %4, %8, %cst_7 {dimension_numbers = #tpu.dot_dimension_numbers<[1], [0], [0], [1], [0, 0, 1, 1], [], []>} : vector<1x512xf32>, vector<512x32xf32>, vector<1x32xf32> -> vector<1x32xf32>
    %c0_8 = arith.constant 0 : index
    %c0_9 = arith.constant 0 : index
    %10 = vector.load %arg5[%c0_8, %c0_9] : memref<512x32xf32, #tpu.memory_space<vmem>>, vector<512x32xf32>
    %cst_10 = arith.constant dense<0.000000e+00> : vector<1x32xf32>
    %11 = tpu.matmul %7, %10, %cst_10 {dimension_numbers = #tpu.dot_dimension_numbers<[1], [0], [0], [1], [0, 0, 1, 1], [], []>} : vector<1x512xf32>, vector<512x32xf32>, vector<1x32xf32> -> vector<1x32xf32>
    %cst_11 = arith.constant 7.812500e-03 : f32
    %12 = vector.broadcast %cst_11 : f32 to vector<1x32xf32>
    %13 = arith.mulf %9, %12 : vector<1x32xf32>
    %cst_12 = arith.constant 7.812500e-03 : f32
    %14 = vector.broadcast %cst_12 : f32 to vector<1x32xf32>
    %15 = arith.mulf %11, %14 : vector<1x32xf32>
    %16 = arith.mulf %13, %13 : vector<1x32xf32>
    %17 = arith.subf %15, %16 : vector<1x32xf32>
    %c0_13 = arith.constant 0 : index
    %c0_14 = arith.constant 0 : index
    %18 = vector.load %arg9[%c0_13, %c0_14] : memref<1x32xf32, #tpu.memory_space<vmem>>, vector<1x32xf32>
    %cst_15 = arith.constant 9.99999974E-6 : f32
    %19 = vector.broadcast %cst_15 : f32 to vector<1x32xf32>
    %20 = arith.addf %17, %19 : vector<1x32xf32>
    %21 = math.rsqrt %20 : vector<1x32xf32>
    %22 = arith.mulf %18, %21 : vector<1x32xf32>
    %c0_16 = arith.constant 0 : index
    %c0_17 = arith.constant 0 : index
    %23 = vector.load %arg10[%c0_16, %c0_17] : memref<1x32xf32, #tpu.memory_space<vmem>>, vector<1x32xf32>
    %24 = arith.mulf %13, %22 : vector<1x32xf32>
    %25 = arith.subf %23, %24 : vector<1x32xf32>
    %c0_18 = arith.constant 0 : index
    %c0_19 = arith.constant 0 : index
    %26 = vector.load %arg6[%c0_18, %c0_19] : memref<32x512xf32, #tpu.memory_space<vmem>>, vector<32x512xf32>
    %cst_20 = arith.constant dense<0.000000e+00> : vector<1x512xf32>
    %27 = tpu.matmul %22, %26, %cst_20 {dimension_numbers = #tpu.dot_dimension_numbers<[1], [0], [0], [1], [0, 0, 1, 1], [], []>} : vector<1x32xf32>, vector<32x512xf32>, vector<1x512xf32> -> vector<1x512xf32>
    %c0_21 = arith.constant 0 : index
    %c0_22 = arith.constant 0 : index
    %28 = vector.load %arg6[%c0_21, %c0_22] : memref<32x512xf32, #tpu.memory_space<vmem>>, vector<32x512xf32>
    %cst_23 = arith.constant dense<0.000000e+00> : vector<1x512xf32>
    %29 = tpu.matmul %25, %28, %cst_23 {dimension_numbers = #tpu.dot_dimension_numbers<[1], [0], [0], [1], [0, 0, 1, 1], [], []>} : vector<1x32xf32>, vector<32x512xf32>, vector<1x512xf32> -> vector<1x512xf32>
    %30 = vector.broadcast %27 : vector<1x512xf32> to vector<8x512xf32>
    %31 = arith.mulf %2, %30 : vector<8x512xf32>
    %32 = vector.broadcast %29 : vector<1x512xf32> to vector<8x512xf32>
    %33 = arith.addf %31, %32 : vector<8x512xf32>
    %cst_24 = arith.constant 0.000000e+00 : f32
    %34 = vector.broadcast %cst_24 : f32 to vector<8x512xf32>
    %35 = arith.maximumf %33, %34 : vector<8x512xf32>
    %36 = arith.truncf %35 : vector<8x512xf32> to vector<8x512xbf16>
    %c0_25 = arith.constant 0 : index
    %c0_26 = arith.constant 0 : index
    %37 = vector.load %arg2[%c0_25, %c0_26] : memref<512x1024xbf16, #tpu.memory_space<vmem>>, vector<512x1024xbf16>
    %cst_27 = arith.constant dense<0.000000e+00> : vector<8x1024xf32>
    %38 = tpu.matmul %36, %37, %cst_27 {dimension_numbers = #tpu.dot_dimension_numbers<[1], [0], [0], [1], [0, 0, 1, 1], [], []>} : vector<8x512xbf16>, vector<512x1024xbf16>, vector<8x1024xf32> -> vector<8x1024xf32>
    %cst_28 = arith.constant dense<0.000000e+00> : vector<1024xf32>
    %39 = vector.multi_reduction <add>, %38, %cst_28 [0] : vector<8x1024xf32> to vector<1024xf32>
    %40 = vector.shape_cast %39 : vector<1024xf32> to vector<1x1024xf32>
    %41 = arith.mulf %38, %38 : vector<8x1024xf32>
    %cst_29 = arith.constant dense<0.000000e+00> : vector<1024xf32>
    %42 = vector.multi_reduction <add>, %41, %cst_29 [0] : vector<8x1024xf32> to vector<1024xf32>
    %43 = vector.shape_cast %42 : vector<1024xf32> to vector<1x1024xf32>
    %c0_30 = arith.constant 0 : index
    %c0_31 = arith.constant 0 : index
    %44 = vector.load %arg7[%c0_30, %c0_31] : memref<1024x16xf32, #tpu.memory_space<vmem>>, vector<1024x16xf32>
    %cst_32 = arith.constant dense<0.000000e+00> : vector<1x16xf32>
    %45 = tpu.matmul %40, %44, %cst_32 {dimension_numbers = #tpu.dot_dimension_numbers<[1], [0], [0], [1], [0, 0, 1, 1], [], []>} : vector<1x1024xf32>, vector<1024x16xf32>, vector<1x16xf32> -> vector<1x16xf32>
    %c0_33 = arith.constant 0 : index
    %c0_34 = arith.constant 0 : index
    %46 = vector.load %arg7[%c0_33, %c0_34] : memref<1024x16xf32, #tpu.memory_space<vmem>>, vector<1024x16xf32>
    %cst_35 = arith.constant dense<0.000000e+00> : vector<1x16xf32>
    %47 = tpu.matmul %43, %46, %cst_35 {dimension_numbers = #tpu.dot_dimension_numbers<[1], [0], [0], [1], [0, 0, 1, 1], [], []>} : vector<1x1024xf32>, vector<1024x16xf32>, vector<1x16xf32> -> vector<1x16xf32>
    %cst_36 = arith.constant 0.001953125 : f32
    %48 = vector.broadcast %cst_36 : f32 to vector<1x16xf32>
    %49 = arith.mulf %45, %48 : vector<1x16xf32>
    %cst_37 = arith.constant 0.001953125 : f32
    %50 = vector.broadcast %cst_37 : f32 to vector<1x16xf32>
    %51 = arith.mulf %47, %50 : vector<1x16xf32>
    %52 = arith.mulf %49, %49 : vector<1x16xf32>
    %53 = arith.subf %51, %52 : vector<1x16xf32>
    %c0_38 = arith.constant 0 : index
    %c0_39 = arith.constant 0 : index
    %54 = vector.load %arg11[%c0_38, %c0_39] : memref<1x16xf32, #tpu.memory_space<vmem>>, vector<1x16xf32>
    %cst_40 = arith.constant 9.99999974E-6 : f32
    %55 = vector.broadcast %cst_40 : f32 to vector<1x16xf32>
    %56 = arith.addf %53, %55 : vector<1x16xf32>
    %57 = math.rsqrt %56 : vector<1x16xf32>
    %58 = arith.mulf %54, %57 : vector<1x16xf32>
    %c0_41 = arith.constant 0 : index
    %c0_42 = arith.constant 0 : index
    %59 = vector.load %arg12[%c0_41, %c0_42] : memref<1x16xf32, #tpu.memory_space<vmem>>, vector<1x16xf32>
    %60 = arith.mulf %49, %58 : vector<1x16xf32>
    %61 = arith.subf %59, %60 : vector<1x16xf32>
    %c0_43 = arith.constant 0 : index
    %c0_44 = arith.constant 0 : index
    %62 = vector.load %arg8[%c0_43, %c0_44] : memref<16x1024xf32, #tpu.memory_space<vmem>>, vector<16x1024xf32>
    %cst_45 = arith.constant dense<0.000000e+00> : vector<1x1024xf32>
    %63 = tpu.matmul %58, %62, %cst_45 {dimension_numbers = #tpu.dot_dimension_numbers<[1], [0], [0], [1], [0, 0, 1, 1], [], []>} : vector<1x16xf32>, vector<16x1024xf32>, vector<1x1024xf32> -> vector<1x1024xf32>
    %c0_46 = arith.constant 0 : index
    %c0_47 = arith.constant 0 : index
    %64 = vector.load %arg8[%c0_46, %c0_47] : memref<16x1024xf32, #tpu.memory_space<vmem>>, vector<16x1024xf32>
    %cst_48 = arith.constant dense<0.000000e+00> : vector<1x1024xf32>
    %65 = tpu.matmul %61, %64, %cst_48 {dimension_numbers = #tpu.dot_dimension_numbers<[1], [0], [0], [1], [0, 0, 1, 1], [], []>} : vector<1x16xf32>, vector<16x1024xf32>, vector<1x1024xf32> -> vector<1x1024xf32>
    %66 = vector.broadcast %63 : vector<1x1024xf32> to vector<8x1024xf32>
    %67 = arith.mulf %38, %66 : vector<8x1024xf32>
    %68 = vector.broadcast %65 : vector<1x1024xf32> to vector<8x1024xf32>
    %69 = arith.addf %67, %68 : vector<8x1024xf32>
    %cst_49 = arith.constant 0.000000e+00 : f32
    %70 = vector.broadcast %cst_49 : f32 to vector<8x1024xf32>
    %71 = arith.maximumf %69, %70 : vector<8x1024xf32>
    %72 = arith.truncf %71 : vector<8x1024xf32> to vector<8x1024xbf16>
    %c0_50 = arith.constant 0 : index
    %c0_51 = arith.constant 0 : index
    %73 = vector.load %arg3[%c0_50, %c0_51] : memref<1024x768xbf16, #tpu.memory_space<vmem>>, vector<1024x768xbf16>
    %cst_52 = arith.constant dense<0.000000e+00> : vector<8x768xf32>
    %74 = tpu.matmul %72, %73, %cst_52 {dimension_numbers = #tpu.dot_dimension_numbers<[1], [0], [0], [1], [0, 0, 1, 1], [], []>} : vector<8x1024xbf16>, vector<1024x768xbf16>, vector<8x768xf32> -> vector<8x768xf32>
    %75 = vector.extract_strided_slice %74 {offsets = [0, 0], sizes = [8, 128], strides = [1, 1]} : vector<8x768xf32> to vector<8x128xf32>
    %c0_53 = arith.constant 0 : index
    %c0_54 = arith.constant 0 : index
    %76 = vector.load %arg15[%c0_53, %c0_54] : memref<48x128xf32, #tpu.memory_space<vmem>>, vector<8x128xf32>
    tpu.vector_store %arg15[%c0_53, %c0_54], %75 {strides = array<i32>} : memref<48x128xf32, #tpu.memory_space<vmem>>, vector<8x128xf32>,
    %77 = vector.extract_strided_slice %74 {offsets = [0, 128], sizes = [8, 128], strides = [1, 1]} : vector<8x768xf32> to vector<8x128xf32>
    %c8 = arith.constant 8 : index
    %c0_55 = arith.constant 0 : index
    %78 = vector.load %arg15[%c8, %c0_55] : memref<48x128xf32, #tpu.memory_space<vmem>>, vector<8x128xf32>
    tpu.vector_store %arg15[%c8, %c0_55], %77 {strides = array<i32>} : memref<48x128xf32, #tpu.memory_space<vmem>>, vector<8x128xf32>,
    %79 = vector.extract_strided_slice %74 {offsets = [0, 256], sizes = [8, 128], strides = [1, 1]} : vector<8x768xf32> to vector<8x128xf32>
    %c16 = arith.constant 16 : index
    %c0_56 = arith.constant 0 : index
    %80 = vector.load %arg15[%c16, %c0_56] : memref<48x128xf32, #tpu.memory_space<vmem>>, vector<8x128xf32>
    tpu.vector_store %arg15[%c16, %c0_56], %79 {strides = array<i32>} : memref<48x128xf32, #tpu.memory_space<vmem>>, vector<8x128xf32>,
    %81 = vector.extract_strided_slice %74 {offsets = [0, 384], sizes = [8, 128], strides = [1, 1]} : vector<8x768xf32> to vector<8x128xf32>
    %c24 = arith.constant 24 : index
    %c0_57 = arith.constant 0 : index
    %82 = vector.load %arg15[%c24, %c0_57] : memref<48x128xf32, #tpu.memory_space<vmem>>, vector<8x128xf32>
    tpu.vector_store %arg15[%c24, %c0_57], %81 {strides = array<i32>} : memref<48x128xf32, #tpu.memory_space<vmem>>, vector<8x128xf32>,
    %83 = vector.extract_strided_slice %74 {offsets = [0, 512], sizes = [8, 128], strides = [1, 1]} : vector<8x768xf32> to vector<8x128xf32>
    %c32 = arith.constant 32 : index
    %c0_58 = arith.constant 0 : index
    %84 = vector.load %arg15[%c32, %c0_58] : memref<48x128xf32, #tpu.memory_space<vmem>>, vector<8x128xf32>
    tpu.vector_store %arg15[%c32, %c0_58], %83 {strides = array<i32>} : memref<48x128xf32, #tpu.memory_space<vmem>>, vector<8x128xf32>,
    %85 = vector.extract_strided_slice %74 {offsets = [0, 640], sizes = [8, 128], strides = [1, 1]} : vector<8x768xf32> to vector<8x128xf32>
    %c40 = arith.constant 40 : index
    %c0_59 = arith.constant 0 : index
    %86 = vector.load %arg15[%c40, %c0_59] : memref<48x128xf32, #tpu.memory_space<vmem>>, vector<8x128xf32>
    tpu.vector_store %arg15[%c40, %c0_59], %85 {strides = array<i32>} : memref<48x128xf32, #tpu.memory_space<vmem>>, vector<8x128xf32>,
    %c0_60 = arith.constant 0 : index
    %c0_61 = arith.constant 0 : index
    %87 = vector.load %arg4[%c0_60, %c0_61] : memref<36x48xf32, #tpu.memory_space<vmem>>, vector<36x48xf32>
    %c0_62 = arith.constant 0 : index
    %c0_63 = arith.constant 0 : index
    %88 = vector.load %arg15[%c0_62, %c0_63] : memref<48x128xf32, #tpu.memory_space<vmem>>, vector<48x128xf32>
    %cst_64 = arith.constant dense<0.000000e+00> : vector<36x128xf32>
    %89 = tpu.matmul %87, %88, %cst_64 {dimension_numbers = #tpu.dot_dimension_numbers<[1], [0], [0], [1], [0, 0, 1, 1], [], []>} : vector<36x48xf32>, vector<48x128xf32>, vector<36x128xf32> -> vector<36x128xf32>
    %c0_65 = arith.constant 0 : index
    %90 = memref.load %arg13[%c0_65] : memref<1xf32, #tpu.memory_space<smem>>
    %91 = vector.broadcast %90 : f32 to vector<36x128xf32>
    %92 = arith.addf %89, %91 : vector<36x128xf32>
    %cst_66 = arith.constant 0.000000e+00 : f32
    %93 = vector.broadcast %cst_66 : f32 to vector<36x128xf32>
    %94 = arith.subf %93, %92 : vector<36x128xf32>
    %95 = math.exp %94 : vector<36x128xf32>
    %cst_67 = arith.constant 1.000000e+00 : f32
    %96 = vector.broadcast %cst_67 : f32 to vector<36x128xf32>
    %97 = arith.addf %96, %95 : vector<36x128xf32>
    %98 = tpu.reciprocal %97 {approx = true} : vector<36x128xf32> -> vector<36x128xf32>
    %cst_68 = arith.constant 0.000000e+00 : f32
    %cst_69 = arith.constant 1.000000e+00 : f32
    %99 = vector.broadcast %cst_68 : f32 to vector<36x128xf32>
    %100 = arith.maximumf %99, %98 : vector<36x128xf32>
    %101 = vector.broadcast %cst_69 : f32 to vector<36x128xf32>
    %102 = arith.minimumf %101, %100 : vector<36x128xf32>
    %c0_70 = arith.constant 0 : index
    %c0_71 = arith.constant 0 : index
    %103 = vector.load %arg14[%c0_70, %c0_71] : memref<36x128xf32, #tpu.memory_space<vmem>>, vector<36x128xf32>
    tpu.vector_store %arg14[%c0_70, %c0_71], %102 {strides = array<i32>} : memref<36x128xf32, #tpu.memory_space<vmem>>, vector<36x128xf32>,
    return
  }
}

</mosaic_0001>

<llo_original>
// kernel: _impl.1
$region0: #{_impl.1}
  #allocation0 [shape = 'u32[]', space=smem, size = 0x4, offset = 0x4, fixed_abs, tag = 'smem constant byte address 0x4 - core index']
  #allocation1 [shape = 'u32[144,128]{1,0:T(1,128)}', space=vmem, size = 0x12000, scoped, tag = 'internal scratch']
  #allocation2 [shape = 'f32[48,128]{1,0:T(8,128)}', space=vmem, size = 0x6000, scoped, tag = 'scratch operand']
  #allocation3 [shape = 'f32[1]{0:T(128)S(6)}', space=smem, size = 0x200, scoped, tag = 'scoped memory for _impl.1']
  %s0 = inlined_call_operand.vmem [shape: bf16[8,256], index: 0, kind: input, shape index: {}]
  %s1 = inlined_call_operand.hbm [shape: bf16[256,512], index: 1, kind: input, shape index: {}]
  %s2 = inlined_call_operand.hbm [shape: bf16[512,1024], index: 2, kind: input, shape index: {}]
  %s3 = inlined_call_operand.hbm [shape: bf16[1024,768], index: 3, kind: input, shape index: {}]
  %s4 = inlined_call_operand.hbm [shape: f32[36,48], index: 4, kind: input, shape index: {}]
  %s5 = inlined_call_operand.vmem [shape: f32[512,32], index: 5, kind: input, shape index: {}]
  %s6 = inlined_call_operand.hbm [shape: f32[32,512], index: 6, kind: input, shape index: {}]
  %s7 = inlined_call_operand.vmem [shape: f32[1024,16], index: 7, kind: input, shape index: {}]
  %s8 = inlined_call_operand.hbm [shape: f32[16,1024], index: 8, kind: input, shape index: {}]
  %s9 = inlined_call_operand.hbm [shape: f32[1,32], index: 9, kind: input, shape index: {}]
  %s10 = inlined_call_operand.hbm [shape: f32[1,32], index: 10, kind: input, shape index: {}]
  %s11 = inlined_call_operand.hbm [shape: f32[1,16], index: 11, kind: input, shape index: {}]
  %s12 = inlined_call_operand.hbm [shape: f32[1,16], index: 12, kind: input, shape index: {}]
  %s13 = inlined_call_operand.<no memory space> [shape: f32[1], index: 13, kind: input, shape index: {}]
  %s14 = inlined_call_operand.vmem [shape: f32[36,128], index: 14, kind: output, shape index: {}]
  %s15 = sld [smem:[#allocation0]]
  $region106: #{_impl.1} parent=0
    _
  %s17 = ssub.s32 1, %s15
  %s18 = scalar_select 0, %s17, %s15
  %19 = sst [smem:[#allocation3]] %s13
  $region1: #{_impl.1} parent=0
    #allocation4 [shape = 'u8[262144]{0}', space=vmem, size = 0x40000, scoped, tag = 'input window, operand 1, single buffered']
    #allocation5 [shape = 's32[1]{0}', space=sflag, size = 0x4, scoped, tag = 'scoped memory for _impl.1']
    #allocation6 [shape = 'u8[1048576]{0}', space=vmem, size = 0x100000, scoped, tag = 'input window, operand 2, single buffered']
    #allocation7 [shape = 's32[1]{0}', space=sflag, size = 0x4, scoped, tag = 'scoped memory for _impl.1']
    #allocation8 [shape = 'u8[1572864]{0}', space=vmem, size = 0x180000, scoped, tag = 'input window, operand 3, single buffered']
    #allocation9 [shape = 'u8[20480]{0}', space=vmem, size = 0x5000, scoped, tag = 'input window, operand 4, single buffered']
    #allocation10 [shape = 's32[1]{0}', space=sflag, size = 0x4, scoped, tag = 'scoped memory for _impl.1']
    #allocation11 [shape = 'u8[65536]{0}', space=vmem, size = 0x10000, scoped, tag = 'input window, operand 6, single buffered']
    #allocation12 [shape = 'u8[65536]{0}', space=vmem, size = 0x10000, scoped, tag = 'input window, operand 8, single buffered']
    #allocation13 [shape = 's32[1]{0}', space=sflag, size = 0x4, scoped, tag = 'scoped memory for _impl.1']
    #allocation14 [shape = 'u8[512]{0}', space=vmem, size = 0x400, scoped, tag = 'input window, operand 9, single buffered']
    #allocation15 [shape = 'u8[512]{0}', space=vmem, size = 0x400, scoped, tag = 'input window, operand 10, single buffered']
    #allocation16 [shape = 's32[1]{0}', space=sflag, size = 0x4, scoped, tag = 'scoped memory for _impl.1']
    #allocation17 [shape = 'u8[512]{0}', space=vmem, size = 0x400, scoped, tag = 'input window, operand 11, single buffered']
    #allocation18 [shape = 'u8[512]{0}', space=vmem, size = 0x400, scoped, tag = 'input window, operand 12, single buffered']
    #allocation19 [shape = 's32[1]{0}', space=sflag, size = 0x4, scoped, tag = 'scoped memory for _impl.1']
    %20 = vsyncpa [#allocation5], 0
    %21 = vsyncpa [#allocation7], 0
    %22 = vsyncpa [#allocation10], 0
    %23 = vsyncpa [#allocation13], 0
    %24 = vsyncpa [#allocation16], 0
    %25 = vsyncpa [#allocation19], 0
    // Predicated region
    $region2: #{_impl.1} parent=1 // pred_check
      _
    $region3: #{_impl.1} parent=1 // pred_check_branch
      %27 = sbr.rel (0) target = $region5
    $region4: #{_impl.1} parent=1 // pred_region
      _
    $region5: #{_impl.1} parent=1 // pred_fallthru
      _
    // Predicated region
    $region6: #{_impl.1} parent=1 // pred_check
      _
    $region7: #{_impl.1} parent=1 // pred_check_branch
      %29 = sbr.rel (0) target = $region9
    $region8: #{_impl.1} parent=1 // pred_region
      %s31 = ssub.s32 8192, 8192
      %32 = vsyncadd [#allocation5], %s31
      %s33 = sshll.u32 [#allocation4], 4
      %s34 = int_to_ptr.vmem [resolvable:$true] %s33
      %39 = dma.hbm_to_vmem [thread:$0]  %s1, 8192, %s34, [#allocation5], 256, 256, 16
    $region9: #{_impl.1} parent=1 // pred_fallthru
      _
    // Predicated region
    $region10: #{_impl.1} parent=1 // pred_check
      _
    $region11: #{_impl.1} parent=1 // pred_check_branch
      %41 = sbr.rel (0) target = $region13
    $region12: #{_impl.1} parent=1 // pred_region
      %s43 = ssub.s32 32768, 32768
      %44 = vsyncadd [#allocation7], %s43
      %s45 = sshll.u32 [#allocation6], 4
      %s46 = int_to_ptr.vmem [resolvable:$true] %s45
      %51 = dma.hbm_to_vmem [thread:$0]  %s2, 32768, %s46, [#allocation7], 512, 512, 32
    $region13: #{_impl.1} parent=1 // pred_fallthru
      _
    // Predicated region
    $region14: #{_impl.1} parent=1 // pred_check
      _
    $region15: #{_impl.1} parent=1 // pred_check_branch
      %53 = sbr.rel (0) target = $region17
    $region16: #{_impl.1} parent=1 // pred_region
      %s55 = ssub.s32 49152, 49152
      %56 = vsyncadd [#allocation7], %s55
      %s57 = sshll.u32 [#allocation8], 4
      %s58 = int_to_ptr.vmem [resolvable:$true] %s57
      %63 = dma.hbm_to_vmem [thread:$0]  %s3, 49152, %s58, [#allocation7], 384, 384, 24
    $region17: #{_impl.1} parent=1 // pred_fallthru
      _
    // Predicated region
    $region18: #{_impl.1} parent=1 // pred_check
      _
    $region19: #{_impl.1} parent=1 // pred_check_branch
      %65 = sbr.rel (0) target = $region21
    $region20: #{_impl.1} parent=1 // pred_region
      %s67 = ssub.s32 640, 640
      %68 = vsyncadd [#allocation10], %s67
      %s69 = sshll.u32 [#allocation9], 4
      %s70 = int_to_ptr.vmem [resolvable:$true] %s69
      %75 = dma.hbm_to_vmem [thread:$0]  %s4, 640, %s70, [#allocation10], 128, 128, 8
    $region21: #{_impl.1} parent=1 // pred_fallthru
      _
    // Predicated region
    $region22: #{_impl.1} parent=1 // pred_check
      _
    $region23: #{_impl.1} parent=1 // pred_check_branch
      %77 = sbr.rel (0) target = $region25
    $region24: #{_impl.1} parent=1 // pred_region
      _
    $region25: #{_impl.1} parent=1 // pred_fallthru
      _
    // Predicated region
    $region26: #{_impl.1} parent=1 // pred_check
      _
    $region27: #{_impl.1} parent=1 // pred_check_branch
      %79 = sbr.rel (0) target = $region29
    $region28: #{_impl.1} parent=1 // pred_region
      %s81 = ssub.s32 2048, 2048
      %82 = vsyncadd [#allocation10], %s81
      %s83 = sshll.u32 [#allocation11], 4
      %s84 = int_to_ptr.vmem [resolvable:$true] %s83
      %89 = dma.hbm_to_vmem [thread:$0]  %s6, 2048, %s84, [#allocation10], 512, 512, 32
    $region29: #{_impl.1} parent=1 // pred_fallthru
      _
    // Predicated region
    $region30: #{_impl.1} parent=1 // pred_check
      _
    $region31: #{_impl.1} parent=1 // pred_check_branch
      %91 = sbr.rel (0) target = $region33
    $region32: #{_impl.1} parent=1 // pred_region
      _
    $region33: #{_impl.1} parent=1 // pred_fallthru
      _
    // Predicated region
    $region34: #{_impl.1} parent=1 // pred_check
      _
    $region35: #{_impl.1} parent=1 // pred_check_branch
      %93 = sbr.rel (0) target = $region37
    $region36: #{_impl.1} parent=1 // pred_region
      %s95 = ssub.s32 2048, 2048
      %96 = vsyncadd [#allocation13], %s95
      %s97 = sshll.u32 [#allocation12], 4
      %s98 = int_to_ptr.vmem [resolvable:$true] %s97
      %103 = dma.hbm_to_vmem [thread:$0]  %s8, 2048, %s98, [#allocation13], 1024, 1024, 64
    $region37: #{_impl.1} parent=1 // pred_fallthru
      _
    // Predicated region
    $region38: #{_impl.1} parent=1 // pred_check
      _
    $region39: #{_impl.1} parent=1 // pred_check_branch
      %105 = sbr.rel (0) target = $region41
    $region40: #{_impl.1} parent=1 // pred_region
      %s107 = ssub.s32 16, 16
      %108 = vsyncadd [#allocation13], %s107
      %s110 = sshll.u32 [#allocation14], 4
      %s111 = int_to_ptr.vmem [resolvable:$true] %s110
      %113 = dma.hbm_to_vmem [thread:$0]  %s9, 16, %s111, [#allocation13]
    $region41: #{_impl.1} parent=1 // pred_fallthru
      _
    // Predicated region
    $region42: #{_impl.1} parent=1 // pred_check
      _
    $region43: #{_impl.1} parent=1 // pred_check_branch
      %115 = sbr.rel (0) target = $region45
    $region44: #{_impl.1} parent=1 // pred_region
      %s117 = ssub.s32 16, 16
      %118 = vsyncadd [#allocation16], %s117
      %s120 = sshll.u32 [#allocation15], 4
      %s121 = int_to_ptr.vmem [resolvable:$true] %s120
      %123 = dma.hbm_to_vmem [thread:$0]  %s10, 16, %s121, [#allocation16]
    $region45: #{_impl.1} parent=1 // pred_fallthru
      _
    // Predicated region
    $region46: #{_impl.1} parent=1 // pred_check
      _
    $region47: #{_impl.1} parent=1 // pred_check_branch
      %125 = sbr.rel (0) target = $region49
    $region48: #{_impl.1} parent=1 // pred_region
      %s127 = ssub.s32 16, 16
      %128 = vsyncadd [#allocation16], %s127
      %s130 = sshll.u32 [#allocation17], 4
      %s131 = int_to_ptr.vmem [resolvable:$true] %s130
      %133 = dma.hbm_to_vmem [thread:$0]  %s11, 16, %s131, [#allocation16]
    $region49: #{_impl.1} parent=1 // pred_fallthru
      _
    // Predicated region
    $region50: #{_impl.1} parent=1 // pred_check
      _
    $region51: #{_impl.1} parent=1 // pred_check_branch
      %135 = sbr.rel (0) target = $region53
    $region52: #{_impl.1} parent=1 // pred_region
      %s137 = ssub.s32 16, 16
      %138 = vsyncadd [#allocation19], %s137
      %s140 = sshll.u32 [#allocation18], 4
      %s141 = int_to_ptr.vmem [resolvable:$true] %s140
      %143 = dma.hbm_to_vmem [thread:$0]  %s12, 16, %s141, [#allocation19]
    $region53: #{_impl.1} parent=1 // pred_fallthru
      _
    // Predicated region
    $region54: #{_impl.1} parent=1 // pred_check
      _
    $region55: #{_impl.1} parent=1 // pred_check_branch
      %145 = sbr.rel (0) target = $region57
    $region56: #{_impl.1} parent=1 // pred_region
      _
    $region57: #{_impl.1} parent=1 // pred_fallthru
      _
    // Predicated region
    $region58: #{_impl.1} parent=1 // pred_check
      _
    $region59: #{_impl.1} parent=1 // pred_check_branch
      %147 = sbr.rel (0) target = $region61
    $region60: #{_impl.1} parent=1 // pred_region
      %148 = dma.done [#allocation5], 8192
    $region61: #{_impl.1} parent=1 // pred_fallthru
      _
    // Predicated region
    $region62: #{_impl.1} parent=1 // pred_check
      _
    $region63: #{_impl.1} parent=1 // pred_check_branch
      %150 = sbr.rel (0) target = $region65
    $region64: #{_impl.1} parent=1 // pred_region
      %151 = dma.done [#allocation7], 32768
    $region65: #{_impl.1} parent=1 // pred_fallthru
      _
    // Predicated region
    $region66: #{_impl.1} parent=1 // pred_check
      _
    $region67: #{_impl.1} parent=1 // pred_check_branch
      %153 = sbr.rel (0) target = $region69
    $region68: #{_impl.1} parent=1 // pred_region
      %154 = dma.done [#allocation7], 49152
    $region69: #{_impl.1} parent=1 // pred_fallthru
      _
    // Predicated region
    $region70: #{_impl.1} parent=1 // pred_check
      _
    $region71: #{_impl.1} parent=1 // pred_check_branch
      %156 = sbr.rel (0) target = $region73
    $region72: #{_impl.1} parent=1 // pred_region
      %157 = dma.done [#allocation10], 640
    $region73: #{_impl.1} parent=1 // pred_fallthru
      _
    // Predicated region
    $region74: #{_impl.1} parent=1 // pred_check
      _
    $region75: #{_impl.1} parent=1 // pred_check_branch
      %159 = sbr.rel (0) target = $region77
    $region76: #{_impl.1} parent=1 // pred_region
      %160 = dma.done [#allocation10], 2048
    $region77: #{_impl.1} parent=1 // pred_fallthru
      _
    // Predicated region
    $region78: #{_impl.1} parent=1 // pred_check
      _
    $region79: #{_impl.1} parent=1 // pred_check_branch
      %162 = sbr.rel (0) target = $region81
    $region80: #{_impl.1} parent=1 // pred_region
      %163 = dma.done [#allocation13], 2048
    $region81: #{_impl.1} parent=1 // pred_fallthru
      _
    // Predicated region
    $region82: #{_impl.1} parent=1 // pred_check
      _
    $region83: #{_impl.1} parent=1 // pred_check_branch
      %165 = sbr.rel (0) target = $region85
    $region84: #{_impl.1} parent=1 // pred_region
      %166 = dma.done [#allocation13], 16
    $region85: #{_impl.1} parent=1 // pred_fallthru
      _
    // Predicated region
    $region86: #{_impl.1} parent=1 // pred_check
      _
    $region87: #{_impl.1} parent=1 // pred_check_branch
      %168 = sbr.rel (0) target = $region89
    $region88: #{_impl.1} parent=1 // pred_region
      %169 = dma.done [#allocation16], 16
    $region89: #{_impl.1} parent=1 // pred_fallthru
      _
    // Predicated region
    $region90: #{_impl.1} parent=1 // pred_check
      _
    $region91: #{_impl.1} parent=1 // pred_check_branch
      %171 = sbr.rel (0) target = $region93
    $region92: #{_impl.1} parent=1 // pred_region
      %172 = dma.done [#allocation16], 16
    $region93: #{_impl.1} parent=1 // pred_fallthru
      _
    // Predicated region
    $region94: #{_impl.1} parent=1 // pred_check
      _
    $region95: #{_impl.1} parent=1 // pred_check_branch
      %174 = sbr.rel (0) target = $region97
    $region96: #{_impl.1} parent=1 // pred_region
      %175 = dma.done [#allocation19], 16
    $region97: #{_impl.1} parent=1 // pred_fallthru
      _
    %v176 = vld [vmem:[%s0] sm:$0xff]
    %v177 = vld [vmem:[#allocation4] sm:$0xff]
    %v178 = vld [vmem:[#allocation4 + $0x8] sm:$0xff]
    %v179 = vld [vmem:[#allocation4 + $0x10] sm:$0xff]
    %v180 = vld [vmem:[#allocation4 + $0x18] sm:$0xff]
    %v181 = vld [vmem:[#allocation4 + $0x20] sm:$0xff]
    %v182 = vld [vmem:[#allocation4 + $0x28] sm:$0xff]
    %v183 = vld [vmem:[#allocation4 + $0x30] sm:$0xff]
    %v184 = vld [vmem:[#allocation4 + $0x38] sm:$0xff]
    %v185 = vld [vmem:[#allocation4 + $0x40] sm:$0xff]
    %v186 = vld [vmem:[#allocation4 + $0x48] sm:$0xff]
    %v187 = vld [vmem:[#allocation4 + $0x50] sm:$0xff]
    %v188 = vld [vmem:[#allocation4 + $0x58] sm:$0xff]
    %v189 = vld [vmem:[#allocation4 + $0x60] sm:$0xff]
    %v190 = vld [vmem:[#allocation4 + $0x68] sm:$0xff]
    %v191 = vld [vmem:[#allocation4 + $0x70] sm:$0xff]
    %v192 = vld [vmem:[#allocation4 + $0x78] sm:$0xff]
    %v193 = vld [vmem:[#allocation4 + $0x80] sm:$0xff]
    %v194 = vld [vmem:[#allocation4 + $0x88] sm:$0xff]
    %v195 = vld [vmem:[#allocation4 + $0x90] sm:$0xff]
    %v196 = vld [vmem:[#allocation4 + $0x98] sm:$0xff]
    %v197 = vld [vmem:[#allocation4 + $0xa0] sm:$0xff]
    %v198 = vld [vmem:[#allocation4 + $0xa8] sm:$0xff]
    %v199 = vld [vmem:[#allocation4 + $0xb0] sm:$0xff]
    %v200 = vld [vmem:[#allocation4 + $0xb8] sm:$0xff]
    %v201 = vld [vmem:[#allocation4 + $0xc0] sm:$0xff]
    %v202 = vld [vmem:[#allocation4 + $0xc8] sm:$0xff]
    %v203 = vld [vmem:[#allocation4 + $0xd0] sm:$0xff]
    %v204 = vld [vmem:[#allocation4 + $0xd8] sm:$0xff]
    %v205 = vld [vmem:[#allocation4 + $0xe0] sm:$0xff]
    %v206 = vld [vmem:[#allocation4 + $0xe8] sm:$0xff]
    %v207 = vld [vmem:[#allocation4 + $0xf0] sm:$0xff]
    %v208 = vld [vmem:[#allocation4 + $0xf8] sm:$0xff]
    %v209 = vld [vmem:[#allocation4 + $0x100] sm:$0xff]
    %v210 = vld [vmem:[#allocation4 + $0x108] sm:$0xff]
    %v211 = vld [vmem:[#allocation4 + $0x110] sm:$0xff]
    %v212 = vld [vmem:[#allocation4 + $0x118] sm:$0xff]
    %v213 = vld [vmem:[#allocation4 + $0x120] sm:$0xff]
    %v214 = vld [vmem:[#allocation4 + $0x128] sm:$0xff]
    %v215 = vld [vmem:[#allocation4 + $0x130] sm:$0xff]
    %v216 = vld [vmem:[#allocation4 + $0x138] sm:$0xff]
    %v217 = vld [vmem:[#allocation4 + $0x140] sm:$0xff]
    %v218 = vld [vmem:[#allocation4 + $0x148] sm:$0xff]
    %v219 = vld [vmem:[#allocation4 + $0x150] sm:$0xff]
    %v220 = vld [vmem:[#allocation4 + $0x158] sm:$0xff]
    %v221 = vld [vmem:[#allocation4 + $0x160] sm:$0xff]
    %v222 = vld [vmem:[#allocation4 + $0x168] sm:$0xff]
    %v223 = vld [vmem:[#allocation4 + $0x170] sm:$0xff]
    %v224 = vld [vmem:[#allocation4 + $0x178] sm:$0xff]
    %v225 = vld [vmem:[#allocation4 + $0x180] sm:$0xff]
    %v226 = vld [vmem:[#allocation4 + $0x188] sm:$0xff]
    %v227 = vld [vmem:[#allocation4 + $0x190] sm:$0xff]
    %v228 = vld [vmem:[#allocation4 + $0x198] sm:$0xff]
    %v229 = vld [vmem:[#allocation4 + $0x1a0] sm:$0xff]
    %v230 = vld [vmem:[#allocation4 + $0x1a8] sm:$0xff]
    %v231 = vld [vmem:[#allocation4 + $0x1b0] sm:$0xff]
    %v232 = vld [vmem:[#allocation4 + $0x1b8] sm:$0xff]
    %v233 = vld [vmem:[#allocation4 + $0x1c0] sm:$0xff]
    %v234 = vld [vmem:[#allocation4 + $0x1c8] sm:$0xff]
    %v235 = vld [vmem:[#allocation4 + $0x1d0] sm:$0xff]
    %v236 = vld [vmem:[#allocation4 + $0x1d8] sm:$0xff]
    %v237 = vld [vmem:[#allocation4 + $0x1e0] sm:$0xff]
    %v238 = vld [vmem:[#allocation4 + $0x1e8] sm:$0xff]
    %v239 = vld [vmem:[#allocation4 + $0x1f0] sm:$0xff]
    %v240 = vld [vmem:[#allocation4 + $0x1f8] sm:$0xff]
    %v242 = vunpack.c.l.b16 %v176
    %v243 = vunpack.c.h.b16 %v176
    %v244 = vpack.c.b16 %v242, %v242
    %v245 = vpack.c.b16 %v243, %v243
    %v312 = vunpack.c.l.b16 %v177
    %v313 = vunpack.c.h.b16 %v177
    %v314 = vunpack.c.l.b16 %v178
    %v315 = vunpack.c.h.b16 %v178
    %v316 = vunpack.c.l.b16 %v179
    %v317 = vunpack.c.h.b16 %v179
    %v318 = vunpack.c.l.b16 %v180
    %v319 = vunpack.c.h.b16 %v180
    %v320 = vunpack.c.l.b16 %v181
    %v321 = vunpack.c.h.b16 %v181
    %v322 = vunpack.c.l.b16 %v182
    %v323 = vunpack.c.h.b16 %v182
    %v324 = vunpack.c.l.b16 %v183
    %v325 = vunpack.c.h.b16 %v183
    %v326 = vunpack.c.l.b16 %v184
    %v327 = vunpack.c.h.b16 %v184
    %v328 = vunpack.c.l.b16 %v185
    %v329 = vunpack.c.h.b16 %v185
    %v330 = vunpack.c.l.b16 %v186
    %v331 = vunpack.c.h.b16 %v186
    %v332 = vunpack.c.l.b16 %v187
    %v333 = vunpack.c.h.b16 %v187
    %v334 = vunpack.c.l.b16 %v188
    %v335 = vunpack.c.h.b16 %v188
    %v336 = vunpack.c.l.b16 %v189
    %v337 = vunpack.c.h.b16 %v189
    %v338 = vunpack.c.l.b16 %v190
    %v339 = vunpack.c.h.b16 %v190
    %v340 = vunpack.c.l.b16 %v191
    %v341 = vunpack.c.h.b16 %v191
    %v342 = vunpack.c.l.b16 %v192
    %v343 = vunpack.c.h.b16 %v192
    %v344 = vunpack.c.l.b16 %v193
    %v345 = vunpack.c.h.b16 %v193
    %v346 = vunpack.c.l.b16 %v194
    %v347 = vunpack.c.h.b16 %v194
    %v348 = vunpack.c.l.b16 %v195
    %v349 = vunpack.c.h.b16 %v195
    %v350 = vunpack.c.l.b16 %v196
    %v351 = vunpack.c.h.b16 %v196
    %v352 = vunpack.c.l.b16 %v197
    %v353 = vunpack.c.h.b16 %v197
    %v354 = vunpack.c.l.b16 %v198
    %v355 = vunpack.c.h.b16 %v198
    %v356 = vunpack.c.l.b16 %v199
    %v357 = vunpack.c.h.b16 %v199
    %v358 = vunpack.c.l.b16 %v200
    %v359 = vunpack.c.h.b16 %v200
    %v360 = vunpack.c.l.b16 %v201
    %v361 = vunpack.c.h.b16 %v201
    %v362 = vunpack.c.l.b16 %v202
    %v363 = vunpack.c.h.b16 %v202
    %v364 = vunpack.c.l.b16 %v203
    %v365 = vunpack.c.h.b16 %v203
    %v366 = vunpack.c.l.b16 %v204
    %v367 = vunpack.c.h.b16 %v204
    %v368 = vunpack.c.l.b16 %v205
    %v369 = vunpack.c.h.b16 %v205
    %v370 = vunpack.c.l.b16 %v206
    %v371 = vunpack.c.h.b16 %v206
    %v372 = vunpack.c.l.b16 %v207
    %v373 = vunpack.c.h.b16 %v207
    %v374 = vunpack.c.l.b16 %v208
    %v375 = vunpack.c.h.b16 %v208
    %v376 = vunpack.c.l.b16 %v209
    %v377 = vunpack.c.h.b16 %v209
    %v378 = vunpack.c.l.b16 %v210
    %v379 = vunpack.c.h.b16 %v210
    %v380 = vunpack.c.l.b16 %v211
    %v381 = vunpack.c.h.b16 %v211
    %v382 = vunpack.c.l.b16 %v212
    %v383 = vunpack.c.h.b16 %v212
    %v384 = vunpack.c.l.b16 %v213
    %v385 = vunpack.c.h.b16 %v213
    %v386 = vunpack.c.l.b16 %v214
    %v387 = vunpack.c.h.b16 %v214
    %v388 = vunpack.c.l.b16 %v215
    %v389 = vunpack.c.h.b16 %v215
    %v390 = vunpack.c.l.b16 %v216
    %v391 = vunpack.c.h.b16 %v216
    %v392 = vunpack.c.l.b16 %v217
    %v393 = vunpack.c.h.b16 %v217
    %v394 = vunpack.c.l.b16 %v218
    %v395 = vunpack.c.h.b16 %v218
    %v396 = vunpack.c.l.b16 %v219
    %v397 = vunpack.c.h.b16 %v219
    %v398 = vunpack.c.l.b16 %v220
    %v399 = vunpack.c.h.b16 %v220
    %v400 = vunpack.c.l.b16 %v221
    %v401 = vunpack.c.h.b16 %v221
    %v402 = vunpack.c.l.b16 %v222
    %v403 = vunpack.c.h.b16 %v222
    %v404 = vunpack.c.l.b16 %v223
    %v405 = vunpack.c.h.b16 %v223
    %v406 = vunpack.c.l.b16 %v224
    %v407 = vunpack.c.h.b16 %v224
    %v408 = vunpack.c.l.b16 %v225
    %v409 = vunpack.c.h.b16 %v225
    %v410 = vunpack.c.l.b16 %v226
    %v411 = vunpack.c.h.b16 %v226
    %v412 = vunpack.c.l.b16 %v227
    %v413 = vunpack.c.h.b16 %v227
    %v414 = vunpack.c.l.b16 %v228
    %v415 = vunpack.c.h.b16 %v228
    %v416 = vunpack.c.l.b16 %v229
    %v417 = vunpack.c.h.b16 %v229
    %v418 = vunpack.c.l.b16 %v230
    %v419 = vunpack.c.h.b16 %v230
    %v420 = vunpack.c.l.b16 %v231
    %v421 = vunpack.c.h.b16 %v231
    %v422 = vunpack.c.l.b16 %v232
    %v423 = vunpack.c.h.b16 %v232
    %v424 = vunpack.c.l.b16 %v233
    %v425 = vunpack.c.h.b16 %v233
    %v426 = vunpack.c.l.b16 %v234
    %v427 = vunpack.c.h.b16 %v234
    %v428 = vunpack.c.l.b16 %v235
    %v429 = vunpack.c.h.b16 %v235
    %v430 = vunpack.c.l.b16 %v236
    %v431 = vunpack.c.h.b16 %v236
    %v432 = vunpack.c.l.b16 %v237
    %v433 = vunpack.c.h.b16 %v237
    %v434 = vunpack.c.l.b16 %v238
    %v435 = vunpack.c.h.b16 %v238
    %v436 = vunpack.c.l.b16 %v239
    %v437 = vunpack.c.h.b16 %v239
    %v438 = vunpack.c.l.b16 %v240
    %v439 = vunpack.c.h.b16 %v240
    %v440 = vpack.c.b16 %v316, %v312
    %v441 = vpack.c.b16 %v317, %v313
    %v442 = vpack.c.b16 %v318, %v314
    %v443 = vpack.c.b16 %v319, %v315
    %v444 = vpack.c.b16 %v324, %v320
    %v445 = vpack.c.b16 %v325, %v321
    %v446 = vpack.c.b16 %v326, %v322
    %v447 = vpack.c.b16 %v327, %v323
    %v448 = vpack.c.b16 %v332, %v328
    %v449 = vpack.c.b16 %v333, %v329
    %v450 = vpack.c.b16 %v334, %v330
    %v451 = vpack.c.b16 %v335, %v331
    %v452 = vpack.c.b16 %v340, %v336
    %v453 = vpack.c.b16 %v341, %v337
    %v454 = vpack.c.b16 %v342, %v338
    %v455 = vpack.c.b16 %v343, %v339
    %v456 = vpack.c.b16 %v348, %v344
    %v457 = vpack.c.b16 %v349, %v345
    %v458 = vpack.c.b16 %v350, %v346
    %v459 = vpack.c.b16 %v351, %v347
    %v460 = vpack.c.b16 %v356, %v352
    %v461 = vpack.c.b16 %v357, %v353
    %v462 = vpack.c.b16 %v358, %v354
    %v463 = vpack.c.b16 %v359, %v355
    %v464 = vpack.c.b16 %v364, %v360
    %v465 = vpack.c.b16 %v365, %v361
    %v466 = vpack.c.b16 %v366, %v362
    %v467 = vpack.c.b16 %v367, %v363
    %v468 = vpack.c.b16 %v372, %v368
    %v469 = vpack.c.b16 %v373, %v369
    %v470 = vpack.c.b16 %v374, %v370
    %v471 = vpack.c.b16 %v375, %v371
    %v472 = vpack.c.b16 %v380, %v376
    %v473 = vpack.c.b16 %v381, %v377
    %v474 = vpack.c.b16 %v382, %v378
    %v475 = vpack.c.b16 %v383, %v379
    %v476 = vpack.c.b16 %v388, %v384
    %v477 = vpack.c.b16 %v389, %v385
    %v478 = vpack.c.b16 %v390, %v386
    %v479 = vpack.c.b16 %v391, %v387
    %v480 = vpack.c.b16 %v396, %v392
    %v481 = vpack.c.b16 %v397, %v393
    %v482 = vpack.c.b16 %v398, %v394
    %v483 = vpack.c.b16 %v399, %v395
    %v484 = vpack.c.b16 %v404, %v400
    %v485 = vpack.c.b16 %v405, %v401
    %v486 = vpack.c.b16 %v406, %v402
    %v487 = vpack.c.b16 %v407, %v403
    %v488 = vpack.c.b16 %v412, %v408
    %v489 = vpack.c.b16 %v413, %v409
    %v490 = vpack.c.b16 %v414, %v410
    %v491 = vpack.c.b16 %v415, %v411
    %v492 = vpack.c.b16 %v420, %v416
    %v493 = vpack.c.b16 %v421, %v417
    %v494 = vpack.c.b16 %v422, %v418
    %v495 = vpack.c.b16 %v423, %v419
    %v496 = vpack.c.b16 %v428, %v424
    %v497 = vpack.c.b16 %v429, %v425
    %v498 = vpack.c.b16 %v430, %v426
    %v499 = vpack.c.b16 %v431, %v427
    %v500 = vpack.c.b16 %v436, %v432
    %v501 = vpack.c.b16 %v437, %v433
    %v502 = vpack.c.b16 %v438, %v434
    %v503 = vpack.c.b16 %v439, %v435
    %568 = vmatprep.subr.bf16.mxu0 %v441
    %569 = vmatpush1.bf16.msra.mxu0 %v440
    %570 = vmatprep.subr.bf16.mxu0 %v445
    %571 = vmatpush1.bf16.msra.mxu0 %v444
    %572 = vmatprep.subr.bf16.mxu0 %v449
    %573 = vmatpush1.bf16.msra.mxu0 %v448
    %574 = vmatprep.subr.bf16.mxu0 %v453
    %575 = vmatpush1.bf16.msra.mxu0 %v452
    %576 = vmatprep.subr.bf16.mxu0 %v457
    %577 = vmatpush1.bf16.msra.mxu0 %v456
    %578 = vmatprep.subr.bf16.mxu0 %v461
    %579 = vmatpush1.bf16.msra.mxu0 %v460
    %580 = vmatprep.subr.bf16.mxu0 %v465
    %581 = vmatpush1.bf16.msra.mxu0 %v464
    %582 = vmatprep.subr.bf16.mxu0 %v469
    %583 = vmatpush1.bf16.msra.mxu0 %v468
    %584 = vmatprep.subr.bf16.mxu0 %v473
    %585 = vmatpush1.bf16.msra.mxu0 %v472
    %586 = vmatprep.subr.bf16.mxu0 %v477
    %587 = vmatpush1.bf16.msra.mxu0 %v476
    %588 = vmatprep.subr.bf16.mxu0 %v481
    %589 = vmatpush1.bf16.msra.mxu0 %v480
    %590 = vmatprep.subr.bf16.mxu0 %v485
    %591 = vmatpush1.bf16.msra.mxu0 %v484
    %592 = vmatprep.subr.bf16.mxu0 %v489
    %593 = vmatpush1.bf16.msra.mxu0 %v488
    %594 = vmatprep.subr.bf16.mxu0 %v493
    %595 = vmatpush1.bf16.msra.mxu0 %v492
    %596 = vmatprep.subr.bf16.mxu0 %v497
    %597 = vmatpush1.bf16.msra.mxu0 %v496
    %598 = vmatprep.subr.bf16.mxu0 %v501
    %599 = vmatpush1.bf16.msra.mxu0 %v500
    %600 = vmatprep.mubr.bf16.mxu0 %v245
    %601 = vmatmul.mubr.bf16.gmra.mrb[0].mxu0 %v244
    %v602 = vpop.f32.mrb[0].mxu0
    %v603 = vadd.f32 0.0, %v602
    %v604 = vpop.f32.mrb[0].mxu0
    %v605 = vadd.f32 0.0, %v604
    %v606 = vpop.f32.mrb[0].mxu0
    %v607 = vpop.f32.mrb[0].mxu0
    %608 = vdwg.mxu0
    %609 = vmatprep.subr.bf16.mxu0 %v443
    %610 = vmatpush1.bf16.msra.mxu0 %v442
    %611 = vmatprep.subr.bf16.mxu0 %v447
    %612 = vmatpush1.bf16.msra.mxu0 %v446
    %613 = vmatprep.subr.bf16.mxu0 %v451
    %614 = vmatpush1.bf16.msra.mxu0 %v450
    %615 = vmatprep.subr.bf16.mxu0 %v455
    %616 = vmatpush1.bf16.msra.mxu0 %v454
    %617 = vmatprep.subr.bf16.mxu0 %v459
    %618 = vmatpush1.bf16.msra.mxu0 %v458
    %619 = vmatprep.subr.bf16.mxu0 %v463
    %620 = vmatpush1.bf16.msra.mxu0 %v462
    %621 = vmatprep.subr.bf16.mxu0 %v467
    %622 = vmatpush1.bf16.msra.mxu0 %v466
    %623 = vmatprep.subr.bf16.mxu0 %v471
    %624 = vmatpush1.bf16.msra.mxu0 %v470
    %625 = vmatprep.subr.bf16.mxu0 %v475
    %626 = vmatpush1.bf16.msra.mxu0 %v474
    %627 = vmatprep.subr.bf16.mxu0 %v479
    %628 = vmatpush1.bf16.msra.mxu0 %v478
    %629 = vmatprep.subr.bf16.mxu0 %v483
    %630 = vmatpush1.bf16.msra.mxu0 %v482
    %631 = vmatprep.subr.bf16.mxu0 %v487
    %632 = vmatpush1.bf16.msra.mxu0 %v486
    %633 = vmatprep.subr.bf16.mxu0 %v491
    %634 = vmatpush1.bf16.msra.mxu0 %v490
    %635 = vmatprep.subr.bf16.mxu0 %v495
    %636 = vmatpush1.bf16.msra.mxu0 %v494
    %637 = vmatprep.subr.bf16.mxu0 %v499
    %638 = vmatpush1.bf16.msra.mxu0 %v498
    %639 = vmatprep.subr.bf16.mxu0 %v503
    %640 = vmatpush1.bf16.msra.mxu0 %v502
    %641 = vmatprep.mubr.bf16.mxu0 %v245
    %642 = vmatmul.mubr.bf16.gmra.mrb[0].mxu0 %v244
    %v643 = vpop.f32.mrb[0].mxu0
    %v644 = vadd.f32 0.0, %v643
    %v645 = vpop.f32.mrb[0].mxu0
    %v646 = vadd.f32 0.0, %v645
    %v647 = vpop.f32.mrb[0].mxu0
    %v648 = vpop.f32.mrb[0].mxu0
    %649 = vdwg.mxu0
    %v650 = vrot.slane %v603, 4
    %v651 = vadd.f32 %v603, %v650
    %v652 = vrot.slane %v651, 2
    %v653 = vadd.f32 %v651, %v652
    %v654 = vrot.slane %v653, 1
    %v655 = vadd.f32 %v653, %v654
    %v656 = vrot.slane %v605, 4
    %v657 = vadd.f32 %v605, %v656
    %v658 = vrot.slane %v657, 2
    %v659 = vadd.f32 %v657, %v658
    %v660 = vrot.slane %v659, 1
    %v661 = vadd.f32 %v659, %v660
    %v662 = vrot.slane %v644, 4
    %v663 = vadd.f32 %v644, %v662
    %v664 = vrot.slane %v663, 2
    %v665 = vadd.f32 %v663, %v664
    %v666 = vrot.slane %v665, 1
    %v667 = vadd.f32 %v665, %v666
    %v668 = vrot.slane %v646, 4
    %v669 = vadd.f32 %v646, %v668
    %v670 = vrot.slane %v669, 2
    %v671 = vadd.f32 %v669, %v670
    %v672 = vrot.slane %v671, 1
    %v673 = vadd.f32 %v671, %v672
    %v674 = vmul.f32 %v603, %v603
    %v675 = vmul.f32 %v605, %v605
    %v676 = vmul.f32 %v644, %v644
    %v677 = vmul.f32 %v646, %v646
    %v678 = vrot.slane %v674, 4
    %v679 = vadd.f32 %v674, %v678
    %v680 = vrot.slane %v679, 2
    %v681 = vadd.f32 %v679, %v680
    %v682 = vrot.slane %v681, 1
    %v683 = vadd.f32 %v681, %v682
    %v684 = vrot.slane %v675, 4
    %v685 = vadd.f32 %v675, %v684
    %v686 = vrot.slane %v685, 2
    %v687 = vadd.f32 %v685, %v686
    %v688 = vrot.slane %v687, 1
    %v689 = vadd.f32 %v687, %v688
    %v690 = vrot.slane %v676, 4
    %v691 = vadd.f32 %v676, %v690
    %v692 = vrot.slane %v691, 2
    %v693 = vadd.f32 %v691, %v692
    %v694 = vrot.slane %v693, 1
    %v695 = vadd.f32 %v693, %v694
    %v696 = vrot.slane %v677, 4
    %v697 = vadd.f32 %v677, %v696
    %v698 = vrot.slane %v697, 2
    %v699 = vadd.f32 %v697, %v698
    %v700 = vrot.slane %v699, 1
    %v701 = vadd.f32 %v699, %v700
    %v702 = vld [vmem:[%s5] sm:$0xff]
    %v703 = vld [vmem:[%s5 + $0x8] sm:$0xff]
    %v704 = vld [vmem:[%s5 + $0x10] sm:$0xff]
    %v705 = vld [vmem:[%s5 + $0x18] sm:$0xff]
    %v706 = vld [vmem:[%s5 + $0x20] sm:$0xff]
    %v707 = vld [vmem:[%s5 + $0x28] sm:$0xff]
    %v708 = vld [vmem:[%s5 + $0x30] sm:$0xff]
    %v709 = vld [vmem:[%s5 + $0x38] sm:$0xff]
    %v710 = vld [vmem:[%s5 + $0x40] sm:$0xff]
    %v711 = vld [vmem:[%s5 + $0x48] sm:$0xff]
    %v712 = vld [vmem:[%s5 + $0x50] sm:$0xff]
    %v713 = vld [vmem:[%s5 + $0x58] sm:$0xff]
    %v714 = vld [vmem:[%s5 + $0x60] sm:$0xff]
    %v715 = vld [vmem:[%s5 + $0x68] sm:$0xff]
    %v716 = vld [vmem:[%s5 + $0x70] sm:$0xff]
    %v717 = vld [vmem:[%s5 + $0x78] sm:$0xff]
    %v718 = vld [vmem:[%s5 + $0x80] sm:$0xff]
    %v719 = vld [vmem:[%s5 + $0x88] sm:$0xff]
    %v720 = vld [vmem:[%s5 + $0x90] sm:$0xff]
    %v721 = vld [vmem:[%s5 + $0x98] sm:$0xff]
    %v722 = vld [vmem:[%s5 + $0xa0] sm:$0xff]
    %v723 = vld [vmem:[%s5 + $0xa8] sm:$0xff]
    %v724 = vld [vmem:[%s5 + $0xb0] sm:$0xff]
    %v725 = vld [vmem:[%s5 + $0xb8] sm:$0xff]
    %v726 = vld [vmem:[%s5 + $0xc0] sm:$0xff]
    %v727 = vld [vmem:[%s5 + $0xc8] sm:$0xff]
    %v728 = vld [vmem:[%s5 + $0xd0] sm:$0xff]
    %v729 = vld [vmem:[%s5 + $0xd8] sm:$0xff]
    %v730 = vld [vmem:[%s5 + $0xe0] sm:$0xff]
    %v731 = vld [vmem:[%s5 + $0xe8] sm:$0xff]
    %v732 = vld [vmem:[%s5 + $0xf0] sm:$0xff]
    %v733 = vld [vmem:[%s5 + $0xf8] sm:$0xff]
    %v734 = vld [vmem:[%s5 + $0x100] sm:$0xff]
    %v735 = vld [vmem:[%s5 + $0x108] sm:$0xff]
    %v736 = vld [vmem:[%s5 + $0x110] sm:$0xff]
    %v737 = vld [vmem:[%s5 + $0x118] sm:$0xff]
    %v738 = vld [vmem:[%s5 + $0x120] sm:$0xff]
    %v739 = vld [vmem:[%s5 + $0x128] sm:$0xff]
    %v740 = vld [vmem:[%s5 + $0x130] sm:$0xff]
    %v741 = vld [vmem:[%s5 + $0x138] sm:$0xff]
    %v742 = vld [vmem:[%s5 + $0x140] sm:$0xff]
    %v743 = vld [vmem:[%s5 + $0x148] sm:$0xff]
    %v744 = vld [vmem:[%s5 + $0x150] sm:$0xff]
    %v745 = vld [vmem:[%s5 + $0x158] sm:$0xff]
    %v746 = vld [vmem:[%s5 + $0x160] sm:$0xff]
    %v747 = vld [vmem:[%s5 + $0x168] sm:$0xff]
    %v748 = vld [vmem:[%s5 + $0x170] sm:$0xff]
    %v749 = vld [vmem:[%s5 + $0x178] sm:$0xff]
    %v750 = vld [vmem:[%s5 + $0x180] sm:$0xff]
    %v751 = vld [vmem:[%s5 + $0x188] sm:$0xff]
    %v752 = vld [vmem:[%s5 + $0x190] sm:$0xff]
    %v753 = vld [vmem:[%s5 + $0x198] sm:$0xff]
    %v754 = vld [vmem:[%s5 + $0x1a0] sm:$0xff]
    %v755 = vld [vmem:[%s5 + $0x1a8] sm:$0xff]
    %v756 = vld [vmem:[%s5 + $0x1b0] sm:$0xff]
    %v757 = vld [vmem:[%s5 + $0x1b8] sm:$0xff]
    %v758 = vld [vmem:[%s5 + $0x1c0] sm:$0xff]
    %v759 = vld [vmem:[%s5 + $0x1c8] sm:$0xff]
    %v760 = vld [vmem:[%s5 + $0x1d0] sm:$0xff]
    %v761 = vld [vmem:[%s5 + $0x1d8] sm:$0xff]
    %v762 = vld [vmem:[%s5 + $0x1e0] sm:$0xff]
    %v763 = vld [vmem:[%s5 + $0x1e8] sm:$0xff]
    %v764 = vld [vmem:[%s5 + $0x1f0] sm:$0xff]
    %v765 = vld [vmem:[%s5 + $0x1f8] sm:$0xff]
    %766 = vmatprep.subr.mxu0 0.0
    %767 = vmatpush1.msra.mxu0 %v702
    %768 = vmatprep.subr.mxu0 0.0
    %769 = vmatpush1.msra.mxu0 %v703
    %770 = vmatprep.subr.mxu0 0.0
    %771 = vmatpush1.msra.mxu0 %v704
    %772 = vmatprep.subr.mxu0 0.0
    %773 = vmatpush1.msra.mxu0 %v705
    %774 = vmatprep.subr.mxu0 0.0
    %775 = vmatpush1.msra.mxu0 %v706
    %776 = vmatprep.subr.mxu0 0.0
    %777 = vmatpush1.msra.mxu0 %v707
    %778 = vmatprep.subr.mxu0 0.0
    %779 = vmatpush1.msra.mxu0 %v708
    %780 = vmatprep.subr.mxu0 0.0
    %781 = vmatpush1.msra.mxu0 %v709
    %782 = vmatprep.subr.mxu0 0.0
    %783 = vmatpush1.msra.mxu0 %v710
    %784 = vmatprep.subr.mxu0 0.0
    %785 = vmatpush1.msra.mxu0 %v711
    %786 = vmatprep.subr.mxu0 0.0
    %787 = vmatpush1.msra.mxu0 %v712
    %788 = vmatprep.subr.mxu0 0.0
    %789 = vmatpush1.msra.mxu0 %v713
    %790 = vmatprep.subr.mxu0 0.0
    %791 = vmatpush1.msra.mxu0 %v714
    %792 = vmatprep.subr.mxu0 0.0
    %793 = vmatpush1.msra.mxu0 %v715
    %794 = vmatprep.subr.mxu0 0.0
    %795 = vmatpush1.msra.mxu0 %v716
    %796 = vmatprep.subr.mxu0 0.0
    %797 = vmatpush1.msra.mxu0 %v717
    %798 = vmatprep.subr.mxu0 0.0
    %799 = vmatpush1.msra.mxu0 %v718
    %800 = vmatprep.subr.mxu0 0.0
    %801 = vmatpush1.msra.mxu0 %v719
    %802 = vmatprep.subr.mxu0 0.0
    %803 = vmatpush1.msra.mxu0 %v720
    %804 = vmatprep.subr.mxu0 0.0
    %805 = vmatpush1.msra.mxu0 %v721
    %806 = vmatprep.subr.mxu0 0.0
    %807 = vmatpush1.msra.mxu0 %v722
    %808 = vmatprep.subr.mxu0 0.0
    %809 = vmatpush1.msra.mxu0 %v723
    %810 = vmatprep.subr.mxu0 0.0
    %811 = vmatpush1.msra.mxu0 %v724
    %812 = vmatprep.subr.mxu0 0.0
    %813 = vmatpush1.msra.mxu0 %v725
    %814 = vmatprep.subr.mxu0 0.0
    %815 = vmatpush1.msra.mxu0 %v726
    %816 = vmatprep.subr.mxu0 0.0
    %817 = vmatpush1.msra.mxu0 %v727
    %818 = vmatprep.subr.mxu0 0.0
    %819 = vmatpush1.msra.mxu0 %v728
    %820 = vmatprep.subr.mxu0 0.0
    %821 = vmatpush1.msra.mxu0 %v729
    %822 = vmatprep.subr.mxu0 0.0
    %823 = vmatpush1.msra.mxu0 %v730
    %824 = vmatprep.subr.mxu0 0.0
    %825 = vmatpush1.msra.mxu0 %v731
    %826 = vmatprep.subr.mxu0 0.0
    %827 = vmatpush1.msra.mxu0 %v732
    %828 = vmatprep.subr.mxu0 0.0
    %829 = vmatpush1.msra.mxu0 %v733
    %830 = vmatprep.mubr.f32.mxu0 %v661
    %831 = vmatmul.mubr.f32.gmra.mrb[0].mxu0 %v655
    %v832 = vpop.f32.mrb[0].mxu0
    %v833 = vadd.f32 0.0, %v832
    %v834 = vpop.f32.mrb[0].mxu0
    %835 = vdwg.mxu0
    %836 = vmatprep.subr.mxu0 0.0
    %837 = vmatpush1.msra.mxu0 %v734
    %838 = vmatprep.subr.mxu0 0.0
    %839 = vmatpush1.msra.mxu0 %v735
    %840 = vmatprep.subr.mxu0 0.0
    %841 = vmatpush1.msra.mxu0 %v736
    %842 = vmatprep.subr.mxu0 0.0
    %843 = vmatpush1.msra.mxu0 %v737
    %844 = vmatprep.subr.mxu0 0.0
    %845 = vmatpush1.msra.mxu0 %v738
    %846 = vmatprep.subr.mxu0 0.0
    %847 = vmatpush1.msra.mxu0 %v739
    %848 = vmatprep.subr.mxu0 0.0
    %849 = vmatpush1.msra.mxu0 %v740
    %850 = vmatprep.subr.mxu0 0.0
    %851 = vmatpush1.msra.mxu0 %v741
    %852 = vmatprep.subr.mxu0 0.0
    %853 = vmatpush1.msra.mxu0 %v742
    %854 = vmatprep.subr.mxu0 0.0
    %855 = vmatpush1.msra.mxu0 %v743
    %856 = vmatprep.subr.mxu0 0.0
    %857 = vmatpush1.msra.mxu0 %v744
    %858 = vmatprep.subr.mxu0 0.0
    %859 = vmatpush1.msra.mxu0 %v745
    %860 = vmatprep.subr.mxu0 0.0
    %861 = vmatpush1.msra.mxu0 %v746
    %862 = vmatprep.subr.mxu0 0.0
    %863 = vmatpush1.msra.mxu0 %v747
    %864 = vmatprep.subr.mxu0 0.0
    %865 = vmatpush1.msra.mxu0 %v748
    %866 = vmatprep.subr.mxu0 0.0
    %867 = vmatpush1.msra.mxu0 %v749
    %868 = vmatprep.subr.mxu0 0.0
    %869 = vmatpush1.msra.mxu0 %v750
    %870 = vmatprep.subr.mxu0 0.0
    %871 = vmatpush1.msra.mxu0 %v751
    %872 = vmatprep.subr.mxu0 0.0
    %873 = vmatpush1.msra.mxu0 %v752
    %874 = vmatprep.subr.mxu0 0.0
    %875 = vmatpush1.msra.mxu0 %v753
    %876 = vmatprep.subr.mxu0 0.0
    %877 = vmatpush1.msra.mxu0 %v754
    %878 = vmatprep.subr.mxu0 0.0
    %879 = vmatpush1.msra.mxu0 %v755
    %880 = vmatprep.subr.mxu0 0.0
    %881 = vmatpush1.msra.mxu0 %v756
    %882 = vmatprep.subr.mxu0 0.0
    %883 = vmatpush1.msra.mxu0 %v757
    %884 = vmatprep.subr.mxu0 0.0
    %885 = vmatpush1.msra.mxu0 %v758
    %886 = vmatprep.subr.mxu0 0.0
    %887 = vmatpush1.msra.mxu0 %v759
    %888 = vmatprep.subr.mxu0 0.0
    %889 = vmatpush1.msra.mxu0 %v760
    %890 = vmatprep.subr.mxu0 0.0
    %891 = vmatpush1.msra.mxu0 %v761
    %892 = vmatprep.subr.mxu0 0.0
    %893 = vmatpush1.msra.mxu0 %v762
    %894 = vmatprep.subr.mxu0 0.0
    %895 = vmatpush1.msra.mxu0 %v763
    %896 = vmatprep.subr.mxu0 0.0
    %897 = vmatpush1.msra.mxu0 %v764
    %898 = vmatprep.subr.mxu0 0.0
    %899 = vmatpush1.msra.mxu0 %v765
    %900 = vmatprep.mubr.f32.mxu0 %v673
    %901 = vmatmul.mubr.f32.gmra.mrb[0].mxu0 %v667
    %v902 = vpop.f32.mrb[0].mxu0
    %v903 = vadd.f32 %v833, %v902
    %v904 = vpop.f32.mrb[0].mxu0
    %905 = vdwg.mxu0
    %906 = vmatprep.subr.mxu0 0.0
    %907 = vmatpush1.msra.mxu0 %v702
    %908 = vmatprep.subr.mxu0 0.0
    %909 = vmatpush1.msra.mxu0 %v703
    %910 = vmatprep.subr.mxu0 0.0
    %911 = vmatpush1.msra.mxu0 %v704
    %912 = vmatprep.subr.mxu0 0.0
    %913 = vmatpush1.msra.mxu0 %v705
    %914 = vmatprep.subr.mxu0 0.0
    %915 = vmatpush1.msra.mxu0 %v706
    %916 = vmatprep.subr.mxu0 0.0
    %917 = vmatpush1.msra.mxu0 %v707
    %918 = vmatprep.subr.mxu0 0.0
    %919 = vmatpush1.msra.mxu0 %v708
    %920 = vmatprep.subr.mxu0 0.0
    %921 = vmatpush1.msra.mxu0 %v709
    %922 = vmatprep.subr.mxu0 0.0
    %923 = vmatpush1.msra.mxu0 %v710
    %924 = vmatprep.subr.mxu0 0.0
    %925 = vmatpush1.msra.mxu0 %v711
    %926 = vmatprep.subr.mxu0 0.0
    %927 = vmatpush1.msra.mxu0 %v712
    %928 = vmatprep.subr.mxu0 0.0
    %929 = vmatpush1.msra.mxu0 %v713
    %930 = vmatprep.subr.mxu0 0.0
    %931 = vmatpush1.msra.mxu0 %v714
    %932 = vmatprep.subr.mxu0 0.0
    %933 = vmatpush1.msra.mxu0 %v715
    %934 = vmatprep.subr.mxu0 0.0
    %935 = vmatpush1.msra.mxu0 %v716
    %936 = vmatprep.subr.mxu0 0.0
    %937 = vmatpush1.msra.mxu0 %v717
    %938 = vmatprep.subr.mxu0 0.0
    %939 = vmatpush1.msra.mxu0 %v718
    %940 = vmatprep.subr.mxu0 0.0
    %941 = vmatpush1.msra.mxu0 %v719
    %942 = vmatprep.subr.mxu0 0.0
    %943 = vmatpush1.msra.mxu0 %v720
    %944 = vmatprep.subr.mxu0 0.0
    %945 = vmatpush1.msra.mxu0 %v721
    %946 = vmatprep.subr.mxu0 0.0
    %947 = vmatpush1.msra.mxu0 %v722
    %948 = vmatprep.subr.mxu0 0.0
    %949 = vmatpush1.msra.mxu0 %v723
    %950 = vmatprep.subr.mxu0 0.0
    %951 = vmatpush1.msra.mxu0 %v724
    %952 = vmatprep.subr.mxu0 0.0
    %953 = vmatpush1.msra.mxu0 %v725
    %954 = vmatprep.subr.mxu0 0.0
    %955 = vmatpush1.msra.mxu0 %v726
    %956 = vmatprep.subr.mxu0 0.0
    %957 = vmatpush1.msra.mxu0 %v727
    %958 = vmatprep.subr.mxu0 0.0
    %959 = vmatpush1.msra.mxu0 %v728
    %960 = vmatprep.subr.mxu0 0.0
    %961 = vmatpush1.msra.mxu0 %v729
    %962 = vmatprep.subr.mxu0 0.0
    %963 = vmatpush1.msra.mxu0 %v730
    %964 = vmatprep.subr.mxu0 0.0
    %965 = vmatpush1.msra.mxu0 %v731
    %966 = vmatprep.subr.mxu0 0.0
    %967 = vmatpush1.msra.mxu0 %v732
    %968 = vmatprep.subr.mxu0 0.0
    %969 = vmatpush1.msra.mxu0 %v733
    %970 = vmatprep.mubr.f32.mxu0 %v689
    %971 = vmatmul.mubr.f32.gmra.mrb[0].mxu0 %v683
    %v972 = vpop.f32.mrb[0].mxu0
    %v973 = vadd.f32 0.0, %v972
    %v974 = vpop.f32.mrb[0].mxu0
    %975 = vdwg.mxu0
    %976 = vmatprep.subr.mxu0 0.0
    %977 = vmatpush1.msra.mxu0 %v734
    %978 = vmatprep.subr.mxu0 0.0
    %979 = vmatpush1.msra.mxu0 %v735
    %980 = vmatprep.subr.mxu0 0.0
    %981 = vmatpush1.msra.mxu0 %v736
    %982 = vmatprep.subr.mxu0 0.0
    %983 = vmatpush1.msra.mxu0 %v737
    %984 = vmatprep.subr.mxu0 0.0
    %985 = vmatpush1.msra.mxu0 %v738
    %986 = vmatprep.subr.mxu0 0.0
    %987 = vmatpush1.msra.mxu0 %v739
    %988 = vmatprep.subr.mxu0 0.0
    %989 = vmatpush1.msra.mxu0 %v740
    %990 = vmatprep.subr.mxu0 0.0
    %991 = vmatpush1.msra.mxu0 %v741
    %992 = vmatprep.subr.mxu0 0.0
    %993 = vmatpush1.msra.mxu0 %v742
    %994 = vmatprep.subr.mxu0 0.0
    %995 = vmatpush1.msra.mxu0 %v743
    %996 = vmatprep.subr.mxu0 0.0
    %997 = vmatpush1.msra.mxu0 %v744
    %998 = vmatprep.subr.mxu0 0.0
    %999 = vmatpush1.msra.mxu0 %v745
    %1000 = vmatprep.subr.mxu0 0.0
    %1001 = vmatpush1.msra.mxu0 %v746
    %1002 = vmatprep.subr.mxu0 0.0
    %1003 = vmatpush1.msra.mxu0 %v747
    %1004 = vmatprep.subr.mxu0 0.0
    %1005 = vmatpush1.msra.mxu0 %v748
    %1006 = vmatprep.subr.mxu0 0.0
    %1007 = vmatpush1.msra.mxu0 %v749
    %1008 = vmatprep.subr.mxu0 0.0
    %1009 = vmatpush1.msra.mxu0 %v750
    %1010 = vmatprep.subr.mxu0 0.0
    %1011 = vmatpush1.msra.mxu0 %v751
    %1012 = vmatprep.subr.mxu0 0.0
    %1013 = vmatpush1.msra.mxu0 %v752
    %1014 = vmatprep.subr.mxu0 0.0
    %1015 = vmatpush1.msra.mxu0 %v753
    %1016 = vmatprep.subr.mxu0 0.0
    %1017 = vmatpush1.msra.mxu0 %v754
    %1018 = vmatprep.subr.mxu0 0.0
    %1019 = vmatpush1.msra.mxu0 %v755
    %1020 = vmatprep.subr.mxu0 0.0
    %1021 = vmatpush1.msra.mxu0 %v756
    %1022 = vmatprep.subr.mxu0 0.0
    %1023 = vmatpush1.msra.mxu0 %v757
    %1024 = vmatprep.subr.mxu0 0.0
    %1025 = vmatpush1.msra.mxu0 %v758
    %1026 = vmatprep.subr.mxu0 0.0
    %1027 = vmatpush1.msra.mxu0 %v759
    %1028 = vmatprep.subr.mxu0 0.0
    %1029 = vmatpush1.msra.mxu0 %v760
    %1030 = vmatprep.subr.mxu0 0.0
    %1031 = vmatpush1.msra.mxu0 %v761
    %1032 = vmatprep.subr.mxu0 0.0
    %1033 = vmatpush1.msra.mxu0 %v762
    %1034 = vmatprep.subr.mxu0 0.0
    %1035 = vmatpush1.msra.mxu0 %v763
    %1036 = vmatprep.subr.mxu0 0.0
    %1037 = vmatpush1.msra.mxu0 %v764
    %1038 = vmatprep.subr.mxu0 0.0
    %1039 = vmatpush1.msra.mxu0 %v765
    %1040 = vmatprep.mubr.f32.mxu0 %v701
    %1041 = vmatmul.mubr.f32.gmra.mrb[0].mxu0 %v695
    %v1042 = vpop.f32.mrb[0].mxu0
    %v1043 = vadd.f32 %v973, %v1042
    %v1044 = vpop.f32.mrb[0].mxu0
    %1045 = vdwg.mxu0
    %v1046 = vmul.f32 %v903, 0.0078125
    %v1047 = vmul.f32 %v1043, 0.0078125
    %v1048 = vmul.f32 %v1046, %v1046
    %v1049 = vsub.f32 %v1047, %v1048
    %v1050 = vld [vmem:[#allocation14] sm:$0x1]
    %v1051 = vadd.f32 %v1049, 1e-05
    %v1052 = vrsqrt.pop %v1051
    %v1053 = vmul.f32 %v1050, %v1052
    %v1054 = vld [vmem:[#allocation15] sm:$0x1]
    %v1055 = vmul.f32 %v1046, %v1053
    %v1056 = vsub.f32 %v1054, %v1055
    %v1057 = vld [vmem:[#allocation11] sm:$0xff]
    %v1058 = vld [vmem:[#allocation11 + $0x8] sm:$0xff]
    %v1059 = vld [vmem:[#allocation11 + $0x10] sm:$0xff]
    %v1060 = vld [vmem:[#allocation11 + $0x18] sm:$0xff]
    %v1061 = vld [vmem:[#allocation11 + $0x20] sm:$0xff]
    %v1062 = vld [vmem:[#allocation11 + $0x28] sm:$0xff]
    %v1063 = vld [vmem:[#allocation11 + $0x30] sm:$0xff]
    %v1064 = vld [vmem:[#allocation11 + $0x38] sm:$0xff]
    %v1065 = vld [vmem:[#allocation11 + $0x40] sm:$0xff]
    %v1066 = vld [vmem:[#allocation11 + $0x48] sm:$0xff]
    %v1067 = vld [vmem:[#allocation11 + $0x50] sm:$0xff]
    %v1068 = vld [vmem:[#allocation11 + $0x58] sm:$0xff]
    %v1069 = vld [vmem:[#allocation11 + $0x60] sm:$0xff]
    %v1070 = vld [vmem:[#allocation11 + $0x68] sm:$0xff]
    %v1071 = vld [vmem:[#allocation11 + $0x70] sm:$0xff]
    %v1072 = vld [vmem:[#allocation11 + $0x78] sm:$0xff]
    %vm1073 = vcmask 261120
    %v1075 = vsel %vm1073, %v1053, 0
    %1077 = vmatprep.subr.mxu0 %v1058
    %1078 = vmatpush1.msra.mxu0 %v1057
    %1079 = vmatprep.subr.mxu0 %v1062
    %1080 = vmatpush1.msra.mxu0 %v1061
    %1081 = vmatprep.subr.mxu0 %v1066
    %1082 = vmatpush1.msra.mxu0 %v1065
    %1083 = vmatprep.subr.mxu0 %v1070
    %1084 = vmatpush1.msra.mxu0 %v1069
    %1085 = vmatprep.subr.mxu0 0.0
    %1086 = vmatpush1.msra.mxu0 0.0
    %1087 = vmatprep.subr.mxu0 0.0
    %1088 = vmatpush1.msra.mxu0 0.0
    %1089 = vmatprep.subr.mxu0 0.0
    %1090 = vmatpush1.msra.mxu0 0.0
    %1091 = vmatprep.subr.mxu0 0.0
    %1092 = vmatpush1.msra.mxu0 0.0
    %1093 = vmatprep.subr.mxu0 0.0
    %1094 = vmatpush1.msra.mxu0 0.0
    %1095 = vmatprep.subr.mxu0 0.0
    %1096 = vmatpush1.msra.mxu0 0.0
    %1097 = vmatprep.subr.mxu0 0.0
    %1098 = vmatpush1.msra.mxu0 0.0
    %1099 = vmatprep.subr.mxu0 0.0
    %1100 = vmatpush1.msra.mxu0 0.0
    %1101 = vmatprep.subr.mxu0 0.0
    %1102 = vmatpush1.msra.mxu0 0.0
    %1103 = vmatprep.subr.mxu0 0.0
    %1104 = vmatpush1.msra.mxu0 0.0
    %1105 = vmatprep.subr.mxu0 0.0
    %1106 = vmatpush1.msra.mxu0 0.0
    %1107 = vmatprep.subr.mxu0 0.0
    %1108 = vmatpush1.msra.mxu0 0.0
    %1109 = vmatprep.subr.mxu0 0.0
    %1110 = vmatpush1.msra.mxu0 0.0
    %1111 = vmatprep.subr.mxu0 0.0
    %1112 = vmatpush1.msra.mxu0 0.0
    %1113 = vmatprep.subr.mxu0 0.0
    %1114 = vmatpush1.msra.mxu0 0.0
    %1115 = vmatprep.subr.mxu0 0.0
    %1116 = vmatpush1.msra.mxu0 0.0
    %1117 = vmatprep.subr.mxu0 0.0
    %1118 = vmatpush1.msra.mxu0 0.0
    %1119 = vmatprep.subr.mxu0 0.0
    %1120 = vmatpush1.msra.mxu0 0.0
    %1121 = vmatprep.subr.mxu0 0.0
    %1122 = vmatpush1.msra.mxu0 0.0
    %1123 = vmatprep.subr.mxu0 0.0
    %1124 = vmatpush1.msra.mxu0 0.0
    %1125 = vmatprep.subr.mxu0 0.0
    %1126 = vmatpush1.msra.mxu0 0.0
    %1127 = vmatprep.subr.mxu0 0.0
    %1128 = vmatpush1.msra.mxu0 0.0
    %1129 = vmatprep.subr.mxu0 0.0
    %1130 = vmatpush1.msra.mxu0 0.0
    %1131 = vmatprep.subr.mxu0 0.0
    %1132 = vmatpush1.msra.mxu0 0.0
    %1133 = vmatprep.subr.mxu0 0.0
    %1134 = vmatpush1.msra.mxu0 0.0
    %1135 = vmatprep.subr.mxu0 0.0
    %1136 = vmatpush1.msra.mxu0 0.0
    %1137 = vmatprep.subr.mxu0 0.0
    %1138 = vmatpush1.msra.mxu0 0.0
    %1139 = vmatprep.subr.mxu0 0.0
    %1140 = vmatpush1.msra.mxu0 0.0
    %1141 = vmatprep.mubr.f32.mxu0 0.0
    %1142 = vmatmul.mubr.f32.gmra.mrb[0].mxu0 %v1075
    %v1143 = vpop.f32.mrb[0].mxu0
    %v1144 = vadd.f32 0.0, %v1143
    %v1145 = vpop.f32.mrb[0].mxu0
    %v1146 = vadd.f32 0.0, %v1145
    %1147 = vdwg.mxu0
    %1148 = vmatprep.subr.mxu0 %v1060
    %1149 = vmatpush1.msra.mxu0 %v1059
    %1150 = vmatprep.subr.mxu0 %v1064
    %1151 = vmatpush1.msra.mxu0 %v1063
    %1152 = vmatprep.subr.mxu0 %v1068
    %1153 = vmatpush1.msra.mxu0 %v1067
    %1154 = vmatprep.subr.mxu0 %v1072
    %1155 = vmatpush1.msra.mxu0 %v1071
    %1156 = vmatprep.subr.mxu0 0.0
    %1157 = vmatpush1.msra.mxu0 0.0
    %1158 = vmatprep.subr.mxu0 0.0
    %1159 = vmatpush1.msra.mxu0 0.0
    %1160 = vmatprep.subr.mxu0 0.0
    %1161 = vmatpush1.msra.mxu0 0.0
    %1162 = vmatprep.subr.mxu0 0.0
    %1163 = vmatpush1.msra.mxu0 0.0
    %1164 = vmatprep.subr.mxu0 0.0
    %1165 = vmatpush1.msra.mxu0 0.0
    %1166 = vmatprep.subr.mxu0 0.0
    %1167 = vmatpush1.msra.mxu0 0.0
    %1168 = vmatprep.subr.mxu0 0.0
    %1169 = vmatpush1.msra.mxu0 0.0
    %1170 = vmatprep.subr.mxu0 0.0
    %1171 = vmatpush1.msra.mxu0 0.0
    %1172 = vmatprep.subr.mxu0 0.0
    %1173 = vmatpush1.msra.mxu0 0.0
    %1174 = vmatprep.subr.mxu0 0.0
    %1175 = vmatpush1.msra.mxu0 0.0
    %1176 = vmatprep.subr.mxu0 0.0
    %1177 = vmatpush1.msra.mxu0 0.0
    %1178 = vmatprep.subr.mxu0 0.0
    %1179 = vmatpush1.msra.mxu0 0.0
    %1180 = vmatprep.subr.mxu0 0.0
    %1181 = vmatpush1.msra.mxu0 0.0
    %1182 = vmatprep.subr.mxu0 0.0
    %1183 = vmatpush1.msra.mxu0 0.0
    %1184 = vmatprep.subr.mxu0 0.0
    %1185 = vmatpush1.msra.mxu0 0.0
    %1186 = vmatprep.subr.mxu0 0.0
    %1187 = vmatpush1.msra.mxu0 0.0
    %1188 = vmatprep.subr.mxu0 0.0
    %1189 = vmatpush1.msra.mxu0 0.0
    %1190 = vmatprep.subr.mxu0 0.0
    %1191 = vmatpush1.msra.mxu0 0.0
    %1192 = vmatprep.subr.mxu0 0.0
    %1193 = vmatpush1.msra.mxu0 0.0
    %1194 = vmatprep.subr.mxu0 0.0
    %1195 = vmatpush1.msra.mxu0 0.0
    %1196 = vmatprep.subr.mxu0 0.0
    %1197 = vmatpush1.msra.mxu0 0.0
    %1198 = vmatprep.subr.mxu0 0.0
    %1199 = vmatpush1.msra.mxu0 0.0
    %1200 = vmatprep.subr.mxu0 0.0
    %1201 = vmatpush1.msra.mxu0 0.0
    %1202 = vmatprep.subr.mxu0 0.0
    %1203 = vmatpush1.msra.mxu0 0.0
    %1204 = vmatprep.subr.mxu0 0.0
    %1205 = vmatpush1.msra.mxu0 0.0
    %1206 = vmatprep.subr.mxu0 0.0
    %1207 = vmatpush1.msra.mxu0 0.0
    %1208 = vmatprep.subr.mxu0 0.0
    %1209 = vmatpush1.msra.mxu0 0.0
    %1210 = vmatprep.subr.mxu0 0.0
    %1211 = vmatpush1.msra.mxu0 0.0
    %1212 = vmatprep.mubr.f32.mxu0 0.0
    %1213 = vmatmul.mubr.f32.gmra.mrb[0].mxu0 %v1075
    %v1214 = vpop.f32.mrb[0].mxu0
    %v1215 = vadd.f32 0.0, %v1214
    %v1216 = vpop.f32.mrb[0].mxu0
    %v1217 = vadd.f32 0.0, %v1216
    %1218 = vdwg.mxu0
    %v1220 = vsel %vm1073, %v1056, 0
    %1222 = vmatprep.subr.mxu0 %v1058
    %1223 = vmatpush1.msra.mxu0 %v1057
    %1224 = vmatprep.subr.mxu0 %v1062
    %1225 = vmatpush1.msra.mxu0 %v1061
    %1226 = vmatprep.subr.mxu0 %v1066
    %1227 = vmatpush1.msra.mxu0 %v1065
    %1228 = vmatprep.subr.mxu0 %v1070
    %1229 = vmatpush1.msra.mxu0 %v1069
    %1230 = vmatprep.subr.mxu0 0.0
    %1231 = vmatpush1.msra.mxu0 0.0
    %1232 = vmatprep.subr.mxu0 0.0
    %1233 = vmatpush1.msra.mxu0 0.0
    %1234 = vmatprep.subr.mxu0 0.0
    %1235 = vmatpush1.msra.mxu0 0.0
    %1236 = vmatprep.subr.mxu0 0.0
    %1237 = vmatpush1.msra.mxu0 0.0
    %1238 = vmatprep.subr.mxu0 0.0
    %1239 = vmatpush1.msra.mxu0 0.0
    %1240 = vmatprep.subr.mxu0 0.0
    %1241 = vmatpush1.msra.mxu0 0.0
    %1242 = vmatprep.subr.mxu0 0.0
    %1243 = vmatpush1.msra.mxu0 0.0
    %1244 = vmatprep.subr.mxu0 0.0
    %1245 = vmatpush1.msra.mxu0 0.0
    %1246 = vmatprep.subr.mxu0 0.0
    %1247 = vmatpush1.msra.mxu0 0.0
    %1248 = vmatprep.subr.mxu0 0.0
    %1249 = vmatpush1.msra.mxu0 0.0
    %1250 = vmatprep.subr.mxu0 0.0
    %1251 = vmatpush1.msra.mxu0 0.0
    %1252 = vmatprep.subr.mxu0 0.0
    %1253 = vmatpush1.msra.mxu0 0.0
    %1254 = vmatprep.subr.mxu0 0.0
    %1255 = vmatpush1.msra.mxu0 0.0
    %1256 = vmatprep.subr.mxu0 0.0
    %1257 = vmatpush1.msra.mxu0 0.0
    %1258 = vmatprep.subr.mxu0 0.0
    %1259 = vmatpush1.msra.mxu0 0.0
    %1260 = vmatprep.subr.mxu0 0.0
    %1261 = vmatpush1.msra.mxu0 0.0
    %1262 = vmatprep.subr.mxu0 0.0
    %1263 = vmatpush1.msra.mxu0 0.0
    %1264 = vmatprep.subr.mxu0 0.0
    %1265 = vmatpush1.msra.mxu0 0.0
    %1266 = vmatprep.subr.mxu0 0.0
    %1267 = vmatpush1.msra.mxu0 0.0
    %1268 = vmatprep.subr.mxu0 0.0
    %1269 = vmatpush1.msra.mxu0 0.0
    %1270 = vmatprep.subr.mxu0 0.0
    %1271 = vmatpush1.msra.mxu0 0.0
    %1272 = vmatprep.subr.mxu0 0.0
    %1273 = vmatpush1.msra.mxu0 0.0
    %1274 = vmatprep.subr.mxu0 0.0
    %1275 = vmatpush1.msra.mxu0 0.0
    %1276 = vmatprep.subr.mxu0 0.0
    %1277 = vmatpush1.msra.mxu0 0.0
    %1278 = vmatprep.subr.mxu0 0.0
    %1279 = vmatpush1.msra.mxu0 0.0
    %1280 = vmatprep.subr.mxu0 0.0
    %1281 = vmatpush1.msra.mxu0 0.0
    %1282 = vmatprep.subr.mxu0 0.0
    %1283 = vmatpush1.msra.mxu0 0.0
    %1284 = vmatprep.subr.mxu0 0.0
    %1285 = vmatpush1.msra.mxu0 0.0
    %1286 = vmatprep.mubr.f32.mxu0 0.0
    %1287 = vmatmul.mubr.f32.gmra.mrb[0].mxu0 %v1220
    %v1288 = vpop.f32.mrb[0].mxu0
    %v1289 = vadd.f32 0.0, %v1288
    %v1290 = vpop.f32.mrb[0].mxu0
    %v1291 = vadd.f32 0.0, %v1290
    %1292 = vdwg.mxu0
    %1293 = vmatprep.subr.mxu0 %v1060
    %1294 = vmatpush1.msra.mxu0 %v1059
    %1295 = vmatprep.subr.mxu0 %v1064
    %1296 = vmatpush1.msra.mxu0 %v1063
    %1297 = vmatprep.subr.mxu0 %v1068
    %1298 = vmatpush1.msra.mxu0 %v1067
    %1299 = vmatprep.subr.mxu0 %v1072
    %1300 = vmatpush1.msra.mxu0 %v1071
    %1301 = vmatprep.subr.mxu0 0.0
    %1302 = vmatpush1.msra.mxu0 0.0
    %1303 = vmatprep.subr.mxu0 0.0
    %1304 = vmatpush1.msra.mxu0 0.0
    %1305 = vmatprep.subr.mxu0 0.0
    %1306 = vmatpush1.msra.mxu0 0.0
    %1307 = vmatprep.subr.mxu0 0.0
    %1308 = vmatpush1.msra.mxu0 0.0
    %1309 = vmatprep.subr.mxu0 0.0
    %1310 = vmatpush1.msra.mxu0 0.0
    %1311 = vmatprep.subr.mxu0 0.0
    %1312 = vmatpush1.msra.mxu0 0.0
    %1313 = vmatprep.subr.mxu0 0.0
    %1314 = vmatpush1.msra.mxu0 0.0
    %1315 = vmatprep.subr.mxu0 0.0
    %1316 = vmatpush1.msra.mxu0 0.0
    %1317 = vmatprep.subr.mxu0 0.0
    %1318 = vmatpush1.msra.mxu0 0.0
    %1319 = vmatprep.subr.mxu0 0.0
    %1320 = vmatpush1.msra.mxu0 0.0
    %1321 = vmatprep.subr.mxu0 0.0
    %1322 = vmatpush1.msra.mxu0 0.0
    %1323 = vmatprep.subr.mxu0 0.0
    %1324 = vmatpush1.msra.mxu0 0.0
    %1325 = vmatprep.subr.mxu0 0.0
    %1326 = vmatpush1.msra.mxu0 0.0
    %1327 = vmatprep.subr.mxu0 0.0
    %1328 = vmatpush1.msra.mxu0 0.0
    %1329 = vmatprep.subr.mxu0 0.0
    %1330 = vmatpush1.msra.mxu0 0.0
    %1331 = vmatprep.subr.mxu0 0.0
    %1332 = vmatpush1.msra.mxu0 0.0
    %1333 = vmatprep.subr.mxu0 0.0
    %1334 = vmatpush1.msra.mxu0 0.0
    %1335 = vmatprep.subr.mxu0 0.0
    %1336 = vmatpush1.msra.mxu0 0.0
    %1337 = vmatprep.subr.mxu0 0.0
    %1338 = vmatpush1.msra.mxu0 0.0
    %1339 = vmatprep.subr.mxu0 0.0
    %1340 = vmatpush1.msra.mxu0 0.0
    %1341 = vmatprep.subr.mxu0 0.0
    %1342 = vmatpush1.msra.mxu0 0.0
    %1343 = vmatprep.subr.mxu0 0.0
    %1344 = vmatpush1.msra.mxu0 0.0
    %1345 = vmatprep.subr.mxu0 0.0
    %1346 = vmatpush1.msra.mxu0 0.0
    %1347 = vmatprep.subr.mxu0 0.0
    %1348 = vmatpush1.msra.mxu0 0.0
    %1349 = vmatprep.subr.mxu0 0.0
    %1350 = vmatpush1.msra.mxu0 0.0
    %1351 = vmatprep.subr.mxu0 0.0
    %1352 = vmatpush1.msra.mxu0 0.0
    %1353 = vmatprep.subr.mxu0 0.0
    %1354 = vmatpush1.msra.mxu0 0.0
    %1355 = vmatprep.subr.mxu0 0.0
    %1356 = vmatpush1.msra.mxu0 0.0
    %1357 = vmatprep.mubr.f32.mxu0 0.0
    %1358 = vmatmul.mubr.f32.gmra.mrb[0].mxu0 %v1220
    %v1359 = vpop.f32.mrb[0].mxu0
    %v1360 = vadd.f32 0.0, %v1359
    %v1361 = vpop.f32.mrb[0].mxu0
    %v1362 = vadd.f32 0.0, %v1361
    %1363 = vdwg.mxu0
    %v1364 = vlaneseq
    %v1365 = vshrl.u32 %v1364, 7
    %v1366 = vsub.s32 0, %v1365
    %v1367 = vrot.slane %v1144, %v1366
    %v1368 = vlaneseq
    %v1369 = vshrl.u32 %v1368, 7
    %v1370 = vsub.s32 0, %v1369
    %v1371 = vrot.slane %v1146, %v1370
    %v1372 = vlaneseq
    %v1373 = vshrl.u32 %v1372, 7
    %v1374 = vsub.s32 0, %v1373
    %v1375 = vrot.slane %v1215, %v1374
    %v1376 = vlaneseq
    %v1377 = vshrl.u32 %v1376, 7
    %v1378 = vsub.s32 0, %v1377
    %v1379 = vrot.slane %v1217, %v1378
    %v1380 = vmul.f32 %v603, %v1367
    %v1381 = vmul.f32 %v605, %v1371
    %v1382 = vmul.f32 %v644, %v1375
    %v1383 = vmul.f32 %v646, %v1379
    %v1384 = vlaneseq
    %v1385 = vshrl.u32 %v1384, 7
    %v1386 = vsub.s32 0, %v1385
    %v1387 = vrot.slane %v1289, %v1386
    %v1388 = vlaneseq
    %v1389 = vshrl.u32 %v1388, 7
    %v1390 = vsub.s32 0, %v1389
    %v1391 = vrot.slane %v1291, %v1390
    %v1392 = vlaneseq
    %v1393 = vshrl.u32 %v1392, 7
    %v1394 = vsub.s32 0, %v1393
    %v1395 = vrot.slane %v1360, %v1394
    %v1396 = vlaneseq
    %v1397 = vshrl.u32 %v1396, 7
    %v1398 = vsub.s32 0, %v1397
    %v1399 = vrot.slane %v1362, %v1398
    %v1400 = vadd.f32 %v1380, %v1387
    %v1401 = vadd.f32 %v1381, %v1391
    %v1402 = vadd.f32 %v1382, %v1395
    %v1403 = vadd.f32 %v1383, %v1399
    %v1404 = vmax.f32 %v1400, 0.0
    %v1405 = vmax.f32 %v1401, 0.0
    %v1406 = vmax.f32 %v1402, 0.0
    %v1407 = vmax.f32 %v1403, 0.0
    %v1408 = vpack.c.bf16 %v1404, %v1404
    %v1409 = vpack.c.bf16 %v1405, %v1405
    %v1410 = vpack.c.bf16 %v1406, %v1406
    %v1411 = vpack.c.bf16 %v1407, %v1407
    %v1412 = vld [vmem:[#allocation6] sm:$0xff]
    %v1413 = vld [vmem:[#allocation6 + $0x8] sm:$0xff]
    %v1414 = vld [vmem:[#allocation6 + $0x10] sm:$0xff]
    %v1415 = vld [vmem:[#allocation6 + $0x18] sm:$0xff]
    %v1416 = vld [vmem:[#allocation6 + $0x20] sm:$0xff]
    %v1417 = vld [vmem:[#allocation6 + $0x28] sm:$0xff]
    %v1418 = vld [vmem:[#allocation6 + $0x30] sm:$0xff]
    %v1419 = vld [vmem:[#allocation6 + $0x38] sm:$0xff]
    %v1420 = vld [vmem:[#allocation6 + $0x40] sm:$0xff]
    %v1421 = vld [vmem:[#allocation6 + $0x48] sm:$0xff]
    %v1422 = vld [vmem:[#allocation6 + $0x50] sm:$0xff]
    %v1423 = vld [vmem:[#allocation6 + $0x58] sm:$0xff]
    %v1424 = vld [vmem:[#allocation6 + $0x60] sm:$0xff]
    %v1425 = vld [vmem:[#allocation6 + $0x68] sm:$0xff]
    %v1426 = vld [vmem:[#allocation6 + $0x70] sm:$0xff]
    %v1427 = vld [vmem:[#allocation6 + $0x78] sm:$0xff]
    %v1428 = vld [vmem:[#allocation6 + $0x80] sm:$0xff]
    %v1429 = vld [vmem:[#allocation6 + $0x88] sm:$0xff]
    %v1430 = vld [vmem:[#allocation6 + $0x90] sm:$0xff]
    %v1431 = vld [vmem:[#allocation6 + $0x98] sm:$0xff]
    %v1432 = vld [vmem:[#allocation6 + $0xa0] sm:$0xff]
    %v1433 = vld [vmem:[#allocation6 + $0xa8] sm:$0xff]
    %v1434 = vld [vmem:[#allocation6 + $0xb0] sm:$0xff]
    %v1435 = vld [vmem:[#allocation6 + $0xb8] sm:$0xff]
    %v1436 = vld [vmem:[#allocation6 + $0xc0] sm:$0xff]
    %v1437 = vld [vmem:[#allocation6 + $0xc8] sm:$0xff]
    %v1438 = vld [vmem:[#allocation6 + $0xd0] sm:$0xff]
    %v1439 = vld [vmem:[#allocation6 + $0xd8] sm:$0xff]
    %v1440 = vld [vmem:[#allocation6 + $0xe0] sm:$0xff]
    %v1441 = vld [vmem:[#allocation6 + $0xe8] sm:$0xff]
    %v1442 = vld [vmem:[#allocation6 + $0xf0] sm:$0xff]
    %v1443 = vld [vmem:[#allocation6 + $0xf8] sm:$0xff]
    %v1444 = vld [vmem:[#allocation6 + $0x100] sm:$0xff]
    %v1445 = vld [vmem:[#allocation6 + $0x108] sm:$0xff]
    %v1446 = vld [vmem:[#allocation6 + $0x110] sm:$0xff]
    %v1447 = vld [vmem:[#allocation6 + $0x118] sm:$0xff]
    %v1448 = vld [vmem:[#allocation6 + $0x120] sm:$0xff]
    %v1449 = vld [vmem:[#allocation6 + $0x128] sm:$0xff]
    %v1450 = vld [vmem:[#allocation6 + $0x130] sm:$0xff]
    %v1451 = vld [vmem:[#allocation6 + $0x138] sm:$0xff]
    %v1452 = vld [vmem:[#allocation6 + $0x140] sm:$0xff]
    %v1453 = vld [vmem:[#allocation6 + $0x148] sm:$0xff]
    %v1454 = vld [vmem:[#allocation6 + $0x150] sm:$0xff]
    %v1455 = vld [vmem:[#allocation6 + $0x158] sm:$0xff]
    %v1456 = vld [vmem:[#allocation6 + $0x160] sm:$0xff]
    %v1457 = vld [vmem:[#allocation6 + $0x168] sm:$0xff]
    %v1458 = vld [vmem:[#allocation6 + $0x170] sm:$0xff]
    %v1459 = vld [vmem:[#allocation6 + $0x178] sm:$0xff]
    %v1460 = vld [vmem:[#allocation6 + $0x180] sm:$0xff]
    %v1461 = vld [vmem:[#allocation6 + $0x188] sm:$0xff]
    %v1462 = vld [vmem:[#allocation6 + $0x190] sm:$0xff]
    %v1463 = vld [vmem:[#allocation6 + $0x198] sm:$0xff]
    %v1464 = vld [vmem:[#allocation6 + $0x1a0] sm:$0xff]
    %v1465 = vld [vmem:[#allocation6 + $0x1a8] sm:$0xff]
    %v1466 = vld [vmem:[#allocation6 + $0x1b0] sm:$0xff]
    %v1467 = vld [vmem:[#allocation6 + $0x1b8] sm:$0xff]
    %v1468 = vld [vmem:[#allocation6 + $0x1c0] sm:$0xff]
    %v1469 = vld [vmem:[#allocation6 + $0x1c8] sm:$0xff]
    %v1470 = vld [vmem:[#allocation6 + $0x1d0] sm:$0xff]
    %v1471 = vld [vmem:[#allocation6 + $0x1d8] sm:$0xff]
    %v1472 = vld [vmem:[#allocation6 + $0x1e0] sm:$0xff]
    %v1473 = vld [vmem:[#allocation6 + $0x1e8] sm:$0xff]
    %v1474 = vld [vmem:[#allocation6 + $0x1f0] sm:$0xff]
    %v1475 = vld [vmem:[#allocation6 + $0x1f8] sm:$0xff]
    %v1476 = vld [vmem:[#allocation6 + $0x200] sm:$0xff]
    %v1477 = vld [vmem:[#allocation6 + $0x208] sm:$0xff]
    %v1478 = vld [vmem:[#allocation6 + $0x210] sm:$0xff]
    %v1479 = vld [vmem:[#allocation6 + $0x218] sm:$0xff]
    %v1480 = vld [vmem:[#allocation6 + $0x220] sm:$0xff]
    %v1481 = vld [vmem:[#allocation6 + $0x228] sm:$0xff]
    %v1482 = vld [vmem:[#allocation6 + $0x230] sm:$0xff]
    %v1483 = vld [vmem:[#allocation6 + $0x238] sm:$0xff]
    %v1484 = vld [vmem:[#allocation6 + $0x240] sm:$0xff]
    %v1485 = vld [vmem:[#allocation6 + $0x248] sm:$0xff]
    %v1486 = vld [vmem:[#allocation6 + $0x250] sm:$0xff]
    %v1487 = vld [vmem:[#allocation6 + $0x258] sm:$0xff]
    %v1488 = vld [vmem:[#allocation6 + $0x260] sm:$0xff]
    %v1489 = vld [vmem:[#allocation6 + $0x268] sm:$0xff]
    %v1490 = vld [vmem:[#allocation6 + $0x270] sm:$0xff]
    %v1491 = vld [vmem:[#allocation6 + $0x278] sm:$0xff]
    %v1492 = vld [vmem:[#allocation6 + $0x280] sm:$0xff]
    %v1493 = vld [vmem:[#allocation6 + $0x288] sm:$0xff]
    %v1494 = vld [vmem:[#allocation6 + $0x290] sm:$0xff]
    %v1495 = vld [vmem:[#allocation6 + $0x298] sm:$0xff]
    %v1496 = vld [vmem:[#allocation6 + $0x2a0] sm:$0xff]
    %v1497 = vld [vmem:[#allocation6 + $0x2a8] sm:$0xff]
    %v1498 = vld [vmem:[#allocation6 + $0x2b0] sm:$0xff]
    %v1499 = vld [vmem:[#allocation6 + $0x2b8] sm:$0xff]
    %v1500 = vld [vmem:[#allocation6 + $0x2c0] sm:$0xff]
    %v1501 = vld [vmem:[#allocation6 + $0x2c8] sm:$0xff]
    %v1502 = vld [vmem:[#allocation6 + $0x2d0] sm:$0xff]
    %v1503 = vld [vmem:[#allocation6 + $0x2d8] sm:$0xff]
    %v1504 = vld [vmem:[#allocation6 + $0x2e0] sm:$0xff]
    %v1505 = vld [vmem:[#allocation6 + $0x2e8] sm:$0xff]
    %v1506 = vld [vmem:[#allocation6 + $0x2f0] sm:$0xff]
    %v1507 = vld [vmem:[#allocation6 + $0x2f8] sm:$0xff]
    %v1508 = vld [vmem:[#allocation6 + $0x300] sm:$0xff]
    %v1509 = vld [vmem:[#allocation6 + $0x308] sm:$0xff]
    %v1510 = vld [vmem:[#allocation6 + $0x310] sm:$0xff]
    %v1511 = vld [vmem:[#allocation6 + $0x318] sm:$0xff]
    %v1512 = vld [vmem:[#allocation6 + $0x320] sm:$0xff]
    %v1513 = vld [vmem:[#allocation6 + $0x328] sm:$0xff]
    %v1514 = vld [vmem:[#allocation6 + $0x330] sm:$0xff]
    %v1515 = vld [vmem:[#allocation6 + $0x338] sm:$0xff]
    %v1516 = vld [vmem:[#allocation6 + $0x340] sm:$0xff]
    %v1517 = vld [vmem:[#allocation6 + $0x348] sm:$0xff]
    %v1518 = vld [vmem:[#allocation6 + $0x350] sm:$0xff]
    %v1519 = vld [vmem:[#allocation6 + $0x358] sm:$0xff]
    %v1520 = vld [vmem:[#allocation6 + $0x360] sm:$0xff]
    %v1521 = vld [vmem:[#allocation6 + $0x368] sm:$0xff]
    %v1522 = vld [vmem:[#allocation6 + $0x370] sm:$0xff]
    %v1523 = vld [vmem:[#allocation6 + $0x378] sm:$0xff]
    %v1524 = vld [vmem:[#allocation6 + $0x380] sm:$0xff]
    %v1525 = vld [vmem:[#allocation6 + $0x388] sm:$0xff]
    %v1526 = vld [vmem:[#allocation6 + $0x390] sm:$0xff]
    %v1527 = vld [vmem:[#allocation6 + $0x398] sm:$0xff]
    %v1528 = vld [vmem:[#allocation6 + $0x3a0] sm:$0xff]
    %v1529 = vld [vmem:[#allocation6 + $0x3a8] sm:$0xff]
    %v1530 = vld [vmem:[#allocation6 + $0x3b0] sm:$0xff]
    %v1531 = vld [vmem:[#allocation6 + $0x3b8] sm:$0xff]
    %v1532 = vld [vmem:[#allocation6 + $0x3c0] sm:$0xff]
    %v1533 = vld [vmem:[#allocation6 + $0x3c8] sm:$0xff]
    %v1534 = vld [vmem:[#allocation6 + $0x3d0] sm:$0xff]
    %v1535 = vld [vmem:[#allocation6 + $0x3d8] sm:$0xff]
    %v1536 = vld [vmem:[#allocation6 + $0x3e0] sm:$0xff]
    %v1537 = vld [vmem:[#allocation6 + $0x3e8] sm:$0xff]
    %v1538 = vld [vmem:[#allocation6 + $0x3f0] sm:$0xff]
    %v1539 = vld [vmem:[#allocation6 + $0x3f8] sm:$0xff]
    %v1540 = vld [vmem:[#allocation6 + $0x400] sm:$0xff]
    %v1541 = vld [vmem:[#allocation6 + $0x408] sm:$0xff]
    %v1542 = vld [vmem:[#allocation6 + $0x410] sm:$0xff]
    %v1543 = vld [vmem:[#allocation6 + $0x418] sm:$0xff]
    %v1544 = vld [vmem:[#allocation6 + $0x420] sm:$0xff]
    %v1545 = vld [vmem:[#allocation6 + $0x428] sm:$0xff]
    %v1546 = vld [vmem:[#allocation6 + $0x430] sm:$0xff]
    %v1547 = vld [vmem:[#allocation6 + $0x438] sm:$0xff]
    %v1548 = vld [vmem:[#allocation6 + $0x440] sm:$0xff]
    %v1549 = vld [vmem:[#allocation6 + $0x448] sm:$0xff]
    %v1550 = vld [vmem:[#allocation6 + $0x450] sm:$0xff]
    %v1551 = vld [vmem:[#allocation6 + $0x458] sm:$0xff]
    %v1552 = vld [vmem:[#allocation6 + $0x460] sm:$0xff]
    %v1553 = vld [vmem:[#allocation6 + $0x468] sm:$0xff]
    %v1554 = vld [vmem:[#allocation6 + $0x470] sm:$0xff]
    %v1555 = vld [vmem:[#allocation6 + $0x478] sm:$0xff]
    %v1556 = vld [vmem:[#allocation6 + $0x480] sm:$0xff]
    %v1557 = vld [vmem:[#allocation6 + $0x488] sm:$0xff]
    %v1558 = vld [vmem:[#allocation6 + $0x490] sm:$0xff]
    %v1559 = vld [vmem:[#allocation6 + $0x498] sm:$0xff]
    %v1560 = vld [vmem:[#allocation6 + $0x4a0] sm:$0xff]
    %v1561 = vld [vmem:[#allocation6 + $0x4a8] sm:$0xff]
    %v1562 = vld [vmem:[#allocation6 + $0x4b0] sm:$0xff]
    %v1563 = vld [vmem:[#allocation6 + $0x4b8] sm:$0xff]
    %v1564 = vld [vmem:[#allocation6 + $0x4c0] sm:$0xff]
    %v1565 = vld [vmem:[#allocation6 + $0x4c8] sm:$0xff]
    %v1566 = vld [vmem:[#allocation6 + $0x4d0] sm:$0xff]
    %v1567 = vld [vmem:[#allocation6 + $0x4d8] sm:$0xff]
    %v1568 = vld [vmem:[#allocation6 + $0x4e0] sm:$0xff]
    %v1569 = vld [vmem:[#allocation6 + $0x4e8] sm:$0xff]
    %v1570 = vld [vmem:[#allocation6 + $0x4f0] sm:$0xff]
    %v1571 = vld [vmem:[#allocation6 + $0x4f8] sm:$0xff]
    %v1572 = vld [vmem:[#allocation6 + $0x500] sm:$0xff]
    %v1573 = vld [vmem:[#allocation6 + $0x508] sm:$0xff]
    %v1574 = vld [vmem:[#allocation6 + $0x510] sm:$0xff]
    %v1575 = vld [vmem:[#allocation6 + $0x518] sm:$0xff]
    %v1576 = vld [vmem:[#allocation6 + $0x520] sm:$0xff]
    %v1577 = vld [vmem:[#allocation6 + $0x528] sm:$0xff]
    %v1578 = vld [vmem:[#allocation6 + $0x530] sm:$0xff]
    %v1579 = vld [vmem:[#allocation6 + $0x538] sm:$0xff]
    %v1580 = vld [vmem:[#allocation6 + $0x540] sm:$0xff]
    %v1581 = vld [vmem:[#allocation6 + $0x548] sm:$0xff]
    %v1582 = vld [vmem:[#allocation6 + $0x550] sm:$0xff]
    %v1583 = vld [vmem:[#allocation6 + $0x558] sm:$0xff]
    %v1584 = vld [vmem:[#allocation6 + $0x560] sm:$0xff]
    %v1585 = vld [vmem:[#allocation6 + $0x568] sm:$0xff]
    %v1586 = vld [vmem:[#allocation6 + $0x570] sm:$0xff]
    %v1587 = vld [vmem:[#allocation6 + $0x578] sm:$0xff]
    %v1588 = vld [vmem:[#allocation6 + $0x580] sm:$0xff]
    %v1589 = vld [vmem:[#allocation6 + $0x588] sm:$0xff]
    %v1590 = vld [vmem:[#allocation6 + $0x590] sm:$0xff]
    %v1591 = vld [vmem:[#allocation6 + $0x598] sm:$0xff]
    %v1592 = vld [vmem:[#allocation6 + $0x5a0] sm:$0xff]
    %v1593 = vld [vmem:[#allocation6 + $0x5a8] sm:$0xff]
    %v1594 = vld [vmem:[#allocation6 + $0x5b0] sm:$0xff]
    %v1595 = vld [vmem:[#allocation6 + $0x5b8] sm:$0xff]
    %v1596 = vld [vmem:[#allocation6 + $0x5c0] sm:$0xff]
    %v1597 = vld [vmem:[#allocation6 + $0x5c8] sm:$0xff]
    %v1598 = vld [vmem:[#allocation6 + $0x5d0] sm:$0xff]
    %v1599 = vld [vmem:[#allocation6 + $0x5d8] sm:$0xff]
    %v1600 = vld [vmem:[#allocation6 + $0x5e0] sm:$0xff]
    %v1601 = vld [vmem:[#allocation6 + $0x5e8] sm:$0xff]
    %v1602 = vld [vmem:[#allocation6 + $0x5f0] sm:$0xff]
    %v1603 = vld [vmem:[#allocation6 + $0x5f8] sm:$0xff]
    %v1604 = vld [vmem:[#allocation6 + $0x600] sm:$0xff]
    %v1605 = vld [vmem:[#allocation6 + $0x608] sm:$0xff]
    %v1606 = vld [vmem:[#allocation6 + $0x610] sm:$0xff]
    %v1607 = vld [vmem:[#allocation6 + $0x618] sm:$0xff]
    %v1608 = vld [vmem:[#allocation6 + $0x620] sm:$0xff]
    %v1609 = vld [vmem:[#allocation6 + $0x628] sm:$0xff]
    %v1610 = vld [vmem:[#allocation6 + $0x630] sm:$0xff]
    %v1611 = vld [vmem:[#allocation6 + $0x638] sm:$0xff]
    %v1612 = vld [vmem:[#allocation6 + $0x640] sm:$0xff]
    %v1613 = vld [vmem:[#allocation6 + $0x648] sm:$0xff]
    %v1614 = vld [vmem:[#allocation6 + $0x650] sm:$0xff]
    %v1615 = vld [vmem:[#allocation6 + $0x658] sm:$0xff]
    %v1616 = vld [vmem:[#allocation6 + $0x660] sm:$0xff]
    %v1617 = vld [vmem:[#allocation6 + $0x668] sm:$0xff]
    %v1618 = vld [vmem:[#allocation6 + $0x670] sm:$0xff]
    %v1619 = vld [vmem:[#allocation6 + $0x678] sm:$0xff]
    %v1620 = vld [vmem:[#allocation6 + $0x680] sm:$0xff]
    %v1621 = vld [vmem:[#allocation6 + $0x688] sm:$0xff]
    %v1622 = vld [vmem:[#allocation6 + $0x690] sm:$0xff]
    %v1623 = vld [vmem:[#allocation6 + $0x698] sm:$0xff]
    %v1624 = vld [vmem:[#allocation6 + $0x6a0] sm:$0xff]
    %v1625 = vld [vmem:[#allocation6 + $0x6a8] sm:$0xff]
    %v1626 = vld [vmem:[#allocation6 + $0x6b0] sm:$0xff]
    %v1627 = vld [vmem:[#allocation6 + $0x6b8] sm:$0xff]
    %v1628 = vld [vmem:[#allocation6 + $0x6c0] sm:$0xff]
    %v1629 = vld [vmem:[#allocation6 + $0x6c8] sm:$0xff]
    %v1630 = vld [vmem:[#allocation6 + $0x6d0] sm:$0xff]
    %v1631 = vld [vmem:[#allocation6 + $0x6d8] sm:$0xff]
    %v1632 = vld [vmem:[#allocation6 + $0x6e0] sm:$0xff]
    %v1633 = vld [vmem:[#allocation6 + $0x6e8] sm:$0xff]
    %v1634 = vld [vmem:[#allocation6 + $0x6f0] sm:$0xff]
    %v1635 = vld [vmem:[#allocation6 + $0x6f8] sm:$0xff]
    %v1636 = vld [vmem:[#allocation6 + $0x700] sm:$0xff]
    %v1637 = vld [vmem:[#allocation6 + $0x708] sm:$0xff]
    %v1638 = vld [vmem:[#allocation6 + $0x710] sm:$0xff]
    %v1639 = vld [vmem:[#allocation6 + $0x718] sm:$0xff]
    %v1640 = vld [vmem:[#allocation6 + $0x720] sm:$0xff]
    %v1641 = vld [vmem:[#allocation6 + $0x728] sm:$0xff]
    %v1642 = vld [vmem:[#allocation6 + $0x730] sm:$0xff]
    %v1643 = vld [vmem:[#allocation6 + $0x738] sm:$0xff]
    %v1644 = vld [vmem:[#allocation6 + $0x740] sm:$0xff]
    %v1645 = vld [vmem:[#allocation6 + $0x748] sm:$0xff]
    %v1646 = vld [vmem:[#allocation6 + $0x750] sm:$0xff]
    %v1647 = vld [vmem:[#allocation6 + $0x758] sm:$0xff]
    %v1648 = vld [vmem:[#allocation6 + $0x760] sm:$0xff]
    %v1649 = vld [vmem:[#allocation6 + $0x768] sm:$0xff]
    %v1650 = vld [vmem:[#allocation6 + $0x770] sm:$0xff]
    %v1651 = vld [vmem:[#allocation6 + $0x778] sm:$0xff]
    %v1652 = vld [vmem:[#allocation6 + $0x780] sm:$0xff]
    %v1653 = vld [vmem:[#allocation6 + $0x788] sm:$0xff]
    %v1654 = vld [vmem:[#allocation6 + $0x790] sm:$0xff]
    %v1655 = vld [vmem:[#allocation6 + $0x798] sm:$0xff]
    %v1656 = vld [vmem:[#allocation6 + $0x7a0] sm:$0xff]
    %v1657 = vld [vmem:[#allocation6 + $0x7a8] sm:$0xff]
    %v1658 = vld [vmem:[#allocation6 + $0x7b0] sm:$0xff]
    %v1659 = vld [vmem:[#allocation6 + $0x7b8] sm:$0xff]
    %v1660 = vld [vmem:[#allocation6 + $0x7c0] sm:$0xff]
    %v1661 = vld [vmem:[#allocation6 + $0x7c8] sm:$0xff]
    %v1662 = vld [vmem:[#allocation6 + $0x7d0] sm:$0xff]
    %v1663 = vld [vmem:[#allocation6 + $0x7d8] sm:$0xff]
    %v1664 = vld [vmem:[#allocation6 + $0x7e0] sm:$0xff]
    %v1665 = vld [vmem:[#allocation6 + $0x7e8] sm:$0xff]
    %v1666 = vld [vmem:[#allocation6 + $0x7f0] sm:$0xff]
    %v1667 = vld [vmem:[#allocation6 + $0x7f8] sm:$0xff]
    %v1924 = vunpack.c.l.b16 %v1412
    %v1925 = vunpack.c.h.b16 %v1412
    %v1926 = vunpack.c.l.b16 %v1413
    %v1927 = vunpack.c.h.b16 %v1413
    %v1928 = vunpack.c.l.b16 %v1414
    %v1929 = vunpack.c.h.b16 %v1414
    %v1930 = vunpack.c.l.b16 %v1415
    %v1931 = vunpack.c.h.b16 %v1415
    %v1932 = vunpack.c.l.b16 %v1416
    %v1933 = vunpack.c.h.b16 %v1416
    %v1934 = vunpack.c.l.b16 %v1417
    %v1935 = vunpack.c.h.b16 %v1417
    %v1936 = vunpack.c.l.b16 %v1418
    %v1937 = vunpack.c.h.b16 %v1418
    %v1938 = vunpack.c.l.b16 %v1419
    %v1939 = vunpack.c.h.b16 %v1419
    %v1940 = vunpack.c.l.b16 %v1420
    %v1941 = vunpack.c.h.b16 %v1420
    %v1942 = vunpack.c.l.b16 %v1421
    %v1943 = vunpack.c.h.b16 %v1421
    %v1944 = vunpack.c.l.b16 %v1422
    %v1945 = vunpack.c.h.b16 %v1422
    %v1946 = vunpack.c.l.b16 %v1423
    %v1947 = vunpack.c.h.b16 %v1423
    %v1948 = vunpack.c.l.b16 %v1424
    %v1949 = vunpack.c.h.b16 %v1424
    %v1950 = vunpack.c.l.b16 %v1425
    %v1951 = vunpack.c.h.b16 %v1425
    %v1952 = vunpack.c.l.b16 %v1426
    %v1953 = vunpack.c.h.b16 %v1426
    %v1954 = vunpack.c.l.b16 %v1427
    %v1955 = vunpack.c.h.b16 %v1427
    %v1956 = vunpack.c.l.b16 %v1428
    %v1957 = vunpack.c.h.b16 %v1428
    %v1958 = vunpack.c.l.b16 %v1429
    %v1959 = vunpack.c.h.b16 %v1429
    %v1960 = vunpack.c.l.b16 %v1430
    %v1961 = vunpack.c.h.b16 %v1430
    %v1962 = vunpack.c.l.b16 %v1431
    %v1963 = vunpack.c.h.b16 %v1431
    %v1964 = vunpack.c.l.b16 %v1432
    %v1965 = vunpack.c.h.b16 %v1432
    %v1966 = vunpack.c.l.b16 %v1433
    %v1967 = vunpack.c.h.b16 %v1433
    %v1968 = vunpack.c.l.b16 %v1434
    %v1969 = vunpack.c.h.b16 %v1434
    %v1970 = vunpack.c.l.b16 %v1435
    %v1971 = vunpack.c.h.b16 %v1435
    %v1972 = vunpack.c.l.b16 %v1436
    %v1973 = vunpack.c.h.b16 %v1436
    %v1974 = vunpack.c.l.b16 %v1437
    %v1975 = vunpack.c.h.b16 %v1437
    %v1976 = vunpack.c.l.b16 %v1438
    %v1977 = vunpack.c.h.b16 %v1438
    %v1978 = vunpack.c.l.b16 %v1439
    %v1979 = vunpack.c.h.b16 %v1439
    %v1980 = vunpack.c.l.b16 %v1440
    %v1981 = vunpack.c.h.b16 %v1440
    %v1982 = vunpack.c.l.b16 %v1441
    %v1983 = vunpack.c.h.b16 %v1441
    %v1984 = vunpack.c.l.b16 %v1442
    %v1985 = vunpack.c.h.b16 %v1442
    %v1986 = vunpack.c.l.b16 %v1443
    %v1987 = vunpack.c.h.b16 %v1443
    %v1988 = vunpack.c.l.b16 %v1444
    %v1989 = vunpack.c.h.b16 %v1444
    %v1990 = vunpack.c.l.b16 %v1445
    %v1991 = vunpack.c.h.b16 %v1445
    %v1992 = vunpack.c.l.b16 %v1446
    %v1993 = vunpack.c.h.b16 %v1446
    %v1994 = vunpack.c.l.b16 %v1447
    %v1995 = vunpack.c.h.b16 %v1447
    %v1996 = vunpack.c.l.b16 %v1448
    %v1997 = vunpack.c.h.b16 %v1448
    %v1998 = vunpack.c.l.b16 %v1449
    %v1999 = vunpack.c.h.b16 %v1449
    %v2000 = vunpack.c.l.b16 %v1450
    %v2001 = vunpack.c.h.b16 %v1450
    %v2002 = vunpack.c.l.b16 %v1451
    %v2003 = vunpack.c.h.b16 %v1451
    %v2004 = vunpack.c.l.b16 %v1452
    %v2005 = vunpack.c.h.b16 %v1452
    %v2006 = vunpack.c.l.b16 %v1453
    %v2007 = vunpack.c.h.b16 %v1453
    %v2008 = vunpack.c.l.b16 %v1454
    %v2009 = vunpack.c.h.b16 %v1454
    %v2010 = vunpack.c.l.b16 %v1455
    %v2011 = vunpack.c.h.b16 %v1455
    %v2012 = vunpack.c.l.b16 %v1456
    %v2013 = vunpack.c.h.b16 %v1456
    %v2014 = vunpack.c.l.b16 %v1457
    %v2015 = vunpack.c.h.b16 %v1457
    %v2016 = vunpack.c.l.b16 %v1458
    %v2017 = vunpack.c.h.b16 %v1458
    %v2018 = vunpack.c.l.b16 %v1459
    %v2019 = vunpack.c.h.b16 %v1459
    %v2020 = vunpack.c.l.b16 %v1460
    %v2021 = vunpack.c.h.b16 %v1460
    %v2022 = vunpack.c.l.b16 %v1461
    %v2023 = vunpack.c.h.b16 %v1461
    %v2024 = vunpack.c.l.b16 %v1462
    %v2025 = vunpack.c.h.b16 %v1462
    %v2026 = vunpack.c.l.b16 %v1463
    %v2027 = vunpack.c.h.b16 %v1463
    %v2028 = vunpack.c.l.b16 %v1464
    %v2029 = vunpack.c.h.b16 %v1464
    %v2030 = vunpack.c.l.b16 %v1465
    %v2031 = vunpack.c.h.b16 %v1465
    %v2032 = vunpack.c.l.b16 %v1466
    %v2033 = vunpack.c.h.b16 %v1466
    %v2034 = vunpack.c.l.b16 %v1467
    %v2035 = vunpack.c.h.b16 %v1467
    %v2036 = vunpack.c.l.b16 %v1468
    %v2037 = vunpack.c.h.b16 %v1468
    %v2038 = vunpack.c.l.b16 %v1469
    %v2039 = vunpack.c.h.b16 %v1469
    %v2040 = vunpack.c.l.b16 %v1470
    %v2041 = vunpack.c.h.b16 %v1470
    %v2042 = vunpack.c.l.b16 %v1471
    %v2043 = vunpack.c.h.b16 %v1471
    %v2044 = vunpack.c.l.b16 %v1472
    %v2045 = vunpack.c.h.b16 %v1472
    %v2046 = vunpack.c.l.b16 %v1473
    %v2047 = vunpack.c.h.b16 %v1473
    %v2048 = vunpack.c.l.b16 %v1474
    %v2049 = vunpack.c.h.b16 %v1474
    %v2050 = vunpack.c.l.b16 %v1475
    %v2051 = vunpack.c.h.b16 %v1475
    %v2052 = vunpack.c.l.b16 %v1476
    %v2053 = vunpack.c.h.b16 %v1476
    %v2054 = vunpack.c.l.b16 %v1477
    %v2055 = vunpack.c.h.b16 %v1477
    %v2056 = vunpack.c.l.b16 %v1478
    %v2057 = vunpack.c.h.b16 %v1478
    %v2058 = vunpack.c.l.b16 %v1479
    %v2059 = vunpack.c.h.b16 %v1479
    %v2060 = vunpack.c.l.b16 %v1480
    %v2061 = vunpack.c.h.b16 %v1480
    %v2062 = vunpack.c.l.b16 %v1481
    %v2063 = vunpack.c.h.b16 %v1481
    %v2064 = vunpack.c.l.b16 %v1482
    %v2065 = vunpack.c.h.b16 %v1482
    %v2066 = vunpack.c.l.b16 %v1483
    %v2067 = vunpack.c.h.b16 %v1483
    %v2068 = vunpack.c.l.b16 %v1484
    %v2069 = vunpack.c.h.b16 %v1484
    %v2070 = vunpack.c.l.b16 %v1485
    %v2071 = vunpack.c.h.b16 %v1485
    %v2072 = vunpack.c.l.b16 %v1486
    %v2073 = vunpack.c.h.b16 %v1486
    %v2074 = vunpack.c.l.b16 %v1487
    %v2075 = vunpack.c.h.b16 %v1487
    %v2076 = vunpack.c.l.b16 %v1488
    %v2077 = vunpack.c.h.b16 %v1488
    %v2078 = vunpack.c.l.b16 %v1489
    %v2079 = vunpack.c.h.b16 %v1489
    %v2080 = vunpack.c.l.b16 %v1490
    %v2081 = vunpack.c.h.b16 %v1490
    %v2082 = vunpack.c.l.b16 %v1491
    %v2083 = vunpack.c.h.b16 %v1491
    %v2084 = vunpack.c.l.b16 %v1492
    %v2085 = vunpack.c.h.b16 %v1492
    %v2086 = vunpack.c.l.b16 %v1493
    %v2087 = vunpack.c.h.b16 %v1493
    %v2088 = vunpack.c.l.b16 %v1494
    %v2089 = vunpack.c.h.b16 %v1494
    %v2090 = vunpack.c.l.b16 %v1495
    %v2091 = vunpack.c.h.b16 %v1495
    %v2092 = vunpack.c.l.b16 %v1496
    %v2093 = vunpack.c.h.b16 %v1496
    %v2094 = vunpack.c.l.b16 %v1497
    %v2095 = vunpack.c.h.b16 %v1497
    %v2096 = vunpack.c.l.b16 %v1498
    %v2097 = vunpack.c.h.b16 %v1498
    %v2098 = vunpack.c.l.b16 %v1499
    %v2099 = vunpack.c.h.b16 %v1499
    %v2100 = vunpack.c.l.b16 %v1500
    %v2101 = vunpack.c.h.b16 %v1500
    %v2102 = vunpack.c.l.b16 %v1501
    %v2103 = vunpack.c.h.b16 %v1501
    %v2104 = vunpack.c.l.b16 %v1502
    %v2105 = vunpack.c.h.b16 %v1502
    %v2106 = vunpack.c.l.b16 %v1503
    %v2107 = vunpack.c.h.b16 %v1503
    %v2108 = vunpack.c.l.b16 %v1504
    %v2109 = vunpack.c.h.b16 %v1504
    %v2110 = vunpack.c.l.b16 %v1505
    %v2111 = vunpack.c.h.b16 %v1505
    %v2112 = vunpack.c.l.b16 %v1506
    %v2113 = vunpack.c.h.b16 %v1506
    %v2114 = vunpack.c.l.b16 %v1507
    %v2115 = vunpack.c.h.b16 %v1507
    %v2116 = vunpack.c.l.b16 %v1508
    %v2117 = vunpack.c.h.b16 %v1508
    %v2118 = vunpack.c.l.b16 %v1509
    %v2119 = vunpack.c.h.b16 %v1509
    %v2120 = vunpack.c.l.b16 %v1510
    %v2121 = vunpack.c.h.b16 %v1510
    %v2122 = vunpack.c.l.b16 %v1511
    %v2123 = vunpack.c.h.b16 %v1511
    %v2124 = vunpack.c.l.b16 %v1512
    %v2125 = vunpack.c.h.b16 %v1512
    %v2126 = vunpack.c.l.b16 %v1513
    %v2127 = vunpack.c.h.b16 %v1513
    %v2128 = vunpack.c.l.b16 %v1514
    %v2129 = vunpack.c.h.b16 %v1514
    %v2130 = vunpack.c.l.b16 %v1515
    %v2131 = vunpack.c.h.b16 %v1515
    %v2132 = vunpack.c.l.b16 %v1516
    %v2133 = vunpack.c.h.b16 %v1516
    %v2134 = vunpack.c.l.b16 %v1517
    %v2135 = vunpack.c.h.b16 %v1517
    %v2136 = vunpack.c.l.b16 %v1518
    %v2137 = vunpack.c.h.b16 %v1518
    %v2138 = vunpack.c.l.b16 %v1519
    %v2139 = vunpack.c.h.b16 %v1519
    %v2140 = vunpack.c.l.b16 %v1520
    %v2141 = vunpack.c.h.b16 %v1520
    %v2142 = vunpack.c.l.b16 %v1521
    %v2143 = vunpack.c.h.b16 %v1521
    %v2144 = vunpack.c.l.b16 %v1522
    %v2145 = vunpack.c.h.b16 %v1522
    %v2146 = vunpack.c.l.b16 %v1523
    %v2147 = vunpack.c.h.b16 %v1523
    %v2148 = vunpack.c.l.b16 %v1524
    %v2149 = vunpack.c.h.b16 %v1524
    %v2150 = vunpack.c.l.b16 %v1525
    %v2151 = vunpack.c.h.b16 %v1525
    %v2152 = vunpack.c.l.b16 %v1526
    %v2153 = vunpack.c.h.b16 %v1526
    %v2154 = vunpack.c.l.b16 %v1527
    %v2155 = vunpack.c.h.b16 %v1527
    %v2156 = vunpack.c.l.b16 %v1528
    %v2157 = vunpack.c.h.b16 %v1528
    %v2158 = vunpack.c.l.b16 %v1529
    %v2159 = vunpack.c.h.b16 %v1529
    %v2160 = vunpack.c.l.b16 %v1530
    %v2161 = vunpack.c.h.b16 %v1530
    %v2162 = vunpack.c.l.b16 %v1531
    %v2163 = vunpack.c.h.b16 %v1531
    %v2164 = vunpack.c.l.b16 %v1532
    %v2165 = vunpack.c.h.b16 %v1532
    %v2166 = vunpack.c.l.b16 %v1533
    %v2167 = vunpack.c.h.b16 %v1533
    %v2168 = vunpack.c.l.b16 %v1534
    %v2169 = vunpack.c.h.b16 %v1534
    %v2170 = vunpack.c.l.b16 %v1535
    %v2171 = vunpack.c.h.b16 %v1535
    %v2172 = vunpack.c.l.b16 %v1536
    %v2173 = vunpack.c.h.b16 %v1536
    %v2174 = vunpack.c.l.b16 %v1537
    %v2175 = vunpack.c.h.b16 %v1537
    %v2176 = vunpack.c.l.b16 %v1538
    %v2177 = vunpack.c.h.b16 %v1538
    %v2178 = vunpack.c.l.b16 %v1539
    %v2179 = vunpack.c.h.b16 %v1539
    %v2180 = vunpack.c.l.b16 %v1540
    %v2181 = vunpack.c.h.b16 %v1540
    %v2182 = vunpack.c.l.b16 %v1541
    %v2183 = vunpack.c.h.b16 %v1541
    %v2184 = vunpack.c.l.b16 %v1542
    %v2185 = vunpack.c.h.b16 %v1542
    %v2186 = vunpack.c.l.b16 %v1543
    %v2187 = vunpack.c.h.b16 %v1543
    %v2188 = vunpack.c.l.b16 %v1544
    %v2189 = vunpack.c.h.b16 %v1544
    %v2190 = vunpack.c.l.b16 %v1545
    %v2191 = vunpack.c.h.b16 %v1545
    %v2192 = vunpack.c.l.b16 %v1546
    %v2193 = vunpack.c.h.b16 %v1546
    %v2194 = vunpack.c.l.b16 %v1547
    %v2195 = vunpack.c.h.b16 %v1547
    %v2196 = vunpack.c.l.b16 %v1548
    %v2197 = vunpack.c.h.b16 %v1548
    %v2198 = vunpack.c.l.b16 %v1549
    %v2199 = vunpack.c.h.b16 %v1549
    %v2200 = vunpack.c.l.b16 %v1550
    %v2201 = vunpack.c.h.b16 %v1550
    %v2202 = vunpack.c.l.b16 %v1551
    %v2203 = vunpack.c.h.b16 %v1551
    %v2204 = vunpack.c.l.b16 %v1552
    %v2205 = vunpack.c.h.b16 %v1552
    %v2206 = vunpack.c.l.b16 %v1553
    %v2207 = vunpack.c.h.b16 %v1553
    %v2208 = vunpack.c.l.b16 %v1554
    %v2209 = vunpack.c.h.b16 %v1554
    %v2210 = vunpack.c.l.b16 %v1555
    %v2211 = vunpack.c.h.b16 %v1555
    %v2212 = vunpack.c.l.b16 %v1556
    %v2213 = vunpack.c.h.b16 %v1556
    %v2214 = vunpack.c.l.b16 %v1557
    %v2215 = vunpack.c.h.b16 %v1557
    %v2216 = vunpack.c.l.b16 %v1558
    %v2217 = vunpack.c.h.b16 %v1558
    %v2218 = vunpack.c.l.b16 %v1559
    %v2219 = vunpack.c.h.b16 %v1559
    %v2220 = vunpack.c.l.b16 %v1560
    %v2221 = vunpack.c.h.b16 %v1560
    %v2222 = vunpack.c.l.b16 %v1561
    %v2223 = vunpack.c.h.b16 %v1561
    %v2224 = vunpack.c.l.b16 %v1562
    %v2225 = vunpack.c.h.b16 %v1562
    %v2226 = vunpack.c.l.b16 %v1563
    %v2227 = vunpack.c.h.b16 %v1563
    %v2228 = vunpack.c.l.b16 %v1564
    %v2229 = vunpack.c.h.b16 %v1564
    %v2230 = vunpack.c.l.b16 %v1565
    %v2231 = vunpack.c.h.b16 %v1565
    %v2232 = vunpack.c.l.b16 %v1566
    %v2233 = vunpack.c.h.b16 %v1566
    %v2234 = vunpack.c.l.b16 %v1567
    %v2235 = vunpack.c.h.b16 %v1567
    %v2236 = vunpack.c.l.b16 %v1568
    %v2237 = vunpack.c.h.b16 %v1568
    %v2238 = vunpack.c.l.b16 %v1569
    %v2239 = vunpack.c.h.b16 %v1569
    %v2240 = vunpack.c.l.b16 %v1570
    %v2241 = vunpack.c.h.b16 %v1570
    %v2242 = vunpack.c.l.b16 %v1571
    %v2243 = vunpack.c.h.b16 %v1571
    %v2244 = vunpack.c.l.b16 %v1572
    %v2245 = vunpack.c.h.b16 %v1572
    %v2246 = vunpack.c.l.b16 %v1573
    %v2247 = vunpack.c.h.b16 %v1573
    %v2248 = vunpack.c.l.b16 %v1574
    %v2249 = vunpack.c.h.b16 %v1574
    %v2250 = vunpack.c.l.b16 %v1575
    %v2251 = vunpack.c.h.b16 %v1575
    %v2252 = vunpack.c.l.b16 %v1576
    %v2253 = vunpack.c.h.b16 %v1576
    %v2254 = vunpack.c.l.b16 %v1577
    %v2255 = vunpack.c.h.b16 %v1577
    %v2256 = vunpack.c.l.b16 %v1578
    %v2257 = vunpack.c.h.b16 %v1578
    %v2258 = vunpack.c.l.b16 %v1579
    %v2259 = vunpack.c.h.b16 %v1579
    %v2260 = vunpack.c.l.b16 %v1580
    %v2261 = vunpack.c.h.b16 %v1580
    %v2262 = vunpack.c.l.b16 %v1581
    %v2263 = vunpack.c.h.b16 %v1581
    %v2264 = vunpack.c.l.b16 %v1582
    %v2265 = vunpack.c.h.b16 %v1582
    %v2266 = vunpack.c.l.b16 %v1583
    %v2267 = vunpack.c.h.b16 %v1583
    %v2268 = vunpack.c.l.b16 %v1584
    %v2269 = vunpack.c.h.b16 %v1584
    %v2270 = vunpack.c.l.b16 %v1585
    %v2271 = vunpack.c.h.b16 %v1585
    %v2272 = vunpack.c.l.b16 %v1586
    %v2273 = vunpack.c.h.b16 %v1586
    %v2274 = vunpack.c.l.b16 %v1587
    %v2275 = vunpack.c.h.b16 %v1587
    %v2276 = vunpack.c.l.b16 %v1588
    %v2277 = vunpack.c.h.b16 %v1588
    %v2278 = vunpack.c.l.b16 %v1589
    %v2279 = vunpack.c.h.b16 %v1589
    %v2280 = vunpack.c.l.b16 %v1590
    %v2281 = vunpack.c.h.b16 %v1590
    %v2282 = vunpack.c.l.b16 %v1591
    %v2283 = vunpack.c.h.b16 %v1591
    %v2284 = vunpack.c.l.b16 %v1592
    %v2285 = vunpack.c.h.b16 %v1592
    %v2286 = vunpack.c.l.b16 %v1593
    %v2287 = vunpack.c.h.b16 %v1593
    %v2288 = vunpack.c.l.b16 %v1594
    %v2289 = vunpack.c.h.b16 %v1594
    %v2290 = vunpack.c.l.b16 %v1595
    %v2291 = vunpack.c.h.b16 %v1595
    %v2292 = vunpack.c.l.b16 %v1596
    %v2293 = vunpack.c.h.b16 %v1596
    %v2294 = vunpack.c.l.b16 %v1597
    %v2295 = vunpack.c.h.b16 %v1597
    %v2296 = vunpack.c.l.b16 %v1598
    %v2297 = vunpack.c.h.b16 %v1598
    %v2298 = vunpack.c.l.b16 %v1599
    %v2299 = vunpack.c.h.b16 %v1599
    %v2300 = vunpack.c.l.b16 %v1600
    %v2301 = vunpack.c.h.b16 %v1600
    %v2302 = vunpack.c.l.b16 %v1601
    %v2303 = vunpack.c.h.b16 %v1601
    %v2304 = vunpack.c.l.b16 %v1602
    %v2305 = vunpack.c.h.b16 %v1602
    %v2306 = vunpack.c.l.b16 %v1603
    %v2307 = vunpack.c.h.b16 %v1603
    %v2308 = vunpack.c.l.b16 %v1604
    %v2309 = vunpack.c.h.b16 %v1604
    %v2310 = vunpack.c.l.b16 %v1605
    %v2311 = vunpack.c.h.b16 %v1605
    %v2312 = vunpack.c.l.b16 %v1606
    %v2313 = vunpack.c.h.b16 %v1606
    %v2314 = vunpack.c.l.b16 %v1607
    %v2315 = vunpack.c.h.b16 %v1607
    %v2316 = vunpack.c.l.b16 %v1608
    %v2317 = vunpack.c.h.b16 %v1608
    %v2318 = vunpack.c.l.b16 %v1609
    %v2319 = vunpack.c.h.b16 %v1609
    %v2320 = vunpack.c.l.b16 %v1610
    %v2321 = vunpack.c.h.b16 %v1610
    %v2322 = vunpack.c.l.b16 %v1611
    %v2323 = vunpack.c.h.b16 %v1611
    %v2324 = vunpack.c.l.b16 %v1612
    %v2325 = vunpack.c.h.b16 %v1612
    %v2326 = vunpack.c.l.b16 %v1613
    %v2327 = vunpack.c.h.b16 %v1613
    %v2328 = vunpack.c.l.b16 %v1614
    %v2329 = vunpack.c.h.b16 %v1614
    %v2330 = vunpack.c.l.b16 %v1615
    %v2331 = vunpack.c.h.b16 %v1615
    %v2332 = vunpack.c.l.b16 %v1616
    %v2333 = vunpack.c.h.b16 %v1616
    %v2334 = vunpack.c.l.b16 %v1617
    %v2335 = vunpack.c.h.b16 %v1617
    %v2336 = vunpack.c.l.b16 %v1618
    %v2337 = vunpack.c.h.b16 %v1618
    %v2338 = vunpack.c.l.b16 %v1619
    %v2339 = vunpack.c.h.b16 %v1619
    %v2340 = vunpack.c.l.b16 %v1620
    %v2341 = vunpack.c.h.b16 %v1620
    %v2342 = vunpack.c.l.b16 %v1621
    %v2343 = vunpack.c.h.b16 %v1621
    %v2344 = vunpack.c.l.b16 %v1622
    %v2345 = vunpack.c.h.b16 %v1622
    %v2346 = vunpack.c.l.b16 %v1623
    %v2347 = vunpack.c.h.b16 %v1623
    %v2348 = vunpack.c.l.b16 %v1624
    %v2349 = vunpack.c.h.b16 %v1624
    %v2350 = vunpack.c.l.b16 %v1625
    %v2351 = vunpack.c.h.b16 %v1625
    %v2352 = vunpack.c.l.b16 %v1626
    %v2353 = vunpack.c.h.b16 %v1626
    %v2354 = vunpack.c.l.b16 %v1627
    %v2355 = vunpack.c.h.b16 %v1627
    %v2356 = vunpack.c.l.b16 %v1628
    %v2357 = vunpack.c.h.b16 %v1628
    %v2358 = vunpack.c.l.b16 %v1629
    %v2359 = vunpack.c.h.b16 %v1629
    %v2360 = vunpack.c.l.b16 %v1630
    %v2361 = vunpack.c.h.b16 %v1630
    %v2362 = vunpack.c.l.b16 %v1631
    %v2363 = vunpack.c.h.b16 %v1631
    %v2364 = vunpack.c.l.b16 %v1632
    %v2365 = vunpack.c.h.b16 %v1632
    %v2366 = vunpack.c.l.b16 %v1633
    %v2367 = vunpack.c.h.b16 %v1633
    %v2368 = vunpack.c.l.b16 %v1634
    %v2369 = vunpack.c.h.b16 %v1634
    %v2370 = vunpack.c.l.b16 %v1635
    %v2371 = vunpack.c.h.b16 %v1635
    %v2372 = vunpack.c.l.b16 %v1636
    %v2373 = vunpack.c.h.b16 %v1636
    %v2374 = vunpack.c.l.b16 %v1637
    %v2375 = vunpack.c.h.b16 %v1637
    %v2376 = vunpack.c.l.b16 %v1638
    %v2377 = vunpack.c.h.b16 %v1638
    %v2378 = vunpack.c.l.b16 %v1639
    %v2379 = vunpack.c.h.b16 %v1639
    %v2380 = vunpack.c.l.b16 %v1640
    %v2381 = vunpack.c.h.b16 %v1640
    %v2382 = vunpack.c.l.b16 %v1641
    %v2383 = vunpack.c.h.b16 %v1641
    %v2384 = vunpack.c.l.b16 %v1642
    %v2385 = vunpack.c.h.b16 %v1642
    %v2386 = vunpack.c.l.b16 %v1643
    %v2387 = vunpack.c.h.b16 %v1643
    %v2388 = vunpack.c.l.b16 %v1644
    %v2389 = vunpack.c.h.b16 %v1644
    %v2390 = vunpack.c.l.b16 %v1645
    %v2391 = vunpack.c.h.b16 %v1645
    %v2392 = vunpack.c.l.b16 %v1646
    %v2393 = vunpack.c.h.b16 %v1646
    %v2394 = vunpack.c.l.b16 %v1647
    %v2395 = vunpack.c.h.b16 %v1647
    %v2396 = vunpack.c.l.b16 %v1648
    %v2397 = vunpack.c.h.b16 %v1648
    %v2398 = vunpack.c.l.b16 %v1649
    %v2399 = vunpack.c.h.b16 %v1649
    %v2400 = vunpack.c.l.b16 %v1650
    %v2401 = vunpack.c.h.b16 %v1650
    %v2402 = vunpack.c.l.b16 %v1651
    %v2403 = vunpack.c.h.b16 %v1651
    %v2404 = vunpack.c.l.b16 %v1652
    %v2405 = vunpack.c.h.b16 %v1652
    %v2406 = vunpack.c.l.b16 %v1653
    %v2407 = vunpack.c.h.b16 %v1653
    %v2408 = vunpack.c.l.b16 %v1654
    %v2409 = vunpack.c.h.b16 %v1654
    %v2410 = vunpack.c.l.b16 %v1655
    %v2411 = vunpack.c.h.b16 %v1655
    %v2412 = vunpack.c.l.b16 %v1656
    %v2413 = vunpack.c.h.b16 %v1656
    %v2414 = vunpack.c.l.b16 %v1657
    %v2415 = vunpack.c.h.b16 %v1657
    %v2416 = vunpack.c.l.b16 %v1658
    %v2417 = vunpack.c.h.b16 %v1658
    %v2418 = vunpack.c.l.b16 %v1659
    %v2419 = vunpack.c.h.b16 %v1659
    %v2420 = vunpack.c.l.b16 %v1660
    %v2421 = vunpack.c.h.b16 %v1660
    %v2422 = vunpack.c.l.b16 %v1661
    %v2423 = vunpack.c.h.b16 %v1661
    %v2424 = vunpack.c.l.b16 %v1662
    %v2425 = vunpack.c.h.b16 %v1662
    %v2426 = vunpack.c.l.b16 %v1663
    %v2427 = vunpack.c.h.b16 %v1663
    %v2428 = vunpack.c.l.b16 %v1664
    %v2429 = vunpack.c.h.b16 %v1664
    %v2430 = vunpack.c.l.b16 %v1665
    %v2431 = vunpack.c.h.b16 %v1665
    %v2432 = vunpack.c.l.b16 %v1666
    %v2433 = vunpack.c.h.b16 %v1666
    %v2434 = vunpack.c.l.b16 %v1667
    %v2435 = vunpack.c.h.b16 %v1667
    %v2436 = vpack.c.b16 %v1932, %v1924
    %v2437 = vpack.c.b16 %v1933, %v1925
    %v2438 = vpack.c.b16 %v1934, %v1926
    %v2439 = vpack.c.b16 %v1935, %v1927
    %v2440 = vpack.c.b16 %v1936, %v1928
    %v2441 = vpack.c.b16 %v1937, %v1929
    %v2442 = vpack.c.b16 %v1938, %v1930
    %v2443 = vpack.c.b16 %v1939, %v1931
    %v2444 = vpack.c.b16 %v1948, %v1940
    %v2445 = vpack.c.b16 %v1949, %v1941
    %v2446 = vpack.c.b16 %v1950, %v1942
    %v2447 = vpack.c.b16 %v1951, %v1943
    %v2448 = vpack.c.b16 %v1952, %v1944
    %v2449 = vpack.c.b16 %v1953, %v1945
    %v2450 = vpack.c.b16 %v1954, %v1946
    %v2451 = vpack.c.b16 %v1955, %v1947
    %v2452 = vpack.c.b16 %v1964, %v1956
    %v2453 = vpack.c.b16 %v1965, %v1957
    %v2454 = vpack.c.b16 %v1966, %v1958
    %v2455 = vpack.c.b16 %v1967, %v1959
    %v2456 = vpack.c.b16 %v1968, %v1960
    %v2457 = vpack.c.b16 %v1969, %v1961
    %v2458 = vpack.c.b16 %v1970, %v1962
    %v2459 = vpack.c.b16 %v1971, %v1963
    %v2460 = vpack.c.b16 %v1980, %v1972
    %v2461 = vpack.c.b16 %v1981, %v1973
    %v2462 = vpack.c.b16 %v1982, %v1974
    %v2463 = vpack.c.b16 %v1983, %v1975
    %v2464 = vpack.c.b16 %v1984, %v1976
    %v2465 = vpack.c.b16 %v1985, %v1977
    %v2466 = vpack.c.b16 %v1986, %v1978
    %v2467 = vpack.c.b16 %v1987, %v1979
    %v2468 = vpack.c.b16 %v1996, %v1988
    %v2469 = vpack.c.b16 %v1997, %v1989
    %v2470 = vpack.c.b16 %v1998, %v1990
    %v2471 = vpack.c.b16 %v1999, %v1991
    %v2472 = vpack.c.b16 %v2000, %v1992
    %v2473 = vpack.c.b16 %v2001, %v1993
    %v2474 = vpack.c.b16 %v2002, %v1994
    %v2475 = vpack.c.b16 %v2003, %v1995
    %v2476 = vpack.c.b16 %v2012, %v2004
    %v2477 = vpack.c.b16 %v2013, %v2005
    %v2478 = vpack.c.b16 %v2014, %v2006
    %v2479 = vpack.c.b16 %v2015, %v2007
    %v2480 = vpack.c.b16 %v2016, %v2008
    %v2481 = vpack.c.b16 %v2017, %v2009
    %v2482 = vpack.c.b16 %v2018, %v2010
    %v2483 = vpack.c.b16 %v2019, %v2011
    %v2484 = vpack.c.b16 %v2028, %v2020
    %v2485 = vpack.c.b16 %v2029, %v2021
    %v2486 = vpack.c.b16 %v2030, %v2022
    %v2487 = vpack.c.b16 %v2031, %v2023
    %v2488 = vpack.c.b16 %v2032, %v2024
    %v2489 = vpack.c.b16 %v2033, %v2025
    %v2490 = vpack.c.b16 %v2034, %v2026
    %v2491 = vpack.c.b16 %v2035, %v2027
    %v2492 = vpack.c.b16 %v2044, %v2036
    %v2493 = vpack.c.b16 %v2045, %v2037
    %v2494 = vpack.c.b16 %v2046, %v2038
    %v2495 = vpack.c.b16 %v2047, %v2039
    %v2496 = vpack.c.b16 %v2048, %v2040
    %v2497 = vpack.c.b16 %v2049, %v2041
    %v2498 = vpack.c.b16 %v2050, %v2042
    %v2499 = vpack.c.b16 %v2051, %v2043
    %v2500 = vpack.c.b16 %v2060, %v2052
    %v2501 = vpack.c.b16 %v2061, %v2053
    %v2502 = vpack.c.b16 %v2062, %v2054
    %v2503 = vpack.c.b16 %v2063, %v2055
    %v2504 = vpack.c.b16 %v2064, %v2056
    %v2505 = vpack.c.b16 %v2065, %v2057
    %v2506 = vpack.c.b16 %v2066, %v2058
    %v2507 = vpack.c.b16 %v2067, %v2059
    %v2508 = vpack.c.b16 %v2076, %v2068
    %v2509 = vpack.c.b16 %v2077, %v2069
    %v2510 = vpack.c.b16 %v2078, %v2070
    %v2511 = vpack.c.b16 %v2079, %v2071
    %v2512 = vpack.c.b16 %v2080, %v2072
    %v2513 = vpack.c.b16 %v2081, %v2073
    %v2514 = vpack.c.b16 %v2082, %v2074
    %v2515 = vpack.c.b16 %v2083, %v2075
    %v2516 = vpack.c.b16 %v2092, %v2084
    %v2517 = vpack.c.b16 %v2093, %v2085
    %v2518 = vpack.c.b16 %v2094, %v2086
    %v2519 = vpack.c.b16 %v2095, %v2087
    %v2520 = vpack.c.b16 %v2096, %v2088
    %v2521 = vpack.c.b16 %v2097, %v2089
    %v2522 = vpack.c.b16 %v2098, %v2090
    %v2523 = vpack.c.b16 %v2099, %v2091
    %v2524 = vpack.c.b16 %v2108, %v2100
    %v2525 = vpack.c.b16 %v2109, %v2101
    %v2526 = vpack.c.b16 %v2110, %v2102
    %v2527 = vpack.c.b16 %v2111, %v2103
    %v2528 = vpack.c.b16 %v2112, %v2104
    %v2529 = vpack.c.b16 %v2113, %v2105
    %v2530 = vpack.c.b16 %v2114, %v2106
    %v2531 = vpack.c.b16 %v2115, %v2107
    %v2532 = vpack.c.b16 %v2124, %v2116
    %v2533 = vpack.c.b16 %v2125, %v2117
    %v2534 = vpack.c.b16 %v2126, %v2118
    %v2535 = vpack.c.b16 %v2127, %v2119
    %v2536 = vpack.c.b16 %v2128, %v2120
    %v2537 = vpack.c.b16 %v2129, %v2121
    %v2538 = vpack.c.b16 %v2130, %v2122
    %v2539 = vpack.c.b16 %v2131, %v2123
    %v2540 = vpack.c.b16 %v2140, %v2132
    %v2541 = vpack.c.b16 %v2141, %v2133
    %v2542 = vpack.c.b16 %v2142, %v2134
    %v2543 = vpack.c.b16 %v2143, %v2135
    %v2544 = vpack.c.b16 %v2144, %v2136
    %v2545 = vpack.c.b16 %v2145, %v2137
    %v2546 = vpack.c.b16 %v2146, %v2138
    %v2547 = vpack.c.b16 %v2147, %v2139
    %v2548 = vpack.c.b16 %v2156, %v2148
    %v2549 = vpack.c.b16 %v2157, %v2149
    %v2550 = vpack.c.b16 %v2158, %v2150
    %v2551 = vpack.c.b16 %v2159, %v2151
    %v2552 = vpack.c.b16 %v2160, %v2152
    %v2553 = vpack.c.b16 %v2161, %v2153
    %v2554 = vpack.c.b16 %v2162, %v2154
    %v2555 = vpack.c.b16 %v2163, %v2155
    %v2556 = vpack.c.b16 %v2172, %v2164
    %v2557 = vpack.c.b16 %v2173, %v2165
    %v2558 = vpack.c.b16 %v2174, %v2166
    %v2559 = vpack.c.b16 %v2175, %v2167
    %v2560 = vpack.c.b16 %v2176, %v2168
    %v2561 = vpack.c.b16 %v2177, %v2169
    %v2562 = vpack.c.b16 %v2178, %v2170
    %v2563 = vpack.c.b16 %v2179, %v2171
    %v2564 = vpack.c.b16 %v2188, %v2180
    %v2565 = vpack.c.b16 %v2189, %v2181
    %v2566 = vpack.c.b16 %v2190, %v2182
    %v2567 = vpack.c.b16 %v2191, %v2183
    %v2568 = vpack.c.b16 %v2192, %v2184
    %v2569 = vpack.c.b16 %v2193, %v2185
    %v2570 = vpack.c.b16 %v2194, %v2186
    %v2571 = vpack.c.b16 %v2195, %v2187
    %v2572 = vpack.c.b16 %v2204, %v2196
    %v2573 = vpack.c.b16 %v2205, %v2197
    %v2574 = vpack.c.b16 %v2206, %v2198
    %v2575 = vpack.c.b16 %v2207, %v2199
    %v2576 = vpack.c.b16 %v2208, %v2200
    %v2577 = vpack.c.b16 %v2209, %v2201
    %v2578 = vpack.c.b16 %v2210, %v2202
    %v2579 = vpack.c.b16 %v2211, %v2203
    %v2580 = vpack.c.b16 %v2220, %v2212
    %v2581 = vpack.c.b16 %v2221, %v2213
    %v2582 = vpack.c.b16 %v2222, %v2214
    %v2583 = vpack.c.b16 %v2223, %v2215
    %v2584 = vpack.c.b16 %v2224, %v2216
    %v2585 = vpack.c.b16 %v2225, %v2217
    %v2586 = vpack.c.b16 %v2226, %v2218
    %v2587 = vpack.c.b16 %v2227, %v2219
    %v2588 = vpack.c.b16 %v2236, %v2228
    %v2589 = vpack.c.b16 %v2237, %v2229
    %v2590 = vpack.c.b16 %v2238, %v2230
    %v2591 = vpack.c.b16 %v2239, %v2231
    %v2592 = vpack.c.b16 %v2240, %v2232
    %v2593 = vpack.c.b16 %v2241, %v2233
    %v2594 = vpack.c.b16 %v2242, %v2234
    %v2595 = vpack.c.b16 %v2243, %v2235
    %v2596 = vpack.c.b16 %v2252, %v2244
    %v2597 = vpack.c.b16 %v2253, %v2245
    %v2598 = vpack.c.b16 %v2254, %v2246
    %v2599 = vpack.c.b16 %v2255, %v2247
    %v2600 = vpack.c.b16 %v2256, %v2248
    %v2601 = vpack.c.b16 %v2257, %v2249
    %v2602 = vpack.c.b16 %v2258, %v2250
    %v2603 = vpack.c.b16 %v2259, %v2251
    %v2604 = vpack.c.b16 %v2268, %v2260
    %v2605 = vpack.c.b16 %v2269, %v2261
    %v2606 = vpack.c.b16 %v2270, %v2262
    %v2607 = vpack.c.b16 %v2271, %v2263
    %v2608 = vpack.c.b16 %v2272, %v2264
    %v2609 = vpack.c.b16 %v2273, %v2265
    %v2610 = vpack.c.b16 %v2274, %v2266
    %v2611 = vpack.c.b16 %v2275, %v2267
    %v2612 = vpack.c.b16 %v2284, %v2276
    %v2613 = vpack.c.b16 %v2285, %v2277
    %v2614 = vpack.c.b16 %v2286, %v2278
    %v2615 = vpack.c.b16 %v2287, %v2279
    %v2616 = vpack.c.b16 %v2288, %v2280
    %v2617 = vpack.c.b16 %v2289, %v2281
    %v2618 = vpack.c.b16 %v2290, %v2282
    %v2619 = vpack.c.b16 %v2291, %v2283
    %v2620 = vpack.c.b16 %v2300, %v2292
    %v2621 = vpack.c.b16 %v2301, %v2293
    %v2622 = vpack.c.b16 %v2302, %v2294
    %v2623 = vpack.c.b16 %v2303, %v2295
    %v2624 = vpack.c.b16 %v2304, %v2296
    %v2625 = vpack.c.b16 %v2305, %v2297
    %v2626 = vpack.c.b16 %v2306, %v2298
    %v2627 = vpack.c.b16 %v2307, %v2299
    %v2628 = vpack.c.b16 %v2316, %v2308
    %v2629 = vpack.c.b16 %v2317, %v2309
    %v2630 = vpack.c.b16 %v2318, %v2310
    %v2631 = vpack.c.b16 %v2319, %v2311
    %v2632 = vpack.c.b16 %v2320, %v2312
    %v2633 = vpack.c.b16 %v2321, %v2313
    %v2634 = vpack.c.b16 %v2322, %v2314
    %v2635 = vpack.c.b16 %v2323, %v2315
    %v2636 = vpack.c.b16 %v2332, %v2324
    %v2637 = vpack.c.b16 %v2333, %v2325
    %v2638 = vpack.c.b16 %v2334, %v2326
    %v2639 = vpack.c.b16 %v2335, %v2327
    %v2640 = vpack.c.b16 %v2336, %v2328
    %v2641 = vpack.c.b16 %v2337, %v2329
    %v2642 = vpack.c.b16 %v2338, %v2330
    %v2643 = vpack.c.b16 %v2339, %v2331
    %v2644 = vpack.c.b16 %v2348, %v2340
    %v2645 = vpack.c.b16 %v2349, %v2341
    %v2646 = vpack.c.b16 %v2350, %v2342
    %v2647 = vpack.c.b16 %v2351, %v2343
    %v2648 = vpack.c.b16 %v2352, %v2344
    %v2649 = vpack.c.b16 %v2353, %v2345
    %v2650 = vpack.c.b16 %v2354, %v2346
    %v2651 = vpack.c.b16 %v2355, %v2347
    %v2652 = vpack.c.b16 %v2364, %v2356
    %v2653 = vpack.c.b16 %v2365, %v2357
    %v2654 = vpack.c.b16 %v2366, %v2358
    %v2655 = vpack.c.b16 %v2367, %v2359
    %v2656 = vpack.c.b16 %v2368, %v2360
    %v2657 = vpack.c.b16 %v2369, %v2361
    %v2658 = vpack.c.b16 %v2370, %v2362
    %v2659 = vpack.c.b16 %v2371, %v2363
    %v2660 = vpack.c.b16 %v2380, %v2372
    %v2661 = vpack.c.b16 %v2381, %v2373
    %v2662 = vpack.c.b16 %v2382, %v2374
    %v2663 = vpack.c.b16 %v2383, %v2375
    %v2664 = vpack.c.b16 %v2384, %v2376
    %v2665 = vpack.c.b16 %v2385, %v2377
    %v2666 = vpack.c.b16 %v2386, %v2378
    %v2667 = vpack.c.b16 %v2387, %v2379
    %v2668 = vpack.c.b16 %v2396, %v2388
    %v2669 = vpack.c.b16 %v2397, %v2389
    %v2670 = vpack.c.b16 %v2398, %v2390
    %v2671 = vpack.c.b16 %v2399, %v2391
    %v2672 = vpack.c.b16 %v2400, %v2392
    %v2673 = vpack.c.b16 %v2401, %v2393
    %v2674 = vpack.c.b16 %v2402, %v2394
    %v2675 = vpack.c.b16 %v2403, %v2395
    %v2676 = vpack.c.b16 %v2412, %v2404
    %v2677 = vpack.c.b16 %v2413, %v2405
    %v2678 = vpack.c.b16 %v2414, %v2406
    %v2679 = vpack.c.b16 %v2415, %v2407
    %v2680 = vpack.c.b16 %v2416, %v2408
    %v2681 = vpack.c.b16 %v2417, %v2409
    %v2682 = vpack.c.b16 %v2418, %v2410
    %v2683 = vpack.c.b16 %v2419, %v2411
    %v2684 = vpack.c.b16 %v2428, %v2420
    %v2685 = vpack.c.b16 %v2429, %v2421
    %v2686 = vpack.c.b16 %v2430, %v2422
    %v2687 = vpack.c.b16 %v2431, %v2423
    %v2688 = vpack.c.b16 %v2432, %v2424
    %v2689 = vpack.c.b16 %v2433, %v2425
    %v2690 = vpack.c.b16 %v2434, %v2426
    %v2691 = vpack.c.b16 %v2435, %v2427
    %2948 = vmatprep.subr.bf16.mxu0 %v2437
    %2949 = vmatpush1.bf16.msra.mxu0 %v2436
    %2950 = vmatprep.subr.bf16.mxu0 %v2445
    %2951 = vmatpush1.bf16.msra.mxu0 %v2444
    %2952 = vmatprep.subr.bf16.mxu0 %v2453
    %2953 = vmatpush1.bf16.msra.mxu0 %v2452
    %2954 = vmatprep.subr.bf16.mxu0 %v2461
    %2955 = vmatpush1.bf16.msra.mxu0 %v2460
    %2956 = vmatprep.subr.bf16.mxu0 %v2469
    %2957 = vmatpush1.bf16.msra.mxu0 %v2468
    %2958 = vmatprep.subr.bf16.mxu0 %v2477
    %2959 = vmatpush1.bf16.msra.mxu0 %v2476
    %2960 = vmatprep.subr.bf16.mxu0 %v2485
    %2961 = vmatpush1.bf16.msra.mxu0 %v2484
    %2962 = vmatprep.subr.bf16.mxu0 %v2493
    %2963 = vmatpush1.bf16.msra.mxu0 %v2492
    %2964 = vmatprep.subr.bf16.mxu0 %v2501
    %2965 = vmatpush1.bf16.msra.mxu0 %v2500
    %2966 = vmatprep.subr.bf16.mxu0 %v2509
    %2967 = vmatpush1.bf16.msra.mxu0 %v2508
    %2968 = vmatprep.subr.bf16.mxu0 %v2517
    %2969 = vmatpush1.bf16.msra.mxu0 %v2516
    %2970 = vmatprep.subr.bf16.mxu0 %v2525
    %2971 = vmatpush1.bf16.msra.mxu0 %v2524
    %2972 = vmatprep.subr.bf16.mxu0 %v2533
    %2973 = vmatpush1.bf16.msra.mxu0 %v2532
    %2974 = vmatprep.subr.bf16.mxu0 %v2541
    %2975 = vmatpush1.bf16.msra.mxu0 %v2540
    %2976 = vmatprep.subr.bf16.mxu0 %v2549
    %2977 = vmatpush1.bf16.msra.mxu0 %v2548
    %2978 = vmatprep.subr.bf16.mxu0 %v2557
    %2979 = vmatpush1.bf16.msra.mxu0 %v2556
    %2980 = vmatprep.mubr.bf16.mxu0 %v1409
    %2981 = vmatmul.mubr.bf16.gmra.mrb[0].mxu0 %v1408
    %v2982 = vpop.f32.mrb[0].mxu0
    %v2983 = vadd.f32 0.0, %v2982
    %v2984 = vpop.f32.mrb[0].mxu0
    %v2985 = vadd.f32 0.0, %v2984
    %v2986 = vpop.f32.mrb[0].mxu0
    %v2987 = vpop.f32.mrb[0].mxu0
    %2988 = vdwg.mxu0
    %2989 = vmatprep.subr.bf16.mxu0 %v2565
    %2990 = vmatpush1.bf16.msra.mxu0 %v2564
    %2991 = vmatprep.subr.bf16.mxu0 %v2573
    %2992 = vmatpush1.bf16.msra.mxu0 %v2572
    %2993 = vmatprep.subr.bf16.mxu0 %v2581
    %2994 = vmatpush1.bf16.msra.mxu0 %v2580
    %2995 = vmatprep.subr.bf16.mxu0 %v2589
    %2996 = vmatpush1.bf16.msra.mxu0 %v2588
    %2997 = vmatprep.subr.bf16.mxu0 %v2597
    %2998 = vmatpush1.bf16.msra.mxu0 %v2596
    %2999 = vmatprep.subr.bf16.mxu0 %v2605
    %3000 = vmatpush1.bf16.msra.mxu0 %v2604
    %3001 = vmatprep.subr.bf16.mxu0 %v2613
    %3002 = vmatpush1.bf16.msra.mxu0 %v2612
    %3003 = vmatprep.subr.bf16.mxu0 %v2621
    %3004 = vmatpush1.bf16.msra.mxu0 %v2620
    %3005 = vmatprep.subr.bf16.mxu0 %v2629
    %3006 = vmatpush1.bf16.msra.mxu0 %v2628
    %3007 = vmatprep.subr.bf16.mxu0 %v2637
    %3008 = vmatpush1.bf16.msra.mxu0 %v2636
    %3009 = vmatprep.subr.bf16.mxu0 %v2645
    %3010 = vmatpush1.bf16.msra.mxu0 %v2644
    %3011 = vmatprep.subr.bf16.mxu0 %v2653
    %3012 = vmatpush1.bf16.msra.mxu0 %v2652
    %3013 = vmatprep.subr.bf16.mxu0 %v2661
    %3014 = vmatpush1.bf16.msra.mxu0 %v2660
    %3015 = vmatprep.subr.bf16.mxu0 %v2669
    %3016 = vmatpush1.bf16.msra.mxu0 %v2668
    %3017 = vmatprep.subr.bf16.mxu0 %v2677
    %3018 = vmatpush1.bf16.msra.mxu0 %v2676
    %3019 = vmatprep.subr.bf16.mxu0 %v2685
    %3020 = vmatpush1.bf16.msra.mxu0 %v2684
    %3021 = vmatprep.mubr.bf16.mxu0 %v1411
    %3022 = vmatmul.mubr.bf16.gmra.mrb[0].mxu0 %v1410
    %v3023 = vpop.f32.mrb[0].mxu0
    %v3024 = vadd.f32 %v2983, %v3023
    %v3025 = vpop.f32.mrb[0].mxu0
    %v3026 = vadd.f32 %v2985, %v3025
    %v3027 = vpop.f32.mrb[0].mxu0
    %v3028 = vpop.f32.mrb[0].mxu0
    %3029 = vdwg.mxu0
    %3030 = vmatprep.subr.bf16.mxu0 %v2439
    %3031 = vmatpush1.bf16.msra.mxu0 %v2438
    %3032 = vmatprep.subr.bf16.mxu0 %v2447
    %3033 = vmatpush1.bf16.msra.mxu0 %v2446
    %3034 = vmatprep.subr.bf16.mxu0 %v2455
    %3035 = vmatpush1.bf16.msra.mxu0 %v2454
    %3036 = vmatprep.subr.bf16.mxu0 %v2463
    %3037 = vmatpush1.bf16.msra.mxu0 %v2462
    %3038 = vmatprep.subr.bf16.mxu0 %v2471
    %3039 = vmatpush1.bf16.msra.mxu0 %v2470
    %3040 = vmatprep.subr.bf16.mxu0 %v2479
    %3041 = vmatpush1.bf16.msra.mxu0 %v2478
    %3042 = vmatprep.subr.bf16.mxu0 %v2487
    %3043 = vmatpush1.bf16.msra.mxu0 %v2486
    %3044 = vmatprep.subr.bf16.mxu0 %v2495
    %3045 = vmatpush1.bf16.msra.mxu0 %v2494
    %3046 = vmatprep.subr.bf16.mxu0 %v2503
    %3047 = vmatpush1.bf16.msra.mxu0 %v2502
    %3048 = vmatprep.subr.bf16.mxu0 %v2511
    %3049 = vmatpush1.bf16.msra.mxu0 %v2510
    %3050 = vmatprep.subr.bf16.mxu0 %v2519
    %3051 = vmatpush1.bf16.msra.mxu0 %v2518
    %3052 = vmatprep.subr.bf16.mxu0 %v2527
    %3053 = vmatpush1.bf16.msra.mxu0 %v2526
    %3054 = vmatprep.subr.bf16.mxu0 %v2535
    %3055 = vmatpush1.bf16.msra.mxu0 %v2534
    %3056 = vmatprep.subr.bf16.mxu0 %v2543
    %3057 = vmatpush1.bf16.msra.mxu0 %v2542
    %3058 = vmatprep.subr.bf16.mxu0 %v2551
    %3059 = vmatpush1.bf16.msra.mxu0 %v2550
    %3060 = vmatprep.subr.bf16.mxu0 %v2559
    %3061 = vmatpush1.bf16.msra.mxu0 %v2558
    %3062 = vmatprep.mubr.bf16.mxu0 %v1409
    %3063 = vmatmul.mubr.bf16.gmra.mrb[0].mxu0 %v1408
    %v3064 = vpop.f32.mrb[0].mxu0
    %v3065 = vadd.f32 0.0, %v3064
    %v3066 = vpop.f32.mrb[0].mxu0
    %v3067 = vadd.f32 0.0, %v3066
    %v3068 = vpop.f32.mrb[0].mxu0
    %v3069 = vpop.f32.mrb[0].mxu0
    %3070 = vdwg.mxu0
    %3071 = vmatprep.subr.bf16.mxu0 %v2567
    %3072 = vmatpush1.bf16.msra.mxu0 %v2566
    %3073 = vmatprep.subr.bf16.mxu0 %v2575
    %3074 = vmatpush1.bf16.msra.mxu0 %v2574
    %3075 = vmatprep.subr.bf16.mxu0 %v2583
    %3076 = vmatpush1.bf16.msra.mxu0 %v2582
    %3077 = vmatprep.subr.bf16.mxu0 %v2591
    %3078 = vmatpush1.bf16.msra.mxu0 %v2590
    %3079 = vmatprep.subr.bf16.mxu0 %v2599
    %3080 = vmatpush1.bf16.msra.mxu0 %v2598
    %3081 = vmatprep.subr.bf16.mxu0 %v2607
    %3082 = vmatpush1.bf16.msra.mxu0 %v2606
    %3083 = vmatprep.subr.bf16.mxu0 %v2615
    %3084 = vmatpush1.bf16.msra.mxu0 %v2614
    %3085 = vmatprep.subr.bf16.mxu0 %v2623
    %3086 = vmatpush1.bf16.msra.mxu0 %v2622
    %3087 = vmatprep.subr.bf16.mxu0 %v2631
    %3088 = vmatpush1.bf16.msra.mxu0 %v2630
    %3089 = vmatprep.subr.bf16.mxu0 %v2639
    %3090 = vmatpush1.bf16.msra.mxu0 %v2638
    %3091 = vmatprep.subr.bf16.mxu0 %v2647
    %3092 = vmatpush1.bf16.msra.mxu0 %v2646
    %3093 = vmatprep.subr.bf16.mxu0 %v2655
    %3094 = vmatpush1.bf16.msra.mxu0 %v2654
    %3095 = vmatprep.subr.bf16.mxu0 %v2663
    %3096 = vmatpush1.bf16.msra.mxu0 %v2662
    %3097 = vmatprep.subr.bf16.mxu0 %v2671
    %3098 = vmatpush1.bf16.msra.mxu0 %v2670
    %3099 = vmatprep.subr.bf16.mxu0 %v2679
    %3100 = vmatpush1.bf16.msra.mxu0 %v2678
    %3101 = vmatprep.subr.bf16.mxu0 %v2687
    %3102 = vmatpush1.bf16.msra.mxu0 %v2686
    %3103 = vmatprep.mubr.bf16.mxu0 %v1411
    %3104 = vmatmul.mubr.bf16.gmra.mrb[0].mxu0 %v1410
    %v3105 = vpop.f32.mrb[0].mxu0
    %v3106 = vadd.f32 %v3065, %v3105
    %v3107 = vpop.f32.mrb[0].mxu0
    %v3108 = vadd.f32 %v3067, %v3107
    %v3109 = vpop.f32.mrb[0].mxu0
    %v3110 = vpop.f32.mrb[0].mxu0
    %3111 = vdwg.mxu0
    %3112 = vmatprep.subr.bf16.mxu0 %v2441
    %3113 = vmatpush1.bf16.msra.mxu0 %v2440
    %3114 = vmatprep.subr.bf16.mxu0 %v2449
    %3115 = vmatpush1.bf16.msra.mxu0 %v2448
    %3116 = vmatprep.subr.bf16.mxu0 %v2457
    %3117 = vmatpush1.bf16.msra.mxu0 %v2456
    %3118 = vmatprep.subr.bf16.mxu0 %v2465
    %3119 = vmatpush1.bf16.msra.mxu0 %v2464
    %3120 = vmatprep.subr.bf16.mxu0 %v2473
    %3121 = vmatpush1.bf16.msra.mxu0 %v2472
    %3122 = vmatprep.subr.bf16.mxu0 %v2481
    %3123 = vmatpush1.bf16.msra.mxu0 %v2480
    %3124 = vmatprep.subr.bf16.mxu0 %v2489
    %3125 = vmatpush1.bf16.msra.mxu0 %v2488
    %3126 = vmatprep.subr.bf16.mxu0 %v2497
    %3127 = vmatpush1.bf16.msra.mxu0 %v2496
    %3128 = vmatprep.subr.bf16.mxu0 %v2505
    %3129 = vmatpush1.bf16.msra.mxu0 %v2504
    %3130 = vmatprep.subr.bf16.mxu0 %v2513
    %3131 = vmatpush1.bf16.msra.mxu0 %v2512
    %3132 = vmatprep.subr.bf16.mxu0 %v2521
    %3133 = vmatpush1.bf16.msra.mxu0 %v2520
    %3134 = vmatprep.subr.bf16.mxu0 %v2529
    %3135 = vmatpush1.bf16.msra.mxu0 %v2528
    %3136 = vmatprep.subr.bf16.mxu0 %v2537
    %3137 = vmatpush1.bf16.msra.mxu0 %v2536
    %3138 = vmatprep.subr.bf16.mxu0 %v2545
    %3139 = vmatpush1.bf16.msra.mxu0 %v2544
    %3140 = vmatprep.subr.bf16.mxu0 %v2553
    %3141 = vmatpush1.bf16.msra.mxu0 %v2552
    %3142 = vmatprep.subr.bf16.mxu0 %v2561
    %3143 = vmatpush1.bf16.msra.mxu0 %v2560
    %3144 = vmatprep.mubr.bf16.mxu0 %v1409
    %3145 = vmatmul.mubr.bf16.gmra.mrb[0].mxu0 %v1408
    %v3146 = vpop.f32.mrb[0].mxu0
    %v3147 = vadd.f32 0.0, %v3146
    %v3148 = vpop.f32.mrb[0].mxu0
    %v3149 = vadd.f32 0.0, %v3148
    %v3150 = vpop.f32.mrb[0].mxu0
    %v3151 = vpop.f32.mrb[0].mxu0
    %3152 = vdwg.mxu0
    %3153 = vmatprep.subr.bf16.mxu0 %v2569
    %3154 = vmatpush1.bf16.msra.mxu0 %v2568
    %3155 = vmatprep.subr.bf16.mxu0 %v2577
    %3156 = vmatpush1.bf16.msra.mxu0 %v2576
    %3157 = vmatprep.subr.bf16.mxu0 %v2585
    %3158 = vmatpush1.bf16.msra.mxu0 %v2584
    %3159 = vmatprep.subr.bf16.mxu0 %v2593
    %3160 = vmatpush1.bf16.msra.mxu0 %v2592
    %3161 = vmatprep.subr.bf16.mxu0 %v2601
    %3162 = vmatpush1.bf16.msra.mxu0 %v2600
    %3163 = vmatprep.subr.bf16.mxu0 %v2609
    %3164 = vmatpush1.bf16.msra.mxu0 %v2608
    %3165 = vmatprep.subr.bf16.mxu0 %v2617
    %3166 = vmatpush1.bf16.msra.mxu0 %v2616
    %3167 = vmatprep.subr.bf16.mxu0 %v2625
    %3168 = vmatpush1.bf16.msra.mxu0 %v2624
    %3169 = vmatprep.subr.bf16.mxu0 %v2633
    %3170 = vmatpush1.bf16.msra.mxu0 %v2632
    %3171 = vmatprep.subr.bf16.mxu0 %v2641
    %3172 = vmatpush1.bf16.msra.mxu0 %v2640
    %3173 = vmatprep.subr.bf16.mxu0 %v2649
    %3174 = vmatpush1.bf16.msra.mxu0 %v2648
    %3175 = vmatprep.subr.bf16.mxu0 %v2657
    %3176 = vmatpush1.bf16.msra.mxu0 %v2656
    %3177 = vmatprep.subr.bf16.mxu0 %v2665
    %3178 = vmatpush1.bf16.msra.mxu0 %v2664
    %3179 = vmatprep.subr.bf16.mxu0 %v2673
    %3180 = vmatpush1.bf16.msra.mxu0 %v2672
    %3181 = vmatprep.subr.bf16.mxu0 %v2681
    %3182 = vmatpush1.bf16.msra.mxu0 %v2680
    %3183 = vmatprep.subr.bf16.mxu0 %v2689
    %3184 = vmatpush1.bf16.msra.mxu0 %v2688
    %3185 = vmatprep.mubr.bf16.mxu0 %v1411
    %3186 = vmatmul.mubr.bf16.gmra.mrb[0].mxu0 %v1410
    %v3187 = vpop.f32.mrb[0].mxu0
    %v3188 = vadd.f32 %v3147, %v3187
    %v3189 = vpop.f32.mrb[0].mxu0
    %v3190 = vadd.f32 %v3149, %v3189
    %v3191 = vpop.f32.mrb[0].mxu0
    %v3192 = vpop.f32.mrb[0].mxu0
    %3193 = vdwg.mxu0
    %3194 = vmatprep.subr.bf16.mxu0 %v2443
    %3195 = vmatpush1.bf16.msra.mxu0 %v2442
    %3196 = vmatprep.subr.bf16.mxu0 %v2451
    %3197 = vmatpush1.bf16.msra.mxu0 %v2450
    %3198 = vmatprep.subr.bf16.mxu0 %v2459
    %3199 = vmatpush1.bf16.msra.mxu0 %v2458
    %3200 = vmatprep.subr.bf16.mxu0 %v2467
    %3201 = vmatpush1.bf16.msra.mxu0 %v2466
    %3202 = vmatprep.subr.bf16.mxu0 %v2475
    %3203 = vmatpush1.bf16.msra.mxu0 %v2474
    %3204 = vmatprep.subr.bf16.mxu0 %v2483
    %3205 = vmatpush1.bf16.msra.mxu0 %v2482
    %3206 = vmatprep.subr.bf16.mxu0 %v2491
    %3207 = vmatpush1.bf16.msra.mxu0 %v2490
    %3208 = vmatprep.subr.bf16.mxu0 %v2499
    %3209 = vmatpush1.bf16.msra.mxu0 %v2498
    %3210 = vmatprep.subr.bf16.mxu0 %v2507
    %3211 = vmatpush1.bf16.msra.mxu0 %v2506
    %3212 = vmatprep.subr.bf16.mxu0 %v2515
    %3213 = vmatpush1.bf16.msra.mxu0 %v2514
    %3214 = vmatprep.subr.bf16.mxu0 %v2523
    %3215 = vmatpush1.bf16.msra.mxu0 %v2522
    %3216 = vmatprep.subr.bf16.mxu0 %v2531
    %3217 = vmatpush1.bf16.msra.mxu0 %v2530
    %3218 = vmatprep.subr.bf16.mxu0 %v2539
    %3219 = vmatpush1.bf16.msra.mxu0 %v2538
    %3220 = vmatprep.subr.bf16.mxu0 %v2547
    %3221 = vmatpush1.bf16.msra.mxu0 %v2546
    %3222 = vmatprep.subr.bf16.mxu0 %v2555
    %3223 = vmatpush1.bf16.msra.mxu0 %v2554
    %3224 = vmatprep.subr.bf16.mxu0 %v2563
    %3225 = vmatpush1.bf16.msra.mxu0 %v2562
    %3226 = vmatprep.mubr.bf16.mxu0 %v1409
    %3227 = vmatmul.mubr.bf16.gmra.mrb[0].mxu0 %v1408
    %v3228 = vpop.f32.mrb[0].mxu0
    %v3229 = vadd.f32 0.0, %v3228
    %v3230 = vpop.f32.mrb[0].mxu0
    %v3231 = vadd.f32 0.0, %v3230
    %v3232 = vpop.f32.mrb[0].mxu0
    %v3233 = vpop.f32.mrb[0].mxu0
    %3234 = vdwg.mxu0
    %3235 = vmatprep.subr.bf16.mxu0 %v2571
    %3236 = vmatpush1.bf16.msra.mxu0 %v2570
    %3237 = vmatprep.subr.bf16.mxu0 %v2579
    %3238 = vmatpush1.bf16.msra.mxu0 %v2578
    %3239 = vmatprep.subr.bf16.mxu0 %v2587
    %3240 = vmatpush1.bf16.msra.mxu0 %v2586
    %3241 = vmatprep.subr.bf16.mxu0 %v2595
    %3242 = vmatpush1.bf16.msra.mxu0 %v2594
    %3243 = vmatprep.subr.bf16.mxu0 %v2603
    %3244 = vmatpush1.bf16.msra.mxu0 %v2602
    %3245 = vmatprep.subr.bf16.mxu0 %v2611
    %3246 = vmatpush1.bf16.msra.mxu0 %v2610
    %3247 = vmatprep.subr.bf16.mxu0 %v2619
    %3248 = vmatpush1.bf16.msra.mxu0 %v2618
    %3249 = vmatprep.subr.bf16.mxu0 %v2627
    %3250 = vmatpush1.bf16.msra.mxu0 %v2626
    %3251 = vmatprep.subr.bf16.mxu0 %v2635
    %3252 = vmatpush1.bf16.msra.mxu0 %v2634
    %3253 = vmatprep.subr.bf16.mxu0 %v2643
    %3254 = vmatpush1.bf16.msra.mxu0 %v2642
    %3255 = vmatprep.subr.bf16.mxu0 %v2651
    %3256 = vmatpush1.bf16.msra.mxu0 %v2650
    %3257 = vmatprep.subr.bf16.mxu0 %v2659
    %3258 = vmatpush1.bf16.msra.mxu0 %v2658
    %3259 = vmatprep.subr.bf16.mxu0 %v2667
    %3260 = vmatpush1.bf16.msra.mxu0 %v2666
    %3261 = vmatprep.subr.bf16.mxu0 %v2675
    %3262 = vmatpush1.bf16.msra.mxu0 %v2674
    %3263 = vmatprep.subr.bf16.mxu0 %v2683
    %3264 = vmatpush1.bf16.msra.mxu0 %v2682
    %3265 = vmatprep.subr.bf16.mxu0 %v2691
    %3266 = vmatpush1.bf16.msra.mxu0 %v2690
    %3267 = vmatprep.mubr.bf16.mxu0 %v1411
    %3268 = vmatmul.mubr.bf16.gmra.mrb[0].mxu0 %v1410
    %v3269 = vpop.f32.mrb[0].mxu0
    %v3270 = vadd.f32 %v3229, %v3269
    %v3271 = vpop.f32.mrb[0].mxu0
    %v3272 = vadd.f32 %v3231, %v3271
    %v3273 = vpop.f32.mrb[0].mxu0
    %v3274 = vpop.f32.mrb[0].mxu0
    %3275 = vdwg.mxu0
    %v3276 = vrot.slane %v3024, 4
    %v3277 = vadd.f32 %v3024, %v3276
    %v3278 = vrot.slane %v3277, 2
    %v3279 = vadd.f32 %v3277, %v3278
    %v3280 = vrot.slane %v3279, 1
    %v3281 = vadd.f32 %v3279, %v3280
    %v3282 = vrot.slane %v3026, 4
    %v3283 = vadd.f32 %v3026, %v3282
    %v3284 = vrot.slane %v3283, 2
    %v3285 = vadd.f32 %v3283, %v3284
    %v3286 = vrot.slane %v3285, 1
    %v3287 = vadd.f32 %v3285, %v3286
    %v3288 = vrot.slane %v3106, 4
    %v3289 = vadd.f32 %v3106, %v3288
    %v3290 = vrot.slane %v3289, 2
    %v3291 = vadd.f32 %v3289, %v3290
    %v3292 = vrot.slane %v3291, 1
    %v3293 = vadd.f32 %v3291, %v3292
    %v3294 = vrot.slane %v3108, 4
    %v3295 = vadd.f32 %v3108, %v3294
    %v3296 = vrot.slane %v3295, 2
    %v3297 = vadd.f32 %v3295, %v3296
    %v3298 = vrot.slane %v3297, 1
    %v3299 = vadd.f32 %v3297, %v3298
    %v3300 = vrot.slane %v3188, 4
    %v3301 = vadd.f32 %v3188, %v3300
    %v3302 = vrot.slane %v3301, 2
    %v3303 = vadd.f32 %v3301, %v3302
    %v3304 = vrot.slane %v3303, 1
    %v3305 = vadd.f32 %v3303, %v3304
    %v3306 = vrot.slane %v3190, 4
    %v3307 = vadd.f32 %v3190, %v3306
    %v3308 = vrot.slane %v3307, 2
    %v3309 = vadd.f32 %v3307, %v3308
    %v3310 = vrot.slane %v3309, 1
    %v3311 = vadd.f32 %v3309, %v3310
    %v3312 = vrot.slane %v3270, 4
    %v3313 = vadd.f32 %v3270, %v3312
    %v3314 = vrot.slane %v3313, 2
    %v3315 = vadd.f32 %v3313, %v3314
    %v3316 = vrot.slane %v3315, 1
    %v3317 = vadd.f32 %v3315, %v3316
    %v3318 = vrot.slane %v3272, 4
    %v3319 = vadd.f32 %v3272, %v3318
    %v3320 = vrot.slane %v3319, 2
    %v3321 = vadd.f32 %v3319, %v3320
    %v3322 = vrot.slane %v3321, 1
    %v3323 = vadd.f32 %v3321, %v3322
    %v3324 = vmul.f32 %v3024, %v3024
    %v3325 = vmul.f32 %v3026, %v3026
    %v3326 = vmul.f32 %v3106, %v3106
    %v3327 = vmul.f32 %v3108, %v3108
    %v3328 = vmul.f32 %v3188, %v3188
    %v3329 = vmul.f32 %v3190, %v3190
    %v3330 = vmul.f32 %v3270, %v3270
    %v3331 = vmul.f32 %v3272, %v3272
    %v3332 = vrot.slane %v3324, 4
    %v3333 = vadd.f32 %v3324, %v3332
    %v3334 = vrot.slane %v3333, 2
    %v3335 = vadd.f32 %v3333, %v3334
    %v3336 = vrot.slane %v3335, 1
    %v3337 = vadd.f32 %v3335, %v3336
    %v3338 = vrot.slane %v3325, 4
    %v3339 = vadd.f32 %v3325, %v3338
    %v3340 = vrot.slane %v3339, 2
    %v3341 = vadd.f32 %v3339, %v3340
    %v3342 = vrot.slane %v3341, 1
    %v3343 = vadd.f32 %v3341, %v3342
    %v3344 = vrot.slane %v3326, 4
    %v3345 = vadd.f32 %v3326, %v3344
    %v3346 = vrot.slane %v3345, 2
    %v3347 = vadd.f32 %v3345, %v3346
    %v3348 = vrot.slane %v3347, 1
    %v3349 = vadd.f32 %v3347, %v3348
    %v3350 = vrot.slane %v3327, 4
    %v3351 = vadd.f32 %v3327, %v3350
    %v3352 = vrot.slane %v3351, 2
    %v3353 = vadd.f32 %v3351, %v3352
    %v3354 = vrot.slane %v3353, 1
    %v3355 = vadd.f32 %v3353, %v3354
    %v3356 = vrot.slane %v3328, 4
    %v3357 = vadd.f32 %v3328, %v3356
    %v3358 = vrot.slane %v3357, 2
    %v3359 = vadd.f32 %v3357, %v3358
    %v3360 = vrot.slane %v3359, 1
    %v3361 = vadd.f32 %v3359, %v3360
    %v3362 = vrot.slane %v3329, 4
    %v3363 = vadd.f32 %v3329, %v3362
    %v3364 = vrot.slane %v3363, 2
    %v3365 = vadd.f32 %v3363, %v3364
    %v3366 = vrot.slane %v3365, 1
    %v3367 = vadd.f32 %v3365, %v3366
    %v3368 = vrot.slane %v3330, 4
    %v3369 = vadd.f32 %v3330, %v3368
    %v3370 = vrot.slane %v3369, 2
    %v3371 = vadd.f32 %v3369, %v3370
    %v3372 = vrot.slane %v3371, 1
    %v3373 = vadd.f32 %v3371, %v3372
    %v3374 = vrot.slane %v3331, 4
    %v3375 = vadd.f32 %v3331, %v3374
    %v3376 = vrot.slane %v3375, 2
    %v3377 = vadd.f32 %v3375, %v3376
    %v3378 = vrot.slane %v3377, 1
    %v3379 = vadd.f32 %v3377, %v3378
    %v3380 = vld [vmem:[%s7] sm:$0xff]
    %v3381 = vld [vmem:[%s7 + $0x8] sm:$0xff]
    %v3382 = vld [vmem:[%s7 + $0x10] sm:$0xff]
    %v3383 = vld [vmem:[%s7 + $0x18] sm:$0xff]
    %v3384 = vld [vmem:[%s7 + $0x20] sm:$0xff]
    %v3385 = vld [vmem:[%s7 + $0x28] sm:$0xff]
    %v3386 = vld [vmem:[%s7 + $0x30] sm:$0xff]
    %v3387 = vld [vmem:[%s7 + $0x38] sm:$0xff]
    %v3388 = vld [vmem:[%s7 + $0x40] sm:$0xff]
    %v3389 = vld [vmem:[%s7 + $0x48] sm:$0xff]
    %v3390 = vld [vmem:[%s7 + $0x50] sm:$0xff]
    %v3391 = vld [vmem:[%s7 + $0x58] sm:$0xff]
    %v3392 = vld [vmem:[%s7 + $0x60] sm:$0xff]
    %v3393 = vld [vmem:[%s7 + $0x68] sm:$0xff]
    %v3394 = vld [vmem:[%s7 + $0x70] sm:$0xff]
    %v3395 = vld [vmem:[%s7 + $0x78] sm:$0xff]
    %v3396 = vld [vmem:[%s7 + $0x80] sm:$0xff]
    %v3397 = vld [vmem:[%s7 + $0x88] sm:$0xff]
    %v3398 = vld [vmem:[%s7 + $0x90] sm:$0xff]
    %v3399 = vld [vmem:[%s7 + $0x98] sm:$0xff]
    %v3400 = vld [vmem:[%s7 + $0xa0] sm:$0xff]
    %v3401 = vld [vmem:[%s7 + $0xa8] sm:$0xff]
    %v3402 = vld [vmem:[%s7 + $0xb0] sm:$0xff]
    %v3403 = vld [vmem:[%s7 + $0xb8] sm:$0xff]
    %v3404 = vld [vmem:[%s7 + $0xc0] sm:$0xff]
    %v3405 = vld [vmem:[%s7 + $0xc8] sm:$0xff]
    %v3406 = vld [vmem:[%s7 + $0xd0] sm:$0xff]
    %v3407 = vld [vmem:[%s7 + $0xd8] sm:$0xff]
    %v3408 = vld [vmem:[%s7 + $0xe0] sm:$0xff]
    %v3409 = vld [vmem:[%s7 + $0xe8] sm:$0xff]
    %v3410 = vld [vmem:[%s7 + $0xf0] sm:$0xff]
    %v3411 = vld [vmem:[%s7 + $0xf8] sm:$0xff]
    %v3412 = vld [vmem:[%s7 + $0x100] sm:$0xff]
    %v3413 = vld [vmem:[%s7 + $0x108] sm:$0xff]
    %v3414 = vld [vmem:[%s7 + $0x110] sm:$0xff]
    %v3415 = vld [vmem:[%s7 + $0x118] sm:$0xff]
    %v3416 = vld [vmem:[%s7 + $0x120] sm:$0xff]
    %v3417 = vld [vmem:[%s7 + $0x128] sm:$0xff]
    %v3418 = vld [vmem:[%s7 + $0x130] sm:$0xff]
    %v3419 = vld [vmem:[%s7 + $0x138] sm:$0xff]
    %v3420 = vld [vmem:[%s7 + $0x140] sm:$0xff]
    %v3421 = vld [vmem:[%s7 + $0x148] sm:$0xff]
    %v3422 = vld [vmem:[%s7 + $0x150] sm:$0xff]
    %v3423 = vld [vmem:[%s7 + $0x158] sm:$0xff]
    %v3424 = vld [vmem:[%s7 + $0x160] sm:$0xff]
    %v3425 = vld [vmem:[%s7 + $0x168] sm:$0xff]
    %v3426 = vld [vmem:[%s7 + $0x170] sm:$0xff]
    %v3427 = vld [vmem:[%s7 + $0x178] sm:$0xff]
    %v3428 = vld [vmem:[%s7 + $0x180] sm:$0xff]
    %v3429 = vld [vmem:[%s7 + $0x188] sm:$0xff]
    %v3430 = vld [vmem:[%s7 + $0x190] sm:$0xff]
    %v3431 = vld [vmem:[%s7 + $0x198] sm:$0xff]
    %v3432 = vld [vmem:[%s7 + $0x1a0] sm:$0xff]
    %v3433 = vld [vmem:[%s7 + $0x1a8] sm:$0xff]
    %v3434 = vld [vmem:[%s7 + $0x1b0] sm:$0xff]
    %v3435 = vld [vmem:[%s7 + $0x1b8] sm:$0xff]
    %v3436 = vld [vmem:[%s7 + $0x1c0] sm:$0xff]
    %v3437 = vld [vmem:[%s7 + $0x1c8] sm:$0xff]
    %v3438 = vld [vmem:[%s7 + $0x1d0] sm:$0xff]
    %v3439 = vld [vmem:[%s7 + $0x1d8] sm:$0xff]
    %v3440 = vld [vmem:[%s7 + $0x1e0] sm:$0xff]
    %v3441 = vld [vmem:[%s7 + $0x1e8] sm:$0xff]
    %v3442 = vld [vmem:[%s7 + $0x1f0] sm:$0xff]
    %v3443 = vld [vmem:[%s7 + $0x1f8] sm:$0xff]
    %v3444 = vld [vmem:[%s7 + $0x200] sm:$0xff]
    %v3445 = vld [vmem:[%s7 + $0x208] sm:$0xff]
    %v3446 = vld [vmem:[%s7 + $0x210] sm:$0xff]
    %v3447 = vld [vmem:[%s7 + $0x218] sm:$0xff]
    %v3448 = vld [vmem:[%s7 + $0x220] sm:$0xff]
    %v3449 = vld [vmem:[%s7 + $0x228] sm:$0xff]
    %v3450 = vld [vmem:[%s7 + $0x230] sm:$0xff]
    %v3451 = vld [vmem:[%s7 + $0x238] sm:$0xff]
    %v3452 = vld [vmem:[%s7 + $0x240] sm:$0xff]
    %v3453 = vld [vmem:[%s7 + $0x248] sm:$0xff]
    %v3454 = vld [vmem:[%s7 + $0x250] sm:$0xff]
    %v3455 = vld [vmem:[%s7 + $0x258] sm:$0xff]
    %v3456 = vld [vmem:[%s7 + $0x260] sm:$0xff]
    %v3457 = vld [vmem:[%s7 + $0x268] sm:$0xff]
    %v3458 = vld [vmem:[%s7 + $0x270] sm:$0xff]
    %v3459 = vld [vmem:[%s7 + $0x278] sm:$0xff]
    %v3460 = vld [vmem:[%s7 + $0x280] sm:$0xff]
    %v3461 = vld [vmem:[%s7 + $0x288] sm:$0xff]
    %v3462 = vld [vmem:[%s7 + $0x290] sm:$0xff]
    %v3463 = vld [vmem:[%s7 + $0x298] sm:$0xff]
    %v3464 = vld [vmem:[%s7 + $0x2a0] sm:$0xff]
    %v3465 = vld [vmem:[%s7 + $0x2a8] sm:$0xff]
    %v3466 = vld [vmem:[%s7 + $0x2b0] sm:$0xff]
    %v3467 = vld [vmem:[%s7 + $0x2b8] sm:$0xff]
    %v3468 = vld [vmem:[%s7 + $0x2c0] sm:$0xff]
    %v3469 = vld [vmem:[%s7 + $0x2c8] sm:$0xff]
    %v3470 = vld [vmem:[%s7 + $0x2d0] sm:$0xff]
    %v3471 = vld [vmem:[%s7 + $0x2d8] sm:$0xff]
    %v3472 = vld [vmem:[%s7 + $0x2e0] sm:$0xff]
    %v3473 = vld [vmem:[%s7 + $0x2e8] sm:$0xff]
    %v3474 = vld [vmem:[%s7 + $0x2f0] sm:$0xff]
    %v3475 = vld [vmem:[%s7 + $0x2f8] sm:$0xff]
    %v3476 = vld [vmem:[%s7 + $0x300] sm:$0xff]
    %v3477 = vld [vmem:[%s7 + $0x308] sm:$0xff]
    %v3478 = vld [vmem:[%s7 + $0x310] sm:$0xff]
    %v3479 = vld [vmem:[%s7 + $0x318] sm:$0xff]
    %v3480 = vld [vmem:[%s7 + $0x320] sm:$0xff]
    %v3481 = vld [vmem:[%s7 + $0x328] sm:$0xff]
    %v3482 = vld [vmem:[%s7 + $0x330] sm:$0xff]
    %v3483 = vld [vmem:[%s7 + $0x338] sm:$0xff]
    %v3484 = vld [vmem:[%s7 + $0x340] sm:$0xff]
    %v3485 = vld [vmem:[%s7 + $0x348] sm:$0xff]
    %v3486 = vld [vmem:[%s7 + $0x350] sm:$0xff]
    %v3487 = vld [vmem:[%s7 + $0x358] sm:$0xff]
    %v3488 = vld [vmem:[%s7 + $0x360] sm:$0xff]
    %v3489 = vld [vmem:[%s7 + $0x368] sm:$0xff]
    %v3490 = vld [vmem:[%s7 + $0x370] sm:$0xff]
    %v3491 = vld [vmem:[%s7 + $0x378] sm:$0xff]
    %v3492 = vld [vmem:[%s7 + $0x380] sm:$0xff]
    %v3493 = vld [vmem:[%s7 + $0x388] sm:$0xff]
    %v3494 = vld [vmem:[%s7 + $0x390] sm:$0xff]
    %v3495 = vld [vmem:[%s7 + $0x398] sm:$0xff]
    %v3496 = vld [vmem:[%s7 + $0x3a0] sm:$0xff]
    %v3497 = vld [vmem:[%s7 + $0x3a8] sm:$0xff]
    %v3498 = vld [vmem:[%s7 + $0x3b0] sm:$0xff]
    %v3499 = vld [vmem:[%s7 + $0x3b8] sm:$0xff]
    %v3500 = vld [vmem:[%s7 + $0x3c0] sm:$0xff]
    %v3501 = vld [vmem:[%s7 + $0x3c8] sm:$0xff]
    %v3502 = vld [vmem:[%s7 + $0x3d0] sm:$0xff]
    %v3503 = vld [vmem:[%s7 + $0x3d8] sm:$0xff]
    %v3504 = vld [vmem:[%s7 + $0x3e0] sm:$0xff]
    %v3505 = vld [vmem:[%s7 + $0x3e8] sm:$0xff]
    %v3506 = vld [vmem:[%s7 + $0x3f0] sm:$0xff]
    %v3507 = vld [vmem:[%s7 + $0x3f8] sm:$0xff]
    %3508 = vmatprep.subr.mxu0 0.0
    %3509 = vmatpush1.msra.mxu0 %v3380
    %3510 = vmatprep.subr.mxu0 0.0
    %3511 = vmatpush1.msra.mxu0 %v3381
    %3512 = vmatprep.subr.mxu0 0.0
    %3513 = vmatpush1.msra.mxu0 %v3382
    %3514 = vmatprep.subr.mxu0 0.0
    %3515 = vmatpush1.msra.mxu0 %v3383
    %3516 = vmatprep.subr.mxu0 0.0
    %3517 = vmatpush1.msra.mxu0 %v3384
    %3518 = vmatprep.subr.mxu0 0.0
    %3519 = vmatpush1.msra.mxu0 %v3385
    %3520 = vmatprep.subr.mxu0 0.0
    %3521 = vmatpush1.msra.mxu0 %v3386
    %3522 = vmatprep.subr.mxu0 0.0
    %3523 = vmatpush1.msra.mxu0 %v3387
    %3524 = vmatprep.subr.mxu0 0.0
    %3525 = vmatpush1.msra.mxu0 %v3388
    %3526 = vmatprep.subr.mxu0 0.0
    %3527 = vmatpush1.msra.mxu0 %v3389
    %3528 = vmatprep.subr.mxu0 0.0
    %3529 = vmatpush1.msra.mxu0 %v3390
    %3530 = vmatprep.subr.mxu0 0.0
    %3531 = vmatpush1.msra.mxu0 %v3391
    %3532 = vmatprep.subr.mxu0 0.0
    %3533 = vmatpush1.msra.mxu0 %v3392
    %3534 = vmatprep.subr.mxu0 0.0
    %3535 = vmatpush1.msra.mxu0 %v3393
    %3536 = vmatprep.subr.mxu0 0.0
    %3537 = vmatpush1.msra.mxu0 %v3394
    %3538 = vmatprep.subr.mxu0 0.0
    %3539 = vmatpush1.msra.mxu0 %v3395
    %3540 = vmatprep.subr.mxu0 0.0
    %3541 = vmatpush1.msra.mxu0 %v3396
    %3542 = vmatprep.subr.mxu0 0.0
    %3543 = vmatpush1.msra.mxu0 %v3397
    %3544 = vmatprep.subr.mxu0 0.0
    %3545 = vmatpush1.msra.mxu0 %v3398
    %3546 = vmatprep.subr.mxu0 0.0
    %3547 = vmatpush1.msra.mxu0 %v3399
    %3548 = vmatprep.subr.mxu0 0.0
    %3549 = vmatpush1.msra.mxu0 %v3400
    %3550 = vmatprep.subr.mxu0 0.0
    %3551 = vmatpush1.msra.mxu0 %v3401
    %3552 = vmatprep.subr.mxu0 0.0
    %3553 = vmatpush1.msra.mxu0 %v3402
    %3554 = vmatprep.subr.mxu0 0.0
    %3555 = vmatpush1.msra.mxu0 %v3403
    %3556 = vmatprep.subr.mxu0 0.0
    %3557 = vmatpush1.msra.mxu0 %v3404
    %3558 = vmatprep.subr.mxu0 0.0
    %3559 = vmatpush1.msra.mxu0 %v3405
    %3560 = vmatprep.subr.mxu0 0.0
    %3561 = vmatpush1.msra.mxu0 %v3406
    %3562 = vmatprep.subr.mxu0 0.0
    %3563 = vmatpush1.msra.mxu0 %v3407
    %3564 = vmatprep.subr.mxu0 0.0
    %3565 = vmatpush1.msra.mxu0 %v3408
    %3566 = vmatprep.subr.mxu0 0.0
    %3567 = vmatpush1.msra.mxu0 %v3409
    %3568 = vmatprep.subr.mxu0 0.0
    %3569 = vmatpush1.msra.mxu0 %v3410
    %3570 = vmatprep.subr.mxu0 0.0
    %3571 = vmatpush1.msra.mxu0 %v3411
    %3572 = vmatprep.mubr.f32.mxu0 %v3287
    %3573 = vmatmul.mubr.f32.gmra.mrb[0].mxu0 %v3281
    %v3574 = vpop.f32.mrb[0].mxu0
    %v3575 = vadd.f32 0.0, %v3574
    %v3576 = vpop.f32.mrb[0].mxu0
    %3577 = vdwg.mxu0
    %3578 = vmatprep.subr.mxu0 0.0
    %3579 = vmatpush1.msra.mxu0 %v3412
    %3580 = vmatprep.subr.mxu0 0.0
    %3581 = vmatpush1.msra.mxu0 %v3413
    %3582 = vmatprep.subr.mxu0 0.0
    %3583 = vmatpush1.msra.mxu0 %v3414
    %3584 = vmatprep.subr.mxu0 0.0
    %3585 = vmatpush1.msra.mxu0 %v3415
    %3586 = vmatprep.subr.mxu0 0.0
    %3587 = vmatpush1.msra.mxu0 %v3416
    %3588 = vmatprep.subr.mxu0 0.0
    %3589 = vmatpush1.msra.mxu0 %v3417
    %3590 = vmatprep.subr.mxu0 0.0
    %3591 = vmatpush1.msra.mxu0 %v3418
    %3592 = vmatprep.subr.mxu0 0.0
    %3593 = vmatpush1.msra.mxu0 %v3419
    %3594 = vmatprep.subr.mxu0 0.0
    %3595 = vmatpush1.msra.mxu0 %v3420
    %3596 = vmatprep.subr.mxu0 0.0
    %3597 = vmatpush1.msra.mxu0 %v3421
    %3598 = vmatprep.subr.mxu0 0.0
    %3599 = vmatpush1.msra.mxu0 %v3422
    %3600 = vmatprep.subr.mxu0 0.0
    %3601 = vmatpush1.msra.mxu0 %v3423
    %3602 = vmatprep.subr.mxu0 0.0
    %3603 = vmatpush1.msra.mxu0 %v3424
    %3604 = vmatprep.subr.mxu0 0.0
    %3605 = vmatpush1.msra.mxu0 %v3425
    %3606 = vmatprep.subr.mxu0 0.0
    %3607 = vmatpush1.msra.mxu0 %v3426
    %3608 = vmatprep.subr.mxu0 0.0
    %3609 = vmatpush1.msra.mxu0 %v3427
    %3610 = vmatprep.subr.mxu0 0.0
    %3611 = vmatpush1.msra.mxu0 %v3428
    %3612 = vmatprep.subr.mxu0 0.0
    %3613 = vmatpush1.msra.mxu0 %v3429
    %3614 = vmatprep.subr.mxu0 0.0
    %3615 = vmatpush1.msra.mxu0 %v3430
    %3616 = vmatprep.subr.mxu0 0.0
    %3617 = vmatpush1.msra.mxu0 %v3431
    %3618 = vmatprep.subr.mxu0 0.0
    %3619 = vmatpush1.msra.mxu0 %v3432
    %3620 = vmatprep.subr.mxu0 0.0
    %3621 = vmatpush1.msra.mxu0 %v3433
    %3622 = vmatprep.subr.mxu0 0.0
    %3623 = vmatpush1.msra.mxu0 %v3434
    %3624 = vmatprep.subr.mxu0 0.0
    %3625 = vmatpush1.msra.mxu0 %v3435
    %3626 = vmatprep.subr.mxu0 0.0
    %3627 = vmatpush1.msra.mxu0 %v3436
    %3628 = vmatprep.subr.mxu0 0.0
    %3629 = vmatpush1.msra.mxu0 %v3437
    %3630 = vmatprep.subr.mxu0 0.0
    %3631 = vmatpush1.msra.mxu0 %v3438
    %3632 = vmatprep.subr.mxu0 0.0
    %3633 = vmatpush1.msra.mxu0 %v3439
    %3634 = vmatprep.subr.mxu0 0.0
    %3635 = vmatpush1.msra.mxu0 %v3440
    %3636 = vmatprep.subr.mxu0 0.0
    %3637 = vmatpush1.msra.mxu0 %v3441
    %3638 = vmatprep.subr.mxu0 0.0
    %3639 = vmatpush1.msra.mxu0 %v3442
    %3640 = vmatprep.subr.mxu0 0.0
    %3641 = vmatpush1.msra.mxu0 %v3443
    %3642 = vmatprep.mubr.f32.mxu0 %v3299
    %3643 = vmatmul.mubr.f32.gmra.mrb[0].mxu0 %v3293
    %v3644 = vpop.f32.mrb[0].mxu0
    %v3645 = vadd.f32 %v3575, %v3644
    %v3646 = vpop.f32.mrb[0].mxu0
    %3647 = vdwg.mxu0
    %3648 = vmatprep.subr.mxu0 0.0
    %3649 = vmatpush1.msra.mxu0 %v3444
    %3650 = vmatprep.subr.mxu0 0.0
    %3651 = vmatpush1.msra.mxu0 %v3445
    %3652 = vmatprep.subr.mxu0 0.0
    %3653 = vmatpush1.msra.mxu0 %v3446
    %3654 = vmatprep.subr.mxu0 0.0
    %3655 = vmatpush1.msra.mxu0 %v3447
    %3656 = vmatprep.subr.mxu0 0.0
    %3657 = vmatpush1.msra.mxu0 %v3448
    %3658 = vmatprep.subr.mxu0 0.0
    %3659 = vmatpush1.msra.mxu0 %v3449
    %3660 = vmatprep.subr.mxu0 0.0
    %3661 = vmatpush1.msra.mxu0 %v3450
    %3662 = vmatprep.subr.mxu0 0.0
    %3663 = vmatpush1.msra.mxu0 %v3451
    %3664 = vmatprep.subr.mxu0 0.0
    %3665 = vmatpush1.msra.mxu0 %v3452
    %3666 = vmatprep.subr.mxu0 0.0
    %3667 = vmatpush1.msra.mxu0 %v3453
    %3668 = vmatprep.subr.mxu0 0.0
    %3669 = vmatpush1.msra.mxu0 %v3454
    %3670 = vmatprep.subr.mxu0 0.0
    %3671 = vmatpush1.msra.mxu0 %v3455
    %3672 = vmatprep.subr.mxu0 0.0
    %3673 = vmatpush1.msra.mxu0 %v3456
    %3674 = vmatprep.subr.mxu0 0.0
    %3675 = vmatpush1.msra.mxu0 %v3457
    %3676 = vmatprep.subr.mxu0 0.0
    %3677 = vmatpush1.msra.mxu0 %v3458
    %3678 = vmatprep.subr.mxu0 0.0
    %3679 = vmatpush1.msra.mxu0 %v3459
    %3680 = vmatprep.subr.mxu0 0.0
    %3681 = vmatpush1.msra.mxu0 %v3460
    %3682 = vmatprep.subr.mxu0 0.0
    %3683 = vmatpush1.msra.mxu0 %v3461
    %3684 = vmatprep.subr.mxu0 0.0
    %3685 = vmatpush1.msra.mxu0 %v3462
    %3686 = vmatprep.subr.mxu0 0.0
    %3687 = vmatpush1.msra.mxu0 %v3463
    %3688 = vmatprep.subr.mxu0 0.0
    %3689 = vmatpush1.msra.mxu0 %v3464
    %3690 = vmatprep.subr.mxu0 0.0
    %3691 = vmatpush1.msra.mxu0 %v3465
    %3692 = vmatprep.subr.mxu0 0.0
    %3693 = vmatpush1.msra.mxu0 %v3466
    %3694 = vmatprep.subr.mxu0 0.0
    %3695 = vmatpush1.msra.mxu0 %v3467
    %3696 = vmatprep.subr.mxu0 0.0
    %3697 = vmatpush1.msra.mxu0 %v3468
    %3698 = vmatprep.subr.mxu0 0.0
    %3699 = vmatpush1.msra.mxu0 %v3469
    %3700 = vmatprep.subr.mxu0 0.0
    %3701 = vmatpush1.msra.mxu0 %v3470
    %3702 = vmatprep.subr.mxu0 0.0
    %3703 = vmatpush1.msra.mxu0 %v3471
    %3704 = vmatprep.subr.mxu0 0.0
    %3705 = vmatpush1.msra.mxu0 %v3472
    %3706 = vmatprep.subr.mxu0 0.0
    %3707 = vmatpush1.msra.mxu0 %v3473
    %3708 = vmatprep.subr.mxu0 0.0
    %3709 = vmatpush1.msra.mxu0 %v3474
    %3710 = vmatprep.subr.mxu0 0.0
    %3711 = vmatpush1.msra.mxu0 %v3475
    %3712 = vmatprep.mubr.f32.mxu0 %v3311
    %3713 = vmatmul.mubr.f32.gmra.mrb[0].mxu0 %v3305
    %v3714 = vpop.f32.mrb[0].mxu0
    %v3715 = vadd.f32 %v3645, %v3714
    %v3716 = vpop.f32.mrb[0].mxu0
    %3717 = vdwg.mxu0
    %3718 = vmatprep.subr.mxu0 0.0
    %3719 = vmatpush1.msra.mxu0 %v3476
    %3720 = vmatprep.subr.mxu0 0.0
    %3721 = vmatpush1.msra.mxu0 %v3477
    %3722 = vmatprep.subr.mxu0 0.0
    %3723 = vmatpush1.msra.mxu0 %v3478
    %3724 = vmatprep.subr.mxu0 0.0
    %3725 = vmatpush1.msra.mxu0 %v3479
    %3726 = vmatprep.subr.mxu0 0.0
    %3727 = vmatpush1.msra.mxu0 %v3480
    %3728 = vmatprep.subr.mxu0 0.0
    %3729 = vmatpush1.msra.mxu0 %v3481
    %3730 = vmatprep.subr.mxu0 0.0
    %3731 = vmatpush1.msra.mxu0 %v3482
    %3732 = vmatprep.subr.mxu0 0.0
    %3733 = vmatpush1.msra.mxu0 %v3483
    %3734 = vmatprep.subr.mxu0 0.0
    %3735 = vmatpush1.msra.mxu0 %v3484
    %3736 = vmatprep.subr.mxu0 0.0
    %3737 = vmatpush1.msra.mxu0 %v3485
    %3738 = vmatprep.subr.mxu0 0.0
    %3739 = vmatpush1.msra.mxu0 %v3486
    %3740 = vmatprep.subr.mxu0 0.0
    %3741 = vmatpush1.msra.mxu0 %v3487
    %3742 = vmatprep.subr.mxu0 0.0
    %3743 = vmatpush1.msra.mxu0 %v3488
    %3744 = vmatprep.subr.mxu0 0.0
    %3745 = vmatpush1.msra.mxu0 %v3489
    %3746 = vmatprep.subr.mxu0 0.0
    %3747 = vmatpush1.msra.mxu0 %v3490
    %3748 = vmatprep.subr.mxu0 0.0
    %3749 = vmatpush1.msra.mxu0 %v3491
    %3750 = vmatprep.subr.mxu0 0.0
    %3751 = vmatpush1.msra.mxu0 %v3492
    %3752 = vmatprep.subr.mxu0 0.0
    %3753 = vmatpush1.msra.mxu0 %v3493
    %3754 = vmatprep.subr.mxu0 0.0
    %3755 = vmatpush1.msra.mxu0 %v3494
    %3756 = vmatprep.subr.mxu0 0.0
    %3757 = vmatpush1.msra.mxu0 %v3495
    %3758 = vmatprep.subr.mxu0 0.0
    %3759 = vmatpush1.msra.mxu0 %v3496
    %3760 = vmatprep.subr.mxu0 0.0
    %3761 = vmatpush1.msra.mxu0 %v3497
    %3762 = vmatprep.subr.mxu0 0.0
    %3763 = vmatpush1.msra.mxu0 %v3498
    %3764 = vmatprep.subr.mxu0 0.0
    %3765 = vmatpush1.msra.mxu0 %v3499
    %3766 = vmatprep.subr.mxu0 0.0
    %3767 = vmatpush1.msra.mxu0 %v3500
    %3768 = vmatprep.subr.mxu0 0.0
    %3769 = vmatpush1.msra.mxu0 %v3501
    %3770 = vmatprep.subr.mxu0 0.0
    %3771 = vmatpush1.msra.mxu0 %v3502
    %3772 = vmatprep.subr.mxu0 0.0
    %3773 = vmatpush1.msra.mxu0 %v3503
    %3774 = vmatprep.subr.mxu0 0.0
    %3775 = vmatpush1.msra.mxu0 %v3504
    %3776 = vmatprep.subr.mxu0 0.0
    %3777 = vmatpush1.msra.mxu0 %v3505
    %3778 = vmatprep.subr.mxu0 0.0
    %3779 = vmatpush1.msra.mxu0 %v3506
    %3780 = vmatprep.subr.mxu0 0.0
    %3781 = vmatpush1.msra.mxu0 %v3507
    %3782 = vmatprep.mubr.f32.mxu0 %v3323
    %3783 = vmatmul.mubr.f32.gmra.mrb[0].mxu0 %v3317
    %v3784 = vpop.f32.mrb[0].mxu0
    %v3785 = vadd.f32 %v3715, %v3784
    %v3786 = vpop.f32.mrb[0].mxu0
    %3787 = vdwg.mxu0
    %3788 = vmatprep.subr.mxu0 0.0
    %3789 = vmatpush1.msra.mxu0 %v3380
    %3790 = vmatprep.subr.mxu0 0.0
    %3791 = vmatpush1.msra.mxu0 %v3381
    %3792 = vmatprep.subr.mxu0 0.0
    %3793 = vmatpush1.msra.mxu0 %v3382
    %3794 = vmatprep.subr.mxu0 0.0
    %3795 = vmatpush1.msra.mxu0 %v3383
    %3796 = vmatprep.subr.mxu0 0.0
    %3797 = vmatpush1.msra.mxu0 %v3384
    %3798 = vmatprep.subr.mxu0 0.0
    %3799 = vmatpush1.msra.mxu0 %v3385
    %3800 = vmatprep.subr.mxu0 0.0
    %3801 = vmatpush1.msra.mxu0 %v3386
    %3802 = vmatprep.subr.mxu0 0.0
    %3803 = vmatpush1.msra.mxu0 %v3387
    %3804 = vmatprep.subr.mxu0 0.0
    %3805 = vmatpush1.msra.mxu0 %v3388
    %3806 = vmatprep.subr.mxu0 0.0
    %3807 = vmatpush1.msra.mxu0 %v3389
    %3808 = vmatprep.subr.mxu0 0.0
    %3809 = vmatpush1.msra.mxu0 %v3390
    %3810 = vmatprep.subr.mxu0 0.0
    %3811 = vmatpush1.msra.mxu0 %v3391
    %3812 = vmatprep.subr.mxu0 0.0
    %3813 = vmatpush1.msra.mxu0 %v3392
    %3814 = vmatprep.subr.mxu0 0.0
    %3815 = vmatpush1.msra.mxu0 %v3393
    %3816 = vmatprep.subr.mxu0 0.0
    %3817 = vmatpush1.msra.mxu0 %v3394
    %3818 = vmatprep.subr.mxu0 0.0
    %3819 = vmatpush1.msra.mxu0 %v3395
    %3820 = vmatprep.subr.mxu0 0.0
    %3821 = vmatpush1.msra.mxu0 %v3396
    %3822 = vmatprep.subr.mxu0 0.0
    %3823 = vmatpush1.msra.mxu0 %v3397
    %3824 = vmatprep.subr.mxu0 0.0
    %3825 = vmatpush1.msra.mxu0 %v3398
    %3826 = vmatprep.subr.mxu0 0.0
    %3827 = vmatpush1.msra.mxu0 %v3399
    %3828 = vmatprep.subr.mxu0 0.0
    %3829 = vmatpush1.msra.mxu0 %v3400
    %3830 = vmatprep.subr.mxu0 0.0
    %3831 = vmatpush1.msra.mxu0 %v3401
    %3832 = vmatprep.subr.mxu0 0.0
    %3833 = vmatpush1.msra.mxu0 %v3402
    %3834 = vmatprep.subr.mxu0 0.0
    %3835 = vmatpush1.msra.mxu0 %v3403
    %3836 = vmatprep.subr.mxu0 0.0
    %3837 = vmatpush1.msra.mxu0 %v3404
    %3838 = vmatprep.subr.mxu0 0.0
    %3839 = vmatpush1.msra.mxu0 %v3405
    %3840 = vmatprep.subr.mxu0 0.0
    %3841 = vmatpush1.msra.mxu0 %v3406
    %3842 = vmatprep.subr.mxu0 0.0
    %3843 = vmatpush1.msra.mxu0 %v3407
    %3844 = vmatprep.subr.mxu0 0.0
    %3845 = vmatpush1.msra.mxu0 %v3408
    %3846 = vmatprep.subr.mxu0 0.0
    %3847 = vmatpush1.msra.mxu0 %v3409
    %3848 = vmatprep.subr.mxu0 0.0
    %3849 = vmatpush1.msra.mxu0 %v3410
    %3850 = vmatprep.subr.mxu0 0.0
    %3851 = vmatpush1.msra.mxu0 %v3411
    %3852 = vmatprep.mubr.f32.mxu0 %v3343
    %3853 = vmatmul.mubr.f32.gmra.mrb[0].mxu0 %v3337
    %v3854 = vpop.f32.mrb[0].mxu0
    %v3855 = vadd.f32 0.0, %v3854
    %v3856 = vpop.f32.mrb[0].mxu0
    %3857 = vdwg.mxu0
    %3858 = vmatprep.subr.mxu0 0.0
    %3859 = vmatpush1.msra.mxu0 %v3412
    %3860 = vmatprep.subr.mxu0 0.0
    %3861 = vmatpush1.msra.mxu0 %v3413
    %3862 = vmatprep.subr.mxu0 0.0
    %3863 = vmatpush1.msra.mxu0 %v3414
    %3864 = vmatprep.subr.mxu0 0.0
    %3865 = vmatpush1.msra.mxu0 %v3415
    %3866 = vmatprep.subr.mxu0 0.0
    %3867 = vmatpush1.msra.mxu0 %v3416
    %3868 = vmatprep.subr.mxu0 0.0
    %3869 = vmatpush1.msra.mxu0 %v3417
    %3870 = vmatprep.subr.mxu0 0.0
    %3871 = vmatpush1.msra.mxu0 %v3418
    %3872 = vmatprep.subr.mxu0 0.0
    %3873 = vmatpush1.msra.mxu0 %v3419
    %3874 = vmatprep.subr.mxu0 0.0
    %3875 = vmatpush1.msra.mxu0 %v3420
    %3876 = vmatprep.subr.mxu0 0.0
    %3877 = vmatpush1.msra.mxu0 %v3421
    %3878 = vmatprep.subr.mxu0 0.0
    %3879 = vmatpush1.msra.mxu0 %v3422
    %3880 = vmatprep.subr.mxu0 0.0
    %3881 = vmatpush1.msra.mxu0 %v3423
    %3882 = vmatprep.subr.mxu0 0.0
    %3883 = vmatpush1.msra.mxu0 %v3424
    %3884 = vmatprep.subr.mxu0 0.0
    %3885 = vmatpush1.msra.mxu0 %v3425
    %3886 = vmatprep.subr.mxu0 0.0
    %3887 = vmatpush1.msra.mxu0 %v3426
    %3888 = vmatprep.subr.mxu0 0.0
    %3889 = vmatpush1.msra.mxu0 %v3427
    %3890 = vmatprep.subr.mxu0 0.0
    %3891 = vmatpush1.msra.mxu0 %v3428
    %3892 = vmatprep.subr.mxu0 0.0
    %3893 = vmatpush1.msra.mxu0 %v3429
    %3894 = vmatprep.subr.mxu0 0.0
    %3895 = vmatpush1.msra.mxu0 %v3430
    %3896 = vmatprep.subr.mxu0 0.0
    %3897 = vmatpush1.msra.mxu0 %v3431
    %3898 = vmatprep.subr.mxu0 0.0
    %3899 = vmatpush1.msra.mxu0 %v3432
    %3900 = vmatprep.subr.mxu0 0.0
    %3901 = vmatpush1.msra.mxu0 %v3433
    %3902 = vmatprep.subr.mxu0 0.0
    %3903 = vmatpush1.msra.mxu0 %v3434
    %3904 = vmatprep.subr.mxu0 0.0
    %3905 = vmatpush1.msra.mxu0 %v3435
    %3906 = vmatprep.subr.mxu0 0.0
    %3907 = vmatpush1.msra.mxu0 %v3436
    %3908 = vmatprep.subr.mxu0 0.0
    %3909 = vmatpush1.msra.mxu0 %v3437
    %3910 = vmatprep.subr.mxu0 0.0
    %3911 = vmatpush1.msra.mxu0 %v3438
    %3912 = vmatprep.subr.mxu0 0.0
    %3913 = vmatpush1.msra.mxu0 %v3439
    %3914 = vmatprep.subr.mxu0 0.0
    %3915 = vmatpush1.msra.mxu0 %v3440
    %3916 = vmatprep.subr.mxu0 0.0
    %3917 = vmatpush1.msra.mxu0 %v3441
    %3918 = vmatprep.subr.mxu0 0.0
    %3919 = vmatpush1.msra.mxu0 %v3442
    %3920 = vmatprep.subr.mxu0 0.0
    %3921 = vmatpush1.msra.mxu0 %v3443
    %3922 = vmatprep.mubr.f32.mxu0 %v3355
    %3923 = vmatmul.mubr.f32.gmra.mrb[0].mxu0 %v3349
    %v3924 = vpop.f32.mrb[0].mxu0
    %v3925 = vadd.f32 %v3855, %v3924
    %v3926 = vpop.f32.mrb[0].mxu0
    %3927 = vdwg.mxu0
    %3928 = vmatprep.subr.mxu0 0.0
    %3929 = vmatpush1.msra.mxu0 %v3444
    %3930 = vmatprep.subr.mxu0 0.0
    %3931 = vmatpush1.msra.mxu0 %v3445
    %3932 = vmatprep.subr.mxu0 0.0
    %3933 = vmatpush1.msra.mxu0 %v3446
    %3934 = vmatprep.subr.mxu0 0.0
    %3935 = vmatpush1.msra.mxu0 %v3447
    %3936 = vmatprep.subr.mxu0 0.0
    %3937 = vmatpush1.msra.mxu0 %v3448
    %3938 = vmatprep.subr.mxu0 0.0
    %3939 = vmatpush1.msra.mxu0 %v3449
    %3940 = vmatprep.subr.mxu0 0.0
    %3941 = vmatpush1.msra.mxu0 %v3450
    %3942 = vmatprep.subr.mxu0 0.0
    %3943 = vmatpush1.msra.mxu0 %v3451
    %3944 = vmatprep.subr.mxu0 0.0
    %3945 = vmatpush1.msra.mxu0 %v3452
    %3946 = vmatprep.subr.mxu0 0.0
    %3947 = vmatpush1.msra.mxu0 %v3453
    %3948 = vmatprep.subr.mxu0 0.0
    %3949 = vmatpush1.msra.mxu0 %v3454
    %3950 = vmatprep.subr.mxu0 0.0
    %3951 = vmatpush1.msra.mxu0 %v3455
    %3952 = vmatprep.subr.mxu0 0.0
    %3953 = vmatpush1.msra.mxu0 %v3456
    %3954 = vmatprep.subr.mxu0 0.0
    %3955 = vmatpush1.msra.mxu0 %v3457
    %3956 = vmatprep.subr.mxu0 0.0
    %3957 = vmatpush1.msra.mxu0 %v3458
    %3958 = vmatprep.subr.mxu0 0.0
    %3959 = vmatpush1.msra.mxu0 %v3459
    %3960 = vmatprep.subr.mxu0 0.0
    %3961 = vmatpush1.msra.mxu0 %v3460
    %3962 = vmatprep.subr.mxu0 0.0
    %3963 = vmatpush1.msra.mxu0 %v3461
    %3964 = vmatprep.subr.mxu0 0.0
    %3965 = vmatpush1.msra.mxu0 %v3462
    %3966 = vmatprep.subr.mxu0 0.0
    %3967 = vmatpush1.msra.mxu0 %v3463
    %3968 = vmatprep.subr.mxu0 0.0
    %3969 = vmatpush1.msra.mxu0 %v3464
    %3970 = vmatprep.subr.mxu0 0.0
    %3971 = vmatpush1.msra.mxu0 %v3465
    %3972 = vmatprep.subr.mxu0 0.0
    %3973 = vmatpush1.msra.mxu0 %v3466
    %3974 = vmatprep.subr.mxu0 0.0
    %3975 = vmatpush1.msra.mxu0 %v3467
    %3976 = vmatprep.subr.mxu0 0.0
    %3977 = vmatpush1.msra.mxu0 %v3468
    %3978 = vmatprep.subr.mxu0 0.0
    %3979 = vmatpush1.msra.mxu0 %v3469
    %3980 = vmatprep.subr.mxu0 0.0
    %3981 = vmatpush1.msra.mxu0 %v3470
    %3982 = vmatprep.subr.mxu0 0.0
    %3983 = vmatpush1.msra.mxu0 %v3471
    %3984 = vmatprep.subr.mxu0 0.0
    %3985 = vmatpush1.msra.mxu0 %v3472
    %3986 = vmatprep.subr.mxu0 0.0
    %3987 = vmatpush1.msra.mxu0 %v3473
    %3988 = vmatprep.subr.mxu0 0.0
    %3989 = vmatpush1.msra.mxu0 %v3474
    %3990 = vmatprep.subr.mxu0 0.0
    %3991 = vmatpush1.msra.mxu0 %v3475
    %3992 = vmatprep.mubr.f32.mxu0 %v3367
    %3993 = vmatmul.mubr.f32.gmra.mrb[0].mxu0 %v3361
    %v3994 = vpop.f32.mrb[0].mxu0
    %v3995 = vadd.f32 %v3925, %v3994
    %v3996 = vpop.f32.mrb[0].mxu0
    %3997 = vdwg.mxu0
    %3998 = vmatprep.subr.mxu0 0.0
    %3999 = vmatpush1.msra.mxu0 %v3476
    %4000 = vmatprep.subr.mxu0 0.0
    %4001 = vmatpush1.msra.mxu0 %v3477
    %4002 = vmatprep.subr.mxu0 0.0
    %4003 = vmatpush1.msra.mxu0 %v3478
    %4004 = vmatprep.subr.mxu0 0.0
    %4005 = vmatpush1.msra.mxu0 %v3479
    %4006 = vmatprep.subr.mxu0 0.0
    %4007 = vmatpush1.msra.mxu0 %v3480
    %4008 = vmatprep.subr.mxu0 0.0
    %4009 = vmatpush1.msra.mxu0 %v3481
    %4010 = vmatprep.subr.mxu0 0.0
    %4011 = vmatpush1.msra.mxu0 %v3482
    %4012 = vmatprep.subr.mxu0 0.0
    %4013 = vmatpush1.msra.mxu0 %v3483
    %4014 = vmatprep.subr.mxu0 0.0
    %4015 = vmatpush1.msra.mxu0 %v3484
    %4016 = vmatprep.subr.mxu0 0.0
    %4017 = vmatpush1.msra.mxu0 %v3485
    %4018 = vmatprep.subr.mxu0 0.0
    %4019 = vmatpush1.msra.mxu0 %v3486
    %4020 = vmatprep.subr.mxu0 0.0
    %4021 = vmatpush1.msra.mxu0 %v3487
    %4022 = vmatprep.subr.mxu0 0.0
    %4023 = vmatpush1.msra.mxu0 %v3488
    %4024 = vmatprep.subr.mxu0 0.0
    %4025 = vmatpush1.msra.mxu0 %v3489
    %4026 = vmatprep.subr.mxu0 0.0
    %4027 = vmatpush1.msra.mxu0 %v3490
    %4028 = vmatprep.subr.mxu0 0.0
    %4029 = vmatpush1.msra.mxu0 %v3491
    %4030 = vmatprep.subr.mxu0 0.0
    %4031 = vmatpush1.msra.mxu0 %v3492
    %4032 = vmatprep.subr.mxu0 0.0
    %4033 = vmatpush1.msra.mxu0 %v3493
    %4034 = vmatprep.subr.mxu0 0.0
    %4035 = vmatpush1.msra.mxu0 %v3494
    %4036 = vmatprep.subr.mxu0 0.0
    %4037 = vmatpush1.msra.mxu0 %v3495
    %4038 = vmatprep.subr.mxu0 0.0
    %4039 = vmatpush1.msra.mxu0 %v3496
    %4040 = vmatprep.subr.mxu0 0.0
    %4041 = vmatpush1.msra.mxu0 %v3497
    %4042 = vmatprep.subr.mxu0 0.0
    %4043 = vmatpush1.msra.mxu0 %v3498
    %4044 = vmatprep.subr.mxu0 0.0
    %4045 = vmatpush1.msra.mxu0 %v3499
    %4046 = vmatprep.subr.mxu0 0.0
    %4047 = vmatpush1.msra.mxu0 %v3500
    %4048 = vmatprep.subr.mxu0 0.0
    %4049 = vmatpush1.msra.mxu0 %v3501
    %4050 = vmatprep.subr.mxu0 0.0
    %4051 = vmatpush1.msra.mxu0 %v3502
    %4052 = vmatprep.subr.mxu0 0.0
    %4053 = vmatpush1.msra.mxu0 %v3503
    %4054 = vmatprep.subr.mxu0 0.0
    %4055 = vmatpush1.msra.mxu0 %v3504
    %4056 = vmatprep.subr.mxu0 0.0
    %4057 = vmatpush1.msra.mxu0 %v3505
    %4058 = vmatprep.subr.mxu0 0.0
    %4059 = vmatpush1.msra.mxu0 %v3506
    %4060 = vmatprep.subr.mxu0 0.0
    %4061 = vmatpush1.msra.mxu0 %v3507
    %4062 = vmatprep.mubr.f32.mxu0 %v3379
    %4063 = vmatmul.mubr.f32.gmra.mrb[0].mxu0 %v3373
    %v4064 = vpop.f32.mrb[0].mxu0
    %v4065 = vadd.f32 %v3995, %v4064
    %v4066 = vpop.f32.mrb[0].mxu0
    %4067 = vdwg.mxu0
    %v4068 = vmul.f32 %v3785, 0.001953125
    %v4069 = vmul.f32 %v4065, 0.001953125
    %v4070 = vmul.f32 %v4068, %v4068
    %v4071 = vsub.f32 %v4069, %v4070
    %v4072 = vld [vmem:[#allocation17] sm:$0x1]
    %v4073 = vadd.f32 %v4071, 1e-05
    %v4074 = vrsqrt.pop %v4073
    %v4075 = vmul.f32 %v4072, %v4074
    %v4076 = vld [vmem:[#allocation18] sm:$0x1]
    %v4077 = vmul.f32 %v4068, %v4075
    %v4078 = vsub.f32 %v4076, %v4077
    %v4079 = vld [vmem:[#allocation12] sm:$0xff]
    %v4080 = vld [vmem:[#allocation12 + $0x8] sm:$0xff]
    %v4081 = vld [vmem:[#allocation12 + $0x10] sm:$0xff]
    %v4082 = vld [vmem:[#allocation12 + $0x18] sm:$0xff]
    %v4083 = vld [vmem:[#allocation12 + $0x20] sm:$0xff]
    %v4084 = vld [vmem:[#allocation12 + $0x28] sm:$0xff]
    %v4085 = vld [vmem:[#allocation12 + $0x30] sm:$0xff]
    %v4086 = vld [vmem:[#allocation12 + $0x38] sm:$0xff]
    %v4087 = vld [vmem:[#allocation12 + $0x40] sm:$0xff]
    %v4088 = vld [vmem:[#allocation12 + $0x48] sm:$0xff]
    %v4089 = vld [vmem:[#allocation12 + $0x50] sm:$0xff]
    %v4090 = vld [vmem:[#allocation12 + $0x58] sm:$0xff]
    %v4091 = vld [vmem:[#allocation12 + $0x60] sm:$0xff]
    %v4092 = vld [vmem:[#allocation12 + $0x68] sm:$0xff]
    %v4093 = vld [vmem:[#allocation12 + $0x70] sm:$0xff]
    %v4094 = vld [vmem:[#allocation12 + $0x78] sm:$0xff]
    %vm4095 = vcmask 130048
    %v4097 = vsel %vm4095, %v4075, 0
    %4099 = vmatprep.subr.mxu0 %v4080
    %4100 = vmatpush1.msra.mxu0 %v4079
    %4101 = vmatprep.subr.mxu0 %v4088
    %4102 = vmatpush1.msra.mxu0 %v4087
    %4103 = vmatprep.subr.mxu0 0.0
    %4104 = vmatpush1.msra.mxu0 0.0
    %4105 = vmatprep.subr.mxu0 0.0
    %4106 = vmatpush1.msra.mxu0 0.0
    %4107 = vmatprep.subr.mxu0 0.0
    %4108 = vmatpush1.msra.mxu0 0.0
    %4109 = vmatprep.subr.mxu0 0.0
    %4110 = vmatpush1.msra.mxu0 0.0
    %4111 = vmatprep.subr.mxu0 0.0
    %4112 = vmatpush1.msra.mxu0 0.0
    %4113 = vmatprep.subr.mxu0 0.0
    %4114 = vmatpush1.msra.mxu0 0.0
    %4115 = vmatprep.subr.mxu0 0.0
    %4116 = vmatpush1.msra.mxu0 0.0
    %4117 = vmatprep.subr.mxu0 0.0
    %4118 = vmatpush1.msra.mxu0 0.0
    %4119 = vmatprep.subr.mxu0 0.0
    %4120 = vmatpush1.msra.mxu0 0.0
    %4121 = vmatprep.subr.mxu0 0.0
    %4122 = vmatpush1.msra.mxu0 0.0
    %4123 = vmatprep.subr.mxu0 0.0
    %4124 = vmatpush1.msra.mxu0 0.0
    %4125 = vmatprep.subr.mxu0 0.0
    %4126 = vmatpush1.msra.mxu0 0.0
    %4127 = vmatprep.subr.mxu0 0.0
    %4128 = vmatpush1.msra.mxu0 0.0
    %4129 = vmatprep.subr.mxu0 0.0
    %4130 = vmatpush1.msra.mxu0 0.0
    %4131 = vmatprep.subr.mxu0 0.0
    %4132 = vmatpush1.msra.mxu0 0.0
    %4133 = vmatprep.subr.mxu0 0.0
    %4134 = vmatpush1.msra.mxu0 0.0
    %4135 = vmatprep.subr.mxu0 0.0
    %4136 = vmatpush1.msra.mxu0 0.0
    %4137 = vmatprep.subr.mxu0 0.0
    %4138 = vmatpush1.msra.mxu0 0.0
    %4139 = vmatprep.subr.mxu0 0.0
    %4140 = vmatpush1.msra.mxu0 0.0
    %4141 = vmatprep.subr.mxu0 0.0
    %4142 = vmatpush1.msra.mxu0 0.0
    %4143 = vmatprep.subr.mxu0 0.0
    %4144 = vmatpush1.msra.mxu0 0.0
    %4145 = vmatprep.subr.mxu0 0.0
    %4146 = vmatpush1.msra.mxu0 0.0
    %4147 = vmatprep.subr.mxu0 0.0
    %4148 = vmatpush1.msra.mxu0 0.0
    %4149 = vmatprep.subr.mxu0 0.0
    %4150 = vmatpush1.msra.mxu0 0.0
    %4151 = vmatprep.subr.mxu0 0.0
    %4152 = vmatpush1.msra.mxu0 0.0
    %4153 = vmatprep.subr.mxu0 0.0
    %4154 = vmatpush1.msra.mxu0 0.0
    %4155 = vmatprep.subr.mxu0 0.0
    %4156 = vmatpush1.msra.mxu0 0.0
    %4157 = vmatprep.subr.mxu0 0.0
    %4158 = vmatpush1.msra.mxu0 0.0
    %4159 = vmatprep.subr.mxu0 0.0
    %4160 = vmatpush1.msra.mxu0 0.0
    %4161 = vmatprep.subr.mxu0 0.0
    %4162 = vmatpush1.msra.mxu0 0.0
    %4163 = vmatprep.mubr.f32.mxu0 0.0
    %4164 = vmatmul.mubr.f32.gmra.mrb[0].mxu0 %v4097
    %v4165 = vpop.f32.mrb[0].mxu0
    %v4166 = vadd.f32 0.0, %v4165
    %v4167 = vpop.f32.mrb[0].mxu0
    %v4168 = vadd.f32 0.0, %v4167
    %4169 = vdwg.mxu0
    %4170 = vmatprep.subr.mxu0 %v4082
    %4171 = vmatpush1.msra.mxu0 %v4081
    %4172 = vmatprep.subr.mxu0 %v4090
    %4173 = vmatpush1.msra.mxu0 %v4089
    %4174 = vmatprep.subr.mxu0 0.0
    %4175 = vmatpush1.msra.mxu0 0.0
    %4176 = vmatprep.subr.mxu0 0.0
    %4177 = vmatpush1.msra.mxu0 0.0
    %4178 = vmatprep.subr.mxu0 0.0
    %4179 = vmatpush1.msra.mxu0 0.0
    %4180 = vmatprep.subr.mxu0 0.0
    %4181 = vmatpush1.msra.mxu0 0.0
    %4182 = vmatprep.subr.mxu0 0.0
    %4183 = vmatpush1.msra.mxu0 0.0
    %4184 = vmatprep.subr.mxu0 0.0
    %4185 = vmatpush1.msra.mxu0 0.0
    %4186 = vmatprep.subr.mxu0 0.0
    %4187 = vmatpush1.msra.mxu0 0.0
    %4188 = vmatprep.subr.mxu0 0.0
    %4189 = vmatpush1.msra.mxu0 0.0
    %4190 = vmatprep.subr.mxu0 0.0
    %4191 = vmatpush1.msra.mxu0 0.0
    %4192 = vmatprep.subr.mxu0 0.0
    %4193 = vmatpush1.msra.mxu0 0.0
    %4194 = vmatprep.subr.mxu0 0.0
    %4195 = vmatpush1.msra.mxu0 0.0
    %4196 = vmatprep.subr.mxu0 0.0
    %4197 = vmatpush1.msra.mxu0 0.0
    %4198 = vmatprep.subr.mxu0 0.0
    %4199 = vmatpush1.msra.mxu0 0.0
    %4200 = vmatprep.subr.mxu0 0.0
    %4201 = vmatpush1.msra.mxu0 0.0
    %4202 = vmatprep.subr.mxu0 0.0
    %4203 = vmatpush1.msra.mxu0 0.0
    %4204 = vmatprep.subr.mxu0 0.0
    %4205 = vmatpush1.msra.mxu0 0.0
    %4206 = vmatprep.subr.mxu0 0.0
    %4207 = vmatpush1.msra.mxu0 0.0
    %4208 = vmatprep.subr.mxu0 0.0
    %4209 = vmatpush1.msra.mxu0 0.0
    %4210 = vmatprep.subr.mxu0 0.0
    %4211 = vmatpush1.msra.mxu0 0.0
    %4212 = vmatprep.subr.mxu0 0.0
    %4213 = vmatpush1.msra.mxu0 0.0
    %4214 = vmatprep.subr.mxu0 0.0
    %4215 = vmatpush1.msra.mxu0 0.0
    %4216 = vmatprep.subr.mxu0 0.0
    %4217 = vmatpush1.msra.mxu0 0.0
    %4218 = vmatprep.subr.mxu0 0.0
    %4219 = vmatpush1.msra.mxu0 0.0
    %4220 = vmatprep.subr.mxu0 0.0
    %4221 = vmatpush1.msra.mxu0 0.0
    %4222 = vmatprep.subr.mxu0 0.0
    %4223 = vmatpush1.msra.mxu0 0.0
    %4224 = vmatprep.subr.mxu0 0.0
    %4225 = vmatpush1.msra.mxu0 0.0
    %4226 = vmatprep.subr.mxu0 0.0
    %4227 = vmatpush1.msra.mxu0 0.0
    %4228 = vmatprep.subr.mxu0 0.0
    %4229 = vmatpush1.msra.mxu0 0.0
    %4230 = vmatprep.subr.mxu0 0.0
    %4231 = vmatpush1.msra.mxu0 0.0
    %4232 = vmatprep.subr.mxu0 0.0
    %4233 = vmatpush1.msra.mxu0 0.0
    %4234 = vmatprep.mubr.f32.mxu0 0.0
    %4235 = vmatmul.mubr.f32.gmra.mrb[0].mxu0 %v4097
    %v4236 = vpop.f32.mrb[0].mxu0
    %v4237 = vadd.f32 0.0, %v4236
    %v4238 = vpop.f32.mrb[0].mxu0
    %v4239 = vadd.f32 0.0, %v4238
    %4240 = vdwg.mxu0
    %4241 = vmatprep.subr.mxu0 %v4084
    %4242 = vmatpush1.msra.mxu0 %v4083
    %4243 = vmatprep.subr.mxu0 %v4092
    %4244 = vmatpush1.msra.mxu0 %v4091
    %4245 = vmatprep.subr.mxu0 0.0
    %4246 = vmatpush1.msra.mxu0 0.0
    %4247 = vmatprep.subr.mxu0 0.0
    %4248 = vmatpush1.msra.mxu0 0.0
    %4249 = vmatprep.subr.mxu0 0.0
    %4250 = vmatpush1.msra.mxu0 0.0
    %4251 = vmatprep.subr.mxu0 0.0
    %4252 = vmatpush1.msra.mxu0 0.0
    %4253 = vmatprep.subr.mxu0 0.0
    %4254 = vmatpush1.msra.mxu0 0.0
    %4255 = vmatprep.subr.mxu0 0.0
    %4256 = vmatpush1.msra.mxu0 0.0
    %4257 = vmatprep.subr.mxu0 0.0
    %4258 = vmatpush1.msra.mxu0 0.0
    %4259 = vmatprep.subr.mxu0 0.0
    %4260 = vmatpush1.msra.mxu0 0.0
    %4261 = vmatprep.subr.mxu0 0.0
    %4262 = vmatpush1.msra.mxu0 0.0
    %4263 = vmatprep.subr.mxu0 0.0
    %4264 = vmatpush1.msra.mxu0 0.0
    %4265 = vmatprep.subr.mxu0 0.0
    %4266 = vmatpush1.msra.mxu0 0.0
    %4267 = vmatprep.subr.mxu0 0.0
    %4268 = vmatpush1.msra.mxu0 0.0
    %4269 = vmatprep.subr.mxu0 0.0
    %4270 = vmatpush1.msra.mxu0 0.0
    %4271 = vmatprep.subr.mxu0 0.0
    %4272 = vmatpush1.msra.mxu0 0.0
    %4273 = vmatprep.subr.mxu0 0.0
    %4274 = vmatpush1.msra.mxu0 0.0
    %4275 = vmatprep.subr.mxu0 0.0
    %4276 = vmatpush1.msra.mxu0 0.0
    %4277 = vmatprep.subr.mxu0 0.0
    %4278 = vmatpush1.msra.mxu0 0.0
    %4279 = vmatprep.subr.mxu0 0.0
    %4280 = vmatpush1.msra.mxu0 0.0
    %4281 = vmatprep.subr.mxu0 0.0
    %4282 = vmatpush1.msra.mxu0 0.0
    %4283 = vmatprep.subr.mxu0 0.0
    %4284 = vmatpush1.msra.mxu0 0.0
    %4285 = vmatprep.subr.mxu0 0.0
    %4286 = vmatpush1.msra.mxu0 0.0
    %4287 = vmatprep.subr.mxu0 0.0
    %4288 = vmatpush1.msra.mxu0 0.0
    %4289 = vmatprep.subr.mxu0 0.0
    %4290 = vmatpush1.msra.mxu0 0.0
    %4291 = vmatprep.subr.mxu0 0.0
    %4292 = vmatpush1.msra.mxu0 0.0
    %4293 = vmatprep.subr.mxu0 0.0
    %4294 = vmatpush1.msra.mxu0 0.0
    %4295 = vmatprep.subr.mxu0 0.0
    %4296 = vmatpush1.msra.mxu0 0.0
    %4297 = vmatprep.subr.mxu0 0.0
    %4298 = vmatpush1.msra.mxu0 0.0
    %4299 = vmatprep.subr.mxu0 0.0
    %4300 = vmatpush1.msra.mxu0 0.0
    %4301 = vmatprep.subr.mxu0 0.0
    %4302 = vmatpush1.msra.mxu0 0.0
    %4303 = vmatprep.subr.mxu0 0.0
    %4304 = vmatpush1.msra.mxu0 0.0
    %4305 = vmatprep.mubr.f32.mxu0 0.0
    %4306 = vmatmul.mubr.f32.gmra.mrb[0].mxu0 %v4097
    %v4307 = vpop.f32.mrb[0].mxu0
    %v4308 = vadd.f32 0.0, %v4307
    %v4309 = vpop.f32.mrb[0].mxu0
    %v4310 = vadd.f32 0.0, %v4309
    %4311 = vdwg.mxu0
    %4312 = vmatprep.subr.mxu0 %v4086
    %4313 = vmatpush1.msra.mxu0 %v4085
    %4314 = vmatprep.subr.mxu0 %v4094
    %4315 = vmatpush1.msra.mxu0 %v4093
    %4316 = vmatprep.subr.mxu0 0.0
    %4317 = vmatpush1.msra.mxu0 0.0
    %4318 = vmatprep.subr.mxu0 0.0
    %4319 = vmatpush1.msra.mxu0 0.0
    %4320 = vmatprep.subr.mxu0 0.0
    %4321 = vmatpush1.msra.mxu0 0.0
    %4322 = vmatprep.subr.mxu0 0.0
    %4323 = vmatpush1.msra.mxu0 0.0
    %4324 = vmatprep.subr.mxu0 0.0
    %4325 = vmatpush1.msra.mxu0 0.0
    %4326 = vmatprep.subr.mxu0 0.0
    %4327 = vmatpush1.msra.mxu0 0.0
    %4328 = vmatprep.subr.mxu0 0.0
    %4329 = vmatpush1.msra.mxu0 0.0
    %4330 = vmatprep.subr.mxu0 0.0
    %4331 = vmatpush1.msra.mxu0 0.0
    %4332 = vmatprep.subr.mxu0 0.0
    %4333 = vmatpush1.msra.mxu0 0.0
    %4334 = vmatprep.subr.mxu0 0.0
    %4335 = vmatpush1.msra.mxu0 0.0
    %4336 = vmatprep.subr.mxu0 0.0
    %4337 = vmatpush1.msra.mxu0 0.0
    %4338 = vmatprep.subr.mxu0 0.0
    %4339 = vmatpush1.msra.mxu0 0.0
    %4340 = vmatprep.subr.mxu0 0.0
    %4341 = vmatpush1.msra.mxu0 0.0
    %4342 = vmatprep.subr.mxu0 0.0
    %4343 = vmatpush1.msra.mxu0 0.0
    %4344 = vmatprep.subr.mxu0 0.0
    %4345 = vmatpush1.msra.mxu0 0.0
    %4346 = vmatprep.subr.mxu0 0.0
    %4347 = vmatpush1.msra.mxu0 0.0
    %4348 = vmatprep.subr.mxu0 0.0
    %4349 = vmatpush1.msra.mxu0 0.0
    %4350 = vmatprep.subr.mxu0 0.0
    %4351 = vmatpush1.msra.mxu0 0.0
    %4352 = vmatprep.subr.mxu0 0.0
    %4353 = vmatpush1.msra.mxu0 0.0
    %4354 = vmatprep.subr.mxu0 0.0
    %4355 = vmatpush1.msra.mxu0 0.0
    %4356 = vmatprep.subr.mxu0 0.0
    %4357 = vmatpush1.msra.mxu0 0.0
    %4358 = vmatprep.subr.mxu0 0.0
    %4359 = vmatpush1.msra.mxu0 0.0
    %4360 = vmatprep.subr.mxu0 0.0
    %4361 = vmatpush1.msra.mxu0 0.0
    %4362 = vmatprep.subr.mxu0 0.0
    %4363 = vmatpush1.msra.mxu0 0.0
    %4364 = vmatprep.subr.mxu0 0.0
    %4365 = vmatpush1.msra.mxu0 0.0
    %4366 = vmatprep.subr.mxu0 0.0
    %4367 = vmatpush1.msra.mxu0 0.0
    %4368 = vmatprep.subr.mxu0 0.0
    %4369 = vmatpush1.msra.mxu0 0.0
    %4370 = vmatprep.subr.mxu0 0.0
    %4371 = vmatpush1.msra.mxu0 0.0
    %4372 = vmatprep.subr.mxu0 0.0
    %4373 = vmatpush1.msra.mxu0 0.0
    %4374 = vmatprep.subr.mxu0 0.0
    %4375 = vmatpush1.msra.mxu0 0.0
    %4376 = vmatprep.mubr.f32.mxu0 0.0
    %4377 = vmatmul.mubr.f32.gmra.mrb[0].mxu0 %v4097
    %v4378 = vpop.f32.mrb[0].mxu0
    %v4379 = vadd.f32 0.0, %v4378
    %v4380 = vpop.f32.mrb[0].mxu0
    %v4381 = vadd.f32 0.0, %v4380
    %4382 = vdwg.mxu0
    %v4384 = vsel %vm4095, %v4078, 0
    %4386 = vmatprep.subr.mxu0 %v4080
    %4387 = vmatpush1.msra.mxu0 %v4079
    %4388 = vmatprep.subr.mxu0 %v4088
    %4389 = vmatpush1.msra.mxu0 %v4087
    %4390 = vmatprep.subr.mxu0 0.0
    %4391 = vmatpush1.msra.mxu0 0.0
    %4392 = vmatprep.subr.mxu0 0.0
    %4393 = vmatpush1.msra.mxu0 0.0
    %4394 = vmatprep.subr.mxu0 0.0
    %4395 = vmatpush1.msra.mxu0 0.0
    %4396 = vmatprep.subr.mxu0 0.0
    %4397 = vmatpush1.msra.mxu0 0.0
    %4398 = vmatprep.subr.mxu0 0.0
    %4399 = vmatpush1.msra.mxu0 0.0
    %4400 = vmatprep.subr.mxu0 0.0
    %4401 = vmatpush1.msra.mxu0 0.0
    %4402 = vmatprep.subr.mxu0 0.0
    %4403 = vmatpush1.msra.mxu0 0.0
    %4404 = vmatprep.subr.mxu0 0.0
    %4405 = vmatpush1.msra.mxu0 0.0
    %4406 = vmatprep.subr.mxu0 0.0
    %4407 = vmatpush1.msra.mxu0 0.0
    %4408 = vmatprep.subr.mxu0 0.0
    %4409 = vmatpush1.msra.mxu0 0.0
    %4410 = vmatprep.subr.mxu0 0.0
    %4411 = vmatpush1.msra.mxu0 0.0
    %4412 = vmatprep.subr.mxu0 0.0
    %4413 = vmatpush1.msra.mxu0 0.0
    %4414 = vmatprep.subr.mxu0 0.0
    %4415 = vmatpush1.msra.mxu0 0.0
    %4416 = vmatprep.subr.mxu0 0.0
    %4417 = vmatpush1.msra.mxu0 0.0
    %4418 = vmatprep.subr.mxu0 0.0
    %4419 = vmatpush1.msra.mxu0 0.0
    %4420 = vmatprep.subr.mxu0 0.0
    %4421 = vmatpush1.msra.mxu0 0.0
    %4422 = vmatprep.subr.mxu0 0.0
    %4423 = vmatpush1.msra.mxu0 0.0
    %4424 = vmatprep.subr.mxu0 0.0
    %4425 = vmatpush1.msra.mxu0 0.0
    %4426 = vmatprep.subr.mxu0 0.0
    %4427 = vmatpush1.msra.mxu0 0.0
    %4428 = vmatprep.subr.mxu0 0.0
    %4429 = vmatpush1.msra.mxu0 0.0
    %4430 = vmatprep.subr.mxu0 0.0
    %4431 = vmatpush1.msra.mxu0 0.0
    %4432 = vmatprep.subr.mxu0 0.0
    %4433 = vmatpush1.msra.mxu0 0.0
    %4434 = vmatprep.subr.mxu0 0.0
    %4435 = vmatpush1.msra.mxu0 0.0
    %4436 = vmatprep.subr.mxu0 0.0
    %4437 = vmatpush1.msra.mxu0 0.0
    %4438 = vmatprep.subr.mxu0 0.0
    %4439 = vmatpush1.msra.mxu0 0.0
    %4440 = vmatprep.subr.mxu0 0.0
    %4441 = vmatpush1.msra.mxu0 0.0
    %4442 = vmatprep.subr.mxu0 0.0
    %4443 = vmatpush1.msra.mxu0 0.0
    %4444 = vmatprep.subr.mxu0 0.0
    %4445 = vmatpush1.msra.mxu0 0.0
    %4446 = vmatprep.subr.mxu0 0.0
    %4447 = vmatpush1.msra.mxu0 0.0
    %4448 = vmatprep.subr.mxu0 0.0
    %4449 = vmatpush1.msra.mxu0 0.0
    %4450 = vmatprep.mubr.f32.mxu0 0.0
    %4451 = vmatmul.mubr.f32.gmra.mrb[0].mxu0 %v4384
    %v4452 = vpop.f32.mrb[0].mxu0
    %v4453 = vadd.f32 0.0, %v4452
    %v4454 = vpop.f32.mrb[0].mxu0
    %v4455 = vadd.f32 0.0, %v4454
    %4456 = vdwg.mxu0
    %4457 = vmatprep.subr.mxu0 %v4082
    %4458 = vmatpush1.msra.mxu0 %v4081
    %4459 = vmatprep.subr.mxu0 %v4090
    %4460 = vmatpush1.msra.mxu0 %v4089
    %4461 = vmatprep.subr.mxu0 0.0
    %4462 = vmatpush1.msra.mxu0 0.0
    %4463 = vmatprep.subr.mxu0 0.0
    %4464 = vmatpush1.msra.mxu0 0.0
    %4465 = vmatprep.subr.mxu0 0.0
    %4466 = vmatpush1.msra.mxu0 0.0
    %4467 = vmatprep.subr.mxu0 0.0
    %4468 = vmatpush1.msra.mxu0 0.0
    %4469 = vmatprep.subr.mxu0 0.0
    %4470 = vmatpush1.msra.mxu0 0.0
    %4471 = vmatprep.subr.mxu0 0.0
    %4472 = vmatpush1.msra.mxu0 0.0
    %4473 = vmatprep.subr.mxu0 0.0
    %4474 = vmatpush1.msra.mxu0 0.0
    %4475 = vmatprep.subr.mxu0 0.0
    %4476 = vmatpush1.msra.mxu0 0.0
    %4477 = vmatprep.subr.mxu0 0.0
    %4478 = vmatpush1.msra.mxu0 0.0
    %4479 = vmatprep.subr.mxu0 0.0
    %4480 = vmatpush1.msra.mxu0 0.0
    %4481 = vmatprep.subr.mxu0 0.0
    %4482 = vmatpush1.msra.mxu0 0.0
    %4483 = vmatprep.subr.mxu0 0.0
    %4484 = vmatpush1.msra.mxu0 0.0
    %4485 = vmatprep.subr.mxu0 0.0
    %4486 = vmatpush1.msra.mxu0 0.0
    %4487 = vmatprep.subr.mxu0 0.0
    %4488 = vmatpush1.msra.mxu0 0.0
    %4489 = vmatprep.subr.mxu0 0.0
    %4490 = vmatpush1.msra.mxu0 0.0
    %4491 = vmatprep.subr.mxu0 0.0
    %4492 = vmatpush1.msra.mxu0 0.0
    %4493 = vmatprep.subr.mxu0 0.0
    %4494 = vmatpush1.msra.mxu0 0.0
    %4495 = vmatprep.subr.mxu0 0.0
    %4496 = vmatpush1.msra.mxu0 0.0
    %4497 = vmatprep.subr.mxu0 0.0
    %4498 = vmatpush1.msra.mxu0 0.0
    %4499 = vmatprep.subr.mxu0 0.0
    %4500 = vmatpush1.msra.mxu0 0.0
    %4501 = vmatprep.subr.mxu0 0.0
    %4502 = vmatpush1.msra.mxu0 0.0
    %4503 = vmatprep.subr.mxu0 0.0
    %4504 = vmatpush1.msra.mxu0 0.0
    %4505 = vmatprep.subr.mxu0 0.0
    %4506 = vmatpush1.msra.mxu0 0.0
    %4507 = vmatprep.subr.mxu0 0.0
    %4508 = vmatpush1.msra.mxu0 0.0
    %4509 = vmatprep.subr.mxu0 0.0
    %4510 = vmatpush1.msra.mxu0 0.0
    %4511 = vmatprep.subr.mxu0 0.0
    %4512 = vmatpush1.msra.mxu0 0.0
    %4513 = vmatprep.subr.mxu0 0.0
    %4514 = vmatpush1.msra.mxu0 0.0
    %4515 = vmatprep.subr.mxu0 0.0
    %4516 = vmatpush1.msra.mxu0 0.0
    %4517 = vmatprep.subr.mxu0 0.0
    %4518 = vmatpush1.msra.mxu0 0.0
    %4519 = vmatprep.subr.mxu0 0.0
    %4520 = vmatpush1.msra.mxu0 0.0
    %4521 = vmatprep.mubr.f32.mxu0 0.0
    %4522 = vmatmul.mubr.f32.gmra.mrb[0].mxu0 %v4384
    %v4523 = vpop.f32.mrb[0].mxu0
    %v4524 = vadd.f32 0.0, %v4523
    %v4525 = vpop.f32.mrb[0].mxu0
    %v4526 = vadd.f32 0.0, %v4525
    %4527 = vdwg.mxu0
    %4528 = vmatprep.subr.mxu0 %v4084
    %4529 = vmatpush1.msra.mxu0 %v4083
    %4530 = vmatprep.subr.mxu0 %v4092
    %4531 = vmatpush1.msra.mxu0 %v4091
    %4532 = vmatprep.subr.mxu0 0.0
    %4533 = vmatpush1.msra.mxu0 0.0
    %4534 = vmatprep.subr.mxu0 0.0
    %4535 = vmatpush1.msra.mxu0 0.0
    %4536 = vmatprep.subr.mxu0 0.0
    %4537 = vmatpush1.msra.mxu0 0.0
    %4538 = vmatprep.subr.mxu0 0.0
    %4539 = vmatpush1.msra.mxu0 0.0
    %4540 = vmatprep.subr.mxu0 0.0
    %4541 = vmatpush1.msra.mxu0 0.0
    %4542 = vmatprep.subr.mxu0 0.0
    %4543 = vmatpush1.msra.mxu0 0.0
    %4544 = vmatprep.subr.mxu0 0.0
    %4545 = vmatpush1.msra.mxu0 0.0
    %4546 = vmatprep.subr.mxu0 0.0
    %4547 = vmatpush1.msra.mxu0 0.0
    %4548 = vmatprep.subr.mxu0 0.0
    %4549 = vmatpush1.msra.mxu0 0.0
    %4550 = vmatprep.subr.mxu0 0.0
    %4551 = vmatpush1.msra.mxu0 0.0
    %4552 = vmatprep.subr.mxu0 0.0
    %4553 = vmatpush1.msra.mxu0 0.0
    %4554 = vmatprep.subr.mxu0 0.0
    %4555 = vmatpush1.msra.mxu0 0.0
    %4556 = vmatprep.subr.mxu0 0.0
    %4557 = vmatpush1.msra.mxu0 0.0
    %4558 = vmatprep.subr.mxu0 0.0
    %4559 = vmatpush1.msra.mxu0 0.0
    %4560 = vmatprep.subr.mxu0 0.0
    %4561 = vmatpush1.msra.mxu0 0.0
    %4562 = vmatprep.subr.mxu0 0.0
    %4563 = vmatpush1.msra.mxu0 0.0
    %4564 = vmatprep.subr.mxu0 0.0
    %4565 = vmatpush1.msra.mxu0 0.0
    %4566 = vmatprep.subr.mxu0 0.0
    %4567 = vmatpush1.msra.mxu0 0.0
    %4568 = vmatprep.subr.mxu0 0.0
    %4569 = vmatpush1.msra.mxu0 0.0
    %4570 = vmatprep.subr.mxu0 0.0
    %4571 = vmatpush1.msra.mxu0 0.0
    %4572 = vmatprep.subr.mxu0 0.0
    %4573 = vmatpush1.msra.mxu0 0.0
    %4574 = vmatprep.subr.mxu0 0.0
    %4575 = vmatpush1.msra.mxu0 0.0
    %4576 = vmatprep.subr.mxu0 0.0
    %4577 = vmatpush1.msra.mxu0 0.0
    %4578 = vmatprep.subr.mxu0 0.0
    %4579 = vmatpush1.msra.mxu0 0.0
    %4580 = vmatprep.subr.mxu0 0.0
    %4581 = vmatpush1.msra.mxu0 0.0
    %4582 = vmatprep.subr.mxu0 0.0
    %4583 = vmatpush1.msra.mxu0 0.0
    %4584 = vmatprep.subr.mxu0 0.0
    %4585 = vmatpush1.msra.mxu0 0.0
    %4586 = vmatprep.subr.mxu0 0.0
    %4587 = vmatpush1.msra.mxu0 0.0
    %4588 = vmatprep.subr.mxu0 0.0
    %4589 = vmatpush1.msra.mxu0 0.0
    %4590 = vmatprep.subr.mxu0 0.0
    %4591 = vmatpush1.msra.mxu0 0.0
    %4592 = vmatprep.mubr.f32.mxu0 0.0
    %4593 = vmatmul.mubr.f32.gmra.mrb[0].mxu0 %v4384
    %v4594 = vpop.f32.mrb[0].mxu0
    %v4595 = vadd.f32 0.0, %v4594
    %v4596 = vpop.f32.mrb[0].mxu0
    %v4597 = vadd.f32 0.0, %v4596
    %4598 = vdwg.mxu0
    %4599 = vmatprep.subr.mxu0 %v4086
    %4600 = vmatpush1.msra.mxu0 %v4085
    %4601 = vmatprep.subr.mxu0 %v4094
    %4602 = vmatpush1.msra.mxu0 %v4093
    %4603 = vmatprep.subr.mxu0 0.0
    %4604 = vmatpush1.msra.mxu0 0.0
    %4605 = vmatprep.subr.mxu0 0.0
    %4606 = vmatpush1.msra.mxu0 0.0
    %4607 = vmatprep.subr.mxu0 0.0
    %4608 = vmatpush1.msra.mxu0 0.0
    %4609 = vmatprep.subr.mxu0 0.0
    %4610 = vmatpush1.msra.mxu0 0.0
    %4611 = vmatprep.subr.mxu0 0.0
    %4612 = vmatpush1.msra.mxu0 0.0
    %4613 = vmatprep.subr.mxu0 0.0
    %4614 = vmatpush1.msra.mxu0 0.0
    %4615 = vmatprep.subr.mxu0 0.0
    %4616 = vmatpush1.msra.mxu0 0.0
    %4617 = vmatprep.subr.mxu0 0.0
    %4618 = vmatpush1.msra.mxu0 0.0
    %4619 = vmatprep.subr.mxu0 0.0
    %4620 = vmatpush1.msra.mxu0 0.0
    %4621 = vmatprep.subr.mxu0 0.0
    %4622 = vmatpush1.msra.mxu0 0.0
    %4623 = vmatprep.subr.mxu0 0.0
    %4624 = vmatpush1.msra.mxu0 0.0
    %4625 = vmatprep.subr.mxu0 0.0
    %4626 = vmatpush1.msra.mxu0 0.0
    %4627 = vmatprep.subr.mxu0 0.0
    %4628 = vmatpush1.msra.mxu0 0.0
    %4629 = vmatprep.subr.mxu0 0.0
    %4630 = vmatpush1.msra.mxu0 0.0
    %4631 = vmatprep.subr.mxu0 0.0
    %4632 = vmatpush1.msra.mxu0 0.0
    %4633 = vmatprep.subr.mxu0 0.0
    %4634 = vmatpush1.msra.mxu0 0.0
    %4635 = vmatprep.subr.mxu0 0.0
    %4636 = vmatpush1.msra.mxu0 0.0
    %4637 = vmatprep.subr.mxu0 0.0
    %4638 = vmatpush1.msra.mxu0 0.0
    %4639 = vmatprep.subr.mxu0 0.0
    %4640 = vmatpush1.msra.mxu0 0.0
    %4641 = vmatprep.subr.mxu0 0.0
    %4642 = vmatpush1.msra.mxu0 0.0
    %4643 = vmatprep.subr.mxu0 0.0
    %4644 = vmatpush1.msra.mxu0 0.0
    %4645 = vmatprep.subr.mxu0 0.0
    %4646 = vmatpush1.msra.mxu0 0.0
    %4647 = vmatprep.subr.mxu0 0.0
    %4648 = vmatpush1.msra.mxu0 0.0
    %4649 = vmatprep.subr.mxu0 0.0
    %4650 = vmatpush1.msra.mxu0 0.0
    %4651 = vmatprep.subr.mxu0 0.0
    %4652 = vmatpush1.msra.mxu0 0.0
    %4653 = vmatprep.subr.mxu0 0.0
    %4654 = vmatpush1.msra.mxu0 0.0
    %4655 = vmatprep.subr.mxu0 0.0
    %4656 = vmatpush1.msra.mxu0 0.0
    %4657 = vmatprep.subr.mxu0 0.0
    %4658 = vmatpush1.msra.mxu0 0.0
    %4659 = vmatprep.subr.mxu0 0.0
    %4660 = vmatpush1.msra.mxu0 0.0
    %4661 = vmatprep.subr.mxu0 0.0
    %4662 = vmatpush1.msra.mxu0 0.0
    %4663 = vmatprep.mubr.f32.mxu0 0.0
    %4664 = vmatmul.mubr.f32.gmra.mrb[0].mxu0 %v4384
    %v4665 = vpop.f32.mrb[0].mxu0
    %v4666 = vadd.f32 0.0, %v4665
    %v4667 = vpop.f32.mrb[0].mxu0
    %v4668 = vadd.f32 0.0, %v4667
    %4669 = vdwg.mxu0
    %v4670 = vlaneseq
    %v4671 = vshrl.u32 %v4670, 7
    %v4672 = vsub.s32 0, %v4671
    %v4673 = vrot.slane %v4166, %v4672
    %v4674 = vlaneseq
    %v4675 = vshrl.u32 %v4674, 7
    %v4676 = vsub.s32 0, %v4675
    %v4677 = vrot.slane %v4168, %v4676
    %v4678 = vlaneseq
    %v4679 = vshrl.u32 %v4678, 7
    %v4680 = vsub.s32 0, %v4679
    %v4681 = vrot.slane %v4237, %v4680
    %v4682 = vlaneseq
    %v4683 = vshrl.u32 %v4682, 7
    %v4684 = vsub.s32 0, %v4683
    %v4685 = vrot.slane %v4239, %v4684
    %v4686 = vlaneseq
    %v4687 = vshrl.u32 %v4686, 7
    %v4688 = vsub.s32 0, %v4687
    %v4689 = vrot.slane %v4308, %v4688
    %v4690 = vlaneseq
    %v4691 = vshrl.u32 %v4690, 7
    %v4692 = vsub.s32 0, %v4691
    %v4693 = vrot.slane %v4310, %v4692
    %v4694 = vlaneseq
    %v4695 = vshrl.u32 %v4694, 7
    %v4696 = vsub.s32 0, %v4695
    %v4697 = vrot.slane %v4379, %v4696
    %v4698 = vlaneseq
    %v4699 = vshrl.u32 %v4698, 7
    %v4700 = vsub.s32 0, %v4699
    %v4701 = vrot.slane %v4381, %v4700
    %v4702 = vmul.f32 %v3024, %v4673
    %v4703 = vmul.f32 %v3026, %v4677
    %v4704 = vmul.f32 %v3106, %v4681
    %v4705 = vmul.f32 %v3108, %v4685
    %v4706 = vmul.f32 %v3188, %v4689
    %v4707 = vmul.f32 %v3190, %v4693
    %v4708 = vmul.f32 %v3270, %v4697
    %v4709 = vmul.f32 %v3272, %v4701
    %v4710 = vlaneseq
    %v4711 = vshrl.u32 %v4710, 7
    %v4712 = vsub.s32 0, %v4711
    %v4713 = vrot.slane %v4453, %v4712
    %v4714 = vlaneseq
    %v4715 = vshrl.u32 %v4714, 7
    %v4716 = vsub.s32 0, %v4715
    %v4717 = vrot.slane %v4455, %v4716
    %v4718 = vlaneseq
    %v4719 = vshrl.u32 %v4718, 7
    %v4720 = vsub.s32 0, %v4719
    %v4721 = vrot.slane %v4524, %v4720
    %v4722 = vlaneseq
    %v4723 = vshrl.u32 %v4722, 7
    %v4724 = vsub.s32 0, %v4723
    %v4725 = vrot.slane %v4526, %v4724
    %v4726 = vlaneseq
    %v4727 = vshrl.u32 %v4726, 7
    %v4728 = vsub.s32 0, %v4727
    %v4729 = vrot.slane %v4595, %v4728
    %v4730 = vlaneseq
    %v4731 = vshrl.u32 %v4730, 7
    %v4732 = vsub.s32 0, %v4731
    %v4733 = vrot.slane %v4597, %v4732
    %v4734 = vlaneseq
    %v4735 = vshrl.u32 %v4734, 7
    %v4736 = vsub.s32 0, %v4735
    %v4737 = vrot.slane %v4666, %v4736
    %v4738 = vlaneseq
    %v4739 = vshrl.u32 %v4738, 7
    %v4740 = vsub.s32 0, %v4739
    %v4741 = vrot.slane %v4668, %v4740
    %v4742 = vadd.f32 %v4702, %v4713
    %v4743 = vadd.f32 %v4703, %v4717
    %v4744 = vadd.f32 %v4704, %v4721
    %v4745 = vadd.f32 %v4705, %v4725
    %v4746 = vadd.f32 %v4706, %v4729
    %v4747 = vadd.f32 %v4707, %v4733
    %v4748 = vadd.f32 %v4708, %v4737
    %v4749 = vadd.f32 %v4709, %v4741
    %v4750 = vmax.f32 %v4742, 0.0
    %v4751 = vmax.f32 %v4743, 0.0
    %v4752 = vmax.f32 %v4744, 0.0
    %v4753 = vmax.f32 %v4745, 0.0
    %v4754 = vmax.f32 %v4746, 0.0
    %v4755 = vmax.f32 %v4747, 0.0
    %v4756 = vmax.f32 %v4748, 0.0
    %v4757 = vmax.f32 %v4749, 0.0
    %v4758 = vpack.c.bf16 %v4750, %v4750
    %v4759 = vpack.c.bf16 %v4751, %v4751
    %v4760 = vpack.c.bf16 %v4752, %v4752
    %v4761 = vpack.c.bf16 %v4753, %v4753
    %v4762 = vpack.c.bf16 %v4754, %v4754
    %v4763 = vpack.c.bf16 %v4755, %v4755
    %v4764 = vpack.c.bf16 %v4756, %v4756
    %v4765 = vpack.c.bf16 %v4757, %v4757
    %v4766 = vld [vmem:[#allocation8] sm:$0xff]
    %v4767 = vld [vmem:[#allocation8 + $0x8] sm:$0xff]
    %v4768 = vld [vmem:[#allocation8 + $0x10] sm:$0xff]
    %v4769 = vld [vmem:[#allocation8 + $0x18] sm:$0xff]
    %v4770 = vld [vmem:[#allocation8 + $0x20] sm:$0xff]
    %v4771 = vld [vmem:[#allocation8 + $0x28] sm:$0xff]
    %v4772 = vld [vmem:[#allocation8 + $0x30] sm:$0xff]
    %v4773 = vld [vmem:[#allocation8 + $0x38] sm:$0xff]
    %v4774 = vld [vmem:[#allocation8 + $0x40] sm:$0xff]
    %v4775 = vld [vmem:[#allocation8 + $0x48] sm:$0xff]
    %v4776 = vld [vmem:[#allocation8 + $0x50] sm:$0xff]
    %v4777 = vld [vmem:[#allocation8 + $0x58] sm:$0xff]
    %v4778 = vld [vmem:[#allocation8 + $0x60] sm:$0xff]
    %v4779 = vld [vmem:[#allocation8 + $0x68] sm:$0xff]
    %v4780 = vld [vmem:[#allocation8 + $0x70] sm:$0xff]
    %v4781 = vld [vmem:[#allocation8 + $0x78] sm:$0xff]
    %v4782 = vld [vmem:[#allocation8 + $0x80] sm:$0xff]
    %v4783 = vld [vmem:[#allocation8 + $0x88] sm:$0xff]
    %v4784 = vld [vmem:[#allocation8 + $0x90] sm:$0xff]
    %v4785 = vld [vmem:[#allocation8 + $0x98] sm:$0xff]
    %v4786 = vld [vmem:[#allocation8 + $0xa0] sm:$0xff]
    %v4787 = vld [vmem:[#allocation8 + $0xa8] sm:$0xff]
    %v4788 = vld [vmem:[#allocation8 + $0xb0] sm:$0xff]
    %v4789 = vld [vmem:[#allocation8 + $0xb8] sm:$0xff]
    %v4790 = vld [vmem:[#allocation8 + $0xc0] sm:$0xff]
    %v4791 = vld [vmem:[#allocation8 + $0xc8] sm:$0xff]
    %v4792 = vld [vmem:[#allocation8 + $0xd0] sm:$0xff]
    %v4793 = vld [vmem:[#allocation8 + $0xd8] sm:$0xff]
    %v4794 = vld [vmem:[#allocation8 + $0xe0] sm:$0xff]
    %v4795 = vld [vmem:[#allocation8 + $0xe8] sm:$0xff]
    %v4796 = vld [vmem:[#allocation8 + $0xf0] sm:$0xff]
    %v4797 = vld [vmem:[#allocation8 + $0xf8] sm:$0xff]
    %v4798 = vld [vmem:[#allocation8 + $0x100] sm:$0xff]
    %v4799 = vld [vmem:[#allocation8 + $0x108] sm:$0xff]
    %v4800 = vld [vmem:[#allocation8 + $0x110] sm:$0xff]
    %v4801 = vld [vmem:[#allocation8 + $0x118] sm:$0xff]
    %v4802 = vld [vmem:[#allocation8 + $0x120] sm:$0xff]
    %v4803 = vld [vmem:[#allocation8 + $0x128] sm:$0xff]
    %v4804 = vld [vmem:[#allocation8 + $0x130] sm:$0xff]
    %v4805 = vld [vmem:[#allocation8 + $0x138] sm:$0xff]
    %v4806 = vld [vmem:[#allocation8 + $0x140] sm:$0xff]
    %v4807 = vld [vmem:[#allocation8 + $0x148] sm:$0xff]
    %v4808 = vld [vmem:[#allocation8 + $0x150] sm:$0xff]
    %v4809 = vld [vmem:[#allocation8 + $0x158] sm:$0xff]
    %v4810 = vld [vmem:[#allocation8 + $0x160] sm:$0xff]
    %v4811 = vld [vmem:[#allocation8 + $0x168] sm:$0xff]
    %v4812 = vld [vmem:[#allocation8 + $0x170] sm:$0xff]
    %v4813 = vld [vmem:[#allocation8 + $0x178] sm:$0xff]
    %v4814 = vld [vmem:[#allocation8 + $0x180] sm:$0xff]
    %v4815 = vld [vmem:[#allocation8 + $0x188] sm:$0xff]
    %v4816 = vld [vmem:[#allocation8 + $0x190] sm:$0xff]
    %v4817 = vld [vmem:[#allocation8 + $0x198] sm:$0xff]
    %v4818 = vld [vmem:[#allocation8 + $0x1a0] sm:$0xff]
    %v4819 = vld [vmem:[#allocation8 + $0x1a8] sm:$0xff]
    %v4820 = vld [vmem:[#allocation8 + $0x1b0] sm:$0xff]
    %v4821 = vld [vmem:[#allocation8 + $0x1b8] sm:$0xff]
    %v4822 = vld [vmem:[#allocation8 + $0x1c0] sm:$0xff]
    %v4823 = vld [vmem:[#allocation8 + $0x1c8] sm:$0xff]
    %v4824 = vld [vmem:[#allocation8 + $0x1d0] sm:$0xff]
    %v4825 = vld [vmem:[#allocation8 + $0x1d8] sm:$0xff]
    %v4826 = vld [vmem:[#allocation8 + $0x1e0] sm:$0xff]
    %v4827 = vld [vmem:[#allocation8 + $0x1e8] sm:$0xff]
    %v4828 = vld [vmem:[#allocation8 + $0x1f0] sm:$0xff]
    %v4829 = vld [vmem:[#allocation8 + $0x1f8] sm:$0xff]
    %v4830 = vld [vmem:[#allocation8 + $0x200] sm:$0xff]
    %v4831 = vld [vmem:[#allocation8 + $0x208] sm:$0xff]
    %v4832 = vld [vmem:[#allocation8 + $0x210] sm:$0xff]
    %v4833 = vld [vmem:[#allocation8 + $0x218] sm:$0xff]
    %v4834 = vld [vmem:[#allocation8 + $0x220] sm:$0xff]
    %v4835 = vld [vmem:[#allocation8 + $0x228] sm:$0xff]
    %v4836 = vld [vmem:[#allocation8 + $0x230] sm:$0xff]
    %v4837 = vld [vmem:[#allocation8 + $0x238] sm:$0xff]
    %v4838 = vld [vmem:[#allocation8 + $0x240] sm:$0xff]
    %v4839 = vld [vmem:[#allocation8 + $0x248] sm:$0xff]
    %v4840 = vld [vmem:[#allocation8 + $0x250] sm:$0xff]
    %v4841 = vld [vmem:[#allocation8 + $0x258] sm:$0xff]
    %v4842 = vld [vmem:[#allocation8 + $0x260] sm:$0xff]
    %v4843 = vld [vmem:[#allocation8 + $0x268] sm:$0xff]
    %v4844 = vld [vmem:[#allocation8 + $0x270] sm:$0xff]
    %v4845 = vld [vmem:[#allocation8 + $0x278] sm:$0xff]
    %v4846 = vld [vmem:[#allocation8 + $0x280] sm:$0xff]
    %v4847 = vld [vmem:[#allocation8 + $0x288] sm:$0xff]
    %v4848 = vld [vmem:[#allocation8 + $0x290] sm:$0xff]
    %v4849 = vld [vmem:[#allocation8 + $0x298] sm:$0xff]
    %v4850 = vld [vmem:[#allocation8 + $0x2a0] sm:$0xff]
    %v4851 = vld [vmem:[#allocation8 + $0x2a8] sm:$0xff]
    %v4852 = vld [vmem:[#allocation8 + $0x2b0] sm:$0xff]
    %v4853 = vld [vmem:[#allocation8 + $0x2b8] sm:$0xff]
    %v4854 = vld [vmem:[#allocation8 + $0x2c0] sm:$0xff]
    %v4855 = vld [vmem:[#allocation8 + $0x2c8] sm:$0xff]
    %v4856 = vld [vmem:[#allocation8 + $0x2d0] sm:$0xff]
    %v4857 = vld [vmem:[#allocation8 + $0x2d8] sm:$0xff]
    %v4858 = vld [vmem:[#allocation8 + $0x2e0] sm:$0xff]
    %v4859 = vld [vmem:[#allocation8 + $0x2e8] sm:$0xff]
    %v4860 = vld [vmem:[#allocation8 + $0x2f0] sm:$0xff]
    %v4861 = vld [vmem:[#allocation8 + $0x2f8] sm:$0xff]
    %v4862 = vld [vmem:[#allocation8 + $0x300] sm:$0xff]
    %v4863 = vld [vmem:[#allocation8 + $0x308] sm:$0xff]
    %v4864 = vld [vmem:[#allocation8 + $0x310] sm:$0xff]
    %v4865 = vld [vmem:[#allocation8 + $0x318] sm:$0xff]
    %v4866 = vld [vmem:[#allocation8 + $0x320] sm:$0xff]
    %v4867 = vld [vmem:[#allocation8 + $0x328] sm:$0xff]
    %v4868 = vld [vmem:[#allocation8 + $0x330] sm:$0xff]
    %v4869 = vld [vmem:[#allocation8 + $0x338] sm:$0xff]
    %v4870 = vld [vmem:[#allocation8 + $0x340] sm:$0xff]
    %v4871 = vld [vmem:[#allocation8 + $0x348] sm:$0xff]
    %v4872 = vld [vmem:[#allocation8 + $0x350] sm:$0xff]
    %v4873 = vld [vmem:[#allocation8 + $0x358] sm:$0xff]
    %v4874 = vld [vmem:[#allocation8 + $0x360] sm:$0xff]
    %v4875 = vld [vmem:[#allocation8 + $0x368] sm:$0xff]
    %v4876 = vld [vmem:[#allocation8 + $0x370] sm:$0xff]
    %v4877 = vld [vmem:[#allocation8 + $0x378] sm:$0xff]
    %v4878 = vld [vmem:[#allocation8 + $0x380] sm:$0xff]
    %v4879 = vld [vmem:[#allocation8 + $0x388] sm:$0xff]
    %v4880 = vld [vmem:[#allocation8 + $0x390] sm:$0xff]
    %v4881 = vld [vmem:[#allocation8 + $0x398] sm:$0xff]
    %v4882 = vld [vmem:[#allocation8 + $0x3a0] sm:$0xff]
    %v4883 = vld [vmem:[#allocation8 + $0x3a8] sm:$0xff]
    %v4884 = vld [vmem:[#allocation8 + $0x3b0] sm:$0xff]
    %v4885 = vld [vmem:[#allocation8 + $0x3b8] sm:$0xff]
    %v4886 = vld [vmem:[#allocation8 + $0x3c0] sm:$0xff]
    %v4887 = vld [vmem:[#allocation8 + $0x3c8] sm:$0xff]
    %v4888 = vld [vmem:[#allocation8 + $0x3d0] sm:$0xff]
    %v4889 = vld [vmem:[#allocation8 + $0x3d8] sm:$0xff]
    %v4890 = vld [vmem:[#allocation8 + $0x3e0] sm:$0xff]
    %v4891 = vld [vmem:[#allocation8 + $0x3e8] sm:$0xff]
    %v4892 = vld [vmem:[#allocation8 + $0x3f0] sm:$0xff]
    %v4893 = vld [vmem:[#allocation8 + $0x3f8] sm:$0xff]
    %v4894 = vld [vmem:[#allocation8 + $0x400] sm:$0xff]
    %v4895 = vld [vmem:[#allocation8 + $0x408] sm:$0xff]
    %v4896 = vld [vmem:[#allocation8 + $0x410] sm:$0xff]
    %v4897 = vld [vmem:[#allocation8 + $0x418] sm:$0xff]
    %v4898 = vld [vmem:[#allocation8 + $0x420] sm:$0xff]
    %v4899 = vld [vmem:[#allocation8 + $0x428] sm:$0xff]
    %v4900 = vld [vmem:[#allocation8 + $0x430] sm:$0xff]
    %v4901 = vld [vmem:[#allocation8 + $0x438] sm:$0xff]
    %v4902 = vld [vmem:[#allocation8 + $0x440] sm:$0xff]
    %v4903 = vld [vmem:[#allocation8 + $0x448] sm:$0xff]
    %v4904 = vld [vmem:[#allocation8 + $0x450] sm:$0xff]
    %v4905 = vld [vmem:[#allocation8 + $0x458] sm:$0xff]
    %v4906 = vld [vmem:[#allocation8 + $0x460] sm:$0xff]
    %v4907 = vld [vmem:[#allocation8 + $0x468] sm:$0xff]
    %v4908 = vld [vmem:[#allocation8 + $0x470] sm:$0xff]
    %v4909 = vld [vmem:[#allocation8 + $0x478] sm:$0xff]
    %v4910 = vld [vmem:[#allocation8 + $0x480] sm:$0xff]
    %v4911 = vld [vmem:[#allocation8 + $0x488] sm:$0xff]
    %v4912 = vld [vmem:[#allocation8 + $0x490] sm:$0xff]
    %v4913 = vld [vmem:[#allocation8 + $0x498] sm:$0xff]
    %v4914 = vld [vmem:[#allocation8 + $0x4a0] sm:$0xff]
    %v4915 = vld [vmem:[#allocation8 + $0x4a8] sm:$0xff]
    %v4916 = vld [vmem:[#allocation8 + $0x4b0] sm:$0xff]
    %v4917 = vld [vmem:[#allocation8 + $0x4b8] sm:$0xff]
    %v4918 = vld [vmem:[#allocation8 + $0x4c0] sm:$0xff]
    %v4919 = vld [vmem:[#allocation8 + $0x4c8] sm:$0xff]
    %v4920 = vld [vmem:[#allocation8 + $0x4d0] sm:$0xff]
    %v4921 = vld [vmem:[#allocation8 + $0x4d8] sm:$0xff]
    %v4922 = vld [vmem:[#allocation8 + $0x4e0] sm:$0xff]
    %v4923 = vld [vmem:[#allocation8 + $0x4e8] sm:$0xff]
    %v4924 = vld [vmem:[#allocation8 + $0x4f0] sm:$0xff]
    %v4925 = vld [vmem:[#allocation8 + $0x4f8] sm:$0xff]
    %v4926 = vld [vmem:[#allocation8 + $0x500] sm:$0xff]
    %v4927 = vld [vmem:[#allocation8 + $0x508] sm:$0xff]
    %v4928 = vld [vmem:[#allocation8 + $0x510] sm:$0xff]
    %v4929 = vld [vmem:[#allocation8 + $0x518] sm:$0xff]
    %v4930 = vld [vmem:[#allocation8 + $0x520] sm:$0xff]
    %v4931 = vld [vmem:[#allocation8 + $0x528] sm:$0xff]
    %v4932 = vld [vmem:[#allocation8 + $0x530] sm:$0xff]
    %v4933 = vld [vmem:[#allocation8 + $0x538] sm:$0xff]
    %v4934 = vld [vmem:[#allocation8 + $0x540] sm:$0xff]
    %v4935 = vld [vmem:[#allocation8 + $0x548] sm:$0xff]
    %v4936 = vld [vmem:[#allocation8 + $0x550] sm:$0xff]
    %v4937 = vld [vmem:[#allocation8 + $0x558] sm:$0xff]
    %v4938 = vld [vmem:[#allocation8 + $0x560] sm:$0xff]
    %v4939 = vld [vmem:[#allocation8 + $0x568] sm:$0xff]
    %v4940 = vld [vmem:[#allocation8 + $0x570] sm:$0xff]
    %v4941 = vld [vmem:[#allocation8 + $0x578] sm:$0xff]
    %v4942 = vld [vmem:[#allocation8 + $0x580] sm:$0xff]
    %v4943 = vld [vmem:[#allocation8 + $0x588] sm:$0xff]
    %v4944 = vld [vmem:[#allocation8 + $0x590] sm:$0xff]
    %v4945 = vld [vmem:[#allocation8 + $0x598] sm:$0xff]
    %v4946 = vld [vmem:[#allocation8 + $0x5a0] sm:$0xff]
    %v4947 = vld [vmem:[#allocation8 + $0x5a8] sm:$0xff]
    %v4948 = vld [vmem:[#allocation8 + $0x5b0] sm:$0xff]
    %v4949 = vld [vmem:[#allocation8 + $0x5b8] sm:$0xff]
    %v4950 = vld [vmem:[#allocation8 + $0x5c0] sm:$0xff]
    %v4951 = vld [vmem:[#allocation8 + $0x5c8] sm:$0xff]
    %v4952 = vld [vmem:[#allocation8 + $0x5d0] sm:$0xff]
    %v4953 = vld [vmem:[#allocation8 + $0x5d8] sm:$0xff]
    %v4954 = vld [vmem:[#allocation8 + $0x5e0] sm:$0xff]
    %v4955 = vld [vmem:[#allocation8 + $0x5e8] sm:$0xff]
    %v4956 = vld [vmem:[#allocation8 + $0x5f0] sm:$0xff]
    %v4957 = vld [vmem:[#allocation8 + $0x5f8] sm:$0xff]
    %v4958 = vld [vmem:[#allocation8 + $0x600] sm:$0xff]
    %v4959 = vld [vmem:[#allocation8 + $0x608] sm:$0xff]
    %v4960 = vld [vmem:[#allocation8 + $0x610] sm:$0xff]
    %v4961 = vld [vmem:[#allocation8 + $0x618] sm:$0xff]
    %v4962 = vld [vmem:[#allocation8 + $0x620] sm:$0xff]
    %v4963 = vld [vmem:[#allocation8 + $0x628] sm:$0xff]
    %v4964 = vld [vmem:[#allocation8 + $0x630] sm:$0xff]
    %v4965 = vld [vmem:[#allocation8 + $0x638] sm:$0xff]
    %v4966 = vld [vmem:[#allocation8 + $0x640] sm:$0xff]
    %v4967 = vld [vmem:[#allocation8 + $0x648] sm:$0xff]
    %v4968 = vld [vmem:[#allocation8 + $0x650] sm:$0xff]
    %v4969 = vld [vmem:[#allocation8 + $0x658] sm:$0xff]
    %v4970 = vld [vmem:[#allocation8 + $0x660] sm:$0xff]
    %v4971 = vld [vmem:[#allocation8 + $0x668] sm:$0xff]
    %v4972 = vld [vmem:[#allocation8 + $0x670] sm:$0xff]
    %v4973 = vld [vmem:[#allocation8 + $0x678] sm:$0xff]
    %v4974 = vld [vmem:[#allocation8 + $0x680] sm:$0xff]
    %v4975 = vld [vmem:[#allocation8 + $0x688] sm:$0xff]
    %v4976 = vld [vmem:[#allocation8 + $0x690] sm:$0xff]
    %v4977 = vld [vmem:[#allocation8 + $0x698] sm:$0xff]
    %v4978 = vld [vmem:[#allocation8 + $0x6a0] sm:$0xff]
    %v4979 = vld [vmem:[#allocation8 + $0x6a8] sm:$0xff]
    %v4980 = vld [vmem:[#allocation8 + $0x6b0] sm:$0xff]
    %v4981 = vld [vmem:[#allocation8 + $0x6b8] sm:$0xff]
    %v4982 = vld [vmem:[#allocation8 + $0x6c0] sm:$0xff]
    %v4983 = vld [vmem:[#allocation8 + $0x6c8] sm:$0xff]
    %v4984 = vld [vmem:[#allocation8 + $0x6d0] sm:$0xff]
    %v4985 = vld [vmem:[#allocation8 + $0x6d8] sm:$0xff]
    %v4986 = vld [vmem:[#allocation8 + $0x6e0] sm:$0xff]
    %v4987 = vld [vmem:[#allocation8 + $0x6e8] sm:$0xff]
    %v4988 = vld [vmem:[#allocation8 + $0x6f0] sm:$0xff]
    %v4989 = vld [vmem:[#allocation8 + $0x6f8] sm:$0xff]
    %v4990 = vld [vmem:[#allocation8 + $0x700] sm:$0xff]
    %v4991 = vld [vmem:[#allocation8 + $0x708] sm:$0xff]
    %v4992 = vld [vmem:[#allocation8 + $0x710] sm:$0xff]
    %v4993 = vld [vmem:[#allocation8 + $0x718] sm:$0xff]
    %v4994 = vld [vmem:[#allocation8 + $0x720] sm:$0xff]
    %v4995 = vld [vmem:[#allocation8 + $0x728] sm:$0xff]
    %v4996 = vld [vmem:[#allocation8 + $0x730] sm:$0xff]
    %v4997 = vld [vmem:[#allocation8 + $0x738] sm:$0xff]
    %v4998 = vld [vmem:[#allocation8 + $0x740] sm:$0xff]
    %v4999 = vld [vmem:[#allocation8 + $0x748] sm:$0xff]
    %v5000 = vld [vmem:[#allocation8 + $0x750] sm:$0xff]
    %v5001 = vld [vmem:[#allocation8 + $0x758] sm:$0xff]
    %v5002 = vld [vmem:[#allocation8 + $0x760] sm:$0xff]
    %v5003 = vld [vmem:[#allocation8 + $0x768] sm:$0xff]
    %v5004 = vld [vmem:[#allocation8 + $0x770] sm:$0xff]
    %v5005 = vld [vmem:[#allocation8 + $0x778] sm:$0xff]
    %v5006 = vld [vmem:[#allocation8 + $0x780] sm:$0xff]
    %v5007 = vld [vmem:[#allocation8 + $0x788] sm:$0xff]
    %v5008 = vld [vmem:[#allocation8 + $0x790] sm:$0xff]
    %v5009 = vld [vmem:[#allocation8 + $0x798] sm:$0xff]
    %v5010 = vld [vmem:[#allocation8 + $0x7a0] sm:$0xff]
    %v5011 = vld [vmem:[#allocation8 + $0x7a8] sm:$0xff]
    %v5012 = vld [vmem:[#allocation8 + $0x7b0] sm:$0xff]
    %v5013 = vld [vmem:[#allocation8 + $0x7b8] sm:$0xff]
    %v5014 = vld [vmem:[#allocation8 + $0x7c0] sm:$0xff]
    %v5015 = vld [vmem:[#allocation8 + $0x7c8] sm:$0xff]
    %v5016 = vld [vmem:[#allocation8 + $0x7d0] sm:$0xff]
    %v5017 = vld [vmem:[#allocation8 + $0x7d8] sm:$0xff]
    %v5018 = vld [vmem:[#allocation8 + $0x7e0] sm:$0xff]
    %v5019 = vld [vmem:[#allocation8 + $0x7e8] sm:$0xff]
    %v5020 = vld [vmem:[#allocation8 + $0x7f0] sm:$0xff]
    %v5021 = vld [vmem:[#allocation8 + $0x7f8] sm:$0xff]
    %v5022 = vld [vmem:[#allocation8 + $0x800] sm:$0xff]
    %v5023 = vld [vmem:[#allocation8 + $0x808] sm:$0xff]
    %v5024 = vld [vmem:[#allocation8 + $0x810] sm:$0xff]
    %v5025 = vld [vmem:[#allocation8 + $0x818] sm:$0xff]
    %v5026 = vld [vmem:[#allocation8 + $0x820] sm:$0xff]
    %v5027 = vld [vmem:[#allocation8 + $0x828] sm:$0xff]
    %v5028 = vld [vmem:[#allocation8 + $0x830] sm:$0xff]
    %v5029 = vld [vmem:[#allocation8 + $0x838] sm:$0xff]
    %v5030 = vld [vmem:[#allocation8 + $0x840] sm:$0xff]
    %v5031 = vld [vmem:[#allocation8 + $0x848] sm:$0xff]
    %v5032 = vld [vmem:[#allocation8 + $0x850] sm:$0xff]
    %v5033 = vld [vmem:[#allocation8 + $0x858] sm:$0xff]
    %v5034 = vld [vmem:[#allocation8 + $0x860] sm:$0xff]
    %v5035 = vld [vmem:[#allocation8 + $0x868] sm:$0xff]
    %v5036 = vld [vmem:[#allocation8 + $0x870] sm:$0xff]
    %v5037 = vld [vmem:[#allocation8 + $0x878] sm:$0xff]
    %v5038 = vld [vmem:[#allocation8 + $0x880] sm:$0xff]
    %v5039 = vld [vmem:[#allocation8 + $0x888] sm:$0xff]
    %v5040 = vld [vmem:[#allocation8 + $0x890] sm:$0xff]
    %v5041 = vld [vmem:[#allocation8 + $0x898] sm:$0xff]
    %v5042 = vld [vmem:[#allocation8 + $0x8a0] sm:$0xff]
    %v5043 = vld [vmem:[#allocation8 + $0x8a8] sm:$0xff]
    %v5044 = vld [vmem:[#allocation8 + $0x8b0] sm:$0xff]
    %v5045 = vld [vmem:[#allocation8 + $0x8b8] sm:$0xff]
    %v5046 = vld [vmem:[#allocation8 + $0x8c0] sm:$0xff]
    %v5047 = vld [vmem:[#allocation8 + $0x8c8] sm:$0xff]
    %v5048 = vld [vmem:[#allocation8 + $0x8d0] sm:$0xff]
    %v5049 = vld [vmem:[#allocation8 + $0x8d8] sm:$0xff]
    %v5050 = vld [vmem:[#allocation8 + $0x8e0] sm:$0xff]
    %v5051 = vld [vmem:[#allocation8 + $0x8e8] sm:$0xff]
    %v5052 = vld [vmem:[#allocation8 + $0x8f0] sm:$0xff]
    %v5053 = vld [vmem:[#allocation8 + $0x8f8] sm:$0xff]
    %v5054 = vld [vmem:[#allocation8 + $0x900] sm:$0xff]
    %v5055 = vld [vmem:[#allocation8 + $0x908] sm:$0xff]
    %v5056 = vld [vmem:[#allocation8 + $0x910] sm:$0xff]
    %v5057 = vld [vmem:[#allocation8 + $0x918] sm:$0xff]
    %v5058 = vld [vmem:[#allocation8 + $0x920] sm:$0xff]
    %v5059 = vld [vmem:[#allocation8 + $0x928] sm:$0xff]
    %v5060 = vld [vmem:[#allocation8 + $0x930] sm:$0xff]
    %v5061 = vld [vmem:[#allocation8 + $0x938] sm:$0xff]
    %v5062 = vld [vmem:[#allocation8 + $0x940] sm:$0xff]
    %v5063 = vld [vmem:[#allocation8 + $0x948] sm:$0xff]
    %v5064 = vld [vmem:[#allocation8 + $0x950] sm:$0xff]
    %v5065 = vld [vmem:[#allocation8 + $0x958] sm:$0xff]
    %v5066 = vld [vmem:[#allocation8 + $0x960] sm:$0xff]
    %v5067 = vld [vmem:[#allocation8 + $0x968] sm:$0xff]
    %v5068 = vld [vmem:[#allocation8 + $0x970] sm:$0xff]
    %v5069 = vld [vmem:[#allocation8 + $0x978] sm:$0xff]
    %v5070 = vld [vmem:[#allocation8 + $0x980] sm:$0xff]
    %v5071 = vld [vmem:[#allocation8 + $0x988] sm:$0xff]
    %v5072 = vld [vmem:[#allocation8 + $0x990] sm:$0xff]
    %v5073 = vld [vmem:[#allocation8 + $0x998] sm:$0xff]
    %v5074 = vld [vmem:[#allocation8 + $0x9a0] sm:$0xff]
    %v5075 = vld [vmem:[#allocation8 + $0x9a8] sm:$0xff]
    %v5076 = vld [vmem:[#allocation8 + $0x9b0] sm:$0xff]
    %v5077 = vld [vmem:[#allocation8 + $0x9b8] sm:$0xff]
    %v5078 = vld [vmem:[#allocation8 + $0x9c0] sm:$0xff]
    %v5079 = vld [vmem:[#allocation8 + $0x9c8] sm:$0xff]
    %v5080 = vld [vmem:[#allocation8 + $0x9d0] sm:$0xff]
    %v5081 = vld [vmem:[#allocation8 + $0x9d8] sm:$0xff]
    %v5082 = vld [vmem:[#allocation8 + $0x9e0] sm:$0xff]
    %v5083 = vld [vmem:[#allocation8 + $0x9e8] sm:$0xff]
    %v5084 = vld [vmem:[#allocation8 + $0x9f0] sm:$0xff]
    %v5085 = vld [vmem:[#allocation8 + $0x9f8] sm:$0xff]
    %v5086 = vld [vmem:[#allocation8 + $0xa00] sm:$0xff]
    %v5087 = vld [vmem:[#allocation8 + $0xa08] sm:$0xff]
    %v5088 = vld [vmem:[#allocation8 + $0xa10] sm:$0xff]
    %v5089 = vld [vmem:[#allocation8 + $0xa18] sm:$0xff]
    %v5090 = vld [vmem:[#allocation8 + $0xa20] sm:$0xff]
    %v5091 = vld [vmem:[#allocation8 + $0xa28] sm:$0xff]
    %v5092 = vld [vmem:[#allocation8 + $0xa30] sm:$0xff]
    %v5093 = vld [vmem:[#allocation8 + $0xa38] sm:$0xff]
    %v5094 = vld [vmem:[#allocation8 + $0xa40] sm:$0xff]
    %v5095 = vld [vmem:[#allocation8 + $0xa48] sm:$0xff]
    %v5096 = vld [vmem:[#allocation8 + $0xa50] sm:$0xff]
    %v5097 = vld [vmem:[#allocation8 + $0xa58] sm:$0xff]
    %v5098 = vld [vmem:[#allocation8 + $0xa60] sm:$0xff]
    %v5099 = vld [vmem:[#allocation8 + $0xa68] sm:$0xff]
    %v5100 = vld [vmem:[#allocation8 + $0xa70] sm:$0xff]
    %v5101 = vld [vmem:[#allocation8 + $0xa78] sm:$0xff]
    %v5102 = vld [vmem:[#allocation8 + $0xa80] sm:$0xff]
    %v5103 = vld [vmem:[#allocation8 + $0xa88] sm:$0xff]
    %v5104 = vld [vmem:[#allocation8 + $0xa90] sm:$0xff]
    %v5105 = vld [vmem:[#allocation8 + $0xa98] sm:$0xff]
    %v5106 = vld [vmem:[#allocation8 + $0xaa0] sm:$0xff]
    %v5107 = vld [vmem:[#allocation8 + $0xaa8] sm:$0xff]
    %v5108 = vld [vmem:[#allocation8 + $0xab0] sm:$0xff]
    %v5109 = vld [vmem:[#allocation8 + $0xab8] sm:$0xff]
    %v5110 = vld [vmem:[#allocation8 + $0xac0] sm:$0xff]
    %v5111 = vld [vmem:[#allocation8 + $0xac8] sm:$0xff]
    %v5112 = vld [vmem:[#allocation8 + $0xad0] sm:$0xff]
    %v5113 = vld [vmem:[#allocation8 + $0xad8] sm:$0xff]
    %v5114 = vld [vmem:[#allocation8 + $0xae0] sm:$0xff]
    %v5115 = vld [vmem:[#allocation8 + $0xae8] sm:$0xff]
    %v5116 = vld [vmem:[#allocation8 + $0xaf0] sm:$0xff]
    %v5117 = vld [vmem:[#allocation8 + $0xaf8] sm:$0xff]
    %v5118 = vld [vmem:[#allocation8 + $0xb00] sm:$0xff]
    %v5119 = vld [vmem:[#allocation8 + $0xb08] sm:$0xff]
    %v5120 = vld [vmem:[#allocation8 + $0xb10] sm:$0xff]
    %v5121 = vld [vmem:[#allocation8 + $0xb18] sm:$0xff]
    %v5122 = vld [vmem:[#allocation8 + $0xb20] sm:$0xff]
    %v5123 = vld [vmem:[#allocation8 + $0xb28] sm:$0xff]
    %v5124 = vld [vmem:[#allocation8 + $0xb30] sm:$0xff]
    %v5125 = vld [vmem:[#allocation8 + $0xb38] sm:$0xff]
    %v5126 = vld [vmem:[#allocation8 + $0xb40] sm:$0xff]
    %v5127 = vld [vmem:[#allocation8 + $0xb48] sm:$0xff]
    %v5128 = vld [vmem:[#allocation8 + $0xb50] sm:$0xff]
    %v5129 = vld [vmem:[#allocation8 + $0xb58] sm:$0xff]
    %v5130 = vld [vmem:[#allocation8 + $0xb60] sm:$0xff]
    %v5131 = vld [vmem:[#allocation8 + $0xb68] sm:$0xff]
    %v5132 = vld [vmem:[#allocation8 + $0xb70] sm:$0xff]
    %v5133 = vld [vmem:[#allocation8 + $0xb78] sm:$0xff]
    %v5134 = vld [vmem:[#allocation8 + $0xb80] sm:$0xff]
    %v5135 = vld [vmem:[#allocation8 + $0xb88] sm:$0xff]
    %v5136 = vld [vmem:[#allocation8 + $0xb90] sm:$0xff]
    %v5137 = vld [vmem:[#allocation8 + $0xb98] sm:$0xff]
    %v5138 = vld [vmem:[#allocation8 + $0xba0] sm:$0xff]
    %v5139 = vld [vmem:[#allocation8 + $0xba8] sm:$0xff]
    %v5140 = vld [vmem:[#allocation8 + $0xbb0] sm:$0xff]
    %v5141 = vld [vmem:[#allocation8 + $0xbb8] sm:$0xff]
    %v5142 = vld [vmem:[#allocation8 + $0xbc0] sm:$0xff]
    %v5143 = vld [vmem:[#allocation8 + $0xbc8] sm:$0xff]
    %v5144 = vld [vmem:[#allocation8 + $0xbd0] sm:$0xff]
    %v5145 = vld [vmem:[#allocation8 + $0xbd8] sm:$0xff]
    %v5146 = vld [vmem:[#allocation8 + $0xbe0] sm:$0xff]
    %v5147 = vld [vmem:[#allocation8 + $0xbe8] sm:$0xff]
    %v5148 = vld [vmem:[#allocation8 + $0xbf0] sm:$0xff]
    %v5149 = vld [vmem:[#allocation8 + $0xbf8] sm:$0xff]
    %v5534 = vunpack.c.l.b16 %v4766
    %v5535 = vunpack.c.h.b16 %v4766
    %v5536 = vunpack.c.l.b16 %v4767
    %v5537 = vunpack.c.h.b16 %v4767
    %v5538 = vunpack.c.l.b16 %v4768
    %v5539 = vunpack.c.h.b16 %v4768
    %v5540 = vunpack.c.l.b16 %v4769
    %v5541 = vunpack.c.h.b16 %v4769
    %v5542 = vunpack.c.l.b16 %v4770
    %v5543 = vunpack.c.h.b16 %v4770
    %v5544 = vunpack.c.l.b16 %v4771
    %v5545 = vunpack.c.h.b16 %v4771
    %v5546 = vunpack.c.l.b16 %v4772
    %v5547 = vunpack.c.h.b16 %v4772
    %v5548 = vunpack.c.l.b16 %v4773
    %v5549 = vunpack.c.h.b16 %v4773
    %v5550 = vunpack.c.l.b16 %v4774
    %v5551 = vunpack.c.h.b16 %v4774
    %v5552 = vunpack.c.l.b16 %v4775
    %v5553 = vunpack.c.h.b16 %v4775
    %v5554 = vunpack.c.l.b16 %v4776
    %v5555 = vunpack.c.h.b16 %v4776
    %v5556 = vunpack.c.l.b16 %v4777
    %v5557 = vunpack.c.h.b16 %v4777
    %v5558 = vunpack.c.l.b16 %v4778
    %v5559 = vunpack.c.h.b16 %v4778
    %v5560 = vunpack.c.l.b16 %v4779
    %v5561 = vunpack.c.h.b16 %v4779
    %v5562 = vunpack.c.l.b16 %v4780
    %v5563 = vunpack.c.h.b16 %v4780
    %v5564 = vunpack.c.l.b16 %v4781
    %v5565 = vunpack.c.h.b16 %v4781
    %v5566 = vunpack.c.l.b16 %v4782
    %v5567 = vunpack.c.h.b16 %v4782
    %v5568 = vunpack.c.l.b16 %v4783
    %v5569 = vunpack.c.h.b16 %v4783
    %v5570 = vunpack.c.l.b16 %v4784
    %v5571 = vunpack.c.h.b16 %v4784
    %v5572 = vunpack.c.l.b16 %v4785
    %v5573 = vunpack.c.h.b16 %v4785
    %v5574 = vunpack.c.l.b16 %v4786
    %v5575 = vunpack.c.h.b16 %v4786
    %v5576 = vunpack.c.l.b16 %v4787
    %v5577 = vunpack.c.h.b16 %v4787
    %v5578 = vunpack.c.l.b16 %v4788
    %v5579 = vunpack.c.h.b16 %v4788
    %v5580 = vunpack.c.l.b16 %v4789
    %v5581 = vunpack.c.h.b16 %v4789
    %v5582 = vunpack.c.l.b16 %v4790
    %v5583 = vunpack.c.h.b16 %v4790
    %v5584 = vunpack.c.l.b16 %v4791
    %v5585 = vunpack.c.h.b16 %v4791
    %v5586 = vunpack.c.l.b16 %v4792
    %v5587 = vunpack.c.h.b16 %v4792
    %v5588 = vunpack.c.l.b16 %v4793
    %v5589 = vunpack.c.h.b16 %v4793
    %v5590 = vunpack.c.l.b16 %v4794
    %v5591 = vunpack.c.h.b16 %v4794
    %v5592 = vunpack.c.l.b16 %v4795
    %v5593 = vunpack.c.h.b16 %v4795
    %v5594 = vunpack.c.l.b16 %v4796
    %v5595 = vunpack.c.h.b16 %v4796
    %v5596 = vunpack.c.l.b16 %v4797
    %v5597 = vunpack.c.h.b16 %v4797
    %v5598 = vunpack.c.l.b16 %v4798
    %v5599 = vunpack.c.h.b16 %v4798
    %v5600 = vunpack.c.l.b16 %v4799
    %v5601 = vunpack.c.h.b16 %v4799
    %v5602 = vunpack.c.l.b16 %v4800
    %v5603 = vunpack.c.h.b16 %v4800
    %v5604 = vunpack.c.l.b16 %v4801
    %v5605 = vunpack.c.h.b16 %v4801
    %v5606 = vunpack.c.l.b16 %v4802
    %v5607 = vunpack.c.h.b16 %v4802
    %v5608 = vunpack.c.l.b16 %v4803
    %v5609 = vunpack.c.h.b16 %v4803
    %v5610 = vunpack.c.l.b16 %v4804
    %v5611 = vunpack.c.h.b16 %v4804
    %v5612 = vunpack.c.l.b16 %v4805
    %v5613 = vunpack.c.h.b16 %v4805
    %v5614 = vunpack.c.l.b16 %v4806
    %v5615 = vunpack.c.h.b16 %v4806
    %v5616 = vunpack.c.l.b16 %v4807
    %v5617 = vunpack.c.h.b16 %v4807
    %v5618 = vunpack.c.l.b16 %v4808
    %v5619 = vunpack.c.h.b16 %v4808
    %v5620 = vunpack.c.l.b16 %v4809
    %v5621 = vunpack.c.h.b16 %v4809
    %v5622 = vunpack.c.l.b16 %v4810
    %v5623 = vunpack.c.h.b16 %v4810
    %v5624 = vunpack.c.l.b16 %v4811
    %v5625 = vunpack.c.h.b16 %v4811
    %v5626 = vunpack.c.l.b16 %v4812
    %v5627 = vunpack.c.h.b16 %v4812
    %v5628 = vunpack.c.l.b16 %v4813
    %v5629 = vunpack.c.h.b16 %v4813
    %v5630 = vunpack.c.l.b16 %v4814
    %v5631 = vunpack.c.h.b16 %v4814
    %v5632 = vunpack.c.l.b16 %v4815
    %v5633 = vunpack.c.h.b16 %v4815
    %v5634 = vunpack.c.l.b16 %v4816
    %v5635 = vunpack.c.h.b16 %v4816
    %v5636 = vunpack.c.l.b16 %v4817
    %v5637 = vunpack.c.h.b16 %v4817
    %v5638 = vunpack.c.l.b16 %v4818
    %v5639 = vunpack.c.h.b16 %v4818
    %v5640 = vunpack.c.l.b16 %v4819
    %v5641 = vunpack.c.h.b16 %v4819
    %v5642 = vunpack.c.l.b16 %v4820
    %v5643 = vunpack.c.h.b16 %v4820
    %v5644 = vunpack.c.l.b16 %v4821
    %v5645 = vunpack.c.h.b16 %v4821
    %v5646 = vunpack.c.l.b16 %v4822
    %v5647 = vunpack.c.h.b16 %v4822
    %v5648 = vunpack.c.l.b16 %v4823
    %v5649 = vunpack.c.h.b16 %v4823
    %v5650 = vunpack.c.l.b16 %v4824
    %v5651 = vunpack.c.h.b16 %v4824
    %v5652 = vunpack.c.l.b16 %v4825
    %v5653 = vunpack.c.h.b16 %v4825
    %v5654 = vunpack.c.l.b16 %v4826
    %v5655 = vunpack.c.h.b16 %v4826
    %v5656 = vunpack.c.l.b16 %v4827
    %v5657 = vunpack.c.h.b16 %v4827
    %v5658 = vunpack.c.l.b16 %v4828
    %v5659 = vunpack.c.h.b16 %v4828
    %v5660 = vunpack.c.l.b16 %v4829
    %v5661 = vunpack.c.h.b16 %v4829
    %v5662 = vunpack.c.l.b16 %v4830
    %v5663 = vunpack.c.h.b16 %v4830
    %v5664 = vunpack.c.l.b16 %v4831
    %v5665 = vunpack.c.h.b16 %v4831
    %v5666 = vunpack.c.l.b16 %v4832
    %v5667 = vunpack.c.h.b16 %v4832
    %v5668 = vunpack.c.l.b16 %v4833
    %v5669 = vunpack.c.h.b16 %v4833
    %v5670 = vunpack.c.l.b16 %v4834
    %v5671 = vunpack.c.h.b16 %v4834
    %v5672 = vunpack.c.l.b16 %v4835
    %v5673 = vunpack.c.h.b16 %v4835
    %v5674 = vunpack.c.l.b16 %v4836
    %v5675 = vunpack.c.h.b16 %v4836
    %v5676 = vunpack.c.l.b16 %v4837
    %v5677 = vunpack.c.h.b16 %v4837
    %v5678 = vunpack.c.l.b16 %v4838
    %v5679 = vunpack.c.h.b16 %v4838
    %v5680 = vunpack.c.l.b16 %v4839
    %v5681 = vunpack.c.h.b16 %v4839
    %v5682 = vunpack.c.l.b16 %v4840
    %v5683 = vunpack.c.h.b16 %v4840
    %v5684 = vunpack.c.l.b16 %v4841
    %v5685 = vunpack.c.h.b16 %v4841
    %v5686 = vunpack.c.l.b16 %v4842
    %v5687 = vunpack.c.h.b16 %v4842
    %v5688 = vunpack.c.l.b16 %v4843
    %v5689 = vunpack.c.h.b16 %v4843
    %v5690 = vunpack.c.l.b16 %v4844
    %v5691 = vunpack.c.h.b16 %v4844
    %v5692 = vunpack.c.l.b16 %v4845
    %v5693 = vunpack.c.h.b16 %v4845
    %v5694 = vunpack.c.l.b16 %v4846
    %v5695 = vunpack.c.h.b16 %v4846
    %v5696 = vunpack.c.l.b16 %v4847
    %v5697 = vunpack.c.h.b16 %v4847
    %v5698 = vunpack.c.l.b16 %v4848
    %v5699 = vunpack.c.h.b16 %v4848
    %v5700 = vunpack.c.l.b16 %v4849
    %v5701 = vunpack.c.h.b16 %v4849
    %v5702 = vunpack.c.l.b16 %v4850
    %v5703 = vunpack.c.h.b16 %v4850
    %v5704 = vunpack.c.l.b16 %v4851
    %v5705 = vunpack.c.h.b16 %v4851
    %v5706 = vunpack.c.l.b16 %v4852
    %v5707 = vunpack.c.h.b16 %v4852
    %v5708 = vunpack.c.l.b16 %v4853
    %v5709 = vunpack.c.h.b16 %v4853
    %v5710 = vunpack.c.l.b16 %v4854
    %v5711 = vunpack.c.h.b16 %v4854
    %v5712 = vunpack.c.l.b16 %v4855
    %v5713 = vunpack.c.h.b16 %v4855
    %v5714 = vunpack.c.l.b16 %v4856
    %v5715 = vunpack.c.h.b16 %v4856
    %v5716 = vunpack.c.l.b16 %v4857
    %v5717 = vunpack.c.h.b16 %v4857
    %v5718 = vunpack.c.l.b16 %v4858
    %v5719 = vunpack.c.h.b16 %v4858
    %v5720 = vunpack.c.l.b16 %v4859
    %v5721 = vunpack.c.h.b16 %v4859
    %v5722 = vunpack.c.l.b16 %v4860
    %v5723 = vunpack.c.h.b16 %v4860
    %v5724 = vunpack.c.l.b16 %v4861
    %v5725 = vunpack.c.h.b16 %v4861
    %v5726 = vunpack.c.l.b16 %v4862
    %v5727 = vunpack.c.h.b16 %v4862
    %v5728 = vunpack.c.l.b16 %v4863
    %v5729 = vunpack.c.h.b16 %v4863
    %v5730 = vunpack.c.l.b16 %v4864
    %v5731 = vunpack.c.h.b16 %v4864
    %v5732 = vunpack.c.l.b16 %v4865
    %v5733 = vunpack.c.h.b16 %v4865
    %v5734 = vunpack.c.l.b16 %v4866
    %v5735 = vunpack.c.h.b16 %v4866
    %v5736 = vunpack.c.l.b16 %v4867
    %v5737 = vunpack.c.h.b16 %v4867
    %v5738 = vunpack.c.l.b16 %v4868
    %v5739 = vunpack.c.h.b16 %v4868
    %v5740 = vunpack.c.l.b16 %v4869
    %v5741 = vunpack.c.h.b16 %v4869
    %v5742 = vunpack.c.l.b16 %v4870
    %v5743 = vunpack.c.h.b16 %v4870
    %v5744 = vunpack.c.l.b16 %v4871
    %v5745 = vunpack.c.h.b16 %v4871
    %v5746 = vunpack.c.l.b16 %v4872
    %v5747 = vunpack.c.h.b16 %v4872
    %v5748 = vunpack.c.l.b16 %v4873
    %v5749 = vunpack.c.h.b16 %v4873
    %v5750 = vunpack.c.l.b16 %v4874
    %v5751 = vunpack.c.h.b16 %v4874
    %v5752 = vunpack.c.l.b16 %v4875
    %v5753 = vunpack.c.h.b16 %v4875
    %v5754 = vunpack.c.l.b16 %v4876
    %v5755 = vunpack.c.h.b16 %v4876
    %v5756 = vunpack.c.l.b16 %v4877
    %v5757 = vunpack.c.h.b16 %v4877
    %v5758 = vunpack.c.l.b16 %v4878
    %v5759 = vunpack.c.h.b16 %v4878
    %v5760 = vunpack.c.l.b16 %v4879
    %v5761 = vunpack.c.h.b16 %v4879
    %v5762 = vunpack.c.l.b16 %v4880
    %v5763 = vunpack.c.h.b16 %v4880
    %v5764 = vunpack.c.l.b16 %v4881
    %v5765 = vunpack.c.h.b16 %v4881
    %v5766 = vunpack.c.l.b16 %v4882
    %v5767 = vunpack.c.h.b16 %v4882
    %v5768 = vunpack.c.l.b16 %v4883
    %v5769 = vunpack.c.h.b16 %v4883
    %v5770 = vunpack.c.l.b16 %v4884
    %v5771 = vunpack.c.h.b16 %v4884
    %v5772 = vunpack.c.l.b16 %v4885
    %v5773 = vunpack.c.h.b16 %v4885
    %v5774 = vunpack.c.l.b16 %v4886
    %v5775 = vunpack.c.h.b16 %v4886
    %v5776 = vunpack.c.l.b16 %v4887
    %v5777 = vunpack.c.h.b16 %v4887
    %v5778 = vunpack.c.l.b16 %v4888
    %v5779 = vunpack.c.h.b16 %v4888
    %v5780 = vunpack.c.l.b16 %v4889
    %v5781 = vunpack.c.h.b16 %v4889
    %v5782 = vunpack.c.l.b16 %v4890
    %v5783 = vunpack.c.h.b16 %v4890
    %v5784 = vunpack.c.l.b16 %v4891
    %v5785 = vunpack.c.h.b16 %v4891
    %v5786 = vunpack.c.l.b16 %v4892
    %v5787 = vunpack.c.h.b16 %v4892
    %v5788 = vunpack.c.l.b16 %v4893
    %v5789 = vunpack.c.h.b16 %v4893
    %v5790 = vunpack.c.l.b16 %v4894
    %v5791 = vunpack.c.h.b16 %v4894
    %v5792 = vunpack.c.l.b16 %v4895
    %v5793 = vunpack.c.h.b16 %v4895
    %v5794 = vunpack.c.l.b16 %v4896
    %v5795 = vunpack.c.h.b16 %v4896
    %v5796 = vunpack.c.l.b16 %v4897
    %v5797 = vunpack.c.h.b16 %v4897
    %v5798 = vunpack.c.l.b16 %v4898
    %v5799 = vunpack.c.h.b16 %v4898
    %v5800 = vunpack.c.l.b16 %v4899
    %v5801 = vunpack.c.h.b16 %v4899
    %v5802 = vunpack.c.l.b16 %v4900
    %v5803 = vunpack.c.h.b16 %v4900
    %v5804 = vunpack.c.l.b16 %v4901
    %v5805 = vunpack.c.h.b16 %v4901
    %v5806 = vunpack.c.l.b16 %v4902
    %v5807 = vunpack.c.h.b16 %v4902
    %v5808 = vunpack.c.l.b16 %v4903
    %v5809 = vunpack.c.h.b16 %v4903
    %v5810 = vunpack.c.l.b16 %v4904
    %v5811 = vunpack.c.h.b16 %v4904
    %v5812 = vunpack.c.l.b16 %v4905
    %v5813 = vunpack.c.h.b16 %v4905
    %v5814 = vunpack.c.l.b16 %v4906
    %v5815 = vunpack.c.h.b16 %v4906
    %v5816 = vunpack.c.l.b16 %v4907
    %v5817 = vunpack.c.h.b16 %v4907
    %v5818 = vunpack.c.l.b16 %v4908
    %v5819 = vunpack.c.h.b16 %v4908
    %v5820 = vunpack.c.l.b16 %v4909
    %v5821 = vunpack.c.h.b16 %v4909
    %v5822 = vunpack.c.l.b16 %v4910
    %v5823 = vunpack.c.h.b16 %v4910
    %v5824 = vunpack.c.l.b16 %v4911
    %v5825 = vunpack.c.h.b16 %v4911
    %v5826 = vunpack.c.l.b16 %v4912
    %v5827 = vunpack.c.h.b16 %v4912
    %v5828 = vunpack.c.l.b16 %v4913
    %v5829 = vunpack.c.h.b16 %v4913
    %v5830 = vunpack.c.l.b16 %v4914
    %v5831 = vunpack.c.h.b16 %v4914
    %v5832 = vunpack.c.l.b16 %v4915
    %v5833 = vunpack.c.h.b16 %v4915
    %v5834 = vunpack.c.l.b16 %v4916
    %v5835 = vunpack.c.h.b16 %v4916
    %v5836 = vunpack.c.l.b16 %v4917
    %v5837 = vunpack.c.h.b16 %v4917
    %v5838 = vunpack.c.l.b16 %v4918
    %v5839 = vunpack.c.h.b16 %v4918
    %v5840 = vunpack.c.l.b16 %v4919
    %v5841 = vunpack.c.h.b16 %v4919
    %v5842 = vunpack.c.l.b16 %v4920
    %v5843 = vunpack.c.h.b16 %v4920
    %v5844 = vunpack.c.l.b16 %v4921
    %v5845 = vunpack.c.h.b16 %v4921
    %v5846 = vunpack.c.l.b16 %v4922
    %v5847 = vunpack.c.h.b16 %v4922
    %v5848 = vunpack.c.l.b16 %v4923
    %v5849 = vunpack.c.h.b16 %v4923
    %v5850 = vunpack.c.l.b16 %v4924
    %v5851 = vunpack.c.h.b16 %v4924
    %v5852 = vunpack.c.l.b16 %v4925
    %v5853 = vunpack.c.h.b16 %v4925
    %v5854 = vunpack.c.l.b16 %v4926
    %v5855 = vunpack.c.h.b16 %v4926
    %v5856 = vunpack.c.l.b16 %v4927
    %v5857 = vunpack.c.h.b16 %v4927
    %v5858 = vunpack.c.l.b16 %v4928
    %v5859 = vunpack.c.h.b16 %v4928
    %v5860 = vunpack.c.l.b16 %v4929
    %v5861 = vunpack.c.h.b16 %v4929
    %v5862 = vunpack.c.l.b16 %v4930
    %v5863 = vunpack.c.h.b16 %v4930
    %v5864 = vunpack.c.l.b16 %v4931
    %v5865 = vunpack.c.h.b16 %v4931
    %v5866 = vunpack.c.l.b16 %v4932
    %v5867 = vunpack.c.h.b16 %v4932
    %v5868 = vunpack.c.l.b16 %v4933
    %v5869 = vunpack.c.h.b16 %v4933
    %v5870 = vunpack.c.l.b16 %v4934
    %v5871 = vunpack.c.h.b16 %v4934
    %v5872 = vunpack.c.l.b16 %v4935
    %v5873 = vunpack.c.h.b16 %v4935
    %v5874 = vunpack.c.l.b16 %v4936
    %v5875 = vunpack.c.h.b16 %v4936
    %v5876 = vunpack.c.l.b16 %v4937
    %v5877 = vunpack.c.h.b16 %v4937
    %v5878 = vunpack.c.l.b16 %v4938
    %v5879 = vunpack.c.h.b16 %v4938
    %v5880 = vunpack.c.l.b16 %v4939
    %v5881 = vunpack.c.h.b16 %v4939
    %v5882 = vunpack.c.l.b16 %v4940
    %v5883 = vunpack.c.h.b16 %v4940
    %v5884 = vunpack.c.l.b16 %v4941
    %v5885 = vunpack.c.h.b16 %v4941
    %v5886 = vunpack.c.l.b16 %v4942
    %v5887 = vunpack.c.h.b16 %v4942
    %v5888 = vunpack.c.l.b16 %v4943
    %v5889 = vunpack.c.h.b16 %v4943
    %v5890 = vunpack.c.l.b16 %v4944
    %v5891 = vunpack.c.h.b16 %v4944
    %v5892 = vunpack.c.l.b16 %v4945
    %v5893 = vunpack.c.h.b16 %v4945
    %v5894 = vunpack.c.l.b16 %v4946
    %v5895 = vunpack.c.h.b16 %v4946
    %v5896 = vunpack.c.l.b16 %v4947
    %v5897 = vunpack.c.h.b16 %v4947
    %v5898 = vunpack.c.l.b16 %v4948
    %v5899 = vunpack.c.h.b16 %v4948
    %v5900 = vunpack.c.l.b16 %v4949
    %v5901 = vunpack.c.h.b16 %v4949
    %v5902 = vunpack.c.l.b16 %v4950
    %v5903 = vunpack.c.h.b16 %v4950
    %v5904 = vunpack.c.l.b16 %v4951
    %v5905 = vunpack.c.h.b16 %v4951
    %v5906 = vunpack.c.l.b16 %v4952
    %v5907 = vunpack.c.h.b16 %v4952
    %v5908 = vunpack.c.l.b16 %v4953
    %v5909 = vunpack.c.h.b16 %v4953
    %v5910 = vunpack.c.l.b16 %v4954
    %v5911 = vunpack.c.h.b16 %v4954
    %v5912 = vunpack.c.l.b16 %v4955
    %v5913 = vunpack.c.h.b16 %v4955
    %v5914 = vunpack.c.l.b16 %v4956
    %v5915 = vunpack.c.h.b16 %v4956
    %v5916 = vunpack.c.l.b16 %v4957
    %v5917 = vunpack.c.h.b16 %v4957
    %v5918 = vunpack.c.l.b16 %v4958
    %v5919 = vunpack.c.h.b16 %v4958
    %v5920 = vunpack.c.l.b16 %v4959
    %v5921 = vunpack.c.h.b16 %v4959
    %v5922 = vunpack.c.l.b16 %v4960
    %v5923 = vunpack.c.h.b16 %v4960
    %v5924 = vunpack.c.l.b16 %v4961
    %v5925 = vunpack.c.h.b16 %v4961
    %v5926 = vunpack.c.l.b16 %v4962
    %v5927 = vunpack.c.h.b16 %v4962
    %v5928 = vunpack.c.l.b16 %v4963
    %v5929 = vunpack.c.h.b16 %v4963
    %v5930 = vunpack.c.l.b16 %v4964
    %v5931 = vunpack.c.h.b16 %v4964
    %v5932 = vunpack.c.l.b16 %v4965
    %v5933 = vunpack.c.h.b16 %v4965
    %v5934 = vunpack.c.l.b16 %v4966
    %v5935 = vunpack.c.h.b16 %v4966
    %v5936 = vunpack.c.l.b16 %v4967
    %v5937 = vunpack.c.h.b16 %v4967
    %v5938 = vunpack.c.l.b16 %v4968
    %v5939 = vunpack.c.h.b16 %v4968
    %v5940 = vunpack.c.l.b16 %v4969
    %v5941 = vunpack.c.h.b16 %v4969
    %v5942 = vunpack.c.l.b16 %v4970
    %v5943 = vunpack.c.h.b16 %v4970
    %v5944 = vunpack.c.l.b16 %v4971
    %v5945 = vunpack.c.h.b16 %v4971
    %v5946 = vunpack.c.l.b16 %v4972
    %v5947 = vunpack.c.h.b16 %v4972
    %v5948 = vunpack.c.l.b16 %v4973
    %v5949 = vunpack.c.h.b16 %v4973
    %v5950 = vunpack.c.l.b16 %v4974
    %v5951 = vunpack.c.h.b16 %v4974
    %v5952 = vunpack.c.l.b16 %v4975
    %v5953 = vunpack.c.h.b16 %v4975
    %v5954 = vunpack.c.l.b16 %v4976
    %v5955 = vunpack.c.h.b16 %v4976
    %v5956 = vunpack.c.l.b16 %v4977
    %v5957 = vunpack.c.h.b16 %v4977
    %v5958 = vunpack.c.l.b16 %v4978
    %v5959 = vunpack.c.h.b16 %v4978
    %v5960 = vunpack.c.l.b16 %v4979
    %v5961 = vunpack.c.h.b16 %v4979
    %v5962 = vunpack.c.l.b16 %v4980
    %v5963 = vunpack.c.h.b16 %v4980
    %v5964 = vunpack.c.l.b16 %v4981
    %v5965 = vunpack.c.h.b16 %v4981
    %v5966 = vunpack.c.l.b16 %v4982
    %v5967 = vunpack.c.h.b16 %v4982
    %v5968 = vunpack.c.l.b16 %v4983
    %v5969 = vunpack.c.h.b16 %v4983
    %v5970 = vunpack.c.l.b16 %v4984
    %v5971 = vunpack.c.h.b16 %v4984
    %v5972 = vunpack.c.l.b16 %v4985
    %v5973 = vunpack.c.h.b16 %v4985
    %v5974 = vunpack.c.l.b16 %v4986
    %v5975 = vunpack.c.h.b16 %v4986
    %v5976 = vunpack.c.l.b16 %v4987
    %v5977 = vunpack.c.h.b16 %v4987
    %v5978 = vunpack.c.l.b16 %v4988
    %v5979 = vunpack.c.h.b16 %v4988
    %v5980 = vunpack.c.l.b16 %v4989
    %v5981 = vunpack.c.h.b16 %v4989
    %v5982 = vunpack.c.l.b16 %v4990
    %v5983 = vunpack.c.h.b16 %v4990
    %v5984 = vunpack.c.l.b16 %v4991
    %v5985 = vunpack.c.h.b16 %v4991
    %v5986 = vunpack.c.l.b16 %v4992
    %v5987 = vunpack.c.h.b16 %v4992
    %v5988 = vunpack.c.l.b16 %v4993
    %v5989 = vunpack.c.h.b16 %v4993
    %v5990 = vunpack.c.l.b16 %v4994
    %v5991 = vunpack.c.h.b16 %v4994
    %v5992 = vunpack.c.l.b16 %v4995
    %v5993 = vunpack.c.h.b16 %v4995
    %v5994 = vunpack.c.l.b16 %v4996
    %v5995 = vunpack.c.h.b16 %v4996
    %v5996 = vunpack.c.l.b16 %v4997
    %v5997 = vunpack.c.h.b16 %v4997
    %v5998 = vunpack.c.l.b16 %v4998
    %v5999 = vunpack.c.h.b16 %v4998
    %v6000 = vunpack.c.l.b16 %v4999
    %v6001 = vunpack.c.h.b16 %v4999
    %v6002 = vunpack.c.l.b16 %v5000
    %v6003 = vunpack.c.h.b16 %v5000
    %v6004 = vunpack.c.l.b16 %v5001
    %v6005 = vunpack.c.h.b16 %v5001
    %v6006 = vunpack.c.l.b16 %v5002
    %v6007 = vunpack.c.h.b16 %v5002
    %v6008 = vunpack.c.l.b16 %v5003
    %v6009 = vunpack.c.h.b16 %v5003
    %v6010 = vunpack.c.l.b16 %v5004
    %v6011 = vunpack.c.h.b16 %v5004
    %v6012 = vunpack.c.l.b16 %v5005
    %v6013 = vunpack.c.h.b16 %v5005
    %v6014 = vunpack.c.l.b16 %v5006
    %v6015 = vunpack.c.h.b16 %v5006
    %v6016 = vunpack.c.l.b16 %v5007
    %v6017 = vunpack.c.h.b16 %v5007
    %v6018 = vunpack.c.l.b16 %v5008
    %v6019 = vunpack.c.h.b16 %v5008
    %v6020 = vunpack.c.l.b16 %v5009
    %v6021 = vunpack.c.h.b16 %v5009
    %v6022 = vunpack.c.l.b16 %v5010
    %v6023 = vunpack.c.h.b16 %v5010
    %v6024 = vunpack.c.l.b16 %v5011
    %v6025 = vunpack.c.h.b16 %v5011
    %v6026 = vunpack.c.l.b16 %v5012
    %v6027 = vunpack.c.h.b16 %v5012
    %v6028 = vunpack.c.l.b16 %v5013
    %v6029 = vunpack.c.h.b16 %v5013
    %v6030 = vunpack.c.l.b16 %v5014
    %v6031 = vunpack.c.h.b16 %v5014
    %v6032 = vunpack.c.l.b16 %v5015
    %v6033 = vunpack.c.h.b16 %v5015
    %v6034 = vunpack.c.l.b16 %v5016
    %v6035 = vunpack.c.h.b16 %v5016
    %v6036 = vunpack.c.l.b16 %v5017
    %v6037 = vunpack.c.h.b16 %v5017
    %v6038 = vunpack.c.l.b16 %v5018
    %v6039 = vunpack.c.h.b16 %v5018
    %v6040 = vunpack.c.l.b16 %v5019
    %v6041 = vunpack.c.h.b16 %v5019
    %v6042 = vunpack.c.l.b16 %v5020
    %v6043 = vunpack.c.h.b16 %v5020
    %v6044 = vunpack.c.l.b16 %v5021
    %v6045 = vunpack.c.h.b16 %v5021
    %v6046 = vunpack.c.l.b16 %v5022
    %v6047 = vunpack.c.h.b16 %v5022
    %v6048 = vunpack.c.l.b16 %v5023
    %v6049 = vunpack.c.h.b16 %v5023
    %v6050 = vunpack.c.l.b16 %v5024
    %v6051 = vunpack.c.h.b16 %v5024
    %v6052 = vunpack.c.l.b16 %v5025
    %v6053 = vunpack.c.h.b16 %v5025
    %v6054 = vunpack.c.l.b16 %v5026
    %v6055 = vunpack.c.h.b16 %v5026
    %v6056 = vunpack.c.l.b16 %v5027
    %v6057 = vunpack.c.h.b16 %v5027
    %v6058 = vunpack.c.l.b16 %v5028
    %v6059 = vunpack.c.h.b16 %v5028
    %v6060 = vunpack.c.l.b16 %v5029
    %v6061 = vunpack.c.h.b16 %v5029
    %v6062 = vunpack.c.l.b16 %v5030
    %v6063 = vunpack.c.h.b16 %v5030
    %v6064 = vunpack.c.l.b16 %v5031
    %v6065 = vunpack.c.h.b16 %v5031
    %v6066 = vunpack.c.l.b16 %v5032
    %v6067 = vunpack.c.h.b16 %v5032
    %v6068 = vunpack.c.l.b16 %v5033
    %v6069 = vunpack.c.h.b16 %v5033
    %v6070 = vunpack.c.l.b16 %v5034
    %v6071 = vunpack.c.h.b16 %v5034
    %v6072 = vunpack.c.l.b16 %v5035
    %v6073 = vunpack.c.h.b16 %v5035
    %v6074 = vunpack.c.l.b16 %v5036
    %v6075 = vunpack.c.h.b16 %v5036
    %v6076 = vunpack.c.l.b16 %v5037
    %v6077 = vunpack.c.h.b16 %v5037
    %v6078 = vunpack.c.l.b16 %v5038
    %v6079 = vunpack.c.h.b16 %v5038
    %v6080 = vunpack.c.l.b16 %v5039
    %v6081 = vunpack.c.h.b16 %v5039
    %v6082 = vunpack.c.l.b16 %v5040
    %v6083 = vunpack.c.h.b16 %v5040
    %v6084 = vunpack.c.l.b16 %v5041
    %v6085 = vunpack.c.h.b16 %v5041
    %v6086 = vunpack.c.l.b16 %v5042
    %v6087 = vunpack.c.h.b16 %v5042
    %v6088 = vunpack.c.l.b16 %v5043
    %v6089 = vunpack.c.h.b16 %v5043
    %v6090 = vunpack.c.l.b16 %v5044
    %v6091 = vunpack.c.h.b16 %v5044
    %v6092 = vunpack.c.l.b16 %v5045
    %v6093 = vunpack.c.h.b16 %v5045
    %v6094 = vunpack.c.l.b16 %v5046
    %v6095 = vunpack.c.h.b16 %v5046
    %v6096 = vunpack.c.l.b16 %v5047
    %v6097 = vunpack.c.h.b16 %v5047
    %v6098 = vunpack.c.l.b16 %v5048
    %v6099 = vunpack.c.h.b16 %v5048
    %v6100 = vunpack.c.l.b16 %v5049
    %v6101 = vunpack.c.h.b16 %v5049
    %v6102 = vunpack.c.l.b16 %v5050
    %v6103 = vunpack.c.h.b16 %v5050
    %v6104 = vunpack.c.l.b16 %v5051
    %v6105 = vunpack.c.h.b16 %v5051
    %v6106 = vunpack.c.l.b16 %v5052
    %v6107 = vunpack.c.h.b16 %v5052
    %v6108 = vunpack.c.l.b16 %v5053
    %v6109 = vunpack.c.h.b16 %v5053
    %v6110 = vunpack.c.l.b16 %v5054
    %v6111 = vunpack.c.h.b16 %v5054
    %v6112 = vunpack.c.l.b16 %v5055
    %v6113 = vunpack.c.h.b16 %v5055
    %v6114 = vunpack.c.l.b16 %v5056
    %v6115 = vunpack.c.h.b16 %v5056
    %v6116 = vunpack.c.l.b16 %v5057
    %v6117 = vunpack.c.h.b16 %v5057
    %v6118 = vunpack.c.l.b16 %v5058
    %v6119 = vunpack.c.h.b16 %v5058
    %v6120 = vunpack.c.l.b16 %v5059
    %v6121 = vunpack.c.h.b16 %v5059
    %v6122 = vunpack.c.l.b16 %v5060
    %v6123 = vunpack.c.h.b16 %v5060
    %v6124 = vunpack.c.l.b16 %v5061
    %v6125 = vunpack.c.h.b16 %v5061
    %v6126 = vunpack.c.l.b16 %v5062
    %v6127 = vunpack.c.h.b16 %v5062
    %v6128 = vunpack.c.l.b16 %v5063
    %v6129 = vunpack.c.h.b16 %v5063
    %v6130 = vunpack.c.l.b16 %v5064
    %v6131 = vunpack.c.h.b16 %v5064
    %v6132 = vunpack.c.l.b16 %v5065
    %v6133 = vunpack.c.h.b16 %v5065
    %v6134 = vunpack.c.l.b16 %v5066
    %v6135 = vunpack.c.h.b16 %v5066
    %v6136 = vunpack.c.l.b16 %v5067
    %v6137 = vunpack.c.h.b16 %v5067
    %v6138 = vunpack.c.l.b16 %v5068
    %v6139 = vunpack.c.h.b16 %v5068
    %v6140 = vunpack.c.l.b16 %v5069
    %v6141 = vunpack.c.h.b16 %v5069
    %v6142 = vunpack.c.l.b16 %v5070
    %v6143 = vunpack.c.h.b16 %v5070
    %v6144 = vunpack.c.l.b16 %v5071
    %v6145 = vunpack.c.h.b16 %v5071
    %v6146 = vunpack.c.l.b16 %v5072
    %v6147 = vunpack.c.h.b16 %v5072
    %v6148 = vunpack.c.l.b16 %v5073
    %v6149 = vunpack.c.h.b16 %v5073
    %v6150 = vunpack.c.l.b16 %v5074
    %v6151 = vunpack.c.h.b16 %v5074
    %v6152 = vunpack.c.l.b16 %v5075
    %v6153 = vunpack.c.h.b16 %v5075
    %v6154 = vunpack.c.l.b16 %v5076
    %v6155 = vunpack.c.h.b16 %v5076
    %v6156 = vunpack.c.l.b16 %v5077
    %v6157 = vunpack.c.h.b16 %v5077
    %v6158 = vunpack.c.l.b16 %v5078
    %v6159 = vunpack.c.h.b16 %v5078
    %v6160 = vunpack.c.l.b16 %v5079
    %v6161 = vunpack.c.h.b16 %v5079
    %v6162 = vunpack.c.l.b16 %v5080
    %v6163 = vunpack.c.h.b16 %v5080
    %v6164 = vunpack.c.l.b16 %v5081
    %v6165 = vunpack.c.h.b16 %v5081
    %v6166 = vunpack.c.l.b16 %v5082
    %v6167 = vunpack.c.h.b16 %v5082
    %v6168 = vunpack.c.l.b16 %v5083
    %v6169 = vunpack.c.h.b16 %v5083
    %v6170 = vunpack.c.l.b16 %v5084
    %v6171 = vunpack.c.h.b16 %v5084
    %v6172 = vunpack.c.l.b16 %v5085
    %v6173 = vunpack.c.h.b16 %v5085
    %v6174 = vunpack.c.l.b16 %v5086
    %v6175 = vunpack.c.h.b16 %v5086
    %v6176 = vunpack.c.l.b16 %v5087
    %v6177 = vunpack.c.h.b16 %v5087
    %v6178 = vunpack.c.l.b16 %v5088
    %v6179 = vunpack.c.h.b16 %v5088
    %v6180 = vunpack.c.l.b16 %v5089
    %v6181 = vunpack.c.h.b16 %v5089
    %v6182 = vunpack.c.l.b16 %v5090
    %v6183 = vunpack.c.h.b16 %v5090
    %v6184 = vunpack.c.l.b16 %v5091
    %v6185 = vunpack.c.h.b16 %v5091
    %v6186 = vunpack.c.l.b16 %v5092
    %v6187 = vunpack.c.h.b16 %v5092
    %v6188 = vunpack.c.l.b16 %v5093
    %v6189 = vunpack.c.h.b16 %v5093
    %v6190 = vunpack.c.l.b16 %v5094
    %v6191 = vunpack.c.h.b16 %v5094
    %v6192 = vunpack.c.l.b16 %v5095
    %v6193 = vunpack.c.h.b16 %v5095
    %v6194 = vunpack.c.l.b16 %v5096
    %v6195 = vunpack.c.h.b16 %v5096
    %v6196 = vunpack.c.l.b16 %v5097
    %v6197 = vunpack.c.h.b16 %v5097
    %v6198 = vunpack.c.l.b16 %v5098
    %v6199 = vunpack.c.h.b16 %v5098
    %v6200 = vunpack.c.l.b16 %v5099
    %v6201 = vunpack.c.h.b16 %v5099
    %v6202 = vunpack.c.l.b16 %v5100
    %v6203 = vunpack.c.h.b16 %v5100
    %v6204 = vunpack.c.l.b16 %v5101
    %v6205 = vunpack.c.h.b16 %v5101
    %v6206 = vunpack.c.l.b16 %v5102
    %v6207 = vunpack.c.h.b16 %v5102
    %v6208 = vunpack.c.l.b16 %v5103
    %v6209 = vunpack.c.h.b16 %v5103
    %v6210 = vunpack.c.l.b16 %v5104
    %v6211 = vunpack.c.h.b16 %v5104
    %v6212 = vunpack.c.l.b16 %v5105
    %v6213 = vunpack.c.h.b16 %v5105
    %v6214 = vunpack.c.l.b16 %v5106
    %v6215 = vunpack.c.h.b16 %v5106
    %v6216 = vunpack.c.l.b16 %v5107
    %v6217 = vunpack.c.h.b16 %v5107
    %v6218 = vunpack.c.l.b16 %v5108
    %v6219 = vunpack.c.h.b16 %v5108
    %v6220 = vunpack.c.l.b16 %v5109
    %v6221 = vunpack.c.h.b16 %v5109
    %v6222 = vunpack.c.l.b16 %v5110
    %v6223 = vunpack.c.h.b16 %v5110
    %v6224 = vunpack.c.l.b16 %v5111
    %v6225 = vunpack.c.h.b16 %v5111
    %v6226 = vunpack.c.l.b16 %v5112
    %v6227 = vunpack.c.h.b16 %v5112
    %v6228 = vunpack.c.l.b16 %v5113
    %v6229 = vunpack.c.h.b16 %v5113
    %v6230 = vunpack.c.l.b16 %v5114
    %v6231 = vunpack.c.h.b16 %v5114
    %v6232 = vunpack.c.l.b16 %v5115
    %v6233 = vunpack.c.h.b16 %v5115
    %v6234 = vunpack.c.l.b16 %v5116
    %v6235 = vunpack.c.h.b16 %v5116
    %v6236 = vunpack.c.l.b16 %v5117
    %v6237 = vunpack.c.h.b16 %v5117
    %v6238 = vunpack.c.l.b16 %v5118
    %v6239 = vunpack.c.h.b16 %v5118
    %v6240 = vunpack.c.l.b16 %v5119
    %v6241 = vunpack.c.h.b16 %v5119
    %v6242 = vunpack.c.l.b16 %v5120
    %v6243 = vunpack.c.h.b16 %v5120
    %v6244 = vunpack.c.l.b16 %v5121
    %v6245 = vunpack.c.h.b16 %v5121
    %v6246 = vunpack.c.l.b16 %v5122
    %v6247 = vunpack.c.h.b16 %v5122
    %v6248 = vunpack.c.l.b16 %v5123
    %v6249 = vunpack.c.h.b16 %v5123
    %v6250 = vunpack.c.l.b16 %v5124
    %v6251 = vunpack.c.h.b16 %v5124
    %v6252 = vunpack.c.l.b16 %v5125
    %v6253 = vunpack.c.h.b16 %v5125
    %v6254 = vunpack.c.l.b16 %v5126
    %v6255 = vunpack.c.h.b16 %v5126
    %v6256 = vunpack.c.l.b16 %v5127
    %v6257 = vunpack.c.h.b16 %v5127
    %v6258 = vunpack.c.l.b16 %v5128
    %v6259 = vunpack.c.h.b16 %v5128
    %v6260 = vunpack.c.l.b16 %v5129
    %v6261 = vunpack.c.h.b16 %v5129
    %v6262 = vunpack.c.l.b16 %v5130
    %v6263 = vunpack.c.h.b16 %v5130
    %v6264 = vunpack.c.l.b16 %v5131
    %v6265 = vunpack.c.h.b16 %v5131
    %v6266 = vunpack.c.l.b16 %v5132
    %v6267 = vunpack.c.h.b16 %v5132
    %v6268 = vunpack.c.l.b16 %v5133
    %v6269 = vunpack.c.h.b16 %v5133
    %v6270 = vunpack.c.l.b16 %v5134
    %v6271 = vunpack.c.h.b16 %v5134
    %v6272 = vunpack.c.l.b16 %v5135
    %v6273 = vunpack.c.h.b16 %v5135
    %v6274 = vunpack.c.l.b16 %v5136
    %v6275 = vunpack.c.h.b16 %v5136
    %v6276 = vunpack.c.l.b16 %v5137
    %v6277 = vunpack.c.h.b16 %v5137
    %v6278 = vunpack.c.l.b16 %v5138
    %v6279 = vunpack.c.h.b16 %v5138
    %v6280 = vunpack.c.l.b16 %v5139
    %v6281 = vunpack.c.h.b16 %v5139
    %v6282 = vunpack.c.l.b16 %v5140
    %v6283 = vunpack.c.h.b16 %v5140
    %v6284 = vunpack.c.l.b16 %v5141
    %v6285 = vunpack.c.h.b16 %v5141
    %v6286 = vunpack.c.l.b16 %v5142
    %v6287 = vunpack.c.h.b16 %v5142
    %v6288 = vunpack.c.l.b16 %v5143
    %v6289 = vunpack.c.h.b16 %v5143
    %v6290 = vunpack.c.l.b16 %v5144
    %v6291 = vunpack.c.h.b16 %v5144
    %v6292 = vunpack.c.l.b16 %v5145
    %v6293 = vunpack.c.h.b16 %v5145
    %v6294 = vunpack.c.l.b16 %v5146
    %v6295 = vunpack.c.h.b16 %v5146
    %v6296 = vunpack.c.l.b16 %v5147
    %v6297 = vunpack.c.h.b16 %v5147
    %v6298 = vunpack.c.l.b16 %v5148
    %v6299 = vunpack.c.h.b16 %v5148
    %v6300 = vunpack.c.l.b16 %v5149
    %v6301 = vunpack.c.h.b16 %v5149
    %v6302 = vpack.c.b16 %v5540, %v5534
    %v6303 = vpack.c.b16 %v5541, %v5535
    %v6304 = vpack.c.b16 %v5542, %v5536
    %v6305 = vpack.c.b16 %v5543, %v5537
    %v6306 = vpack.c.b16 %v5544, %v5538
    %v6307 = vpack.c.b16 %v5545, %v5539
    %v6308 = vpack.c.b16 %v5552, %v5546
    %v6309 = vpack.c.b16 %v5553, %v5547
    %v6310 = vpack.c.b16 %v5554, %v5548
    %v6311 = vpack.c.b16 %v5555, %v5549
    %v6312 = vpack.c.b16 %v5556, %v5550
    %v6313 = vpack.c.b16 %v5557, %v5551
    %v6314 = vpack.c.b16 %v5564, %v5558
    %v6315 = vpack.c.b16 %v5565, %v5559
    %v6316 = vpack.c.b16 %v5566, %v5560
    %v6317 = vpack.c.b16 %v5567, %v5561
    %v6318 = vpack.c.b16 %v5568, %v5562
    %v6319 = vpack.c.b16 %v5569, %v5563
    %v6320 = vpack.c.b16 %v5576, %v5570
    %v6321 = vpack.c.b16 %v5577, %v5571
    %v6322 = vpack.c.b16 %v5578, %v5572
    %v6323 = vpack.c.b16 %v5579, %v5573
    %v6324 = vpack.c.b16 %v5580, %v5574
    %v6325 = vpack.c.b16 %v5581, %v5575
    %v6326 = vpack.c.b16 %v5588, %v5582
    %v6327 = vpack.c.b16 %v5589, %v5583
    %v6328 = vpack.c.b16 %v5590, %v5584
    %v6329 = vpack.c.b16 %v5591, %v5585
    %v6330 = vpack.c.b16 %v5592, %v5586
    %v6331 = vpack.c.b16 %v5593, %v5587
    %v6332 = vpack.c.b16 %v5600, %v5594
    %v6333 = vpack.c.b16 %v5601, %v5595
    %v6334 = vpack.c.b16 %v5602, %v5596
    %v6335 = vpack.c.b16 %v5603, %v5597
    %v6336 = vpack.c.b16 %v5604, %v5598
    %v6337 = vpack.c.b16 %v5605, %v5599
    %v6338 = vpack.c.b16 %v5612, %v5606
    %v6339 = vpack.c.b16 %v5613, %v5607
    %v6340 = vpack.c.b16 %v5614, %v5608
    %v6341 = vpack.c.b16 %v5615, %v5609
    %v6342 = vpack.c.b16 %v5616, %v5610
    %v6343 = vpack.c.b16 %v5617, %v5611
    %v6344 = vpack.c.b16 %v5624, %v5618
    %v6345 = vpack.c.b16 %v5625, %v5619
    %v6346 = vpack.c.b16 %v5626, %v5620
    %v6347 = vpack.c.b16 %v5627, %v5621
    %v6348 = vpack.c.b16 %v5628, %v5622
    %v6349 = vpack.c.b16 %v5629, %v5623
    %v6350 = vpack.c.b16 %v5636, %v5630
    %v6351 = vpack.c.b16 %v5637, %v5631
    %v6352 = vpack.c.b16 %v5638, %v5632
    %v6353 = vpack.c.b16 %v5639, %v5633
    %v6354 = vpack.c.b16 %v5640, %v5634
    %v6355 = vpack.c.b16 %v5641, %v5635
    %v6356 = vpack.c.b16 %v5648, %v5642
    %v6357 = vpack.c.b16 %v5649, %v5643
    %v6358 = vpack.c.b16 %v5650, %v5644
    %v6359 = vpack.c.b16 %v5651, %v5645
    %v6360 = vpack.c.b16 %v5652, %v5646
    %v6361 = vpack.c.b16 %v5653, %v5647
    %v6362 = vpack.c.b16 %v5660, %v5654
    %v6363 = vpack.c.b16 %v5661, %v5655
    %v6364 = vpack.c.b16 %v5662, %v5656
    %v6365 = vpack.c.b16 %v5663, %v5657
    %v6366 = vpack.c.b16 %v5664, %v5658
    %v6367 = vpack.c.b16 %v5665, %v5659
    %v6368 = vpack.c.b16 %v5672, %v5666
    %v6369 = vpack.c.b16 %v5673, %v5667
    %v6370 = vpack.c.b16 %v5674, %v5668
    %v6371 = vpack.c.b16 %v5675, %v5669
    %v6372 = vpack.c.b16 %v5676, %v5670
    %v6373 = vpack.c.b16 %v5677, %v5671
    %v6374 = vpack.c.b16 %v5684, %v5678
    %v6375 = vpack.c.b16 %v5685, %v5679
    %v6376 = vpack.c.b16 %v5686, %v5680
    %v6377 = vpack.c.b16 %v5687, %v5681
    %v6378 = vpack.c.b16 %v5688, %v5682
    %v6379 = vpack.c.b16 %v5689, %v5683
    %v6380 = vpack.c.b16 %v5696, %v5690
    %v6381 = vpack.c.b16 %v5697, %v5691
    %v6382 = vpack.c.b16 %v5698, %v5692
    %v6383 = vpack.c.b16 %v5699, %v5693
    %v6384 = vpack.c.b16 %v5700, %v5694
    %v6385 = vpack.c.b16 %v5701, %v5695
    %v6386 = vpack.c.b16 %v5708, %v5702
    %v6387 = vpack.c.b16 %v5709, %v5703
    %v6388 = vpack.c.b16 %v5710, %v5704
    %v6389 = vpack.c.b16 %v5711, %v5705
    %v6390 = vpack.c.b16 %v5712, %v5706
    %v6391 = vpack.c.b16 %v5713, %v5707
    %v6392 = vpack.c.b16 %v5720, %v5714
    %v6393 = vpack.c.b16 %v5721, %v5715
    %v6394 = vpack.c.b16 %v5722, %v5716
    %v6395 = vpack.c.b16 %v5723, %v5717
    %v6396 = vpack.c.b16 %v5724, %v5718
    %v6397 = vpack.c.b16 %v5725, %v5719
    %v6398 = vpack.c.b16 %v5732, %v5726
    %v6399 = vpack.c.b16 %v5733, %v5727
    %v6400 = vpack.c.b16 %v5734, %v5728
    %v6401 = vpack.c.b16 %v5735, %v5729
    %v6402 = vpack.c.b16 %v5736, %v5730
    %v6403 = vpack.c.b16 %v5737, %v5731
    %v6404 = vpack.c.b16 %v5744, %v5738
    %v6405 = vpack.c.b16 %v5745, %v5739
    %v6406 = vpack.c.b16 %v5746, %v5740
    %v6407 = vpack.c.b16 %v5747, %v5741
    %v6408 = vpack.c.b16 %v5748, %v5742
    %v6409 = vpack.c.b16 %v5749, %v5743
    %v6410 = vpack.c.b16 %v5756, %v5750
    %v6411 = vpack.c.b16 %v5757, %v5751
    %v6412 = vpack.c.b16 %v5758, %v5752
    %v6413 = vpack.c.b16 %v5759, %v5753
    %v6414 = vpack.c.b16 %v5760, %v5754
    %v6415 = vpack.c.b16 %v5761, %v5755
    %v6416 = vpack.c.b16 %v5768, %v5762
    %v6417 = vpack.c.b16 %v5769, %v5763
    %v6418 = vpack.c.b16 %v5770, %v5764
    %v6419 = vpack.c.b16 %v5771, %v5765
    %v6420 = vpack.c.b16 %v5772, %v5766
    %v6421 = vpack.c.b16 %v5773, %v5767
    %v6422 = vpack.c.b16 %v5780, %v5774
    %v6423 = vpack.c.b16 %v5781, %v5775
    %v6424 = vpack.c.b16 %v5782, %v5776
    %v6425 = vpack.c.b16 %v5783, %v5777
    %v6426 = vpack.c.b16 %v5784, %v5778
    %v6427 = vpack.c.b16 %v5785, %v5779
    %v6428 = vpack.c.b16 %v5792, %v5786
    %v6429 = vpack.c.b16 %v5793, %v5787
    %v6430 = vpack.c.b16 %v5794, %v5788
    %v6431 = vpack.c.b16 %v5795, %v5789
    %v6432 = vpack.c.b16 %v5796, %v5790
    %v6433 = vpack.c.b16 %v5797, %v5791
    %v6434 = vpack.c.b16 %v5804, %v5798
    %v6435 = vpack.c.b16 %v5805, %v5799
    %v6436 = vpack.c.b16 %v5806, %v5800
    %v6437 = vpack.c.b16 %v5807, %v5801
    %v6438 = vpack.c.b16 %v5808, %v5802
    %v6439 = vpack.c.b16 %v5809, %v5803
    %v6440 = vpack.c.b16 %v5816, %v5810
    %v6441 = vpack.c.b16 %v5817, %v5811
    %v6442 = vpack.c.b16 %v5818, %v5812
    %v6443 = vpack.c.b16 %v5819, %v5813
    %v6444 = vpack.c.b16 %v5820, %v5814
    %v6445 = vpack.c.b16 %v5821, %v5815
    %v6446 = vpack.c.b16 %v5828, %v5822
    %v6447 = vpack.c.b16 %v5829, %v5823
    %v6448 = vpack.c.b16 %v5830, %v5824
    %v6449 = vpack.c.b16 %v5831, %v5825
    %v6450 = vpack.c.b16 %v5832, %v5826
    %v6451 = vpack.c.b16 %v5833, %v5827
    %v6452 = vpack.c.b16 %v5840, %v5834
    %v6453 = vpack.c.b16 %v5841, %v5835
    %v6454 = vpack.c.b16 %v5842, %v5836
    %v6455 = vpack.c.b16 %v5843, %v5837
    %v6456 = vpack.c.b16 %v5844, %v5838
    %v6457 = vpack.c.b16 %v5845, %v5839
    %v6458 = vpack.c.b16 %v5852, %v5846
    %v6459 = vpack.c.b16 %v5853, %v5847
    %v6460 = vpack.c.b16 %v5854, %v5848
    %v6461 = vpack.c.b16 %v5855, %v5849
    %v6462 = vpack.c.b16 %v5856, %v5850
    %v6463 = vpack.c.b16 %v5857, %v5851
    %v6464 = vpack.c.b16 %v5864, %v5858
    %v6465 = vpack.c.b16 %v5865, %v5859
    %v6466 = vpack.c.b16 %v5866, %v5860
    %v6467 = vpack.c.b16 %v5867, %v5861
    %v6468 = vpack.c.b16 %v5868, %v5862
    %v6469 = vpack.c.b16 %v5869, %v5863
    %v6470 = vpack.c.b16 %v5876, %v5870
    %v6471 = vpack.c.b16 %v5877, %v5871
    %v6472 = vpack.c.b16 %v5878, %v5872
    %v6473 = vpack.c.b16 %v5879, %v5873
    %v6474 = vpack.c.b16 %v5880, %v5874
    %v6475 = vpack.c.b16 %v5881, %v5875
    %v6476 = vpack.c.b16 %v5888, %v5882
    %v6477 = vpack.c.b16 %v5889, %v5883
    %v6478 = vpack.c.b16 %v5890, %v5884
    %v6479 = vpack.c.b16 %v5891, %v5885
    %v6480 = vpack.c.b16 %v5892, %v5886
    %v6481 = vpack.c.b16 %v5893, %v5887
    %v6482 = vpack.c.b16 %v5900, %v5894
    %v6483 = vpack.c.b16 %v5901, %v5895
    %v6484 = vpack.c.b16 %v5902, %v5896
    %v6485 = vpack.c.b16 %v5903, %v5897
    %v6486 = vpack.c.b16 %v5904, %v5898
    %v6487 = vpack.c.b16 %v5905, %v5899
    %v6488 = vpack.c.b16 %v5912, %v5906
    %v6489 = vpack.c.b16 %v5913, %v5907
    %v6490 = vpack.c.b16 %v5914, %v5908
    %v6491 = vpack.c.b16 %v5915, %v5909
    %v6492 = vpack.c.b16 %v5916, %v5910
    %v6493 = vpack.c.b16 %v5917, %v5911
    %v6494 = vpack.c.b16 %v5924, %v5918
    %v6495 = vpack.c.b16 %v5925, %v5919
    %v6496 = vpack.c.b16 %v5926, %v5920
    %v6497 = vpack.c.b16 %v5927, %v5921
    %v6498 = vpack.c.b16 %v5928, %v5922
    %v6499 = vpack.c.b16 %v5929, %v5923
    %v6500 = vpack.c.b16 %v5936, %v5930
    %v6501 = vpack.c.b16 %v5937, %v5931
    %v6502 = vpack.c.b16 %v5938, %v5932
    %v6503 = vpack.c.b16 %v5939, %v5933
    %v6504 = vpack.c.b16 %v5940, %v5934
    %v6505 = vpack.c.b16 %v5941, %v5935
    %v6506 = vpack.c.b16 %v5948, %v5942
    %v6507 = vpack.c.b16 %v5949, %v5943
    %v6508 = vpack.c.b16 %v5950, %v5944
    %v6509 = vpack.c.b16 %v5951, %v5945
    %v6510 = vpack.c.b16 %v5952, %v5946
    %v6511 = vpack.c.b16 %v5953, %v5947
    %v6512 = vpack.c.b16 %v5960, %v5954
    %v6513 = vpack.c.b16 %v5961, %v5955
    %v6514 = vpack.c.b16 %v5962, %v5956
    %v6515 = vpack.c.b16 %v5963, %v5957
    %v6516 = vpack.c.b16 %v5964, %v5958
    %v6517 = vpack.c.b16 %v5965, %v5959
    %v6518 = vpack.c.b16 %v5972, %v5966
    %v6519 = vpack.c.b16 %v5973, %v5967
    %v6520 = vpack.c.b16 %v5974, %v5968
    %v6521 = vpack.c.b16 %v5975, %v5969
    %v6522 = vpack.c.b16 %v5976, %v5970
    %v6523 = vpack.c.b16 %v5977, %v5971
    %v6524 = vpack.c.b16 %v5984, %v5978
    %v6525 = vpack.c.b16 %v5985, %v5979
    %v6526 = vpack.c.b16 %v5986, %v5980
    %v6527 = vpack.c.b16 %v5987, %v5981
    %v6528 = vpack.c.b16 %v5988, %v5982
    %v6529 = vpack.c.b16 %v5989, %v5983
    %v6530 = vpack.c.b16 %v5996, %v5990
    %v6531 = vpack.c.b16 %v5997, %v5991
    %v6532 = vpack.c.b16 %v5998, %v5992
    %v6533 = vpack.c.b16 %v5999, %v5993
    %v6534 = vpack.c.b16 %v6000, %v5994
    %v6535 = vpack.c.b16 %v6001, %v5995
    %v6536 = vpack.c.b16 %v6008, %v6002
    %v6537 = vpack.c.b16 %v6009, %v6003
    %v6538 = vpack.c.b16 %v6010, %v6004
    %v6539 = vpack.c.b16 %v6011, %v6005
    %v6540 = vpack.c.b16 %v6012, %v6006
    %v6541 = vpack.c.b16 %v6013, %v6007
    %v6542 = vpack.c.b16 %v6020, %v6014
    %v6543 = vpack.c.b16 %v6021, %v6015
    %v6544 = vpack.c.b16 %v6022, %v6016
    %v6545 = vpack.c.b16 %v6023, %v6017
    %v6546 = vpack.c.b16 %v6024, %v6018
    %v6547 = vpack.c.b16 %v6025, %v6019
    %v6548 = vpack.c.b16 %v6032, %v6026
    %v6549 = vpack.c.b16 %v6033, %v6027
    %v6550 = vpack.c.b16 %v6034, %v6028
    %v6551 = vpack.c.b16 %v6035, %v6029
    %v6552 = vpack.c.b16 %v6036, %v6030
    %v6553 = vpack.c.b16 %v6037, %v6031
    %v6554 = vpack.c.b16 %v6044, %v6038
    %v6555 = vpack.c.b16 %v6045, %v6039
    %v6556 = vpack.c.b16 %v6046, %v6040
    %v6557 = vpack.c.b16 %v6047, %v6041
    %v6558 = vpack.c.b16 %v6048, %v6042
    %v6559 = vpack.c.b16 %v6049, %v6043
    %v6560 = vpack.c.b16 %v6056, %v6050
    %v6561 = vpack.c.b16 %v6057, %v6051
    %v6562 = vpack.c.b16 %v6058, %v6052
    %v6563 = vpack.c.b16 %v6059, %v6053
    %v6564 = vpack.c.b16 %v6060, %v6054
    %v6565 = vpack.c.b16 %v6061, %v6055
    %v6566 = vpack.c.b16 %v6068, %v6062
    %v6567 = vpack.c.b16 %v6069, %v6063
    %v6568 = vpack.c.b16 %v6070, %v6064
    %v6569 = vpack.c.b16 %v6071, %v6065
    %v6570 = vpack.c.b16 %v6072, %v6066
    %v6571 = vpack.c.b16 %v6073, %v6067
    %v6572 = vpack.c.b16 %v6080, %v6074
    %v6573 = vpack.c.b16 %v6081, %v6075
    %v6574 = vpack.c.b16 %v6082, %v6076
    %v6575 = vpack.c.b16 %v6083, %v6077
    %v6576 = vpack.c.b16 %v6084, %v6078
    %v6577 = vpack.c.b16 %v6085, %v6079
    %v6578 = vpack.c.b16 %v6092, %v6086
    %v6579 = vpack.c.b16 %v6093, %v6087
    %v6580 = vpack.c.b16 %v6094, %v6088
    %v6581 = vpack.c.b16 %v6095, %v6089
    %v6582 = vpack.c.b16 %v6096, %v6090
    %v6583 = vpack.c.b16 %v6097, %v6091
    %v6584 = vpack.c.b16 %v6104, %v6098
    %v6585 = vpack.c.b16 %v6105, %v6099
    %v6586 = vpack.c.b16 %v6106, %v6100
    %v6587 = vpack.c.b16 %v6107, %v6101
    %v6588 = vpack.c.b16 %v6108, %v6102
    %v6589 = vpack.c.b16 %v6109, %v6103
    %v6590 = vpack.c.b16 %v6116, %v6110
    %v6591 = vpack.c.b16 %v6117, %v6111
    %v6592 = vpack.c.b16 %v6118, %v6112
    %v6593 = vpack.c.b16 %v6119, %v6113
    %v6594 = vpack.c.b16 %v6120, %v6114
    %v6595 = vpack.c.b16 %v6121, %v6115
    %v6596 = vpack.c.b16 %v6128, %v6122
    %v6597 = vpack.c.b16 %v6129, %v6123
    %v6598 = vpack.c.b16 %v6130, %v6124
    %v6599 = vpack.c.b16 %v6131, %v6125
    %v6600 = vpack.c.b16 %v6132, %v6126
    %v6601 = vpack.c.b16 %v6133, %v6127
    %v6602 = vpack.c.b16 %v6140, %v6134
    %v6603 = vpack.c.b16 %v6141, %v6135
    %v6604 = vpack.c.b16 %v6142, %v6136
    %v6605 = vpack.c.b16 %v6143, %v6137
    %v6606 = vpack.c.b16 %v6144, %v6138
    %v6607 = vpack.c.b16 %v6145, %v6139
    %v6608 = vpack.c.b16 %v6152, %v6146
    %v6609 = vpack.c.b16 %v6153, %v6147
    %v6610 = vpack.c.b16 %v6154, %v6148
    %v6611 = vpack.c.b16 %v6155, %v6149
    %v6612 = vpack.c.b16 %v6156, %v6150
    %v6613 = vpack.c.b16 %v6157, %v6151
    %v6614 = vpack.c.b16 %v6164, %v6158
    %v6615 = vpack.c.b16 %v6165, %v6159
    %v6616 = vpack.c.b16 %v6166, %v6160
    %v6617 = vpack.c.b16 %v6167, %v6161
    %v6618 = vpack.c.b16 %v6168, %v6162
    %v6619 = vpack.c.b16 %v6169, %v6163
    %v6620 = vpack.c.b16 %v6176, %v6170
    %v6621 = vpack.c.b16 %v6177, %v6171
    %v6622 = vpack.c.b16 %v6178, %v6172
    %v6623 = vpack.c.b16 %v6179, %v6173
    %v6624 = vpack.c.b16 %v6180, %v6174
    %v6625 = vpack.c.b16 %v6181, %v6175
    %v6626 = vpack.c.b16 %v6188, %v6182
    %v6627 = vpack.c.b16 %v6189, %v6183
    %v6628 = vpack.c.b16 %v6190, %v6184
    %v6629 = vpack.c.b16 %v6191, %v6185
    %v6630 = vpack.c.b16 %v6192, %v6186
    %v6631 = vpack.c.b16 %v6193, %v6187
    %v6632 = vpack.c.b16 %v6200, %v6194
    %v6633 = vpack.c.b16 %v6201, %v6195
    %v6634 = vpack.c.b16 %v6202, %v6196
    %v6635 = vpack.c.b16 %v6203, %v6197
    %v6636 = vpack.c.b16 %v6204, %v6198
    %v6637 = vpack.c.b16 %v6205, %v6199
    %v6638 = vpack.c.b16 %v6212, %v6206
    %v6639 = vpack.c.b16 %v6213, %v6207
    %v6640 = vpack.c.b16 %v6214, %v6208
    %v6641 = vpack.c.b16 %v6215, %v6209
    %v6642 = vpack.c.b16 %v6216, %v6210
    %v6643 = vpack.c.b16 %v6217, %v6211
    %v6644 = vpack.c.b16 %v6224, %v6218
    %v6645 = vpack.c.b16 %v6225, %v6219
    %v6646 = vpack.c.b16 %v6226, %v6220
    %v6647 = vpack.c.b16 %v6227, %v6221
    %v6648 = vpack.c.b16 %v6228, %v6222
    %v6649 = vpack.c.b16 %v6229, %v6223
    %v6650 = vpack.c.b16 %v6236, %v6230
    %v6651 = vpack.c.b16 %v6237, %v6231
    %v6652 = vpack.c.b16 %v6238, %v6232
    %v6653 = vpack.c.b16 %v6239, %v6233
    %v6654 = vpack.c.b16 %v6240, %v6234
    %v6655 = vpack.c.b16 %v6241, %v6235
    %v6656 = vpack.c.b16 %v6248, %v6242
    %v6657 = vpack.c.b16 %v6249, %v6243
    %v6658 = vpack.c.b16 %v6250, %v6244
    %v6659 = vpack.c.b16 %v6251, %v6245
    %v6660 = vpack.c.b16 %v6252, %v6246
    %v6661 = vpack.c.b16 %v6253, %v6247
    %v6662 = vpack.c.b16 %v6260, %v6254
    %v6663 = vpack.c.b16 %v6261, %v6255
    %v6664 = vpack.c.b16 %v6262, %v6256
    %v6665 = vpack.c.b16 %v6263, %v6257
    %v6666 = vpack.c.b16 %v6264, %v6258
    %v6667 = vpack.c.b16 %v6265, %v6259
    %v6668 = vpack.c.b16 %v6272, %v6266
    %v6669 = vpack.c.b16 %v6273, %v6267
    %v6670 = vpack.c.b16 %v6274, %v6268
    %v6671 = vpack.c.b16 %v6275, %v6269
    %v6672 = vpack.c.b16 %v6276, %v6270
    %v6673 = vpack.c.b16 %v6277, %v6271
    %v6674 = vpack.c.b16 %v6284, %v6278
    %v6675 = vpack.c.b16 %v6285, %v6279
    %v6676 = vpack.c.b16 %v6286, %v6280
    %v6677 = vpack.c.b16 %v6287, %v6281
    %v6678 = vpack.c.b16 %v6288, %v6282
    %v6679 = vpack.c.b16 %v6289, %v6283
    %v6680 = vpack.c.b16 %v6296, %v6290
    %v6681 = vpack.c.b16 %v6297, %v6291
    %v6682 = vpack.c.b16 %v6298, %v6292
    %v6683 = vpack.c.b16 %v6299, %v6293
    %v6684 = vpack.c.b16 %v6300, %v6294
    %v6685 = vpack.c.b16 %v6301, %v6295
    %7070 = vmatprep.subr.bf16.mxu0 %v6303
    %7071 = vmatpush1.bf16.msra.mxu0 %v6302
    %7072 = vmatprep.subr.bf16.mxu0 %v6309
    %7073 = vmatpush1.bf16.msra.mxu0 %v6308
    %7074 = vmatprep.subr.bf16.mxu0 %v6315
    %7075 = vmatpush1.bf16.msra.mxu0 %v6314
    %7076 = vmatprep.subr.bf16.mxu0 %v6321
    %7077 = vmatpush1.bf16.msra.mxu0 %v6320
    %7078 = vmatprep.subr.bf16.mxu0 %v6327
    %7079 = vmatpush1.bf16.msra.mxu0 %v6326
    %7080 = vmatprep.subr.bf16.mxu0 %v6333
    %7081 = vmatpush1.bf16.msra.mxu0 %v6332
    %7082 = vmatprep.subr.bf16.mxu0 %v6339
    %7083 = vmatpush1.bf16.msra.mxu0 %v6338
    %7084 = vmatprep.subr.bf16.mxu0 %v6345
    %7085 = vmatpush1.bf16.msra.mxu0 %v6344
    %7086 = vmatprep.subr.bf16.mxu0 %v6351
    %7087 = vmatpush1.bf16.msra.mxu0 %v6350
    %7088 = vmatprep.subr.bf16.mxu0 %v6357
    %7089 = vmatpush1.bf16.msra.mxu0 %v6356
    %7090 = vmatprep.subr.bf16.mxu0 %v6363
    %7091 = vmatpush1.bf16.msra.mxu0 %v6362
    %7092 = vmatprep.subr.bf16.mxu0 %v6369
    %7093 = vmatpush1.bf16.msra.mxu0 %v6368
    %7094 = vmatprep.subr.bf16.mxu0 %v6375
    %7095 = vmatpush1.bf16.msra.mxu0 %v6374
    %7096 = vmatprep.subr.bf16.mxu0 %v6381
    %7097 = vmatpush1.bf16.msra.mxu0 %v6380
    %7098 = vmatprep.subr.bf16.mxu0 %v6387
    %7099 = vmatpush1.bf16.msra.mxu0 %v6386
    %7100 = vmatprep.subr.bf16.mxu0 %v6393
    %7101 = vmatpush1.bf16.msra.mxu0 %v6392
    %7102 = vmatprep.mubr.bf16.mxu0 %v4759
    %7103 = vmatmul.mubr.bf16.gmra.mrb[0].mxu0 %v4758
    %v7104 = vpop.f32.mrb[0].mxu0
    %v7105 = vadd.f32 0.0, %v7104
    %v7106 = vpop.f32.mrb[0].mxu0
    %v7107 = vadd.f32 0.0, %v7106
    %v7108 = vpop.f32.mrb[0].mxu0
    %v7109 = vpop.f32.mrb[0].mxu0
    %7110 = vdwg.mxu0
    %7111 = vmatprep.subr.bf16.mxu0 %v6399
    %7112 = vmatpush1.bf16.msra.mxu0 %v6398
    %7113 = vmatprep.subr.bf16.mxu0 %v6405
    %7114 = vmatpush1.bf16.msra.mxu0 %v6404
    %7115 = vmatprep.subr.bf16.mxu0 %v6411
    %7116 = vmatpush1.bf16.msra.mxu0 %v6410
    %7117 = vmatprep.subr.bf16.mxu0 %v6417
    %7118 = vmatpush1.bf16.msra.mxu0 %v6416
    %7119 = vmatprep.subr.bf16.mxu0 %v6423
    %7120 = vmatpush1.bf16.msra.mxu0 %v6422
    %7121 = vmatprep.subr.bf16.mxu0 %v6429
    %7122 = vmatpush1.bf16.msra.mxu0 %v6428
    %7123 = vmatprep.subr.bf16.mxu0 %v6435
    %7124 = vmatpush1.bf16.msra.mxu0 %v6434
    %7125 = vmatprep.subr.bf16.mxu0 %v6441
    %7126 = vmatpush1.bf16.msra.mxu0 %v6440
    %7127 = vmatprep.subr.bf16.mxu0 %v6447
    %7128 = vmatpush1.bf16.msra.mxu0 %v6446
    %7129 = vmatprep.subr.bf16.mxu0 %v6453
    %7130 = vmatpush1.bf16.msra.mxu0 %v6452
    %7131 = vmatprep.subr.bf16.mxu0 %v6459
    %7132 = vmatpush1.bf16.msra.mxu0 %v6458
    %7133 = vmatprep.subr.bf16.mxu0 %v6465
    %7134 = vmatpush1.bf16.msra.mxu0 %v6464
    %7135 = vmatprep.subr.bf16.mxu0 %v6471
    %7136 = vmatpush1.bf16.msra.mxu0 %v6470
    %7137 = vmatprep.subr.bf16.mxu0 %v6477
    %7138 = vmatpush1.bf16.msra.mxu0 %v6476
    %7139 = vmatprep.subr.bf16.mxu0 %v6483
    %7140 = vmatpush1.bf16.msra.mxu0 %v6482
    %7141 = vmatprep.subr.bf16.mxu0 %v6489
    %7142 = vmatpush1.bf16.msra.mxu0 %v6488
    %7143 = vmatprep.mubr.bf16.mxu0 %v4761
    %7144 = vmatmul.mubr.bf16.gmra.mrb[0].mxu0 %v4760
    %v7145 = vpop.f32.mrb[0].mxu0
    %v7146 = vadd.f32 %v7105, %v7145
    %v7147 = vpop.f32.mrb[0].mxu0
    %v7148 = vadd.f32 %v7107, %v7147
    %v7149 = vpop.f32.mrb[0].mxu0
    %v7150 = vpop.f32.mrb[0].mxu0
    %7151 = vdwg.mxu0
    %7152 = vmatprep.subr.bf16.mxu0 %v6495
    %7153 = vmatpush1.bf16.msra.mxu0 %v6494
    %7154 = vmatprep.subr.bf16.mxu0 %v6501
    %7155 = vmatpush1.bf16.msra.mxu0 %v6500
    %7156 = vmatprep.subr.bf16.mxu0 %v6507
    %7157 = vmatpush1.bf16.msra.mxu0 %v6506
    %7158 = vmatprep.subr.bf16.mxu0 %v6513
    %7159 = vmatpush1.bf16.msra.mxu0 %v6512
    %7160 = vmatprep.subr.bf16.mxu0 %v6519
    %7161 = vmatpush1.bf16.msra.mxu0 %v6518
    %7162 = vmatprep.subr.bf16.mxu0 %v6525
    %7163 = vmatpush1.bf16.msra.mxu0 %v6524
    %7164 = vmatprep.subr.bf16.mxu0 %v6531
    %7165 = vmatpush1.bf16.msra.mxu0 %v6530
    %7166 = vmatprep.subr.bf16.mxu0 %v6537
    %7167 = vmatpush1.bf16.msra.mxu0 %v6536
    %7168 = vmatprep.subr.bf16.mxu0 %v6543
    %7169 = vmatpush1.bf16.msra.mxu0 %v6542
    %7170 = vmatprep.subr.bf16.mxu0 %v6549
    %7171 = vmatpush1.bf16.msra.mxu0 %v6548
    %7172 = vmatprep.subr.bf16.mxu0 %v6555
    %7173 = vmatpush1.bf16.msra.mxu0 %v6554
    %7174 = vmatprep.subr.bf16.mxu0 %v6561
    %7175 = vmatpush1.bf16.msra.mxu0 %v6560
    %7176 = vmatprep.subr.bf16.mxu0 %v6567
    %7177 = vmatpush1.bf16.msra.mxu0 %v6566
    %7178 = vmatprep.subr.bf16.mxu0 %v6573
    %7179 = vmatpush1.bf16.msra.mxu0 %v6572
    %7180 = vmatprep.subr.bf16.mxu0 %v6579
    %7181 = vmatpush1.bf16.msra.mxu0 %v6578
    %7182 = vmatprep.subr.bf16.mxu0 %v6585
    %7183 = vmatpush1.bf16.msra.mxu0 %v6584
    %7184 = vmatprep.mubr.bf16.mxu0 %v4763
    %7185 = vmatmul.mubr.bf16.gmra.mrb[0].mxu0 %v4762
    %v7186 = vpop.f32.mrb[0].mxu0
    %v7187 = vadd.f32 %v7146, %v7186
    %v7188 = vpop.f32.mrb[0].mxu0
    %v7189 = vadd.f32 %v7148, %v7188
    %v7190 = vpop.f32.mrb[0].mxu0
    %v7191 = vpop.f32.mrb[0].mxu0
    %7192 = vdwg.mxu0
    %7193 = vmatprep.subr.bf16.mxu0 %v6591
    %7194 = vmatpush1.bf16.msra.mxu0 %v6590
    %7195 = vmatprep.subr.bf16.mxu0 %v6597
    %7196 = vmatpush1.bf16.msra.mxu0 %v6596
    %7197 = vmatprep.subr.bf16.mxu0 %v6603
    %7198 = vmatpush1.bf16.msra.mxu0 %v6602
    %7199 = vmatprep.subr.bf16.mxu0 %v6609
    %7200 = vmatpush1.bf16.msra.mxu0 %v6608
    %7201 = vmatprep.subr.bf16.mxu0 %v6615
    %7202 = vmatpush1.bf16.msra.mxu0 %v6614
    %7203 = vmatprep.subr.bf16.mxu0 %v6621
    %7204 = vmatpush1.bf16.msra.mxu0 %v6620
    %7205 = vmatprep.subr.bf16.mxu0 %v6627
    %7206 = vmatpush1.bf16.msra.mxu0 %v6626
    %7207 = vmatprep.subr.bf16.mxu0 %v6633
    %7208 = vmatpush1.bf16.msra.mxu0 %v6632
    %7209 = vmatprep.subr.bf16.mxu0 %v6639
    %7210 = vmatpush1.bf16.msra.mxu0 %v6638
    %7211 = vmatprep.subr.bf16.mxu0 %v6645
    %7212 = vmatpush1.bf16.msra.mxu0 %v6644
    %7213 = vmatprep.subr.bf16.mxu0 %v6651
    %7214 = vmatpush1.bf16.msra.mxu0 %v6650
    %7215 = vmatprep.subr.bf16.mxu0 %v6657
    %7216 = vmatpush1.bf16.msra.mxu0 %v6656
    %7217 = vmatprep.subr.bf16.mxu0 %v6663
    %7218 = vmatpush1.bf16.msra.mxu0 %v6662
    %7219 = vmatprep.subr.bf16.mxu0 %v6669
    %7220 = vmatpush1.bf16.msra.mxu0 %v6668
    %7221 = vmatprep.subr.bf16.mxu0 %v6675
    %7222 = vmatpush1.bf16.msra.mxu0 %v6674
    %7223 = vmatprep.subr.bf16.mxu0 %v6681
    %7224 = vmatpush1.bf16.msra.mxu0 %v6680
    %7225 = vmatprep.mubr.bf16.mxu0 %v4765
    %7226 = vmatmul.mubr.bf16.gmra.mrb[0].mxu0 %v4764
    %v7227 = vpop.f32.mrb[0].mxu0
    %v7228 = vadd.f32 %v7187, %v7227
    %v7229 = vpop.f32.mrb[0].mxu0
    %v7230 = vadd.f32 %v7189, %v7229
    %v7231 = vpop.f32.mrb[0].mxu0
    %v7232 = vpop.f32.mrb[0].mxu0
    %7233 = vdwg.mxu0
    %7234 = vmatprep.subr.bf16.mxu0 %v6305
    %7235 = vmatpush1.bf16.msra.mxu0 %v6304
    %7236 = vmatprep.subr.bf16.mxu0 %v6311
    %7237 = vmatpush1.bf16.msra.mxu0 %v6310
    %7238 = vmatprep.subr.bf16.mxu0 %v6317
    %7239 = vmatpush1.bf16.msra.mxu0 %v6316
    %7240 = vmatprep.subr.bf16.mxu0 %v6323
    %7241 = vmatpush1.bf16.msra.mxu0 %v6322
    %7242 = vmatprep.subr.bf16.mxu0 %v6329
    %7243 = vmatpush1.bf16.msra.mxu0 %v6328
    %7244 = vmatprep.subr.bf16.mxu0 %v6335
    %7245 = vmatpush1.bf16.msra.mxu0 %v6334
    %7246 = vmatprep.subr.bf16.mxu0 %v6341
    %7247 = vmatpush1.bf16.msra.mxu0 %v6340
    %7248 = vmatprep.subr.bf16.mxu0 %v6347
    %7249 = vmatpush1.bf16.msra.mxu0 %v6346
    %7250 = vmatprep.subr.bf16.mxu0 %v6353
    %7251 = vmatpush1.bf16.msra.mxu0 %v6352
    %7252 = vmatprep.subr.bf16.mxu0 %v6359
    %7253 = vmatpush1.bf16.msra.mxu0 %v6358
    %7254 = vmatprep.subr.bf16.mxu0 %v6365
    %7255 = vmatpush1.bf16.msra.mxu0 %v6364
    %7256 = vmatprep.subr.bf16.mxu0 %v6371
    %7257 = vmatpush1.bf16.msra.mxu0 %v6370
    %7258 = vmatprep.subr.bf16.mxu0 %v6377
    %7259 = vmatpush1.bf16.msra.mxu0 %v6376
    %7260 = vmatprep.subr.bf16.mxu0 %v6383
    %7261 = vmatpush1.bf16.msra.mxu0 %v6382
    %7262 = vmatprep.subr.bf16.mxu0 %v6389
    %7263 = vmatpush1.bf16.msra.mxu0 %v6388
    %7264 = vmatprep.subr.bf16.mxu0 %v6395
    %7265 = vmatpush1.bf16.msra.mxu0 %v6394
    %7266 = vmatprep.mubr.bf16.mxu0 %v4759
    %7267 = vmatmul.mubr.bf16.gmra.mrb[0].mxu0 %v4758
    %v7268 = vpop.f32.mrb[0].mxu0
    %v7269 = vadd.f32 0.0, %v7268
    %v7270 = vpop.f32.mrb[0].mxu0
    %v7271 = vadd.f32 0.0, %v7270
    %v7272 = vpop.f32.mrb[0].mxu0
    %v7273 = vpop.f32.mrb[0].mxu0
    %7274 = vdwg.mxu0
    %7275 = vmatprep.subr.bf16.mxu0 %v6401
    %7276 = vmatpush1.bf16.msra.mxu0 %v6400
    %7277 = vmatprep.subr.bf16.mxu0 %v6407
    %7278 = vmatpush1.bf16.msra.mxu0 %v6406
    %7279 = vmatprep.subr.bf16.mxu0 %v6413
    %7280 = vmatpush1.bf16.msra.mxu0 %v6412
    %7281 = vmatprep.subr.bf16.mxu0 %v6419
    %7282 = vmatpush1.bf16.msra.mxu0 %v6418
    %7283 = vmatprep.subr.bf16.mxu0 %v6425
    %7284 = vmatpush1.bf16.msra.mxu0 %v6424
    %7285 = vmatprep.subr.bf16.mxu0 %v6431
    %7286 = vmatpush1.bf16.msra.mxu0 %v6430
    %7287 = vmatprep.subr.bf16.mxu0 %v6437
    %7288 = vmatpush1.bf16.msra.mxu0 %v6436
    %7289 = vmatprep.subr.bf16.mxu0 %v6443
    %7290 = vmatpush1.bf16.msra.mxu0 %v6442
    %7291 = vmatprep.subr.bf16.mxu0 %v6449
    %7292 = vmatpush1.bf16.msra.mxu0 %v6448
    %7293 = vmatprep.subr.bf16.mxu0 %v6455
    %7294 = vmatpush1.bf16.msra.mxu0 %v6454
    %7295 = vmatprep.subr.bf16.mxu0 %v6461
    %7296 = vmatpush1.bf16.msra.mxu0 %v6460
    %7297 = vmatprep.subr.bf16.mxu0 %v6467
    %7298 = vmatpush1.bf16.msra.mxu0 %v6466
    %7299 = vmatprep.subr.bf16.mxu0 %v6473
    %7300 = vmatpush1.bf16.msra.mxu0 %v6472
    %7301 = vmatprep.subr.bf16.mxu0 %v6479
    %7302 = vmatpush1.bf16.msra.mxu0 %v6478
    %7303 = vmatprep.subr.bf16.mxu0 %v6485
    %7304 = vmatpush1.bf16.msra.mxu0 %v6484
    %7305 = vmatprep.subr.bf16.mxu0 %v6491
    %7306 = vmatpush1.bf16.msra.mxu0 %v6490
    %7307 = vmatprep.mubr.bf16.mxu0 %v4761
    %7308 = vmatmul.mubr.bf16.gmra.mrb[0].mxu0 %v4760
    %v7309 = vpop.f32.mrb[0].mxu0
    %v7310 = vadd.f32 %v7269, %v7309
    %v7311 = vpop.f32.mrb[0].mxu0
    %v7312 = vadd.f32 %v7271, %v7311
    %v7313 = vpop.f32.mrb[0].mxu0
    %v7314 = vpop.f32.mrb[0].mxu0
    %7315 = vdwg.mxu0
    %7316 = vmatprep.subr.bf16.mxu0 %v6497
    %7317 = vmatpush1.bf16.msra.mxu0 %v6496
    %7318 = vmatprep.subr.bf16.mxu0 %v6503
    %7319 = vmatpush1.bf16.msra.mxu0 %v6502
    %7320 = vmatprep.subr.bf16.mxu0 %v6509
    %7321 = vmatpush1.bf16.msra.mxu0 %v6508
    %7322 = vmatprep.subr.bf16.mxu0 %v6515
    %7323 = vmatpush1.bf16.msra.mxu0 %v6514
    %7324 = vmatprep.subr.bf16.mxu0 %v6521
    %7325 = vmatpush1.bf16.msra.mxu0 %v6520
    %7326 = vmatprep.subr.bf16.mxu0 %v6527
    %7327 = vmatpush1.bf16.msra.mxu0 %v6526
    %7328 = vmatprep.subr.bf16.mxu0 %v6533
    %7329 = vmatpush1.bf16.msra.mxu0 %v6532
    %7330 = vmatprep.subr.bf16.mxu0 %v6539
    %7331 = vmatpush1.bf16.msra.mxu0 %v6538
    %7332 = vmatprep.subr.bf16.mxu0 %v6545
    %7333 = vmatpush1.bf16.msra.mxu0 %v6544
    %7334 = vmatprep.subr.bf16.mxu0 %v6551
    %7335 = vmatpush1.bf16.msra.mxu0 %v6550
    %7336 = vmatprep.subr.bf16.mxu0 %v6557
    %7337 = vmatpush1.bf16.msra.mxu0 %v6556
    %7338 = vmatprep.subr.bf16.mxu0 %v6563
    %7339 = vmatpush1.bf16.msra.mxu0 %v6562
    %7340 = vmatprep.subr.bf16.mxu0 %v6569
    %7341 = vmatpush1.bf16.msra.mxu0 %v6568
    %7342 = vmatprep.subr.bf16.mxu0 %v6575
    %7343 = vmatpush1.bf16.msra.mxu0 %v6574
    %7344 = vmatprep.subr.bf16.mxu0 %v6581
    %7345 = vmatpush1.bf16.msra.mxu0 %v6580
    %7346 = vmatprep.subr.bf16.mxu0 %v6587
    %7347 = vmatpush1.bf16.msra.mxu0 %v6586
    %7348 = vmatprep.mubr.bf16.mxu0 %v4763
    %7349 = vmatmul.mubr.bf16.gmra.mrb[0].mxu0 %v4762
    %v7350 = vpop.f32.mrb[0].mxu0
    %v7351 = vadd.f32 %v7310, %v7350
    %v7352 = vpop.f32.mrb[0].mxu0
    %v7353 = vadd.f32 %v7312, %v7352
    %v7354 = vpop.f32.mrb[0].mxu0
    %v7355 = vpop.f32.mrb[0].mxu0
    %7356 = vdwg.mxu0
    %7357 = vmatprep.subr.bf16.mxu0 %v6593
    %7358 = vmatpush1.bf16.msra.mxu0 %v6592
    %7359 = vmatprep.subr.bf16.mxu0 %v6599
    %7360 = vmatpush1.bf16.msra.mxu0 %v6598
    %7361 = vmatprep.subr.bf16.mxu0 %v6605
    %7362 = vmatpush1.bf16.msra.mxu0 %v6604
    %7363 = vmatprep.subr.bf16.mxu0 %v6611
    %7364 = vmatpush1.bf16.msra.mxu0 %v6610
    %7365 = vmatprep.subr.bf16.mxu0 %v6617
    %7366 = vmatpush1.bf16.msra.mxu0 %v6616
    %7367 = vmatprep.subr.bf16.mxu0 %v6623
    %7368 = vmatpush1.bf16.msra.mxu0 %v6622
    %7369 = vmatprep.subr.bf16.mxu0 %v6629
    %7370 = vmatpush1.bf16.msra.mxu0 %v6628
    %7371 = vmatprep.subr.bf16.mxu0 %v6635
    %7372 = vmatpush1.bf16.msra.mxu0 %v6634
    %7373 = vmatprep.subr.bf16.mxu0 %v6641
    %7374 = vmatpush1.bf16.msra.mxu0 %v6640
    %7375 = vmatprep.subr.bf16.mxu0 %v6647
    %7376 = vmatpush1.bf16.msra.mxu0 %v6646
    %7377 = vmatprep.subr.bf16.mxu0 %v6653
    %7378 = vmatpush1.bf16.msra.mxu0 %v6652
    %7379 = vmatprep.subr.bf16.mxu0 %v6659
    %7380 = vmatpush1.bf16.msra.mxu0 %v6658
    %7381 = vmatprep.subr.bf16.mxu0 %v6665
    %7382 = vmatpush1.bf16.msra.mxu0 %v6664
    %7383 = vmatprep.subr.bf16.mxu0 %v6671
    %7384 = vmatpush1.bf16.msra.mxu0 %v6670
    %7385 = vmatprep.subr.bf16.mxu0 %v6677
    %7386 = vmatpush1.bf16.msra.mxu0 %v6676
    %7387 = vmatprep.subr.bf16.mxu0 %v6683
    %7388 = vmatpush1.bf16.msra.mxu0 %v6682
    %7389 = vmatprep.mubr.bf16.mxu0 %v4765
    %7390 = vmatmul.mubr.bf16.gmra.mrb[0].mxu0 %v4764
    %v7391 = vpop.f32.mrb[0].mxu0
    %v7392 = vadd.f32 %v7351, %v7391
    %v7393 = vpop.f32.mrb[0].mxu0
    %v7394 = vadd.f32 %v7353, %v7393
    %v7395 = vpop.f32.mrb[0].mxu0
    %v7396 = vpop.f32.mrb[0].mxu0
    %7397 = vdwg.mxu0
    %7398 = vmatprep.subr.bf16.mxu0 %v6307
    %7399 = vmatpush1.bf16.msra.mxu0 %v6306
    %7400 = vmatprep.subr.bf16.mxu0 %v6313
    %7401 = vmatpush1.bf16.msra.mxu0 %v6312
    %7402 = vmatprep.subr.bf16.mxu0 %v6319
    %7403 = vmatpush1.bf16.msra.mxu0 %v6318
    %7404 = vmatprep.subr.bf16.mxu0 %v6325
    %7405 = vmatpush1.bf16.msra.mxu0 %v6324
    %7406 = vmatprep.subr.bf16.mxu0 %v6331
    %7407 = vmatpush1.bf16.msra.mxu0 %v6330
    %7408 = vmatprep.subr.bf16.mxu0 %v6337
    %7409 = vmatpush1.bf16.msra.mxu0 %v6336
    %7410 = vmatprep.subr.bf16.mxu0 %v6343
    %7411 = vmatpush1.bf16.msra.mxu0 %v6342
    %7412 = vmatprep.subr.bf16.mxu0 %v6349
    %7413 = vmatpush1.bf16.msra.mxu0 %v6348
    %7414 = vmatprep.subr.bf16.mxu0 %v6355
    %7415 = vmatpush1.bf16.msra.mxu0 %v6354
    %7416 = vmatprep.subr.bf16.mxu0 %v6361
    %7417 = vmatpush1.bf16.msra.mxu0 %v6360
    %7418 = vmatprep.subr.bf16.mxu0 %v6367
    %7419 = vmatpush1.bf16.msra.mxu0 %v6366
    %7420 = vmatprep.subr.bf16.mxu0 %v6373
    %7421 = vmatpush1.bf16.msra.mxu0 %v6372
    %7422 = vmatprep.subr.bf16.mxu0 %v6379
    %7423 = vmatpush1.bf16.msra.mxu0 %v6378
    %7424 = vmatprep.subr.bf16.mxu0 %v6385
    %7425 = vmatpush1.bf16.msra.mxu0 %v6384
    %7426 = vmatprep.subr.bf16.mxu0 %v6391
    %7427 = vmatpush1.bf16.msra.mxu0 %v6390
    %7428 = vmatprep.subr.bf16.mxu0 %v6397
    %7429 = vmatpush1.bf16.msra.mxu0 %v6396
    %7430 = vmatprep.mubr.bf16.mxu0 %v4759
    %7431 = vmatmul.mubr.bf16.gmra.mrb[0].mxu0 %v4758
    %v7432 = vpop.f32.mrb[0].mxu0
    %v7433 = vadd.f32 0.0, %v7432
    %v7434 = vpop.f32.mrb[0].mxu0
    %v7435 = vadd.f32 0.0, %v7434
    %v7436 = vpop.f32.mrb[0].mxu0
    %v7437 = vpop.f32.mrb[0].mxu0
    %7438 = vdwg.mxu0
    %7439 = vmatprep.subr.bf16.mxu0 %v6403
    %7440 = vmatpush1.bf16.msra.mxu0 %v6402
    %7441 = vmatprep.subr.bf16.mxu0 %v6409
    %7442 = vmatpush1.bf16.msra.mxu0 %v6408
    %7443 = vmatprep.subr.bf16.mxu0 %v6415
    %7444 = vmatpush1.bf16.msra.mxu0 %v6414
    %7445 = vmatprep.subr.bf16.mxu0 %v6421
    %7446 = vmatpush1.bf16.msra.mxu0 %v6420
    %7447 = vmatprep.subr.bf16.mxu0 %v6427
    %7448 = vmatpush1.bf16.msra.mxu0 %v6426
    %7449 = vmatprep.subr.bf16.mxu0 %v6433
    %7450 = vmatpush1.bf16.msra.mxu0 %v6432
    %7451 = vmatprep.subr.bf16.mxu0 %v6439
    %7452 = vmatpush1.bf16.msra.mxu0 %v6438
    %7453 = vmatprep.subr.bf16.mxu0 %v6445
    %7454 = vmatpush1.bf16.msra.mxu0 %v6444
    %7455 = vmatprep.subr.bf16.mxu0 %v6451
    %7456 = vmatpush1.bf16.msra.mxu0 %v6450
    %7457 = vmatprep.subr.bf16.mxu0 %v6457
    %7458 = vmatpush1.bf16.msra.mxu0 %v6456
    %7459 = vmatprep.subr.bf16.mxu0 %v6463
    %7460 = vmatpush1.bf16.msra.mxu0 %v6462
    %7461 = vmatprep.subr.bf16.mxu0 %v6469
    %7462 = vmatpush1.bf16.msra.mxu0 %v6468
    %7463 = vmatprep.subr.bf16.mxu0 %v6475
    %7464 = vmatpush1.bf16.msra.mxu0 %v6474
    %7465 = vmatprep.subr.bf16.mxu0 %v6481
    %7466 = vmatpush1.bf16.msra.mxu0 %v6480
    %7467 = vmatprep.subr.bf16.mxu0 %v6487
    %7468 = vmatpush1.bf16.msra.mxu0 %v6486
    %7469 = vmatprep.subr.bf16.mxu0 %v6493
    %7470 = vmatpush1.bf16.msra.mxu0 %v6492
    %7471 = vmatprep.mubr.bf16.mxu0 %v4761
    %7472 = vmatmul.mubr.bf16.gmra.mrb[0].mxu0 %v4760
    %v7473 = vpop.f32.mrb[0].mxu0
    %v7474 = vadd.f32 %v7433, %v7473
    %v7475 = vpop.f32.mrb[0].mxu0
    %v7476 = vadd.f32 %v7435, %v7475
    %v7477 = vpop.f32.mrb[0].mxu0
    %v7478 = vpop.f32.mrb[0].mxu0
    %7479 = vdwg.mxu0
    %7480 = vmatprep.subr.bf16.mxu0 %v6499
    %7481 = vmatpush1.bf16.msra.mxu0 %v6498
    %7482 = vmatprep.subr.bf16.mxu0 %v6505
    %7483 = vmatpush1.bf16.msra.mxu0 %v6504
    %7484 = vmatprep.subr.bf16.mxu0 %v6511
    %7485 = vmatpush1.bf16.msra.mxu0 %v6510
    %7486 = vmatprep.subr.bf16.mxu0 %v6517
    %7487 = vmatpush1.bf16.msra.mxu0 %v6516
    %7488 = vmatprep.subr.bf16.mxu0 %v6523
    %7489 = vmatpush1.bf16.msra.mxu0 %v6522
    %7490 = vmatprep.subr.bf16.mxu0 %v6529
    %7491 = vmatpush1.bf16.msra.mxu0 %v6528
    %7492 = vmatprep.subr.bf16.mxu0 %v6535
    %7493 = vmatpush1.bf16.msra.mxu0 %v6534
    %7494 = vmatprep.subr.bf16.mxu0 %v6541
    %7495 = vmatpush1.bf16.msra.mxu0 %v6540
    %7496 = vmatprep.subr.bf16.mxu0 %v6547
    %7497 = vmatpush1.bf16.msra.mxu0 %v6546
    %7498 = vmatprep.subr.bf16.mxu0 %v6553
    %7499 = vmatpush1.bf16.msra.mxu0 %v6552
    %7500 = vmatprep.subr.bf16.mxu0 %v6559
    %7501 = vmatpush1.bf16.msra.mxu0 %v6558
    %7502 = vmatprep.subr.bf16.mxu0 %v6565
    %7503 = vmatpush1.bf16.msra.mxu0 %v6564
    %7504 = vmatprep.subr.bf16.mxu0 %v6571
    %7505 = vmatpush1.bf16.msra.mxu0 %v6570
    %7506 = vmatprep.subr.bf16.mxu0 %v6577
    %7507 = vmatpush1.bf16.msra.mxu0 %v6576
    %7508 = vmatprep.subr.bf16.mxu0 %v6583
    %7509 = vmatpush1.bf16.msra.mxu0 %v6582
    %7510 = vmatprep.subr.bf16.mxu0 %v6589
    %7511 = vmatpush1.bf16.msra.mxu0 %v6588
    %7512 = vmatprep.mubr.bf16.mxu0 %v4763
    %7513 = vmatmul.mubr.bf16.gmra.mrb[0].mxu0 %v4762
    %v7514 = vpop.f32.mrb[0].mxu0
    %v7515 = vadd.f32 %v7474, %v7514
    %v7516 = vpop.f32.mrb[0].mxu0
    %v7517 = vadd.f32 %v7476, %v7516
    %v7518 = vpop.f32.mrb[0].mxu0
    %v7519 = vpop.f32.mrb[0].mxu0
    %7520 = vdwg.mxu0
    %7521 = vmatprep.subr.bf16.mxu0 %v6595
    %7522 = vmatpush1.bf16.msra.mxu0 %v6594
    %7523 = vmatprep.subr.bf16.mxu0 %v6601
    %7524 = vmatpush1.bf16.msra.mxu0 %v6600
    %7525 = vmatprep.subr.bf16.mxu0 %v6607
    %7526 = vmatpush1.bf16.msra.mxu0 %v6606
    %7527 = vmatprep.subr.bf16.mxu0 %v6613
    %7528 = vmatpush1.bf16.msra.mxu0 %v6612
    %7529 = vmatprep.subr.bf16.mxu0 %v6619
    %7530 = vmatpush1.bf16.msra.mxu0 %v6618
    %7531 = vmatprep.subr.bf16.mxu0 %v6625
    %7532 = vmatpush1.bf16.msra.mxu0 %v6624
    %7533 = vmatprep.subr.bf16.mxu0 %v6631
    %7534 = vmatpush1.bf16.msra.mxu0 %v6630
    %7535 = vmatprep.subr.bf16.mxu0 %v6637
    %7536 = vmatpush1.bf16.msra.mxu0 %v6636
    %7537 = vmatprep.subr.bf16.mxu0 %v6643
    %7538 = vmatpush1.bf16.msra.mxu0 %v6642
    %7539 = vmatprep.subr.bf16.mxu0 %v6649
    %7540 = vmatpush1.bf16.msra.mxu0 %v6648
    %7541 = vmatprep.subr.bf16.mxu0 %v6655
    %7542 = vmatpush1.bf16.msra.mxu0 %v6654
    %7543 = vmatprep.subr.bf16.mxu0 %v6661
    %7544 = vmatpush1.bf16.msra.mxu0 %v6660
    %7545 = vmatprep.subr.bf16.mxu0 %v6667
    %7546 = vmatpush1.bf16.msra.mxu0 %v6666
    %7547 = vmatprep.subr.bf16.mxu0 %v6673
    %7548 = vmatpush1.bf16.msra.mxu0 %v6672
    %7549 = vmatprep.subr.bf16.mxu0 %v6679
    %7550 = vmatpush1.bf16.msra.mxu0 %v6678
    %7551 = vmatprep.subr.bf16.mxu0 %v6685
    %7552 = vmatpush1.bf16.msra.mxu0 %v6684
    %7553 = vmatprep.mubr.bf16.mxu0 %v4765
    %7554 = vmatmul.mubr.bf16.gmra.mrb[0].mxu0 %v4764
    %v7555 = vpop.f32.mrb[0].mxu0
    %v7556 = vadd.f32 %v7515, %v7555
    %v7557 = vpop.f32.mrb[0].mxu0
    %v7558 = vadd.f32 %v7517, %v7557
    %v7559 = vpop.f32.mrb[0].mxu0
    %v7560 = vpop.f32.mrb[0].mxu0
    %7561 = vdwg.mxu0
    %7562 = vst [vmem:[#allocation2] sm:$0xff] %v7228
    %7563 = vst [vmem:[#allocation2 + $0x8] sm:$0xff] %v7230
    %7564 = vst [vmem:[#allocation2 + $0x10] sm:$0xff] %v7392
    %7565 = vst [vmem:[#allocation2 + $0x18] sm:$0xff] %v7394
    %7566 = vst [vmem:[#allocation2 + $0x20] sm:$0xff] %v7556
    %7567 = vst [vmem:[#allocation2 + $0x28] sm:$0xff] %v7558
    %v7568 = vld [vmem:[#allocation9] sm:$0xff]
    %v7569 = vld [vmem:[#allocation9 + $0x8] sm:$0xff]
    %v7570 = vld [vmem:[#allocation9 + $0x10] sm:$0xff]
    %v7571 = vld [vmem:[#allocation9 + $0x18] sm:$0xff]
    %v7572 = vld [vmem:[#allocation9 + $0x20] sm:$0xf]
    %v7573 = vld [vmem:[#allocation2] sm:$0xff]
    %v7574 = vld [vmem:[#allocation2 + $0x8] sm:$0xff]
    %v7575 = vld [vmem:[#allocation2 + $0x10] sm:$0xff]
    %v7576 = vld [vmem:[#allocation2 + $0x18] sm:$0xff]
    %v7577 = vld [vmem:[#allocation2 + $0x20] sm:$0xff]
    %v7578 = vld [vmem:[#allocation2 + $0x28] sm:$0xff]
    %s7579 = sld [smem:[#allocation3]]
    %v7580 = vstv %s7579
    %vm7581 = vcmask 392192
    %v7583 = vsel %vm7581, %v7568, 0
    %v7586 = vsel %vm7581, %v7569, 0
    %v7589 = vsel %vm7581, %v7570, 0
    %v7592 = vsel %vm7581, %v7571, 0
    %v7595 = vsel %vm7581, %v7572, 0
    %7597 = vmatprep.subr.mxu0 0.0
    %7598 = vmatpush1.msra.mxu0 %v7573
    %7599 = vmatprep.subr.mxu0 0.0
    %7600 = vmatpush1.msra.mxu0 %v7574
    %7601 = vmatprep.subr.mxu0 0.0
    %7602 = vmatpush1.msra.mxu0 %v7575
    %7603 = vmatprep.subr.mxu0 0.0
    %7604 = vmatpush1.msra.mxu0 %v7576
    %7605 = vmatprep.subr.mxu0 0.0
    %7606 = vmatpush1.msra.mxu0 %v7577
    %7607 = vmatprep.subr.mxu0 0.0
    %7608 = vmatpush1.msra.mxu0 %v7578
    %7609 = vmatprep.subr.mxu0 0.0
    %7610 = vmatpush1.msra.mxu0 0.0
    %7611 = vmatprep.subr.mxu0 0.0
    %7612 = vmatpush1.msra.mxu0 0.0
    %7613 = vmatprep.subr.mxu0 0.0
    %7614 = vmatpush1.msra.mxu0 0.0
    %7615 = vmatprep.subr.mxu0 0.0
    %7616 = vmatpush1.msra.mxu0 0.0
    %7617 = vmatprep.subr.mxu0 0.0
    %7618 = vmatpush1.msra.mxu0 0.0
    %7619 = vmatprep.subr.mxu0 0.0
    %7620 = vmatpush1.msra.mxu0 0.0
    %7621 = vmatprep.subr.mxu0 0.0
    %7622 = vmatpush1.msra.mxu0 0.0
    %7623 = vmatprep.subr.mxu0 0.0
    %7624 = vmatpush1.msra.mxu0 0.0
    %7625 = vmatprep.subr.mxu0 0.0
    %7626 = vmatpush1.msra.mxu0 0.0
    %7627 = vmatprep.subr.mxu0 0.0
    %7628 = vmatpush1.msra.mxu0 0.0
    %7629 = vmatprep.subr.mxu0 0.0
    %7630 = vmatpush1.msra.mxu0 0.0
    %7631 = vmatprep.subr.mxu0 0.0
    %7632 = vmatpush1.msra.mxu0 0.0
    %7633 = vmatprep.subr.mxu0 0.0
    %7634 = vmatpush1.msra.mxu0 0.0
    %7635 = vmatprep.subr.mxu0 0.0
    %7636 = vmatpush1.msra.mxu0 0.0
    %7637 = vmatprep.subr.mxu0 0.0
    %7638 = vmatpush1.msra.mxu0 0.0
    %7639 = vmatprep.subr.mxu0 0.0
    %7640 = vmatpush1.msra.mxu0 0.0
    %7641 = vmatprep.subr.mxu0 0.0
    %7642 = vmatpush1.msra.mxu0 0.0
    %7643 = vmatprep.subr.mxu0 0.0
    %7644 = vmatpush1.msra.mxu0 0.0
    %7645 = vmatprep.subr.mxu0 0.0
    %7646 = vmatpush1.msra.mxu0 0.0
    %7647 = vmatprep.subr.mxu0 0.0
    %7648 = vmatpush1.msra.mxu0 0.0
    %7649 = vmatprep.subr.mxu0 0.0
    %7650 = vmatpush1.msra.mxu0 0.0
    %7651 = vmatprep.subr.mxu0 0.0
    %7652 = vmatpush1.msra.mxu0 0.0
    %7653 = vmatprep.subr.mxu0 0.0
    %7654 = vmatpush1.msra.mxu0 0.0
    %7655 = vmatprep.subr.mxu0 0.0
    %7656 = vmatpush1.msra.mxu0 0.0
    %7657 = vmatprep.subr.mxu0 0.0
    %7658 = vmatpush1.msra.mxu0 0.0
    %7659 = vmatprep.subr.mxu0 0.0
    %7660 = vmatpush1.msra.mxu0 0.0
    %7661 = vmatprep.mubr.f32.mxu0 0.0
    %7662 = vmatmul.mubr.f32.gmra.mrb[0].mxu0 %v7583
    %v7663 = vpop.f32.mrb[0].mxu0
    %v7664 = vadd.f32 %v7580, %v7663
    %v7665 = vpop.f32.mrb[0].mxu0
    %7666 = vmatprep.mubr.f32.mxu0 0.0
    %7667 = vmatmul.mubr.f32.gmra.mrb[0].mxu0 %v7586
    %v7668 = vpop.f32.mrb[0].mxu0
    %v7669 = vadd.f32 %v7580, %v7668
    %v7670 = vpop.f32.mrb[0].mxu0
    %7671 = vmatprep.mubr.f32.mxu0 0.0
    %7672 = vmatmul.mubr.f32.gmra.mrb[0].mxu0 %v7589
    %v7673 = vpop.f32.mrb[0].mxu0
    %v7674 = vadd.f32 %v7580, %v7673
    %v7675 = vpop.f32.mrb[0].mxu0
    %7676 = vmatprep.mubr.f32.mxu0 0.0
    %7677 = vmatmul.mubr.f32.gmra.mrb[0].mxu0 %v7592
    %v7678 = vpop.f32.mrb[0].mxu0
    %v7679 = vadd.f32 %v7580, %v7678
    %v7680 = vpop.f32.mrb[0].mxu0
    %7681 = vmatprep.mubr.f32.mxu0 0.0
    %7682 = vmatmul.mubr.f32.gmra.mrb[0].mxu0 %v7595
    %v7683 = vpop.f32.mrb[0].mxu0
    %v7684 = vadd.f32 %v7580, %v7683
    %v7685 = vpop.f32.mrb[0].mxu0
    %7686 = vdwg.mxu0
    %v7687 = vsub.f32 0.0, %v7664
    %v7688 = vsub.f32 0.0, %v7669
    %v7689 = vsub.f32 0.0, %v7674
    %v7690 = vsub.f32 0.0, %v7679
    %v7691 = vsub.f32 0.0, %v7684
    %v7692 = vmul.f32 %v7687, 1.442695
    %v7693 = vpow.pop %v7692
    %v7694 = vmul.f32 %v7688, 1.442695
    %v7695 = vpow.pop %v7694
    %v7696 = vmul.f32 %v7689, 1.442695
    %v7697 = vpow.pop %v7696
    %v7698 = vmul.f32 %v7690, 1.442695
    %v7699 = vpow.pop %v7698
    %v7700 = vmul.f32 %v7691, 1.442695
    %v7701 = vpow.pop %v7700
    %v7702 = vadd.f32 %v7693, 1.0
    %v7703 = vadd.f32 %v7695, 1.0
    %v7704 = vadd.f32 %v7697, 1.0
    %v7705 = vadd.f32 %v7699, 1.0
    %v7706 = vadd.f32 %v7701, 1.0
    %v7707 = vrcp.pop %v7702
    %v7708 = vrcp.pop %v7703
    %v7709 = vrcp.pop %v7704
    %v7710 = vrcp.pop %v7705
    %v7711 = vrcp.pop %v7706
    %v7712 = vmax.f32 %v7707, 0.0
    %v7713 = vmax.f32 %v7708, 0.0
    %v7714 = vmax.f32 %v7709, 0.0
    %v7715 = vmax.f32 %v7710, 0.0
    %v7716 = vmax.f32 %v7711, 0.0
    %v7717 = vmin.f32 %v7712, 1.0
    %v7718 = vmin.f32 %v7713, 1.0
    %v7719 = vmin.f32 %v7714, 1.0
    %v7720 = vmin.f32 %v7715, 1.0
    %v7721 = vmin.f32 %v7716, 1.0
    %7722 = vst [vmem:[%s14] sm:$0xff] %v7717
    %7723 = vst [vmem:[%s14 + $0x8] sm:$0xff] %v7718
    %7724 = vst [vmem:[%s14 + $0x10] sm:$0xff] %v7719
    %7725 = vst [vmem:[%s14 + $0x18] sm:$0xff] %v7720
    %7726 = vst [vmem:[%s14 + $0x20] sm:$0xf] %v7721
    // Predicated region
    $region98: #{_impl.1} parent=1 // pred_check
      _
    $region99: #{_impl.1} parent=1 // pred_check_branch
      %7728 = sbr.rel (0) target = $region101
    $region100: #{_impl.1} parent=1 // pred_region
      _
    $region101: #{_impl.1} parent=1 // pred_fallthru
      _
    // Predicated region
    $region102: #{_impl.1} parent=1 // pred_check
      _
    $region103: #{_impl.1} parent=1 // pred_check_branch
      %7730 = sbr.rel (0) target = $region105
    $region104: #{_impl.1} parent=1 // pred_region
      _
    $region105: #{_impl.1} parent=1 // pred_fallthru
      _
    %7731 = vsyncpa [#allocation5], 1
    %7732 = vsyncpa [#allocation7], 1
    %7733 = vsyncpa [#allocation10], 1
    %7734 = vsyncpa [#allocation13], 1
    %7735 = vsyncpa [#allocation16], 1
    %7736 = vsyncpa [#allocation19], 1

</llo_original>
